<compile_context>
chip_gen: v7x
topology: tpu7x:2x2x1
jax: 0.10.0
libtpu: 0.0.40
codegen_flags: <defaults>
</compile_context>

<pallas_src>
import functools

import jax
import jax.numpy as jnp
from jax.experimental import pallas as pl
from jax.experimental.pallas import tpu as pltpu

EPS = 1e-5  # nn.LayerNorm default


def _layernorm(x, gamma, beta):
    mu = jnp.mean(x, axis=-1, keepdims=True)
    var = jnp.mean((x - mu) * (x - mu), axis=-1, keepdims=True)
    return (x - mu) * jax.lax.rsqrt(var + EPS) * gamma + beta


# ----------------------------------------------------------------------------
# Kernel: one grid step = (batch block b, encoder layer l).
# The f32 residual stream lives in VMEM scratch across the layer axis.
# ----------------------------------------------------------------------------
def fused_transformer_kernel(x_ref,
                             wqkv_ref, bqkv_ref, wo_ref, bo_ref,
                             g1_ref, be1_ref, w1_ref, b1_ref,
                             w2_ref, b2_ref, g2_ref, be2_ref,
                             fcw_ref, fcb_ref,
                             o_ref, x_scr, *, num_heads):
    l = pl.program_id(1)
    bf16 = jnp.bfloat16
    Bb, S, D = x_ref.shape
    M = Bb * S                      # batch folded into matmul M dimension
    H = num_heads
    hd = D // H

    @pl.when(l == 0)
    def _():                        # load input block into the resident stream
        x_scr[...] = x_ref[...].reshape(M, D)

    x = x_scr[...]                  # (M, D) f32

    # ---- fused QKV projection: one MXU pass with N = 3D (scale folded in) ----
    qkv = jnp.dot(x.astype(bf16), wqkv_ref[0],
                  preferred_element_type=jnp.float32) + bqkv_ref[0]

    # ---- single head-split relayout for q/k/v together: (M,3H,hd)->(3H,M,hd)
    qkvh = pltpu.einshape("mgd->gmd", qkv.reshape(M, 3 * H, hd)).astype(bf16)
    q = qkvh[0 * H:1 * H].reshape(H * Bb, S, hd)   # batch index = h*Bb + b
    k = qkvh[1 * H:2 * H].reshape(H * Bb, S, hd)
    v = qkvh[2 * H:3 * H].reshape(H * Bb, S, hd)

    # ---- attention batched over (head, batch) ----
    s = jnp.einsum("hqd,hkd->hqk", q, k,
                   preferred_element_type=jnp.float32)          # (H*Bb, S, S)
    s = s - jnp.max(s, axis=-1, keepdims=True)
    p = jnp.exp(s)
    p = p * pl.reciprocal(jnp.sum(p, axis=-1, keepdims=True), approx=True)
    ctx = jnp.einsum("hqk,hkd->hqd", p.astype(bf16), v,
                     preferred_element_type=jnp.float32)        # (H*Bb, S, hd)

    # ---- merge heads back: single relayout (3H,M,hd)->(M,H,hd)->(M,D) ----
    ctx = pltpu.einshape("hmd->mhd", ctx.reshape(H, M, hd)).reshape(M, D)
    attn = jnp.dot(ctx.astype(bf16), wo_ref[0],
                   preferred_element_type=jnp.float32) + bo_ref[0]

    # TODO(synk): dropout(p=0.3) after attention / inside the FFN is identity
    # in eval mode; training-mode stochastic dropout is not reproduced here.

    # ---- residual + LayerNorm 1 (post-norm) ----
    ln1 = _layernorm(x + attn, g1_ref[0], be1_ref[0])

    # ---- ReLU feed-forward + residual + LayerNorm 2 ----
    ffh = jnp.maximum(
        jnp.dot(ln1.astype(bf16), w1_ref[0],
                preferred_element_type=jnp.float32) + b1_ref[0], 0.0)
    ff = jnp.dot(ffh.astype(bf16), w2_ref[0],
                 preferred_element_type=jnp.float32) + b2_ref[0]
    x_new = _layernorm(ln1 + ff, g2_ref[0], be2_ref[0])
    x_scr[...] = x_new

    # ---- after the last layer: mean-pool over S and classify ----
    @pl.when(l == pl.num_programs(1) - 1)
    def _():
        pooled = jnp.mean(x_new.reshape(Bb, S, D), axis=1)       # (Bb, D)
        logits = jnp.dot(pooled.astype(bf16), fcw_ref[...],
                         preferred_element_type=jnp.float32) + fcb_ref[...]
        o_ref[...] = logits.reshape(Bb, 1, -1)


STACKED_ORDER = ('wqkv', 'bqkv', 'wo', 'bo', 'g1', 'be1',
                 'w1', 'b1', 'w2', 'b2', 'g2', 'be2')


def _default_batch_blocks(batch):
    """2-way parallel batch split only on v7x (2 TCs/chip); 1 block elsewhere."""
    try:
        kind = jax.devices()[0].device_kind.lower()
    except Exception:
        kind = ""
    return 2 if ("v7" in kind and batch % 2 == 0) else 1


def _forward(src, params, num_heads, batch_blocks, buffered_consts):
    B, S, D = src.shape
    L = params['wqkv'].shape[0]
    C = params['fc_w'].shape[-1]
    Bb = B // batch_blocks
    stacked = [params[name] for name in STACKED_ORDER]

    def layer_spec(p):                       # streamed: new block per layer step
        nlead = p.ndim - 1

        def imap(b, l):
            return (l,) + (0,) * nlead

        return pl.BlockSpec((1,) + p.shape[1:], imap)

    def const_spec(p):                       # resident: constant block index
        nd = p.ndim

        def imap(b, l):
            return (0,) * nd

        if buffered_consts:
            return pl.BlockSpec(p.shape, imap, pipeline_mode=pl.Buffered(1))
        return pl.BlockSpec(p.shape, imap)

    # Scoped-VMEM limit sized from the actual resident footprint (+ headroom).
    nbytes = lambda a: a.size * a.dtype.itemsize
    per_layer = sum(nbytes(p) for p in stacked) // L
    resident = (2 * per_layer                          # double-buffered layer wts
                + 2 * nbytes(src) // batch_blocks      # input block
                + nbytes(params['fc_w']) + nbytes(params['fc_b'])
                + Bb * S * D * 4                       # residual-stream scratch
                + 2 * B * C * 4)                       # output
    vmem_limit = int(min(max(2 * resident + (8 << 20), 32 << 20), 64 << 20))

    kernel = functools.partial(fused_transformer_kernel, num_heads=num_heads)
    out = pl.pallas_call(
        kernel,
        out_shape=jax.ShapeDtypeStruct((B, 1, C), jnp.float32),
        grid=(batch_blocks, L),
        in_specs=[pl.BlockSpec((Bb, S, D), lambda b, l: (b, 0, 0))]
                 + [layer_spec(p) for p in stacked]
                 + [const_spec(params['fc_w']), const_spec(params['fc_b'])],
        out_specs=pl.BlockSpec((Bb, 1, C), lambda b, l: (b, 0, 0)),
        scratch_shapes=[pltpu.VMEM((Bb * S, D), jnp.float32)],
        compiler_params=pltpu.CompilerParams(
            dimension_semantics=("parallel", "arbitrary"),
            vmem_limit_bytes=vmem_limit),
    )(src, *stacked, params['fc_w'], params['fc_b'])
    return out.reshape(B, C)


def transformer_model(src, params, num_heads, batch_blocks=None):
    """Full TransformerModel forward (eval mode) in a single pallas_call."""
    if batch_blocks is None:
        batch_blocks = _default_batch_blocks(src.shape[0])
    try:
        return _forward(src, params, num_heads, batch_blocks,
                        buffered_consts=True)
    except Exception:
        # Fallback if this jax build rejects pipeline_mode=pl.Buffered(1) on
        # top-level BlockSpecs; everything else is unchanged.
        return _forward(src, params, num_heads, batch_blocks,
                        buffered_consts=False)


# ----------------------------------------------------------------------------
# Parameter init (deterministic, synthetic) + wrapper-time weight preparation.
# ----------------------------------------------------------------------------
def init_params(key, input_dim, num_heads, hidden_dim, num_layers,
                num_classes=5, scale=0.02):
    def nxt():
        nonlocal key
        key, sub = jax.random.split(key)
        return sub

    layers = []
    for _ in range(num_layers):
        D, Hf = input_dim, hidden_dim
        layers.append(dict(
            wq=scale * jax.random.normal(nxt(), (D, D), jnp.float32),
            bq=jnp.zeros((1, D), jnp.float32),
            wk=scale * jax.random.normal(nxt(), (D, D), jnp.float32),
            bk=jnp.zeros((1, D), jnp.float32),
            wv=scale * jax.random.normal(nxt(), (D, D), jnp.float32),
            bv=jnp.zeros((1, D), jnp.float32),
            wo=scale * jax.random.normal(nxt(), (D, D), jnp.float32),
            bo=jnp.zeros((1, D), jnp.float32),
            g1=jnp.ones((1, D), jnp.float32),
            be1=jnp.zeros((1, D), jnp.float32),
            w1=scale * jax.random.normal(nxt(), (D, Hf), jnp.float32),
            b1=jnp.zeros((1, Hf), jnp.float32),
            w2=scale * jax.random.normal(nxt(), (Hf, D), jnp.float32),
            b2=jnp.zeros((1, D), jnp.float32),
            g2=jnp.ones((1, D), jnp.float32),
            be2=jnp.zeros((1, D), jnp.float32),
        ))
    fc_w = scale * jax.random.normal(nxt(), (input_dim, num_classes), jnp.float32)
    fc_b = jnp.zeros((1, num_classes), jnp.float32)
    return dict(layers=layers, fc_w=fc_w, fc_b=fc_b)


def prepare_params(raw, input_dim, num_heads):
    """Fuse QKV, fold 1/sqrt(hd) into Wq/bq, stack layers, bf16-cast MXU weights."""
    hd = input_dim // num_heads
    scale = 1.0 / jnp.sqrt(jnp.float32(hd))
    mx = jnp.bfloat16  # MXU operand dtype; accumulation stays f32 in-kernel

    def stack(fn):
        return jnp.stack([fn(lp) for lp in raw['layers']])

    return dict(
        wqkv=stack(lambda lp: jnp.concatenate(
            [lp['wq'] * scale, lp['wk'], lp['wv']], axis=1)).astype(mx),
        bqkv=stack(lambda lp: jnp.concatenate(
            [lp['bq'] * scale, lp['bk'], lp['bv']], axis=1)),
        wo=stack(lambda lp: lp['wo']).astype(mx),
        bo=stack(lambda lp: lp['bo']),
        g1=stack(lambda lp: lp['g1']),
        be1=stack(lambda lp: lp['be1']),
        w1=stack(lambda lp: lp['w1']).astype(mx),
        b1=stack(lambda lp: lp['b1']),
        w2=stack(lambda lp: lp['w2']).astype(mx),
        b2=stack(lambda lp: lp['b2']),
        g2=stack(lambda lp: lp['g2']),
        be2=stack(lambda lp: lp['be2']),
        fc_w=raw['fc_w'].astype(mx),
        fc_b=raw['fc_b'],
    )


if __name__ == "__main__":
    # Small shapes consistent with the module's forward: src is (B, S, D).
    B, S = 2, 8
    input_dim, num_heads, hidden_dim, num_layers = 32, 4, 64, 2

    key = jax.random.PRNGKey(0)
    key_x, key_p = jax.random.split(key)
    src = jax.random.normal(key_x, (B, S, input_dim), jnp.float32)
    raw = init_params(key_p, input_dim, num_heads, hidden_dim, num_layers)
    params = prepare_params(raw, input_dim, num_heads)

    out = transformer_model(src, params, num_heads)
    out = jax.block_until_ready(out)
    assert out.shape == (B, 5) and out.dtype == jnp.float32
    print("KERNEL_OK")
</pallas_src>

<mosaic_0001>
module attributes {stable_mosaic.version = 11 : i64} {
  func.func @fused_transformer_kernel(%arg0: i32, %arg1: i32, %arg2: memref<2x8x32xf32, #tpu.memory_space<vmem>>, %arg3: memref<1x32x96xbf16, #tpu.memory_space<vmem>>, %arg4: memref<1x1x96xf32, #tpu.memory_space<vmem>>, %arg5: memref<1x32x32xbf16, #tpu.memory_space<vmem>>, %arg6: memref<1x1x32xf32, #tpu.memory_space<vmem>>, %arg7: memref<1x1x32xf32, #tpu.memory_space<vmem>>, %arg8: memref<1x1x32xf32, #tpu.memory_space<vmem>>, %arg9: memref<1x32x64xbf16, #tpu.memory_space<vmem>>, %arg10: memref<1x1x64xf32, #tpu.memory_space<vmem>>, %arg11: memref<1x64x32xbf16, #tpu.memory_space<vmem>>, %arg12: memref<1x1x32xf32, #tpu.memory_space<vmem>>, %arg13: memref<1x1x32xf32, #tpu.memory_space<vmem>>, %arg14: memref<1x1x32xf32, #tpu.memory_space<vmem>>, %arg15: memref<32x5xbf16, #tpu.memory_space<vmem>>, %arg16: memref<1x5xf32, #tpu.memory_space<vmem>>, %arg17: memref<2x1x5xf32, #tpu.memory_space<vmem>>, %arg18: memref<16x32xf32, #tpu.memory_space<vmem>>) attributes {dimension_semantics = [#tpu.dimension_semantics<parallel>, #tpu.dimension_semantics<arbitrary>], iteration_bounds = array<i64: 1, 2>, scalar_prefetch = 0 : i64, scratch_operands = 1 : i64, tpu.core_type = #tpu.core_type<tc>, window_params = [{transform_indices = @transform_0, window_bounds = array<i64: 2, 8, 32>}, {transform_indices = @transform_1, window_bounds = array<i64: 1, 32, 96>}, {transform_indices = @transform_2, window_bounds = array<i64: 1, 1, 96>}, {transform_indices = @transform_3, window_bounds = array<i64: 1, 32, 32>}, {transform_indices = @transform_4, window_bounds = array<i64: 1, 1, 32>}, {transform_indices = @transform_5, window_bounds = array<i64: 1, 1, 32>}, {transform_indices = @transform_6, window_bounds = array<i64: 1, 1, 32>}, {transform_indices = @transform_7, window_bounds = array<i64: 1, 32, 64>}, {transform_indices = @transform_8, window_bounds = array<i64: 1, 1, 64>}, {transform_indices = @transform_9, window_bounds = array<i64: 1, 64, 32>}, {transform_indices = @transform_10, window_bounds = array<i64: 1, 1, 32>}, {transform_indices = @transform_11, window_bounds = array<i64: 1, 1, 32>}, {transform_indices = @transform_12, window_bounds = array<i64: 1, 1, 32>}, {pipeline_mode = #tpu.pipeline_mode<synchronous>, transform_indices = @transform_13, window_bounds = array<i64: 32, 5>}, {pipeline_mode = #tpu.pipeline_mode<synchronous>, transform_indices = @transform_14, window_bounds = array<i64: 1, 5>}, {transform_indices = @transform_15, window_bounds = array<i64: 2, 1, 5>}]} {
    %c0_i32 = arith.constant 0 : i32
    %0 = arith.cmpi eq, %arg1, %c0_i32 : i32
    %1 = arith.extui %0 : i1 to i32
    %c0_i32_0 = arith.constant 0 : i32
    %2 = arith.cmpi ne, %1, %c0_i32_0 : i32
    scf.if %2 {
      %c0_59 = arith.constant 0 : index
      %c0_60 = arith.constant 0 : index
      %c0_61 = arith.constant 0 : index
      %125 = vector.load %arg2[%c0_59, %c0_60, %c0_61] : memref<2x8x32xf32, #tpu.memory_space<vmem>>, vector<2x8x32xf32>
      %126 = vector.shape_cast %125 : vector<2x8x32xf32> to vector<16x32xf32>
      %c0_62 = arith.constant 0 : index
      %c0_63 = arith.constant 0 : index
      %127 = vector.load %arg18[%c0_62, %c0_63] : memref<16x32xf32, #tpu.memory_space<vmem>>, vector<16x32xf32>
      tpu.vector_store %arg18[%c0_62, %c0_63], %126 {strides = array<i32>} : memref<16x32xf32, #tpu.memory_space<vmem>>, vector<16x32xf32>,
    } else {
    }
    %c0 = arith.constant 0 : index
    %c0_1 = arith.constant 0 : index
    %3 = vector.load %arg18[%c0, %c0_1] : memref<16x32xf32, #tpu.memory_space<vmem>>, vector<16x32xf32>
    %4 = arith.truncf %3 : vector<16x32xf32> to vector<16x32xbf16>
    %c0_2 = arith.constant 0 : index
    %c0_3 = arith.constant 0 : index
    %c0_4 = arith.constant 0 : index
    %5 = vector.load %arg3[%c0_2, %c0_3, %c0_4] : memref<1x32x96xbf16, #tpu.memory_space<vmem>>, vector<1x32x96xbf16>
    %6 = vector.shape_cast %5 : vector<1x32x96xbf16> to vector<32x96xbf16>
    %cst = arith.constant dense<0.000000e+00> : vector<16x96xf32>
    %7 = tpu.matmul %4, %6, %cst {dimension_numbers = #tpu.dot_dimension_numbers<[1], [0], [0], [1], [0, 0, 1, 1], [], []>} : vector<16x32xbf16>, vector<32x96xbf16>, vector<16x96xf32> -> vector<16x96xf32>
    %c0_5 = arith.constant 0 : index
    %c0_6 = arith.constant 0 : index
    %c0_7 = arith.constant 0 : index
    %8 = vector.load %arg4[%c0_5, %c0_6, %c0_7] : memref<1x1x96xf32, #tpu.memory_space<vmem>>, vector<1x1x96xf32>
    %9 = vector.shape_cast %8 : vector<1x1x96xf32> to vector<1x96xf32>
    %10 = vector.broadcast %9 : vector<1x96xf32> to vector<16x96xf32>
    %11 = arith.addf %7, %10 : vector<16x96xf32>
    %12 = vector.shape_cast %11 : vector<16x96xf32> to vector<16x12x8xf32>
    %13 = tpu.transpose %12, [1, 0, 2] : vector<16x12x8xf32> -> vector<12x16x8xf32>
    %14 = arith.truncf %13 : vector<12x16x8xf32> to vector<12x16x8xbf16>
    %15 = vector.extract_strided_slice %14 {offsets = [0, 0, 0], sizes = [4, 16, 8], strides = [1, 1, 1]} : vector<12x16x8xbf16> to vector<4x16x8xbf16>
    %16 = vector.shape_cast %15 : vector<4x16x8xbf16> to vector<8x8x8xbf16>
    %17 = vector.extract_strided_slice %14 {offsets = [4, 0, 0], sizes = [4, 16, 8], strides = [1, 1, 1]} : vector<12x16x8xbf16> to vector<4x16x8xbf16>
    %18 = vector.shape_cast %17 : vector<4x16x8xbf16> to vector<8x8x8xbf16>
    %19 = vector.extract_strided_slice %14 {offsets = [8, 0, 0], sizes = [4, 16, 8], strides = [1, 1, 1]} : vector<12x16x8xbf16> to vector<4x16x8xbf16>
    %20 = vector.shape_cast %19 : vector<4x16x8xbf16> to vector<8x8x8xbf16>
    "tpu.trace_start"() <{level = 10 : i32, message = "hqd,hkd->hqk"}> : () -> ()
    %cst_8 = arith.constant dense<0.000000e+00> : vector<8x8x8xf32>
    %21 = tpu.matmul %16, %18, %cst_8 {dimension_numbers = #tpu.dot_dimension_numbers<[2], [2], [1], [1], [0, 0, 0, 1, 1, 1], [0], [0]>} : vector<8x8x8xbf16>, vector<8x8x8xbf16>, vector<8x8x8xf32> -> vector<8x8x8xf32>
    "tpu.trace_stop"() : () -> ()
    %cst_9 = arith.constant dense<0xFF800000> : vector<8x8xf32>
    %22 = vector.multi_reduction <maximumf>, %21, %cst_9 [2] : vector<8x8x8xf32> to vector<8x8xf32>
    %23 = vector.shape_cast %22 : vector<8x8xf32> to vector<8x8x1xf32>
    %24 = vector.broadcast %23 : vector<8x8x1xf32> to vector<8x8x8xf32>
    %25 = arith.subf %21, %24 : vector<8x8x8xf32>
    %26 = math.exp %25 : vector<8x8x8xf32>
    %cst_10 = arith.constant dense<0.000000e+00> : vector<8x8xf32>
    %27 = vector.multi_reduction <add>, %26, %cst_10 [2] : vector<8x8x8xf32> to vector<8x8xf32>
    %28 = vector.shape_cast %27 : vector<8x8xf32> to vector<8x8x1xf32>
    %29 = tpu.reciprocal %28 {approx = true} : vector<8x8x1xf32> -> vector<8x8x1xf32>
    %30 = vector.broadcast %29 : vector<8x8x1xf32> to vector<8x8x8xf32>
    %31 = arith.mulf %26, %30 : vector<8x8x8xf32>
    %32 = arith.truncf %31 : vector<8x8x8xf32> to vector<8x8x8xbf16>
    "tpu.trace_start"() <{level = 10 : i32, message = "hqk,hkd->hqd"}> : () -> ()
    %cst_11 = arith.constant dense<0.000000e+00> : vector<8x8x8xf32>
    %33 = tpu.matmul %32, %20, %cst_11 {dimension_numbers = #tpu.dot_dimension_numbers<[2], [1], [1], [2], [0, 0, 0, 1, 1, 2], [0], [0]>} : vector<8x8x8xbf16>, vector<8x8x8xbf16>, vector<8x8x8xf32> -> vector<8x8x8xf32>
    "tpu.trace_stop"() : () -> ()
    %34 = vector.shape_cast %33 : vector<8x8x8xf32> to vector<4x16x8xf32>
    %35 = tpu.transpose %34, [1, 0, 2] : vector<4x16x8xf32> -> vector<16x4x8xf32>
    %36 = vector.shape_cast %35 : vector<16x4x8xf32> to vector<16x32xf32>
    %37 = arith.truncf %36 : vector<16x32xf32> to vector<16x32xbf16>
    %c0_12 = arith.constant 0 : index
    %c0_13 = arith.constant 0 : index
    %c0_14 = arith.constant 0 : index
    %38 = vector.load %arg5[%c0_12, %c0_13, %c0_14] : memref<1x32x32xbf16, #tpu.memory_space<vmem>>, vector<1x32x32xbf16>
    %39 = vector.shape_cast %38 : vector<1x32x32xbf16> to vector<32x32xbf16>
    %cst_15 = arith.constant dense<0.000000e+00> : vector<16x32xf32>
    %40 = tpu.matmul %37, %39, %cst_15 {dimension_numbers = #tpu.dot_dimension_numbers<[1], [0], [0], [1], [0, 0, 1, 1], [], []>} : vector<16x32xbf16>, vector<32x32xbf16>, vector<16x32xf32> -> vector<16x32xf32>
    %c0_16 = arith.constant 0 : index
    %c0_17 = arith.constant 0 : index
    %c0_18 = arith.constant 0 : index
    %41 = vector.load %arg6[%c0_16, %c0_17, %c0_18] : memref<1x1x32xf32, #tpu.memory_space<vmem>>, vector<1x1x32xf32>
    %42 = vector.shape_cast %41 : vector<1x1x32xf32> to vector<1x32xf32>
    %43 = vector.broadcast %42 : vector<1x32xf32> to vector<16x32xf32>
    %44 = arith.addf %40, %43 : vector<16x32xf32>
    %45 = arith.addf %3, %44 : vector<16x32xf32>
    %c0_19 = arith.constant 0 : index
    %c0_20 = arith.constant 0 : index
    %c0_21 = arith.constant 0 : index
    %46 = vector.load %arg7[%c0_19, %c0_20, %c0_21] : memref<1x1x32xf32, #tpu.memory_space<vmem>>, vector<1x1x32xf32>
    %47 = vector.shape_cast %46 : vector<1x1x32xf32> to vector<1x32xf32>
    %c0_22 = arith.constant 0 : index
    %c0_23 = arith.constant 0 : index
    %c0_24 = arith.constant 0 : index
    %48 = vector.load %arg8[%c0_22, %c0_23, %c0_24] : memref<1x1x32xf32, #tpu.memory_space<vmem>>, vector<1x1x32xf32>
    %49 = vector.shape_cast %48 : vector<1x1x32xf32> to vector<1x32xf32>
    %cst_25 = arith.constant dense<0.000000e+00> : vector<16xf32>
    %50 = vector.multi_reduction <add>, %45, %cst_25 [1] : vector<16x32xf32> to vector<16xf32>
    %51 = vector.shape_cast %50 : vector<16xf32> to vector<16x1xf32>
    %cst_26 = arith.constant 3.200000e+01 : f32
    %52 = vector.broadcast %cst_26 : f32 to vector<16x1xf32>
    %53 = arith.divf %51, %52 : vector<16x1xf32>
    %54 = vector.broadcast %53 : vector<16x1xf32> to vector<16x32xf32>
    %55 = arith.subf %45, %54 : vector<16x32xf32>
    %56 = vector.broadcast %53 : vector<16x1xf32> to vector<16x32xf32>
    %57 = arith.subf %45, %56 : vector<16x32xf32>
    %58 = arith.mulf %55, %57 : vector<16x32xf32>
    %cst_27 = arith.constant dense<0.000000e+00> : vector<16xf32>
    %59 = vector.multi_reduction <add>, %58, %cst_27 [1] : vector<16x32xf32> to vector<16xf32>
    %60 = vector.shape_cast %59 : vector<16xf32> to vector<16x1xf32>
    %cst_28 = arith.constant 3.200000e+01 : f32
    %61 = vector.broadcast %cst_28 : f32 to vector<16x1xf32>
    %62 = arith.divf %60, %61 : vector<16x1xf32>
    %63 = vector.broadcast %53 : vector<16x1xf32> to vector<16x32xf32>
    %64 = arith.subf %45, %63 : vector<16x32xf32>
    %cst_29 = arith.constant 9.99999974E-6 : f32
    %65 = vector.broadcast %cst_29 : f32 to vector<16x1xf32>
    %66 = arith.addf %62, %65 : vector<16x1xf32>
    %67 = math.rsqrt %66 : vector<16x1xf32>
    %68 = vector.broadcast %67 : vector<16x1xf32> to vector<16x32xf32>
    %69 = arith.mulf %64, %68 : vector<16x32xf32>
    %70 = vector.broadcast %47 : vector<1x32xf32> to vector<16x32xf32>
    %71 = arith.mulf %69, %70 : vector<16x32xf32>
    %72 = vector.broadcast %49 : vector<1x32xf32> to vector<16x32xf32>
    %73 = arith.addf %71, %72 : vector<16x32xf32>
    %74 = arith.truncf %73 : vector<16x32xf32> to vector<16x32xbf16>
    %c0_30 = arith.constant 0 : index
    %c0_31 = arith.constant 0 : index
    %c0_32 = arith.constant 0 : index
    %75 = vector.load %arg9[%c0_30, %c0_31, %c0_32] : memref<1x32x64xbf16, #tpu.memory_space<vmem>>, vector<1x32x64xbf16>
    %76 = vector.shape_cast %75 : vector<1x32x64xbf16> to vector<32x64xbf16>
    %cst_33 = arith.constant dense<0.000000e+00> : vector<16x64xf32>
    %77 = tpu.matmul %74, %76, %cst_33 {dimension_numbers = #tpu.dot_dimension_numbers<[1], [0], [0], [1], [0, 0, 1, 1], [], []>} : vector<16x32xbf16>, vector<32x64xbf16>, vector<16x64xf32> -> vector<16x64xf32>
    %c0_34 = arith.constant 0 : index
    %c0_35 = arith.constant 0 : index
    %c0_36 = arith.constant 0 : index
    %78 = vector.load %arg10[%c0_34, %c0_35, %c0_36] : memref<1x1x64xf32, #tpu.memory_space<vmem>>, vector<1x1x64xf32>
    %79 = vector.shape_cast %78 : vector<1x1x64xf32> to vector<1x64xf32>
    %80 = vector.broadcast %79 : vector<1x64xf32> to vector<16x64xf32>
    %81 = arith.addf %77, %80 : vector<16x64xf32>
    %cst_37 = arith.constant 0.000000e+00 : f32
    %82 = vector.broadcast %cst_37 : f32 to vector<16x64xf32>
    %83 = arith.maximumf %81, %82 : vector<16x64xf32>
    %84 = arith.truncf %83 : vector<16x64xf32> to vector<16x64xbf16>
    %c0_38 = arith.constant 0 : index
    %c0_39 = arith.constant 0 : index
    %c0_40 = arith.constant 0 : index
    %85 = vector.load %arg11[%c0_38, %c0_39, %c0_40] : memref<1x64x32xbf16, #tpu.memory_space<vmem>>, vector<1x64x32xbf16>
    %86 = vector.shape_cast %85 : vector<1x64x32xbf16> to vector<64x32xbf16>
    %cst_41 = arith.constant dense<0.000000e+00> : vector<16x32xf32>
    %87 = tpu.matmul %84, %86, %cst_41 {dimension_numbers = #tpu.dot_dimension_numbers<[1], [0], [0], [1], [0, 0, 1, 1], [], []>} : vector<16x64xbf16>, vector<64x32xbf16>, vector<16x32xf32> -> vector<16x32xf32>
    %c0_42 = arith.constant 0 : index
    %c0_43 = arith.constant 0 : index
    %c0_44 = arith.constant 0 : index
    %88 = vector.load %arg12[%c0_42, %c0_43, %c0_44] : memref<1x1x32xf32, #tpu.memory_space<vmem>>, vector<1x1x32xf32>
    %89 = vector.shape_cast %88 : vector<1x1x32xf32> to vector<1x32xf32>
    %90 = vector.broadcast %89 : vector<1x32xf32> to vector<16x32xf32>
    %91 = arith.addf %87, %90 : vector<16x32xf32>
    %92 = arith.addf %73, %91 : vector<16x32xf32>
    %c0_45 = arith.constant 0 : index
    %c0_46 = arith.constant 0 : index
    %c0_47 = arith.constant 0 : index
    %93 = vector.load %arg13[%c0_45, %c0_46, %c0_47] : memref<1x1x32xf32, #tpu.memory_space<vmem>>, vector<1x1x32xf32>
    %94 = vector.shape_cast %93 : vector<1x1x32xf32> to vector<1x32xf32>
    %c0_48 = arith.constant 0 : index
    %c0_49 = arith.constant 0 : index
    %c0_50 = arith.constant 0 : index
    %95 = vector.load %arg14[%c0_48, %c0_49, %c0_50] : memref<1x1x32xf32, #tpu.memory_space<vmem>>, vector<1x1x32xf32>
    %96 = vector.shape_cast %95 : vector<1x1x32xf32> to vector<1x32xf32>
    %cst_51 = arith.constant dense<0.000000e+00> : vector<16xf32>
    %97 = vector.multi_reduction <add>, %92, %cst_51 [1] : vector<16x32xf32> to vector<16xf32>
    %98 = vector.shape_cast %97 : vector<16xf32> to vector<16x1xf32>
    %cst_52 = arith.constant 3.200000e+01 : f32
    %99 = vector.broadcast %cst_52 : f32 to vector<16x1xf32>
    %100 = arith.divf %98, %99 : vector<16x1xf32>
    %101 = vector.broadcast %100 : vector<16x1xf32> to vector<16x32xf32>
    %102 = arith.subf %92, %101 : vector<16x32xf32>
    %103 = vector.broadcast %100 : vector<16x1xf32> to vector<16x32xf32>
    %104 = arith.subf %92, %103 : vector<16x32xf32>
    %105 = arith.mulf %102, %104 : vector<16x32xf32>
    %cst_53 = arith.constant dense<0.000000e+00> : vector<16xf32>
    %106 = vector.multi_reduction <add>, %105, %cst_53 [1] : vector<16x32xf32> to vector<16xf32>
    %107 = vector.shape_cast %106 : vector<16xf32> to vector<16x1xf32>
    %cst_54 = arith.constant 3.200000e+01 : f32
    %108 = vector.broadcast %cst_54 : f32 to vector<16x1xf32>
    %109 = arith.divf %107, %108 : vector<16x1xf32>
    %110 = vector.broadcast %100 : vector<16x1xf32> to vector<16x32xf32>
    %111 = arith.subf %92, %110 : vector<16x32xf32>
    %cst_55 = arith.constant 9.99999974E-6 : f32
    %112 = vector.broadcast %cst_55 : f32 to vector<16x1xf32>
    %113 = arith.addf %109, %112 : vector<16x1xf32>
    %114 = math.rsqrt %113 : vector<16x1xf32>
    %115 = vector.broadcast %114 : vector<16x1xf32> to vector<16x32xf32>
    %116 = arith.mulf %111, %115 : vector<16x32xf32>
    %117 = vector.broadcast %94 : vector<1x32xf32> to vector<16x32xf32>
    %118 = arith.mulf %116, %117 : vector<16x32xf32>
    %119 = vector.broadcast %96 : vector<1x32xf32> to vector<16x32xf32>
    %120 = arith.addf %118, %119 : vector<16x32xf32>
    %c0_56 = arith.constant 0 : index
    %c0_57 = arith.constant 0 : index
    %121 = vector.load %arg18[%c0_56, %c0_57] : memref<16x32xf32, #tpu.memory_space<vmem>>, vector<16x32xf32>
    tpu.vector_store %arg18[%c0_56, %c0_57], %120 {strides = array<i32>} : memref<16x32xf32, #tpu.memory_space<vmem>>, vector<16x32xf32>,
    %c1_i32 = arith.constant 1 : i32
    %122 = arith.cmpi eq, %arg1, %c1_i32 : i32
    %123 = arith.extui %122 : i1 to i32
    %c0_i32_58 = arith.constant 0 : i32
    %124 = arith.cmpi ne, %123, %c0_i32_58 : i32
    scf.if %124 {
      %125 = vector.shape_cast %120 : vector<16x32xf32> to vector<2x8x32xf32>
      %cst_59 = arith.constant dense<0.000000e+00> : vector<2x32xf32>
      %126 = vector.multi_reduction <add>, %125, %cst_59 [1] : vector<2x8x32xf32> to vector<2x32xf32>
      %cst_60 = arith.constant 8.000000e+00 : f32
      %127 = vector.broadcast %cst_60 : f32 to vector<2x32xf32>
      %128 = arith.divf %126, %127 : vector<2x32xf32>
      %129 = arith.truncf %128 : vector<2x32xf32> to vector<2x32xbf16>
      %c0_61 = arith.constant 0 : index
      %c0_62 = arith.constant 0 : index
      %130 = vector.load %arg15[%c0_61, %c0_62] : memref<32x5xbf16, #tpu.memory_space<vmem>>, vector<32x5xbf16>
      %cst_63 = arith.constant dense<0.000000e+00> : vector<2x5xf32>
      %131 = tpu.matmul %129, %130, %cst_63 {dimension_numbers = #tpu.dot_dimension_numbers<[1], [0], [0], [1], [0, 0, 1, 1], [], []>} : vector<2x32xbf16>, vector<32x5xbf16>, vector<2x5xf32> -> vector<2x5xf32>
      %c0_64 = arith.constant 0 : index
      %c0_65 = arith.constant 0 : index
      %132 = vector.load %arg16[%c0_64, %c0_65] : memref<1x5xf32, #tpu.memory_space<vmem>>, vector<1x5xf32>
      %133 = vector.broadcast %132 : vector<1x5xf32> to vector<2x5xf32>
      %134 = arith.addf %131, %133 : vector<2x5xf32>
      %135 = vector.shape_cast %134 : vector<2x5xf32> to vector<2x1x5xf32>
      %c0_66 = arith.constant 0 : index
      %c0_67 = arith.constant 0 : index
      %c0_68 = arith.constant 0 : index
      %136 = vector.load %arg17[%c0_66, %c0_67, %c0_68] : memref<2x1x5xf32, #tpu.memory_space<vmem>>, vector<2x1x5xf32>
      tpu.vector_store %arg17[%c0_66, %c0_67, %c0_68], %135 {strides = array<i32>} : memref<2x1x5xf32, #tpu.memory_space<vmem>>, vector<2x1x5xf32>,
    } else {
    }
    return
  }
  func.func @transform_0(%arg0: i32, %arg1: i32) -> (i32, i32, i32) {
    %c0_i32 = arith.constant 0 : i32
    %c0_i32_0 = arith.constant 0 : i32
    %c0_i32_1 = arith.constant 0 : i32
    return %arg0, %c0_i32, %c0_i32_0 : i32, i32, i32
  }
  func.func @transform_1(%arg0: i32, %arg1: i32) -> (i32, i32, i32) {
    %c0_i32 = arith.constant 0 : i32
    %c0_i32_0 = arith.constant 0 : i32
    %c0_i32_1 = arith.constant 0 : i32
    return %arg1, %c0_i32, %c0_i32_0 : i32, i32, i32
  }
  func.func @transform_2(%arg0: i32, %arg1: i32) -> (i32, i32, i32) {
    %c0_i32 = arith.constant 0 : i32
    %c0_i32_0 = arith.constant 0 : i32
    %c0_i32_1 = arith.constant 0 : i32
    return %arg1, %c0_i32, %c0_i32_0 : i32, i32, i32
  }
  func.func @transform_3(%arg0: i32, %arg1: i32) -> (i32, i32, i32) {
    %c0_i32 = arith.constant 0 : i32
    %c0_i32_0 = arith.constant 0 : i32
    %c0_i32_1 = arith.constant 0 : i32
    return %arg1, %c0_i32, %c0_i32_0 : i32, i32, i32
  }
  func.func @transform_4(%arg0: i32, %arg1: i32) -> (i32, i32, i32) {
    %c0_i32 = arith.constant 0 : i32
    %c0_i32_0 = arith.constant 0 : i32
    %c0_i32_1 = arith.constant 0 : i32
    return %arg1, %c0_i32, %c0_i32_0 : i32, i32, i32
  }
  func.func @transform_5(%arg0: i32, %arg1: i32) -> (i32, i32, i32) {
    %c0_i32 = arith.constant 0 : i32
    %c0_i32_0 = arith.constant 0 : i32
    %c0_i32_1 = arith.constant 0 : i32
    return %arg1, %c0_i32, %c0_i32_0 : i32, i32, i32
  }
  func.func @transform_6(%arg0: i32, %arg1: i32) -> (i32, i32, i32) {
    %c0_i32 = arith.constant 0 : i32
    %c0_i32_0 = arith.constant 0 : i32
    %c0_i32_1 = arith.constant 0 : i32
    return %arg1, %c0_i32, %c0_i32_0 : i32, i32, i32
  }
  func.func @transform_7(%arg0: i32, %arg1: i32) -> (i32, i32, i32) {
    %c0_i32 = arith.constant 0 : i32
    %c0_i32_0 = arith.constant 0 : i32
    %c0_i32_1 = arith.constant 0 : i32
    return %arg1, %c0_i32, %c0_i32_0 : i32, i32, i32
  }
  func.func @transform_8(%arg0: i32, %arg1: i32) -> (i32, i32, i32) {
    %c0_i32 = arith.constant 0 : i32
    %c0_i32_0 = arith.constant 0 : i32
    %c0_i32_1 = arith.constant 0 : i32
    return %arg1, %c0_i32, %c0_i32_0 : i32, i32, i32
  }
  func.func @transform_9(%arg0: i32, %arg1: i32) -> (i32, i32, i32) {
    %c0_i32 = arith.constant 0 : i32
    %c0_i32_0 = arith.constant 0 : i32
    %c0_i32_1 = arith.constant 0 : i32
    return %arg1, %c0_i32, %c0_i32_0 : i32, i32, i32
  }
  func.func @transform_10(%arg0: i32, %arg1: i32) -> (i32, i32, i32) {
    %c0_i32 = arith.constant 0 : i32
    %c0_i32_0 = arith.constant 0 : i32
    %c0_i32_1 = arith.constant 0 : i32
    return %arg1, %c0_i32, %c0_i32_0 : i32, i32, i32
  }
  func.func @transform_11(%arg0: i32, %arg1: i32) -> (i32, i32, i32) {
    %c0_i32 = arith.constant 0 : i32
    %c0_i32_0 = arith.constant 0 : i32
    %c0_i32_1 = arith.constant 0 : i32
    return %arg1, %c0_i32, %c0_i32_0 : i32, i32, i32
  }
  func.func @transform_12(%arg0: i32, %arg1: i32) -> (i32, i32, i32) {
    %c0_i32 = arith.constant 0 : i32
    %c0_i32_0 = arith.constant 0 : i32
    %c0_i32_1 = arith.constant 0 : i32
    return %arg1, %c0_i32, %c0_i32_0 : i32, i32, i32
  }
  func.func @transform_13(%arg0: i32, %arg1: i32) -> (i32, i32) {
    %c0_i32 = arith.constant 0 : i32
    %c0_i32_0 = arith.constant 0 : i32
    %c0_i32_1 = arith.constant 0 : i32
    return %c0_i32, %c0_i32_0 : i32, i32
  }
  func.func @transform_14(%arg0: i32, %arg1: i32) -> (i32, i32) {
    %c0_i32 = arith.constant 0 : i32
    %c0_i32_0 = arith.constant 0 : i32
    %c0_i32_1 = arith.constant 0 : i32
    return %c0_i32, %c0_i32_0 : i32, i32
  }
  func.func @transform_15(%arg0: i32, %arg1: i32) -> (i32, i32, i32) {
    %c0_i32 = arith.constant 0 : i32
    %c0_i32_0 = arith.constant 0 : i32
    %c0_i32_1 = arith.constant 0 : i32
    return %arg0, %c0_i32, %c0_i32_0 : i32, i32, i32
  }
}

module attributes {stable_mosaic.version = 11 : i64} {
  func.func @fused_transformer_kernel(%arg0: i32, %arg1: i32, %arg2: memref<2x8x32xf32, #tpu.memory_space<vmem>>, %arg3: memref<1x32x96xbf16, #tpu.memory_space<vmem>>, %arg4: memref<1x1x96xf32, #tpu.memory_space<vmem>>, %arg5: memref<1x32x32xbf16, #tpu.memory_space<vmem>>, %arg6: memref<1x1x32xf32, #tpu.memory_space<vmem>>, %arg7: memref<1x1x32xf32, #tpu.memory_space<vmem>>, %arg8: memref<1x1x32xf32, #tpu.memory_space<vmem>>, %arg9: memref<1x32x64xbf16, #tpu.memory_space<vmem>>, %arg10: memref<1x1x64xf32, #tpu.memory_space<vmem>>, %arg11: memref<1x64x32xbf16, #tpu.memory_space<vmem>>, %arg12: memref<1x1x32xf32, #tpu.memory_space<vmem>>, %arg13: memref<1x1x32xf32, #tpu.memory_space<vmem>>, %arg14: memref<1x1x32xf32, #tpu.memory_space<vmem>>, %arg15: memref<32x5xbf16, #tpu.memory_space<vmem>>, %arg16: memref<1x5xf32, #tpu.memory_space<vmem>>, %arg17: memref<2x1x5xf32, #tpu.memory_space<vmem>>, %arg18: memref<16x32xf32, #tpu.memory_space<vmem>>) attributes {dimension_semantics = [#tpu.dimension_semantics<parallel>, #tpu.dimension_semantics<arbitrary>], iteration_bounds = array<i64: 1, 2>, scalar_prefetch = 0 : i64, scratch_operands = 1 : i64, tpu.core_type = #tpu.core_type<tc>, window_params = [{transform_indices = @transform_0, window_bounds = array<i64: 2, 8, 32>}, {transform_indices = @transform_1, window_bounds = array<i64: 1, 32, 96>}, {transform_indices = @transform_2, window_bounds = array<i64: 1, 1, 96>}, {transform_indices = @transform_3, window_bounds = array<i64: 1, 32, 32>}, {transform_indices = @transform_4, window_bounds = array<i64: 1, 1, 32>}, {transform_indices = @transform_5, window_bounds = array<i64: 1, 1, 32>}, {transform_indices = @transform_6, window_bounds = array<i64: 1, 1, 32>}, {transform_indices = @transform_7, window_bounds = array<i64: 1, 32, 64>}, {transform_indices = @transform_8, window_bounds = array<i64: 1, 1, 64>}, {transform_indices = @transform_9, window_bounds = array<i64: 1, 64, 32>}, {transform_indices = @transform_10, window_bounds = array<i64: 1, 1, 32>}, {transform_indices = @transform_11, window_bounds = array<i64: 1, 1, 32>}, {transform_indices = @transform_12, window_bounds = array<i64: 1, 1, 32>}, {pipeline_mode = #tpu.pipeline_mode<synchronous>, transform_indices = @transform_13, window_bounds = array<i64: 32, 5>}, {pipeline_mode = #tpu.pipeline_mode<synchronous>, transform_indices = @transform_14, window_bounds = array<i64: 1, 5>}, {transform_indices = @transform_15, window_bounds = array<i64: 2, 1, 5>}]} {
    %c0_i32 = arith.constant 0 : i32
    %0 = arith.cmpi eq, %arg1, %c0_i32 : i32
    %1 = arith.extui %0 : i1 to i32
    %c0_i32_0 = arith.constant 0 : i32
    %2 = arith.cmpi ne, %1, %c0_i32_0 : i32
    scf.if %2 {
      %c0_59 = arith.constant 0 : index
      %c0_60 = arith.constant 0 : index
      %c0_61 = arith.constant 0 : index
      %125 = vector.load %arg2[%c0_59, %c0_60, %c0_61] : memref<2x8x32xf32, #tpu.memory_space<vmem>>, vector<2x8x32xf32>
      %126 = vector.shape_cast %125 : vector<2x8x32xf32> to vector<16x32xf32>
      %c0_62 = arith.constant 0 : index
      %c0_63 = arith.constant 0 : index
      %127 = vector.load %arg18[%c0_62, %c0_63] : memref<16x32xf32, #tpu.memory_space<vmem>>, vector<16x32xf32>
      tpu.vector_store %arg18[%c0_62, %c0_63], %126 {strides = array<i32>} : memref<16x32xf32, #tpu.memory_space<vmem>>, vector<16x32xf32>,
    } else {
    }
    %c0 = arith.constant 0 : index
    %c0_1 = arith.constant 0 : index
    %3 = vector.load %arg18[%c0, %c0_1] : memref<16x32xf32, #tpu.memory_space<vmem>>, vector<16x32xf32>
    %4 = arith.truncf %3 : vector<16x32xf32> to vector<16x32xbf16>
    %c0_2 = arith.constant 0 : index
    %c0_3 = arith.constant 0 : index
    %c0_4 = arith.constant 0 : index
    %5 = vector.load %arg3[%c0_2, %c0_3, %c0_4] : memref<1x32x96xbf16, #tpu.memory_space<vmem>>, vector<1x32x96xbf16>
    %6 = vector.shape_cast %5 : vector<1x32x96xbf16> to vector<32x96xbf16>
    %cst = arith.constant dense<0.000000e+00> : vector<16x96xf32>
    %7 = tpu.matmul %4, %6, %cst {dimension_numbers = #tpu.dot_dimension_numbers<[1], [0], [0], [1], [0, 0, 1, 1], [], []>} : vector<16x32xbf16>, vector<32x96xbf16>, vector<16x96xf32> -> vector<16x96xf32>
    %c0_5 = arith.constant 0 : index
    %c0_6 = arith.constant 0 : index
    %c0_7 = arith.constant 0 : index
    %8 = vector.load %arg4[%c0_5, %c0_6, %c0_7] : memref<1x1x96xf32, #tpu.memory_space<vmem>>, vector<1x1x96xf32>
    %9 = vector.shape_cast %8 : vector<1x1x96xf32> to vector<1x96xf32>
    %10 = vector.broadcast %9 : vector<1x96xf32> to vector<16x96xf32>
    %11 = arith.addf %7, %10 : vector<16x96xf32>
    %12 = vector.shape_cast %11 : vector<16x96xf32> to vector<16x12x8xf32>
    %13 = tpu.transpose %12, [1, 0, 2] : vector<16x12x8xf32> -> vector<12x16x8xf32>
    %14 = arith.truncf %13 : vector<12x16x8xf32> to vector<12x16x8xbf16>
    %15 = vector.extract_strided_slice %14 {offsets = [0, 0, 0], sizes = [4, 16, 8], strides = [1, 1, 1]} : vector<12x16x8xbf16> to vector<4x16x8xbf16>
    %16 = vector.shape_cast %15 : vector<4x16x8xbf16> to vector<8x8x8xbf16>
    %17 = vector.extract_strided_slice %14 {offsets = [4, 0, 0], sizes = [4, 16, 8], strides = [1, 1, 1]} : vector<12x16x8xbf16> to vector<4x16x8xbf16>
    %18 = vector.shape_cast %17 : vector<4x16x8xbf16> to vector<8x8x8xbf16>
    %19 = vector.extract_strided_slice %14 {offsets = [8, 0, 0], sizes = [4, 16, 8], strides = [1, 1, 1]} : vector<12x16x8xbf16> to vector<4x16x8xbf16>
    %20 = vector.shape_cast %19 : vector<4x16x8xbf16> to vector<8x8x8xbf16>
    "tpu.trace_start"() <{level = 10 : i32, message = "hqd,hkd->hqk"}> : () -> ()
    %cst_8 = arith.constant dense<0.000000e+00> : vector<8x8x8xf32>
    %21 = tpu.matmul %16, %18, %cst_8 {dimension_numbers = #tpu.dot_dimension_numbers<[2], [2], [1], [1], [0, 0, 0, 1, 1, 1], [0], [0]>} : vector<8x8x8xbf16>, vector<8x8x8xbf16>, vector<8x8x8xf32> -> vector<8x8x8xf32>
    "tpu.trace_stop"() : () -> ()
    %cst_9 = arith.constant dense<0xFF800000> : vector<8x8xf32>
    %22 = vector.multi_reduction <maximumf>, %21, %cst_9 [2] : vector<8x8x8xf32> to vector<8x8xf32>
    %23 = vector.shape_cast %22 : vector<8x8xf32> to vector<8x8x1xf32>
    %24 = vector.broadcast %23 : vector<8x8x1xf32> to vector<8x8x8xf32>
    %25 = arith.subf %21, %24 : vector<8x8x8xf32>
    %26 = math.exp %25 : vector<8x8x8xf32>
    %cst_10 = arith.constant dense<0.000000e+00> : vector<8x8xf32>
    %27 = vector.multi_reduction <add>, %26, %cst_10 [2] : vector<8x8x8xf32> to vector<8x8xf32>
    %28 = vector.shape_cast %27 : vector<8x8xf32> to vector<8x8x1xf32>
    %29 = tpu.reciprocal %28 {approx = true} : vector<8x8x1xf32> -> vector<8x8x1xf32>
    %30 = vector.broadcast %29 : vector<8x8x1xf32> to vector<8x8x8xf32>
    %31 = arith.mulf %26, %30 : vector<8x8x8xf32>
    %32 = arith.truncf %31 : vector<8x8x8xf32> to vector<8x8x8xbf16>
    "tpu.trace_start"() <{level = 10 : i32, message = "hqk,hkd->hqd"}> : () -> ()
    %cst_11 = arith.constant dense<0.000000e+00> : vector<8x8x8xf32>
    %33 = tpu.matmul %32, %20, %cst_11 {dimension_numbers = #tpu.dot_dimension_numbers<[2], [1], [1], [2], [0, 0, 0, 1, 1, 2], [0], [0]>} : vector<8x8x8xbf16>, vector<8x8x8xbf16>, vector<8x8x8xf32> -> vector<8x8x8xf32>
    "tpu.trace_stop"() : () -> ()
    %34 = vector.shape_cast %33 : vector<8x8x8xf32> to vector<4x16x8xf32>
    %35 = tpu.transpose %34, [1, 0, 2] : vector<4x16x8xf32> -> vector<16x4x8xf32>
    %36 = vector.shape_cast %35 : vector<16x4x8xf32> to vector<16x32xf32>
    %37 = arith.truncf %36 : vector<16x32xf32> to vector<16x32xbf16>
    %c0_12 = arith.constant 0 : index
    %c0_13 = arith.constant 0 : index
    %c0_14 = arith.constant 0 : index
    %38 = vector.load %arg5[%c0_12, %c0_13, %c0_14] : memref<1x32x32xbf16, #tpu.memory_space<vmem>>, vector<1x32x32xbf16>
    %39 = vector.shape_cast %38 : vector<1x32x32xbf16> to vector<32x32xbf16>
    %cst_15 = arith.constant dense<0.000000e+00> : vector<16x32xf32>
    %40 = tpu.matmul %37, %39, %cst_15 {dimension_numbers = #tpu.dot_dimension_numbers<[1], [0], [0], [1], [0, 0, 1, 1], [], []>} : vector<16x32xbf16>, vector<32x32xbf16>, vector<16x32xf32> -> vector<16x32xf32>
    %c0_16 = arith.constant 0 : index
    %c0_17 = arith.constant 0 : index
    %c0_18 = arith.constant 0 : index
    %41 = vector.load %arg6[%c0_16, %c0_17, %c0_18] : memref<1x1x32xf32, #tpu.memory_space<vmem>>, vector<1x1x32xf32>
    %42 = vector.shape_cast %41 : vector<1x1x32xf32> to vector<1x32xf32>
    %43 = vector.broadcast %42 : vector<1x32xf32> to vector<16x32xf32>
    %44 = arith.addf %40, %43 : vector<16x32xf32>
    %45 = arith.addf %3, %44 : vector<16x32xf32>
    %c0_19 = arith.constant 0 : index
    %c0_20 = arith.constant 0 : index
    %c0_21 = arith.constant 0 : index
    %46 = vector.load %arg7[%c0_19, %c0_20, %c0_21] : memref<1x1x32xf32, #tpu.memory_space<vmem>>, vector<1x1x32xf32>
    %47 = vector.shape_cast %46 : vector<1x1x32xf32> to vector<1x32xf32>
    %c0_22 = arith.constant 0 : index
    %c0_23 = arith.constant 0 : index
    %c0_24 = arith.constant 0 : index
    %48 = vector.load %arg8[%c0_22, %c0_23, %c0_24] : memref<1x1x32xf32, #tpu.memory_space<vmem>>, vector<1x1x32xf32>
    %49 = vector.shape_cast %48 : vector<1x1x32xf32> to vector<1x32xf32>
    %cst_25 = arith.constant dense<0.000000e+00> : vector<16xf32>
    %50 = vector.multi_reduction <add>, %45, %cst_25 [1] : vector<16x32xf32> to vector<16xf32>
    %51 = vector.shape_cast %50 : vector<16xf32> to vector<16x1xf32>
    %cst_26 = arith.constant 3.200000e+01 : f32
    %52 = vector.broadcast %cst_26 : f32 to vector<16x1xf32>
    %53 = arith.divf %51, %52 : vector<16x1xf32>
    %54 = vector.broadcast %53 : vector<16x1xf32> to vector<16x32xf32>
    %55 = arith.subf %45, %54 : vector<16x32xf32>
    %56 = vector.broadcast %53 : vector<16x1xf32> to vector<16x32xf32>
    %57 = arith.subf %45, %56 : vector<16x32xf32>
    %58 = arith.mulf %55, %57 : vector<16x32xf32>
    %cst_27 = arith.constant dense<0.000000e+00> : vector<16xf32>
    %59 = vector.multi_reduction <add>, %58, %cst_27 [1] : vector<16x32xf32> to vector<16xf32>
    %60 = vector.shape_cast %59 : vector<16xf32> to vector<16x1xf32>
    %cst_28 = arith.constant 3.200000e+01 : f32
    %61 = vector.broadcast %cst_28 : f32 to vector<16x1xf32>
    %62 = arith.divf %60, %61 : vector<16x1xf32>
    %63 = vector.broadcast %53 : vector<16x1xf32> to vector<16x32xf32>
    %64 = arith.subf %45, %63 : vector<16x32xf32>
    %cst_29 = arith.constant 9.99999974E-6 : f32
    %65 = vector.broadcast %cst_29 : f32 to vector<16x1xf32>
    %66 = arith.addf %62, %65 : vector<16x1xf32>
    %67 = math.rsqrt %66 : vector<16x1xf32>
    %68 = vector.broadcast %67 : vector<16x1xf32> to vector<16x32xf32>
    %69 = arith.mulf %64, %68 : vector<16x32xf32>
    %70 = vector.broadcast %47 : vector<1x32xf32> to vector<16x32xf32>
    %71 = arith.mulf %69, %70 : vector<16x32xf32>
    %72 = vector.broadcast %49 : vector<1x32xf32> to vector<16x32xf32>
    %73 = arith.addf %71, %72 : vector<16x32xf32>
    %74 = arith.truncf %73 : vector<16x32xf32> to vector<16x32xbf16>
    %c0_30 = arith.constant 0 : index
    %c0_31 = arith.constant 0 : index
    %c0_32 = arith.constant 0 : index
    %75 = vector.load %arg9[%c0_30, %c0_31, %c0_32] : memref<1x32x64xbf16, #tpu.memory_space<vmem>>, vector<1x32x64xbf16>
    %76 = vector.shape_cast %75 : vector<1x32x64xbf16> to vector<32x64xbf16>
    %cst_33 = arith.constant dense<0.000000e+00> : vector<16x64xf32>
    %77 = tpu.matmul %74, %76, %cst_33 {dimension_numbers = #tpu.dot_dimension_numbers<[1], [0], [0], [1], [0, 0, 1, 1], [], []>} : vector<16x32xbf16>, vector<32x64xbf16>, vector<16x64xf32> -> vector<16x64xf32>
    %c0_34 = arith.constant 0 : index
    %c0_35 = arith.constant 0 : index
    %c0_36 = arith.constant 0 : index
    %78 = vector.load %arg10[%c0_34, %c0_35, %c0_36] : memref<1x1x64xf32, #tpu.memory_space<vmem>>, vector<1x1x64xf32>
    %79 = vector.shape_cast %78 : vector<1x1x64xf32> to vector<1x64xf32>
    %80 = vector.broadcast %79 : vector<1x64xf32> to vector<16x64xf32>
    %81 = arith.addf %77, %80 : vector<16x64xf32>
    %cst_37 = arith.constant 0.000000e+00 : f32
    %82 = vector.broadcast %cst_37 : f32 to vector<16x64xf32>
    %83 = arith.maximumf %81, %82 : vector<16x64xf32>
    %84 = arith.truncf %83 : vector<16x64xf32> to vector<16x64xbf16>
    %c0_38 = arith.constant 0 : index
    %c0_39 = arith.constant 0 : index
    %c0_40 = arith.constant 0 : index
    %85 = vector.load %arg11[%c0_38, %c0_39, %c0_40] : memref<1x64x32xbf16, #tpu.memory_space<vmem>>, vector<1x64x32xbf16>
    %86 = vector.shape_cast %85 : vector<1x64x32xbf16> to vector<64x32xbf16>
    %cst_41 = arith.constant dense<0.000000e+00> : vector<16x32xf32>
    %87 = tpu.matmul %84, %86, %cst_41 {dimension_numbers = #tpu.dot_dimension_numbers<[1], [0], [0], [1], [0, 0, 1, 1], [], []>} : vector<16x64xbf16>, vector<64x32xbf16>, vector<16x32xf32> -> vector<16x32xf32>
    %c0_42 = arith.constant 0 : index
    %c0_43 = arith.constant 0 : index
    %c0_44 = arith.constant 0 : index
    %88 = vector.load %arg12[%c0_42, %c0_43, %c0_44] : memref<1x1x32xf32, #tpu.memory_space<vmem>>, vector<1x1x32xf32>
    %89 = vector.shape_cast %88 : vector<1x1x32xf32> to vector<1x32xf32>
    %90 = vector.broadcast %89 : vector<1x32xf32> to vector<16x32xf32>
    %91 = arith.addf %87, %90 : vector<16x32xf32>
    %92 = arith.addf %73, %91 : vector<16x32xf32>
    %c0_45 = arith.constant 0 : index
    %c0_46 = arith.constant 0 : index
    %c0_47 = arith.constant 0 : index
    %93 = vector.load %arg13[%c0_45, %c0_46, %c0_47] : memref<1x1x32xf32, #tpu.memory_space<vmem>>, vector<1x1x32xf32>
    %94 = vector.shape_cast %93 : vector<1x1x32xf32> to vector<1x32xf32>
    %c0_48 = arith.constant 0 : index
    %c0_49 = arith.constant 0 : index
    %c0_50 = arith.constant 0 : index
    %95 = vector.load %arg14[%c0_48, %c0_49, %c0_50] : memref<1x1x32xf32, #tpu.memory_space<vmem>>, vector<1x1x32xf32>
    %96 = vector.shape_cast %95 : vector<1x1x32xf32> to vector<1x32xf32>
    %cst_51 = arith.constant dense<0.000000e+00> : vector<16xf32>
    %97 = vector.multi_reduction <add>, %92, %cst_51 [1] : vector<16x32xf32> to vector<16xf32>
    %98 = vector.shape_cast %97 : vector<16xf32> to vector<16x1xf32>
    %cst_52 = arith.constant 3.200000e+01 : f32
    %99 = vector.broadcast %cst_52 : f32 to vector<16x1xf32>
    %100 = arith.divf %98, %99 : vector<16x1xf32>
    %101 = vector.broadcast %100 : vector<16x1xf32> to vector<16x32xf32>
    %102 = arith.subf %92, %101 : vector<16x32xf32>
    %103 = vector.broadcast %100 : vector<16x1xf32> to vector<16x32xf32>
    %104 = arith.subf %92, %103 : vector<16x32xf32>
    %105 = arith.mulf %102, %104 : vector<16x32xf32>
    %cst_53 = arith.constant dense<0.000000e+00> : vector<16xf32>
    %106 = vector.multi_reduction <add>, %105, %cst_53 [1] : vector<16x32xf32> to vector<16xf32>
    %107 = vector.shape_cast %106 : vector<16xf32> to vector<16x1xf32>
    %cst_54 = arith.constant 3.200000e+01 : f32
    %108 = vector.broadcast %cst_54 : f32 to vector<16x1xf32>
    %109 = arith.divf %107, %108 : vector<16x1xf32>
    %110 = vector.broadcast %100 : vector<16x1xf32> to vector<16x32xf32>
    %111 = arith.subf %92, %110 : vector<16x32xf32>
    %cst_55 = arith.constant 9.99999974E-6 : f32
    %112 = vector.broadcast %cst_55 : f32 to vector<16x1xf32>
    %113 = arith.addf %109, %112 : vector<16x1xf32>
    %114 = math.rsqrt %113 : vector<16x1xf32>
    %115 = vector.broadcast %114 : vector<16x1xf32> to vector<16x32xf32>
    %116 = arith.mulf %111, %115 : vector<16x32xf32>
    %117 = vector.broadcast %94 : vector<1x32xf32> to vector<16x32xf32>
    %118 = arith.mulf %116, %117 : vector<16x32xf32>
    %119 = vector.broadcast %96 : vector<1x32xf32> to vector<16x32xf32>
    %120 = arith.addf %118, %119 : vector<16x32xf32>
    %c0_56 = arith.constant 0 : index
    %c0_57 = arith.constant 0 : index
    %121 = vector.load %arg18[%c0_56, %c0_57] : memref<16x32xf32, #tpu.memory_space<vmem>>, vector<16x32xf32>
    tpu.vector_store %arg18[%c0_56, %c0_57], %120 {strides = array<i32>} : memref<16x32xf32, #tpu.memory_space<vmem>>, vector<16x32xf32>,
    %c1_i32 = arith.constant 1 : i32
    %122 = arith.cmpi eq, %arg1, %c1_i32 : i32
    %123 = arith.extui %122 : i1 to i32
    %c0_i32_58 = arith.constant 0 : i32
    %124 = arith.cmpi ne, %123, %c0_i32_58 : i32
    scf.if %124 {
      %125 = vector.shape_cast %120 : vector<16x32xf32> to vector<2x8x32xf32>
      %cst_59 = arith.constant dense<0.000000e+00> : vector<2x32xf32>
      %126 = vector.multi_reduction <add>, %125, %cst_59 [1] : vector<2x8x32xf32> to vector<2x32xf32>
      %cst_60 = arith.constant 8.000000e+00 : f32
      %127 = vector.broadcast %cst_60 : f32 to vector<2x32xf32>
      %128 = arith.divf %126, %127 : vector<2x32xf32>
      %129 = arith.truncf %128 : vector<2x32xf32> to vector<2x32xbf16>
      %c0_61 = arith.constant 0 : index
      %c0_62 = arith.constant 0 : index
      %130 = vector.load %arg15[%c0_61, %c0_62] : memref<32x5xbf16, #tpu.memory_space<vmem>>, vector<32x5xbf16>
      %cst_63 = arith.constant dense<0.000000e+00> : vector<2x5xf32>
      %131 = tpu.matmul %129, %130, %cst_63 {dimension_numbers = #tpu.dot_dimension_numbers<[1], [0], [0], [1], [0, 0, 1, 1], [], []>} : vector<2x32xbf16>, vector<32x5xbf16>, vector<2x5xf32> -> vector<2x5xf32>
      %c0_64 = arith.constant 0 : index
      %c0_65 = arith.constant 0 : index
      %132 = vector.load %arg16[%c0_64, %c0_65] : memref<1x5xf32, #tpu.memory_space<vmem>>, vector<1x5xf32>
      %133 = vector.broadcast %132 : vector<1x5xf32> to vector<2x5xf32>
      %134 = arith.addf %131, %133 : vector<2x5xf32>
      %135 = vector.shape_cast %134 : vector<2x5xf32> to vector<2x1x5xf32>
      %c0_66 = arith.constant 0 : index
      %c0_67 = arith.constant 0 : index
      %c0_68 = arith.constant 0 : index
      %136 = vector.load %arg17[%c0_66, %c0_67, %c0_68] : memref<2x1x5xf32, #tpu.memory_space<vmem>>, vector<2x1x5xf32>
      tpu.vector_store %arg17[%c0_66, %c0_67, %c0_68], %135 {strides = array<i32>} : memref<2x1x5xf32, #tpu.memory_space<vmem>>, vector<2x1x5xf32>,
    } else {
    }
    return
  }
  func.func @transform_0(%arg0: i32, %arg1: i32) -> (i32, i32, i32) {
    %c0_i32 = arith.constant 0 : i32
    %c0_i32_0 = arith.constant 0 : i32
    %c0_i32_1 = arith.constant 0 : i32
    return %arg0, %c0_i32, %c0_i32_0 : i32, i32, i32
  }
  func.func @transform_1(%arg0: i32, %arg1: i32) -> (i32, i32, i32) {
    %c0_i32 = arith.constant 0 : i32
    %c0_i32_0 = arith.constant 0 : i32
    %c0_i32_1 = arith.constant 0 : i32
    return %arg1, %c0_i32, %c0_i32_0 : i32, i32, i32
  }
  func.func @transform_2(%arg0: i32, %arg1: i32) -> (i32, i32, i32) {
    %c0_i32 = arith.constant 0 : i32
    %c0_i32_0 = arith.constant 0 : i32
    %c0_i32_1 = arith.constant 0 : i32
    return %arg1, %c0_i32, %c0_i32_0 : i32, i32, i32
  }
  func.func @transform_3(%arg0: i32, %arg1: i32) -> (i32, i32, i32) {
    %c0_i32 = arith.constant 0 : i32
    %c0_i32_0 = arith.constant 0 : i32
    %c0_i32_1 = arith.constant 0 : i32
    return %arg1, %c0_i32, %c0_i32_0 : i32, i32, i32
  }
  func.func @transform_4(%arg0: i32, %arg1: i32) -> (i32, i32, i32) {
    %c0_i32 = arith.constant 0 : i32
    %c0_i32_0 = arith.constant 0 : i32
    %c0_i32_1 = arith.constant 0 : i32
    return %arg1, %c0_i32, %c0_i32_0 : i32, i32, i32
  }
  func.func @transform_5(%arg0: i32, %arg1: i32) -> (i32, i32, i32) {
    %c0_i32 = arith.constant 0 : i32
    %c0_i32_0 = arith.constant 0 : i32
    %c0_i32_1 = arith.constant 0 : i32
    return %arg1, %c0_i32, %c0_i32_0 : i32, i32, i32
  }
  func.func @transform_6(%arg0: i32, %arg1: i32) -> (i32, i32, i32) {
    %c0_i32 = arith.constant 0 : i32
    %c0_i32_0 = arith.constant 0 : i32
    %c0_i32_1 = arith.constant 0 : i32
    return %arg1, %c0_i32, %c0_i32_0 : i32, i32, i32
  }
  func.func @transform_7(%arg0: i32, %arg1: i32) -> (i32, i32, i32) {
    %c0_i32 = arith.constant 0 : i32
    %c0_i32_0 = arith.constant 0 : i32
    %c0_i32_1 = arith.constant 0 : i32
    return %arg1, %c0_i32, %c0_i32_0 : i32, i32, i32
  }
  func.func @transform_8(%arg0: i32, %arg1: i32) -> (i32, i32, i32) {
    %c0_i32 = arith.constant 0 : i32
    %c0_i32_0 = arith.constant 0 : i32
    %c0_i32_1 = arith.constant 0 : i32
    return %arg1, %c0_i32, %c0_i32_0 : i32, i32, i32
  }
  func.func @transform_9(%arg0: i32, %arg1: i32) -> (i32, i32, i32) {
    %c0_i32 = arith.constant 0 : i32
    %c0_i32_0 = arith.constant 0 : i32
    %c0_i32_1 = arith.constant 0 : i32
    return %arg1, %c0_i32, %c0_i32_0 : i32, i32, i32
  }
  func.func @transform_10(%arg0: i32, %arg1: i32) -> (i32, i32, i32) {
    %c0_i32 = arith.constant 0 : i32
    %c0_i32_0 = arith.constant 0 : i32
    %c0_i32_1 = arith.constant 0 : i32
    return %arg1, %c0_i32, %c0_i32_0 : i32, i32, i32
  }
  func.func @transform_11(%arg0: i32, %arg1: i32) -> (i32, i32, i32) {
    %c0_i32 = arith.constant 0 : i32
    %c0_i32_0 = arith.constant 0 : i32
    %c0_i32_1 = arith.constant 0 : i32
    return %arg1, %c0_i32, %c0_i32_0 : i32, i32, i32
  }
  func.func @transform_12(%arg0: i32, %arg1: i32) -> (i32, i32, i32) {
    %c0_i32 = arith.constant 0 : i32
    %c0_i32_0 = arith.constant 0 : i32
    %c0_i32_1 = arith.constant 0 : i32
    return %arg1, %c0_i32, %c0_i32_0 : i32, i32, i32
  }
  func.func @transform_13(%arg0: i32, %arg1: i32) -> (i32, i32) {
    %c0_i32 = arith.constant 0 : i32
    %c0_i32_0 = arith.constant 0 : i32
    %c0_i32_1 = arith.constant 0 : i32
    return %c0_i32, %c0_i32_0 : i32, i32
  }
  func.func @transform_14(%arg0: i32, %arg1: i32) -> (i32, i32) {
    %c0_i32 = arith.constant 0 : i32
    %c0_i32_0 = arith.constant 0 : i32
    %c0_i32_1 = arith.constant 0 : i32
    return %c0_i32, %c0_i32_0 : i32, i32
  }
  func.func @transform_15(%arg0: i32, %arg1: i32) -> (i32, i32, i32) {
    %c0_i32 = arith.constant 0 : i32
    %c0_i32_0 = arith.constant 0 : i32
    %c0_i32_1 = arith.constant 0 : i32
    return %arg0, %c0_i32, %c0_i32_0 : i32, i32, i32
  }
}

</mosaic_0001>

<llo_original>
// kernel: tpu_custom_call.1
$region0: #{tpu_custom_call.1}
  #allocation0 [shape = 'u32[]', space=smem, size = 0x4, offset = 0x4, fixed_abs, tag = 'smem constant byte address 0x4 - core index']
  #allocation1 [shape = 'u32[144,128]{1,0:T(1,128)}', space=vmem, size = 0x12000, scoped, tag = 'internal scratch']
  #allocation2 [shape = 'f32[16,32]{1,0:T(8,128)}', space=vmem, size = 0x2000, scoped, tag = 'scratch operand']
  %s0 = inlined_call_operand.vmem [shape: f32[2,8,32], index: 0, kind: input, shape index: {}]
  %s1 = inlined_call_operand.vmem [shape: bf16[2,32,96], index: 1, kind: input, shape index: {}]
  %s2 = inlined_call_operand.vmem [shape: f32[2,1,96], index: 2, kind: input, shape index: {}]
  %s3 = inlined_call_operand.vmem [shape: bf16[2,32,32], index: 3, kind: input, shape index: {}]
  %s4 = inlined_call_operand.vmem [shape: f32[2,1,32], index: 4, kind: input, shape index: {}]
  %s5 = inlined_call_operand.hbm [shape: f32[2,1,32], index: 5, kind: input, shape index: {}]
  %s6 = inlined_call_operand.hbm [shape: f32[2,1,32], index: 6, kind: input, shape index: {}]
  %s7 = inlined_call_operand.vmem [shape: bf16[2,32,64], index: 7, kind: input, shape index: {}]
  %s8 = inlined_call_operand.hbm [shape: f32[2,1,64], index: 8, kind: input, shape index: {}]
  %s9 = inlined_call_operand.vmem [shape: bf16[2,64,32], index: 9, kind: input, shape index: {}]
  %s10 = inlined_call_operand.hbm [shape: f32[2,1,32], index: 10, kind: input, shape index: {}]
  %s11 = inlined_call_operand.vmem [shape: f32[2,1,32], index: 11, kind: input, shape index: {}]
  %s12 = inlined_call_operand.vmem [shape: f32[2,1,32], index: 12, kind: input, shape index: {}]
  %s13 = inlined_call_operand.vmem [shape: bf16[32,5], index: 13, kind: input, shape index: {}]
  %s14 = inlined_call_operand.vmem [shape: f32[1,5], index: 14, kind: input, shape index: {}]
  %s15 = inlined_call_operand.hbm [shape: f32[2,1,5], index: 15, kind: output, shape index: {}]
  %s16 = sld [smem:[#allocation0]]
  $region117: #{tpu_custom_call.1} parent=0
    _
  %s18 = ssub.s32 1, %s16
  %s19 = scalar_select 0, %s18, %s16
  $region1: #{tpu_custom_call.1} parent=0
    #allocation3 [shape = 'u8[1024]{0}', space=vmem, size = 0x400, scoped, tag = 'input window, operand 5']
    #allocation4 [shape = 's32[2]{0}', space=sflag, size = 0x8, scoped, tag = 'scoped memory for tpu_custom_call.1']
    #allocation5 [shape = 's32[2]{0}', space=sflag, size = 0x8, scoped, tag = 'scoped memory for tpu_custom_call.1']
    #allocation6 [shape = 'u8[1024]{0}', space=vmem, size = 0x400, scoped, tag = 'input window, operand 6']
    #allocation7 [shape = 's32[2]{0}', space=sflag, size = 0x8, scoped, tag = 'scoped memory for tpu_custom_call.1']
    #allocation8 [shape = 'u8[1024]{0}', space=vmem, size = 0x400, scoped, tag = 'input window, operand 8']
    #allocation9 [shape = 'u8[1024]{0}', space=vmem, size = 0x400, scoped, tag = 'input window, operand 10']
    #allocation10 [shape = 's32[2]{0}', space=sflag, size = 0x8, scoped, tag = 'scoped memory for tpu_custom_call.1']
    #allocation11 [shape = 'u8[1024]{0}', space=vmem, size = 0x400, scoped, tag = 'output window, operand 0, single buffered']
    %20 = vsyncpa [#allocation4], 0
    %s21 = scalar_lea.sflag [#allocation4], 1
    %22 = vsyncpa %s21, 0
    %23 = vsyncpa [#allocation7], 0
    %s24 = scalar_lea.sflag [#allocation7], 1
    %25 = vsyncpa %s24, 0
    %26 = vsyncpa [#allocation10], 0
    %s27 = scalar_lea.sflag [#allocation10], 1
    %28 = vsyncpa %s27, 0
    %29 = vsyncpa [#allocation5], 0
    loop: start=0, step=1, limit=4
    $region2: #{tpu_custom_call.1} parent=1 // loop_pre_header
      _
    $region3: #{tpu_custom_call.1} parent=1 // loop_header
      %s31 = sphi 0, %s35
      %p32 = scmp.ge.s32.totalorder %s31, 4
      %s38 = sphi 0, %s50
      %s39 = sphi 0, %s46
      %s40 = sphi 0, %s38
      %s41 = sphi 0, %s39
      %s42 = sphi 0, %s40
      %s43 = sphi 0, %s41
      %s53 = sphi 0, %s55
      %s56 = sphi 0, %s53
      %s57 = sphi 0, %s56
      %s73 = sphi 0, %s57
      %s79 = sphi 0, %s81
      %s82 = sphi 0, %s79
      %s83 = sphi 0, %s82
      %s99 = sphi 0, %s83
      %s105 = sphi 0, %s107
      %s108 = sphi 0, %s105
      %s109 = sphi 0, %s108
      %s125 = sphi 0, %s109
      %s131 = sphi 0, %s133
      %s134 = sphi 0, %s131
      %s135 = sphi 0, %s134
      %s151 = sphi 0, %s135
      %s157 = sphi 0, %s159
      %s160 = sphi 0, %s157
      %s161 = sphi 0, %s160
      %s177 = sphi 0, %s161
      %s183 = sphi 0, %s185
      %s186 = sphi 0, %s183
      %s187 = sphi 0, %s186
      %s203 = sphi 0, %s187
      %s209 = sphi 0, %s211
      %s212 = sphi 0, %s209
      %s213 = sphi 0, %s212
      %s229 = sphi 0, %s213
      %s235 = sphi 0, %s237
      %s238 = sphi 0, %s235
      %s239 = sphi 0, %s238
      %s255 = sphi 0, %s239
      %s261 = sphi 0, %s263
      %s264 = sphi 0, %s261
      %s265 = sphi 0, %s264
      %s281 = sphi 0, %s265
      %s287 = sphi 0, %s289
      %s290 = sphi 0, %s287
      %s291 = sphi 0, %s290
      %s307 = sphi 0, %s291
      %s313 = sphi 0, %s315
      %s316 = sphi 0, %s313
      %s317 = sphi 0, %s316
      %s333 = sphi 0, %s317
      %s339 = sphi 0, %s341
      %s342 = sphi 0, %s339
      %s343 = sphi 0, %s342
      %s359 = sphi 0, %s343
      %s365 = sphi 0, %s367
      %s368 = sphi 0, %s365
      %s369 = sphi 0, %s368
      %s385 = sphi 0, %s369
      %s389 = sphi 0, %s389
      %s391 = sphi 0, %s389
      %s392 = sphi 0, %s391
      %s406 = sphi 0, %s392
      %s410 = sphi 0, %s410
      %s412 = sphi 0, %s410
      %s413 = sphi 0, %s412
      %s427 = sphi 0, %s413
      %s433 = sphi 0, %s435
      %s436 = sphi 0, %s433
      %s437 = sphi 0, %s436
      %s453 = sphi 0, %s437
    $region4: #{tpu_custom_call.1} parent=1 // loop_header_branch
      %34 = sbr.rel (%p32) target = $region8
    $region5: #{tpu_custom_call.1} parent=1 // loop_body
      %s36 = ssub.s32 %s31, 1
      %s37 = ssub.s32 %s31, 2
      %s44 = sadd.s32 1, %s39
      %p45 = scmp.ge.s32.totalorder %s44, 2
      %s46 = scalar_select %p45, 0, %s44
      %s47 = sadd.s32 1, %s38
      %s48 = scalar_select %p45, %s47, %s38
      %p49 = scmp.ge.s32.totalorder %s48, 1
      %s50 = scalar_select %p49, 0, %s48
      %s51 = ssub.s32 %s38, %s50
      %p52 = scmp.eq.s32.totalorder %s51, 0
      %s54 = sadd.s32 %s53, 1
      %s55 = scalar_select %p52, %s53, %s54
      %p58 = pneg %p52
      %p59 = scmp.eq.s32.totalorder %s31, 1
      %p60 = por %p58, %p59
      %p61 = scmp.ne.s32.totalorder %s53, %s56
      %p62 = scmp.eq.s32.totalorder %s31, 0
      %p63 = por %p61, %p62
      %p64 = scmp.ne.s32.totalorder %s53, %s56
      %p65 = scmp.eq.s32.totalorder %s36, 1
      %p66 = por %p64, %p65
      %p67 = scmp.ne.s32.totalorder %s56, %s57
      %p68 = scmp.eq.s32.totalorder %s36, 0
      %p69 = por %p67, %p68
      %p70 = scmp.ne.s32.totalorder %s56, %s57
      %p71 = scmp.eq.s32.totalorder %s37, 1
      %p72 = por %p70, %p71
      %p74 = scmp.ne.s32.totalorder %s57, %s73
      %p75 = scmp.eq.s32.totalorder %s37, 0
      %p76 = por %p74, %p75
      %s77 = ssub.s32 %s39, %s46
      %p78 = scmp.eq.s32.totalorder %s77, 0
      %s80 = sadd.s32 %s79, 1
      %s81 = scalar_select %p78, %s79, %s80
      %p84 = pneg %p78
      %p85 = scmp.eq.s32.totalorder %s31, 1
      %p86 = por %p84, %p85
      %p87 = scmp.ne.s32.totalorder %s79, %s82
      %p88 = scmp.eq.s32.totalorder %s31, 0
      %p89 = por %p87, %p88
      %p90 = scmp.ne.s32.totalorder %s79, %s82
      %p91 = scmp.eq.s32.totalorder %s36, 1
      %p92 = por %p90, %p91
      %p93 = scmp.ne.s32.totalorder %s82, %s83
      %p94 = scmp.eq.s32.totalorder %s36, 0
      %p95 = por %p93, %p94
      %p96 = scmp.ne.s32.totalorder %s82, %s83
      %p97 = scmp.eq.s32.totalorder %s37, 1
      %p98 = por %p96, %p97
      %p100 = scmp.ne.s32.totalorder %s83, %s99
      %p101 = scmp.eq.s32.totalorder %s37, 0
      %p102 = por %p100, %p101
      %s103 = ssub.s32 %s39, %s46
      %p104 = scmp.eq.s32.totalorder %s103, 0
      %s106 = sadd.s32 %s105, 1
      %s107 = scalar_select %p104, %s105, %s106
      %p110 = pneg %p104
      %p111 = scmp.eq.s32.totalorder %s31, 1
      %p112 = por %p110, %p111
      %p113 = scmp.ne.s32.totalorder %s105, %s108
      %p114 = scmp.eq.s32.totalorder %s31, 0
      %p115 = por %p113, %p114
      %p116 = scmp.ne.s32.totalorder %s105, %s108
      %p117 = scmp.eq.s32.totalorder %s36, 1
      %p118 = por %p116, %p117
      %p119 = scmp.ne.s32.totalorder %s108, %s109
      %p120 = scmp.eq.s32.totalorder %s36, 0
      %p121 = por %p119, %p120
      %p122 = scmp.ne.s32.totalorder %s108, %s109
      %p123 = scmp.eq.s32.totalorder %s37, 1
      %p124 = por %p122, %p123
      %p126 = scmp.ne.s32.totalorder %s109, %s125
      %p127 = scmp.eq.s32.totalorder %s37, 0
      %p128 = por %p126, %p127
      %s129 = ssub.s32 %s39, %s46
      %p130 = scmp.eq.s32.totalorder %s129, 0
      %s132 = sadd.s32 %s131, 1
      %s133 = scalar_select %p130, %s131, %s132
      %p136 = pneg %p130
      %p137 = scmp.eq.s32.totalorder %s31, 1
      %p138 = por %p136, %p137
      %p139 = scmp.ne.s32.totalorder %s131, %s134
      %p140 = scmp.eq.s32.totalorder %s31, 0
      %p141 = por %p139, %p140
      %p142 = scmp.ne.s32.totalorder %s131, %s134
      %p143 = scmp.eq.s32.totalorder %s36, 1
      %p144 = por %p142, %p143
      %p145 = scmp.ne.s32.totalorder %s134, %s135
      %p146 = scmp.eq.s32.totalorder %s36, 0
      %p147 = por %p145, %p146
      %p148 = scmp.ne.s32.totalorder %s134, %s135
      %p149 = scmp.eq.s32.totalorder %s37, 1
      %p150 = por %p148, %p149
      %p152 = scmp.ne.s32.totalorder %s135, %s151
      %p153 = scmp.eq.s32.totalorder %s37, 0
      %p154 = por %p152, %p153
      %s155 = ssub.s32 %s39, %s46
      %p156 = scmp.eq.s32.totalorder %s155, 0
      %s158 = sadd.s32 %s157, 1
      %s159 = scalar_select %p156, %s157, %s158
      %p162 = pneg %p156
      %p163 = scmp.eq.s32.totalorder %s31, 1
      %p164 = por %p162, %p163
      %p165 = scmp.ne.s32.totalorder %s157, %s160
      %p166 = scmp.eq.s32.totalorder %s31, 0
      %p167 = por %p165, %p166
      %p168 = scmp.ne.s32.totalorder %s157, %s160
      %p169 = scmp.eq.s32.totalorder %s36, 1
      %p170 = por %p168, %p169
      %p171 = scmp.ne.s32.totalorder %s160, %s161
      %p172 = scmp.eq.s32.totalorder %s36, 0
      %p173 = por %p171, %p172
      %p174 = scmp.ne.s32.totalorder %s160, %s161
      %p175 = scmp.eq.s32.totalorder %s37, 1
      %p176 = por %p174, %p175
      %p178 = scmp.ne.s32.totalorder %s161, %s177
      %p179 = scmp.eq.s32.totalorder %s37, 0
      %p180 = por %p178, %p179
      %s181 = ssub.s32 %s39, %s46
      %p182 = scmp.eq.s32.totalorder %s181, 0
      %s184 = sadd.s32 %s183, 1
      %s185 = scalar_select %p182, %s183, %s184
      %p188 = pneg %p182
      %p189 = scmp.eq.s32.totalorder %s31, 1
      %p190 = por %p188, %p189
      %p191 = scmp.ne.s32.totalorder %s183, %s186
      %p192 = scmp.eq.s32.totalorder %s31, 0
      %p193 = por %p191, %p192
      %p194 = scmp.ne.s32.totalorder %s183, %s186
      %p195 = scmp.eq.s32.totalorder %s36, 1
      %p196 = por %p194, %p195
      %p197 = scmp.ne.s32.totalorder %s186, %s187
      %p198 = scmp.eq.s32.totalorder %s36, 0
      %p199 = por %p197, %p198
      %p200 = scmp.ne.s32.totalorder %s186, %s187
      %p201 = scmp.eq.s32.totalorder %s37, 1
      %p202 = por %p200, %p201
      %p204 = scmp.ne.s32.totalorder %s187, %s203
      %p205 = scmp.eq.s32.totalorder %s37, 0
      %p206 = por %p204, %p205
      %s207 = ssub.s32 %s39, %s46
      %p208 = scmp.eq.s32.totalorder %s207, 0
      %s210 = sadd.s32 %s209, 1
      %s211 = scalar_select %p208, %s209, %s210
      %p214 = pneg %p208
      %p215 = scmp.eq.s32.totalorder %s31, 1
      %p216 = por %p214, %p215
      %p217 = scmp.ne.s32.totalorder %s209, %s212
      %p218 = scmp.eq.s32.totalorder %s31, 0
      %p219 = por %p217, %p218
      %p220 = scmp.ne.s32.totalorder %s209, %s212
      %p221 = scmp.eq.s32.totalorder %s36, 1
      %p222 = por %p220, %p221
      %p223 = scmp.ne.s32.totalorder %s212, %s213
      %p224 = scmp.eq.s32.totalorder %s36, 0
      %p225 = por %p223, %p224
      %p226 = scmp.ne.s32.totalorder %s212, %s213
      %p227 = scmp.eq.s32.totalorder %s37, 1
      %p228 = por %p226, %p227
      %p230 = scmp.ne.s32.totalorder %s213, %s229
      %p231 = scmp.eq.s32.totalorder %s37, 0
      %p232 = por %p230, %p231
      %s233 = ssub.s32 %s39, %s46
      %p234 = scmp.eq.s32.totalorder %s233, 0
      %s236 = sadd.s32 %s235, 1
      %s237 = scalar_select %p234, %s235, %s236
      %p240 = pneg %p234
      %p241 = scmp.eq.s32.totalorder %s31, 1
      %p242 = por %p240, %p241
      %p243 = scmp.ne.s32.totalorder %s235, %s238
      %p244 = scmp.eq.s32.totalorder %s31, 0
      %p245 = por %p243, %p244
      %p246 = scmp.ne.s32.totalorder %s235, %s238
      %p247 = scmp.eq.s32.totalorder %s36, 1
      %p248 = por %p246, %p247
      %p249 = scmp.ne.s32.totalorder %s238, %s239
      %p250 = scmp.eq.s32.totalorder %s36, 0
      %p251 = por %p249, %p250
      %p252 = scmp.ne.s32.totalorder %s238, %s239
      %p253 = scmp.eq.s32.totalorder %s37, 1
      %p254 = por %p252, %p253
      %p256 = scmp.ne.s32.totalorder %s239, %s255
      %p257 = scmp.eq.s32.totalorder %s37, 0
      %p258 = por %p256, %p257
      %s259 = ssub.s32 %s39, %s46
      %p260 = scmp.eq.s32.totalorder %s259, 0
      %s262 = sadd.s32 %s261, 1
      %s263 = scalar_select %p260, %s261, %s262
      %p266 = pneg %p260
      %p267 = scmp.eq.s32.totalorder %s31, 1
      %p268 = por %p266, %p267
      %p269 = scmp.ne.s32.totalorder %s261, %s264
      %p270 = scmp.eq.s32.totalorder %s31, 0
      %p271 = por %p269, %p270
      %p272 = scmp.ne.s32.totalorder %s261, %s264
      %p273 = scmp.eq.s32.totalorder %s36, 1
      %p274 = por %p272, %p273
      %p275 = scmp.ne.s32.totalorder %s264, %s265
      %p276 = scmp.eq.s32.totalorder %s36, 0
      %p277 = por %p275, %p276
      %p278 = scmp.ne.s32.totalorder %s264, %s265
      %p279 = scmp.eq.s32.totalorder %s37, 1
      %p280 = por %p278, %p279
      %p282 = scmp.ne.s32.totalorder %s265, %s281
      %p283 = scmp.eq.s32.totalorder %s37, 0
      %p284 = por %p282, %p283
      %s285 = ssub.s32 %s39, %s46
      %p286 = scmp.eq.s32.totalorder %s285, 0
      %s288 = sadd.s32 %s287, 1
      %s289 = scalar_select %p286, %s287, %s288
      %p292 = pneg %p286
      %p293 = scmp.eq.s32.totalorder %s31, 1
      %p294 = por %p292, %p293
      %p295 = scmp.ne.s32.totalorder %s287, %s290
      %p296 = scmp.eq.s32.totalorder %s31, 0
      %p297 = por %p295, %p296
      %p298 = scmp.ne.s32.totalorder %s287, %s290
      %p299 = scmp.eq.s32.totalorder %s36, 1
      %p300 = por %p298, %p299
      %p301 = scmp.ne.s32.totalorder %s290, %s291
      %p302 = scmp.eq.s32.totalorder %s36, 0
      %p303 = por %p301, %p302
      %p304 = scmp.ne.s32.totalorder %s290, %s291
      %p305 = scmp.eq.s32.totalorder %s37, 1
      %p306 = por %p304, %p305
      %p308 = scmp.ne.s32.totalorder %s291, %s307
      %p309 = scmp.eq.s32.totalorder %s37, 0
      %p310 = por %p308, %p309
      %s311 = ssub.s32 %s39, %s46
      %p312 = scmp.eq.s32.totalorder %s311, 0
      %s314 = sadd.s32 %s313, 1
      %s315 = scalar_select %p312, %s313, %s314
      %p318 = pneg %p312
      %p319 = scmp.eq.s32.totalorder %s31, 1
      %p320 = por %p318, %p319
      %p321 = scmp.ne.s32.totalorder %s313, %s316
      %p322 = scmp.eq.s32.totalorder %s31, 0
      %p323 = por %p321, %p322
      %p324 = scmp.ne.s32.totalorder %s313, %s316
      %p325 = scmp.eq.s32.totalorder %s36, 1
      %p326 = por %p324, %p325
      %p327 = scmp.ne.s32.totalorder %s316, %s317
      %p328 = scmp.eq.s32.totalorder %s36, 0
      %p329 = por %p327, %p328
      %p330 = scmp.ne.s32.totalorder %s316, %s317
      %p331 = scmp.eq.s32.totalorder %s37, 1
      %p332 = por %p330, %p331
      %p334 = scmp.ne.s32.totalorder %s317, %s333
      %p335 = scmp.eq.s32.totalorder %s37, 0
      %p336 = por %p334, %p335
      %s337 = ssub.s32 %s39, %s46
      %p338 = scmp.eq.s32.totalorder %s337, 0
      %s340 = sadd.s32 %s339, 1
      %s341 = scalar_select %p338, %s339, %s340
      %p344 = pneg %p338
      %p345 = scmp.eq.s32.totalorder %s31, 1
      %p346 = por %p344, %p345
      %p347 = scmp.ne.s32.totalorder %s339, %s342
      %p348 = scmp.eq.s32.totalorder %s31, 0
      %p349 = por %p347, %p348
      %p350 = scmp.ne.s32.totalorder %s339, %s342
      %p351 = scmp.eq.s32.totalorder %s36, 1
      %p352 = por %p350, %p351
      %p353 = scmp.ne.s32.totalorder %s342, %s343
      %p354 = scmp.eq.s32.totalorder %s36, 0
      %p355 = por %p353, %p354
      %p356 = scmp.ne.s32.totalorder %s342, %s343
      %p357 = scmp.eq.s32.totalorder %s37, 1
      %p358 = por %p356, %p357
      %p360 = scmp.ne.s32.totalorder %s343, %s359
      %p361 = scmp.eq.s32.totalorder %s37, 0
      %p362 = por %p360, %p361
      %s363 = ssub.s32 %s39, %s46
      %p364 = scmp.eq.s32.totalorder %s363, 0
      %s366 = sadd.s32 %s365, 1
      %s367 = scalar_select %p364, %s365, %s366
      %p370 = pneg %p364
      %p371 = scmp.eq.s32.totalorder %s31, 1
      %p372 = por %p370, %p371
      %p373 = scmp.ne.s32.totalorder %s365, %s368
      %p374 = scmp.eq.s32.totalorder %s31, 0
      %p375 = por %p373, %p374
      %p376 = scmp.ne.s32.totalorder %s365, %s368
      %p377 = scmp.eq.s32.totalorder %s36, 1
      %p378 = por %p376, %p377
      %p379 = scmp.ne.s32.totalorder %s368, %s369
      %p380 = scmp.eq.s32.totalorder %s36, 0
      %p381 = por %p379, %p380
      %p382 = scmp.ne.s32.totalorder %s368, %s369
      %p383 = scmp.eq.s32.totalorder %s37, 1
      %p384 = por %p382, %p383
      %p386 = scmp.ne.s32.totalorder %s369, %s385
      %p387 = scmp.eq.s32.totalorder %s37, 0
      %p388 = por %p386, %p387
      %s390 = sadd.s32 %s389, 1
      %p393 = scmp.eq.s32.totalorder %s31, 1
      %p394 = scmp.ne.s32.totalorder %s389, %s391
      %p395 = scmp.eq.s32.totalorder %s31, 0
      %p396 = por %p394, %p395
      %p397 = scmp.ne.s32.totalorder %s389, %s391
      %p398 = scmp.eq.s32.totalorder %s36, 1
      %p399 = por %p397, %p398
      %p400 = scmp.ne.s32.totalorder %s391, %s392
      %p401 = scmp.eq.s32.totalorder %s36, 0
      %p402 = por %p400, %p401
      %p403 = scmp.ne.s32.totalorder %s391, %s392
      %p404 = scmp.eq.s32.totalorder %s37, 1
      %p405 = por %p403, %p404
      %p407 = scmp.ne.s32.totalorder %s392, %s406
      %p408 = scmp.eq.s32.totalorder %s37, 0
      %p409 = por %p407, %p408
      %s411 = sadd.s32 %s410, 1
      %p414 = scmp.eq.s32.totalorder %s31, 1
      %p415 = scmp.ne.s32.totalorder %s410, %s412
      %p416 = scmp.eq.s32.totalorder %s31, 0
      %p417 = por %p415, %p416
      %p418 = scmp.ne.s32.totalorder %s410, %s412
      %p419 = scmp.eq.s32.totalorder %s36, 1
      %p420 = por %p418, %p419
      %p421 = scmp.ne.s32.totalorder %s412, %s413
      %p422 = scmp.eq.s32.totalorder %s36, 0
      %p423 = por %p421, %p422
      %p424 = scmp.ne.s32.totalorder %s412, %s413
      %p425 = scmp.eq.s32.totalorder %s37, 1
      %p426 = por %p424, %p425
      %p428 = scmp.ne.s32.totalorder %s413, %s427
      %p429 = scmp.eq.s32.totalorder %s37, 0
      %p430 = por %p428, %p429
      %s431 = ssub.s32 %s38, %s50
      %p432 = scmp.eq.s32.totalorder %s431, 0
      %s434 = sadd.s32 %s433, 1
      %s435 = scalar_select %p432, %s433, %s434
      %p438 = pneg %p432
      %p439 = scmp.eq.s32.totalorder %s31, 1
      %p440 = por %p438, %p439
      %p441 = scmp.ne.s32.totalorder %s433, %s436
      %p442 = scmp.eq.s32.totalorder %s31, 0
      %p443 = por %p441, %p442
      %p444 = scmp.ne.s32.totalorder %s433, %s436
      %p445 = scmp.eq.s32.totalorder %s36, 1
      %p446 = por %p444, %p445
      %p447 = scmp.ne.s32.totalorder %s436, %s437
      %p448 = scmp.eq.s32.totalorder %s36, 0
      %p449 = por %p447, %p448
      %p450 = scmp.ne.s32.totalorder %s436, %s437
      %p451 = scmp.eq.s32.totalorder %s37, 1
      %p452 = por %p450, %p451
      %p454 = scmp.ne.s32.totalorder %s437, %s453
      %p455 = scmp.eq.s32.totalorder %s37, 0
      %p456 = por %p454, %p455
      %p457 = scmp.le.s32.totalorder 1, %s31
      %p458 = scmp.lt.s32.totalorder %s31, 3
      %p459 = pnand %p457, %p458
      %p460 = pneg %p459
      // Predicated region
      $region9: #{tpu_custom_call.1} parent=5 // pred_check
        _
      $region10: #{tpu_custom_call.1} parent=5 // pred_check_branch
        %462 = sbr.rel (%p459) target = $region12
      $region11: #{tpu_custom_call.1} parent=5 // pred_region
        %s463 = ssub.s32 %s31, 1
        // Predicated region
        $region13: #{tpu_custom_call.1} parent=11 // pred_check
          %p464 = pneg %p69
        $region14: #{tpu_custom_call.1} parent=11 // pred_check_branch
          %466 = sbr.rel (%p464) target = $region16
        $region15: #{tpu_custom_call.1} parent=11 // pred_region
          %s467 = smul.u32 2, %s40
          %p468 = scmp.lt.s32.totalorder %s467, 1
          %s469 = scalar_select %p468, %s467, 1
          %s470 = smul.addr %s469, 8
          %s471 = scalar_lea.vmem %s0, %s470
          %s472 = smul.u32 2, %s40
        $region16: #{tpu_custom_call.1} parent=11 // pred_fallthru
          _
        // Predicated region
        $region17: #{tpu_custom_call.1} parent=11 // pred_check
          %p473 = pneg %p402
        $region18: #{tpu_custom_call.1} parent=11 // pred_check_branch
          %475 = sbr.rel (%p473) target = $region20
        $region19: #{tpu_custom_call.1} parent=11 // pred_region
          _
        $region20: #{tpu_custom_call.1} parent=11 // pred_fallthru
          _
        // Predicated region
        $region21: #{tpu_custom_call.1} parent=11 // pred_check
          %p476 = pneg %p423
        $region22: #{tpu_custom_call.1} parent=11 // pred_check_branch
          %478 = sbr.rel (%p476) target = $region24
        $region23: #{tpu_custom_call.1} parent=11 // pred_region
          _
        $region24: #{tpu_custom_call.1} parent=11 // pred_fallthru
          _
      $region12: #{tpu_custom_call.1} parent=5 // pred_fallthru
        _
      %p479 = scmp.lt.s32.totalorder %s31, 2
      // Predicated region
      $region25: #{tpu_custom_call.1} parent=5 // pred_check
        %p480 = pneg %p479
      $region26: #{tpu_custom_call.1} parent=5 // pred_check_branch
        %482 = sbr.rel (%p480) target = $region28
      $region27: #{tpu_custom_call.1} parent=5 // pred_region
        // Predicated region
        $region29: #{tpu_custom_call.1} parent=27 // pred_check
          %p483 = pneg %p89
        $region30: #{tpu_custom_call.1} parent=27 // pred_check_branch
          %485 = sbr.rel (%p483) target = $region32
        $region31: #{tpu_custom_call.1} parent=27 // pred_region
          %p486 = scmp.lt.s32.totalorder %s39, 1
          %s487 = scalar_select %p486, %s39, 1
          %s488 = smul.addr %s487, 4
          %s489 = smul.addr %s488, 4
          %s490 = scalar_lea.vmem %s1, %s489
        $region32: #{tpu_custom_call.1} parent=27 // pred_fallthru
          _
        // Predicated region
        $region33: #{tpu_custom_call.1} parent=27 // pred_check
          %p491 = pneg %p115
        $region34: #{tpu_custom_call.1} parent=27 // pred_check_branch
          %493 = sbr.rel (%p491) target = $region36
        $region35: #{tpu_custom_call.1} parent=27 // pred_region
          %p494 = scmp.lt.s32.totalorder %s39, 1
          %s495 = scalar_select %p494, %s39, 1
          %s496 = scalar_lea.vmem %s2, %s495
        $region36: #{tpu_custom_call.1} parent=27 // pred_fallthru
          _
        // Predicated region
        $region37: #{tpu_custom_call.1} parent=27 // pred_check
          %p497 = pneg %p141
        $region38: #{tpu_custom_call.1} parent=27 // pred_check_branch
          %499 = sbr.rel (%p497) target = $region40
        $region39: #{tpu_custom_call.1} parent=27 // pred_region
          %p500 = scmp.lt.s32.totalorder %s39, 1
          %s501 = scalar_select %p500, %s39, 1
          %s502 = smul.addr %s501, 4
          %s503 = smul.addr %s502, 4
          %s504 = scalar_lea.vmem %s3, %s503
        $region40: #{tpu_custom_call.1} parent=27 // pred_fallthru
          _
        // Predicated region
        $region41: #{tpu_custom_call.1} parent=27 // pred_check
          %p505 = pneg %p167
        $region42: #{tpu_custom_call.1} parent=27 // pred_check_branch
          %507 = sbr.rel (%p505) target = $region44
        $region43: #{tpu_custom_call.1} parent=27 // pred_region
          %p508 = scmp.lt.s32.totalorder %s39, 1
          %s509 = scalar_select %p508, %s39, 1
          %s510 = scalar_lea.vmem %s4, %s509
        $region44: #{tpu_custom_call.1} parent=27 // pred_fallthru
          _
        // Predicated region
        $region45: #{tpu_custom_call.1} parent=27 // pred_check
          %p511 = pneg %p193
        $region46: #{tpu_custom_call.1} parent=27 // pred_check_branch
          %513 = sbr.rel (%p511) target = $region48
        $region47: #{tpu_custom_call.1} parent=27 // pred_region
          %s514 = sand.u32 %s183, 1
          %s515 = scalar_lea.sflag [#allocation4], %s514
          %s516 = sand.u32 %s183, 1
          %s517 = scalar_lea.vmem [#allocation3], %s516
          %s519 = ssub.s32 16, 16
          %520 = vsyncadd %s515, %s519
          %s521 = smul.addr %s39, 16
          %s522 = scalar_lea.hbm %s5, %s521
          %s524 = sshll.u32 %s517, 4
          %s525 = int_to_ptr.vmem [resolvable:$true] %s524
          %527 = dma.hbm_to_vmem [thread:$0]  %s522, 16, %s525, %s515
        $region48: #{tpu_custom_call.1} parent=27 // pred_fallthru
          _
        // Predicated region
        $region49: #{tpu_custom_call.1} parent=27 // pred_check
          %p528 = pneg %p219
        $region50: #{tpu_custom_call.1} parent=27 // pred_check_branch
          %530 = sbr.rel (%p528) target = $region52
        $region51: #{tpu_custom_call.1} parent=27 // pred_region
          %s531 = sand.u32 %s31, 1
          %s532 = scalar_lea.sflag [#allocation7], %s531
          %s533 = sand.u32 %s209, 1
          %s534 = scalar_lea.vmem [#allocation6], %s533
          %s536 = ssub.s32 16, 16
          %537 = vsyncadd %s532, %s536
          %s538 = smul.addr %s39, 16
          %s539 = scalar_lea.hbm %s6, %s538
          %s541 = sshll.u32 %s534, 4
          %s542 = int_to_ptr.vmem [resolvable:$true] %s541
          %544 = dma.hbm_to_vmem [thread:$0]  %s539, 16, %s542, %s532
        $region52: #{tpu_custom_call.1} parent=27 // pred_fallthru
          _
        // Predicated region
        $region53: #{tpu_custom_call.1} parent=27 // pred_check
          %p545 = pneg %p245
        $region54: #{tpu_custom_call.1} parent=27 // pred_check_branch
          %547 = sbr.rel (%p545) target = $region56
        $region55: #{tpu_custom_call.1} parent=27 // pred_region
          %p548 = scmp.lt.s32.totalorder %s39, 1
          %s549 = scalar_select %p548, %s39, 1
          %s550 = smul.addr %s549, 4
          %s551 = smul.addr %s550, 4
          %s552 = scalar_lea.vmem %s7, %s551
        $region56: #{tpu_custom_call.1} parent=27 // pred_fallthru
          _
        // Predicated region
        $region57: #{tpu_custom_call.1} parent=27 // pred_check
          %p553 = pneg %p271
        $region58: #{tpu_custom_call.1} parent=27 // pred_check_branch
          %555 = sbr.rel (%p553) target = $region60
        $region59: #{tpu_custom_call.1} parent=27 // pred_region
          %s556 = sand.u32 %s31, 1
          %s557 = scalar_lea.sflag [#allocation7], %s556
          %s558 = sand.u32 %s261, 1
          %s559 = scalar_lea.vmem [#allocation8], %s558
          %s561 = ssub.s32 16, 16
          %562 = vsyncadd %s557, %s561
          %s563 = smul.addr %s39, 16
          %s564 = scalar_lea.hbm %s8, %s563
          %s566 = sshll.u32 %s559, 4
          %s567 = int_to_ptr.vmem [resolvable:$true] %s566
          %569 = dma.hbm_to_vmem [thread:$0]  %s564, 16, %s567, %s557
        $region60: #{tpu_custom_call.1} parent=27 // pred_fallthru
          _
        // Predicated region
        $region61: #{tpu_custom_call.1} parent=27 // pred_check
          %p570 = pneg %p297
        $region62: #{tpu_custom_call.1} parent=27 // pred_check_branch
          %572 = sbr.rel (%p570) target = $region64
        $region63: #{tpu_custom_call.1} parent=27 // pred_region
          %p573 = scmp.lt.s32.totalorder %s39, 1
          %s574 = scalar_select %p573, %s39, 1
          %s575 = smul.addr %s574, 8
          %s576 = smul.addr %s575, 4
          %s577 = scalar_lea.vmem %s9, %s576
        $region64: #{tpu_custom_call.1} parent=27 // pred_fallthru
          _
        // Predicated region
        $region65: #{tpu_custom_call.1} parent=27 // pred_check
          %p578 = pneg %p323
        $region66: #{tpu_custom_call.1} parent=27 // pred_check_branch
          %580 = sbr.rel (%p578) target = $region68
        $region67: #{tpu_custom_call.1} parent=27 // pred_region
          %s581 = sand.u32 %s313, 1
          %s582 = scalar_lea.sflag [#allocation10], %s581
          %s583 = sand.u32 %s313, 1
          %s584 = scalar_lea.vmem [#allocation9], %s583
          %s586 = ssub.s32 16, 16
          %587 = vsyncadd %s582, %s586
          %s588 = smul.addr %s39, 16
          %s589 = scalar_lea.hbm %s10, %s588
          %s591 = sshll.u32 %s584, 4
          %s592 = int_to_ptr.vmem [resolvable:$true] %s591
          %594 = dma.hbm_to_vmem [thread:$0]  %s589, 16, %s592, %s582
        $region68: #{tpu_custom_call.1} parent=27 // pred_fallthru
          _
        // Predicated region
        $region69: #{tpu_custom_call.1} parent=27 // pred_check
          %p595 = pneg %p349
        $region70: #{tpu_custom_call.1} parent=27 // pred_check_branch
          %597 = sbr.rel (%p595) target = $region72
        $region71: #{tpu_custom_call.1} parent=27 // pred_region
          %p598 = scmp.lt.s32.totalorder %s39, 1
          %s599 = scalar_select %p598, %s39, 1
          %s600 = scalar_lea.vmem %s11, %s599
        $region72: #{tpu_custom_call.1} parent=27 // pred_fallthru
          _
        // Predicated region
        $region73: #{tpu_custom_call.1} parent=27 // pred_check
          %p601 = pneg %p375
        $region74: #{tpu_custom_call.1} parent=27 // pred_check_branch
          %603 = sbr.rel (%p601) target = $region76
        $region75: #{tpu_custom_call.1} parent=27 // pred_region
          %p604 = scmp.lt.s32.totalorder %s39, 1
          %s605 = scalar_select %p604, %s39, 1
          %s606 = scalar_lea.vmem %s12, %s605
        $region76: #{tpu_custom_call.1} parent=27 // pred_fallthru
          _
      $region28: #{tpu_custom_call.1} parent=5 // pred_fallthru
        _
      %p607 = scmp.le.s32.totalorder 1, %s31
      %p608 = scmp.lt.s32.totalorder %s31, 3
      %p609 = pnand %p607, %p608
      %p610 = pneg %p609
      // Predicated region
      $region77: #{tpu_custom_call.1} parent=5 // pred_check
        _
      $region78: #{tpu_custom_call.1} parent=5 // pred_check_branch
        %612 = sbr.rel (%p609) target = $region80
      $region79: #{tpu_custom_call.1} parent=5 // pred_region
        %s613 = ssub.s32 %s31, 1
        %s614 = sand.u32 %s186, 1
        %s615 = scalar_lea.sflag [#allocation4], %s614
        %s616 = sand.u32 %s186, 1
        %s617 = scalar_lea.vmem [#allocation3], %s616
        // Predicated region
        $region81: #{tpu_custom_call.1} parent=79 // pred_check
          %p618 = pneg %p199
        $region82: #{tpu_custom_call.1} parent=79 // pred_check_branch
          %620 = sbr.rel (%p618) target = $region84
        $region83: #{tpu_custom_call.1} parent=79 // pred_region
          %621 = dma.done %s615, 16
        $region84: #{tpu_custom_call.1} parent=79 // pred_fallthru
          _
        %s622 = sand.u32 %s36, 1
        %s623 = scalar_lea.sflag [#allocation7], %s622
        %s624 = sand.u32 %s212, 1
        %s625 = scalar_lea.vmem [#allocation6], %s624
        // Predicated region
        $region85: #{tpu_custom_call.1} parent=79 // pred_check
          %p626 = pneg %p225
        $region86: #{tpu_custom_call.1} parent=79 // pred_check_branch
          %628 = sbr.rel (%p626) target = $region88
        $region87: #{tpu_custom_call.1} parent=79 // pred_region
          %629 = dma.done %s623, 16
        $region88: #{tpu_custom_call.1} parent=79 // pred_fallthru
          _
        %s630 = sand.u32 %s36, 1
        %s631 = scalar_lea.sflag [#allocation7], %s630
        %s632 = sand.u32 %s264, 1
        %s633 = scalar_lea.vmem [#allocation8], %s632
        // Predicated region
        $region89: #{tpu_custom_call.1} parent=79 // pred_check
          %p634 = pneg %p277
        $region90: #{tpu_custom_call.1} parent=79 // pred_check_branch
          %636 = sbr.rel (%p634) target = $region92
        $region91: #{tpu_custom_call.1} parent=79 // pred_region
          %637 = dma.done %s631, 16
        $region92: #{tpu_custom_call.1} parent=79 // pred_fallthru
          _
        %s638 = sand.u32 %s316, 1
        %s639 = scalar_lea.sflag [#allocation10], %s638
        %s640 = sand.u32 %s316, 1
        %s641 = scalar_lea.vmem [#allocation9], %s640
        // Predicated region
        $region93: #{tpu_custom_call.1} parent=79 // pred_check
          %p642 = pneg %p329
        $region94: #{tpu_custom_call.1} parent=79 // pred_check_branch
          %644 = sbr.rel (%p642) target = $region96
        $region95: #{tpu_custom_call.1} parent=79 // pred_region
          %645 = dma.done %s639, 16
        $region96: #{tpu_custom_call.1} parent=79 // pred_fallthru
          _
        %s646 = smul.u32 2, %s40
        %p647 = scmp.lt.s32.totalorder %s646, 1
        %s648 = scalar_select %p647, %s646, 1
        %s649 = smul.addr %s648, 8
        %s650 = scalar_lea.vmem %s0, %s649
        %p651 = pneg %p69
        %p652 = pneg %p66
        %p653 = scmp.lt.s32.totalorder %s41, 1
        %s654 = scalar_select %p653, %s41, 1
        %s655 = smul.addr %s654, 4
        %s656 = smul.addr %s655, 4
        %s657 = scalar_lea.vmem %s1, %s656
        %p658 = pneg %p95
        %p659 = pneg %p92
        %p660 = scmp.lt.s32.totalorder %s41, 1
        %s661 = scalar_select %p660, %s41, 1
        %s662 = scalar_lea.vmem %s2, %s661
        %p663 = pneg %p121
        %p664 = pneg %p118
        %p665 = scmp.lt.s32.totalorder %s41, 1
        %s666 = scalar_select %p665, %s41, 1
        %s667 = smul.addr %s666, 4
        %s668 = smul.addr %s667, 4
        %s669 = scalar_lea.vmem %s3, %s668
        %p670 = pneg %p147
        %p671 = pneg %p144
        %p672 = scmp.lt.s32.totalorder %s41, 1
        %s673 = scalar_select %p672, %s41, 1
        %s674 = scalar_lea.vmem %s4, %s673
        %p675 = pneg %p173
        %p676 = pneg %p170
        %s677 = sand.u32 %s186, 1
        %s678 = scalar_lea.sflag [#allocation4], %s677
        %s679 = sand.u32 %s186, 1
        %s680 = scalar_lea.vmem [#allocation3], %s679
        %p681 = pneg %p199
        %p682 = pneg %p196
        %s683 = sand.u32 %s36, 1
        %s684 = scalar_lea.sflag [#allocation7], %s683
        %s685 = sand.u32 %s212, 1
        %s686 = scalar_lea.vmem [#allocation6], %s685
        %p687 = pneg %p225
        %p688 = pneg %p222
        %p689 = scmp.lt.s32.totalorder %s41, 1
        %s690 = scalar_select %p689, %s41, 1
        %s691 = smul.addr %s690, 4
        %s692 = smul.addr %s691, 4
        %s693 = scalar_lea.vmem %s7, %s692
        %p694 = pneg %p251
        %p695 = pneg %p248
        %s696 = sand.u32 %s36, 1
        %s697 = scalar_lea.sflag [#allocation7], %s696
        %s698 = sand.u32 %s264, 1
        %s699 = scalar_lea.vmem [#allocation8], %s698
        %p700 = pneg %p277
        %p701 = pneg %p274
        %p702 = scmp.lt.s32.totalorder %s41, 1
        %s703 = scalar_select %p702, %s41, 1
        %s704 = smul.addr %s703, 8
        %s705 = smul.addr %s704, 4
        %s706 = scalar_lea.vmem %s9, %s705
        %p707 = pneg %p303
        %p708 = pneg %p300
        %s709 = sand.u32 %s316, 1
        %s710 = scalar_lea.sflag [#allocation10], %s709
        %s711 = sand.u32 %s316, 1
        %s712 = scalar_lea.vmem [#allocation9], %s711
        %p713 = pneg %p329
        %p714 = pneg %p326
        %p715 = scmp.lt.s32.totalorder %s41, 1
        %s716 = scalar_select %p715, %s41, 1
        %s717 = scalar_lea.vmem %s11, %s716
        %p718 = pneg %p355
        %p719 = pneg %p352
        %p720 = scmp.lt.s32.totalorder %s41, 1
        %s721 = scalar_select %p720, %s41, 1
        %s722 = scalar_lea.vmem %s12, %s721
        %p723 = pneg %p381
        %p724 = pneg %p378
        %p725 = pneg %p402
        %p726 = pneg %p399
        %p727 = pneg %p423
        %p728 = pneg %p420
        %p729 = pneg %p449
        %p730 = pneg %p446
        %s731 = smul.u32 2, %s40
        %p732 = scmp.lt.s32.totalorder %s731, 1
        %s733 = scalar_select %p732, %s731, 1
        %s734 = smul.addr %s733, 8
        %s735 = scalar_lea.vmem %s0, %s734
        %s736 = smul.u32 2, %s40
        %p737 = scmp.lt.s32.totalorder %s41, 1
        %s738 = scalar_select %p737, %s41, 1
        %s739 = smul.addr %s738, 4
        %s740 = smul.addr %s739, 4
        %s741 = scalar_lea.vmem %s1, %s740
        %p742 = scmp.lt.s32.totalorder %s41, 1
        %s743 = scalar_select %p742, %s41, 1
        %s744 = scalar_lea.vmem %s2, %s743
        %p745 = scmp.lt.s32.totalorder %s41, 1
        %s746 = scalar_select %p745, %s41, 1
        %s747 = smul.addr %s746, 4
        %s748 = smul.addr %s747, 4
        %s749 = scalar_lea.vmem %s3, %s748
        %p750 = scmp.lt.s32.totalorder %s41, 1
        %s751 = scalar_select %p750, %s41, 1
        %s752 = scalar_lea.vmem %s4, %s751
        %p753 = scmp.lt.s32.totalorder %s41, 1
        %s754 = scalar_select %p753, %s41, 1
        %s755 = smul.addr %s754, 4
        %s756 = smul.addr %s755, 4
        %s757 = scalar_lea.vmem %s7, %s756
        %p758 = scmp.lt.s32.totalorder %s41, 1
        %s759 = scalar_select %p758, %s41, 1
        %s760 = smul.addr %s759, 8
        %s761 = smul.addr %s760, 4
        %s762 = scalar_lea.vmem %s9, %s761
        %p763 = scmp.lt.s32.totalorder %s41, 1
        %s764 = scalar_select %p763, %s41, 1
        %s765 = scalar_lea.vmem %s11, %s764
        %p766 = scmp.lt.s32.totalorder %s41, 1
        %s767 = scalar_select %p766, %s41, 1
        %s768 = scalar_lea.vmem %s12, %s767
        %s769 = smul.u32 2, %s40
        %p771 = scmp.eq.s32.totalorder %s41, 0
        // Predicated region
        $region97: #{tpu_custom_call.1} parent=79 // pred_check
          %p772 = pneg %p771
        $region98: #{tpu_custom_call.1} parent=79 // pred_check_branch
          %774 = sbr.rel (%p772) target = $region100
        $region99: #{tpu_custom_call.1} parent=79 // pred_region
          %v775 = vld [vmem:[%s735] sm:$0xff]
          %v776 = vld [vmem:[%s735 + $0x8] sm:$0xff]
          %vm777 = vcmask 261120
          %778 = vst.msk [vmem:[#allocation2] sm:$0xff] %vm777, %v775
          %779 = vst.msk [vmem:[#allocation2 + $0x8] sm:$0xff] %vm777, %v776
        $region100: #{tpu_custom_call.1} parent=79 // pred_fallthru
          _
        %v780 = vld [vmem:[#allocation2] sm:$0xff]
        %v781 = vld [vmem:[#allocation2 + $0x8] sm:$0xff]
        %v782 = vpack.c.bf16 %v781, %v780
        %v783 = vld [vmem:[%s741] sm:$0xf]
        %v784 = vld [vmem:[%s741 + $0x4] sm:$0xf]
        %v785 = vld [vmem:[%s741 + $0x8] sm:$0xf]
        %v786 = vld [vmem:[%s741 + $0xc] sm:$0xf]
        %v787 = vld [vmem:[%s744] sm:$0x1]
        %v789 = vlaneseq
        %v790 = vshrl.u32 %v789, 7
        %v791 = vsub.s32 0, %v790
        %v792 = vrot.slane %v787, %v791
        %v798 = vunpack.c.l.b16 %v783
        %v799 = vunpack.c.l.b16 %v784
        %v800 = vunpack.c.l.b16 %v785
        %v801 = vunpack.c.l.b16 %v786
        %v802 = vpack.c.b16 %v799, %v798
        %v803 = vpack.c.b16 %v801, %v800
        %vm806 = vcmask 261120
        %v808 = vsel %vm806, %v782, 0
        %810 = vmatprep.subr.bf16.mxu0 0
        %811 = vmatpush1.bf16.msra.mxu0 %v802
        %812 = vmatprep.subr.bf16.mxu0 0
        %813 = vmatpush1.bf16.msra.mxu0 %v803
        %814 = vmatprep.subr.bf16.mxu0 0
        %815 = vmatpush1.bf16.msra.mxu0 0
        %816 = vmatprep.subr.bf16.mxu0 0
        %817 = vmatpush1.bf16.msra.mxu0 0
        %818 = vmatprep.subr.bf16.mxu0 0
        %819 = vmatpush1.bf16.msra.mxu0 0
        %820 = vmatprep.subr.bf16.mxu0 0
        %821 = vmatpush1.bf16.msra.mxu0 0
        %822 = vmatprep.subr.bf16.mxu0 0
        %823 = vmatpush1.bf16.msra.mxu0 0
        %824 = vmatprep.subr.bf16.mxu0 0
        %825 = vmatpush1.bf16.msra.mxu0 0
        %826 = vmatprep.subr.bf16.mxu0 0
        %827 = vmatpush1.bf16.msra.mxu0 0
        %828 = vmatprep.subr.bf16.mxu0 0
        %829 = vmatpush1.bf16.msra.mxu0 0
        %830 = vmatprep.subr.bf16.mxu0 0
        %831 = vmatpush1.bf16.msra.mxu0 0
        %832 = vmatprep.subr.bf16.mxu0 0
        %833 = vmatpush1.bf16.msra.mxu0 0
        %834 = vmatprep.subr.bf16.mxu0 0
        %835 = vmatpush1.bf16.msra.mxu0 0
        %836 = vmatprep.subr.bf16.mxu0 0
        %837 = vmatpush1.bf16.msra.mxu0 0
        %838 = vmatprep.subr.bf16.mxu0 0
        %839 = vmatpush1.bf16.msra.mxu0 0
        %840 = vmatprep.subr.bf16.mxu0 0
        %841 = vmatpush1.bf16.msra.mxu0 0
        %842 = vmatprep.mubr.bf16.mxu0 0
        %843 = vmatmul.mubr.bf16.gmra.mrb[0].mxu0 %v808
        %v844 = vpop.f32.mrb[0].mxu0
        %v845 = vadd.f32 %v792, %v844
        %v846 = vpop.f32.mrb[0].mxu0
        %v847 = vpop.f32.mrb[0].mxu0
        %v848 = vadd.f32 %v792, %v847
        %v849 = vpop.f32.mrb[0].mxu0
        %850 = vdwg.mxu0
        %853 = vrot.lane.b32.xlu0 %v845, 120
        %v854 = vpop.permute.xlu0 %853
        %855 = vrot.lane.b32.xlu0 %v848, 120
        %v856 = vpop.permute.xlu0 %855
        %859 = vrot.lane.b32.xlu0 %v845, 112
        %v860 = vpop.permute.xlu0 %859
        %861 = vrot.lane.b32.xlu0 %v848, 112
        %v862 = vpop.permute.xlu0 %861
        %865 = vrot.lane.b32.xlu0 %v845, 104
        %v866 = vpop.permute.xlu0 %865
        %867 = vrot.lane.b32.xlu0 %v848, 104
        %v868 = vpop.permute.xlu0 %867
        %871 = vrot.lane.b32.xlu0 %v845, 96
        %v872 = vpop.permute.xlu0 %871
        %873 = vrot.lane.b32.xlu0 %v848, 96
        %v874 = vpop.permute.xlu0 %873
        %877 = vrot.lane.b32.xlu0 %v845, 88
        %v878 = vpop.permute.xlu0 %877
        %879 = vrot.lane.b32.xlu0 %v848, 88
        %v880 = vpop.permute.xlu0 %879
        %883 = vrot.lane.b32.xlu0 %v845, 80
        %v884 = vpop.permute.xlu0 %883
        %885 = vrot.lane.b32.xlu0 %v848, 80
        %v886 = vpop.permute.xlu0 %885
        %889 = vrot.lane.b32.xlu0 %v845, 72
        %v890 = vpop.permute.xlu0 %889
        %891 = vrot.lane.b32.xlu0 %v848, 72
        %v892 = vpop.permute.xlu0 %891
        %895 = vrot.lane.b32.xlu0 %v845, 64
        %v896 = vpop.permute.xlu0 %895
        %897 = vrot.lane.b32.xlu0 %v848, 64
        %v898 = vpop.permute.xlu0 %897
        %901 = vrot.lane.b32.xlu0 %v845, 56
        %v902 = vpop.permute.xlu0 %901
        %903 = vrot.lane.b32.xlu0 %v848, 56
        %v904 = vpop.permute.xlu0 %903
        %907 = vrot.lane.b32.xlu0 %v845, 48
        %v908 = vpop.permute.xlu0 %907
        %909 = vrot.lane.b32.xlu0 %v848, 48
        %v910 = vpop.permute.xlu0 %909
        %913 = vrot.lane.b32.xlu0 %v845, 40
        %v914 = vpop.permute.xlu0 %913
        %915 = vrot.lane.b32.xlu0 %v848, 40
        %v916 = vpop.permute.xlu0 %915
        %v919 = vcombine.low %v845, %v860
        %v920 = vcombine.high %v845, %v860
        %v922 = vunpack.c.l.s4 1983009808
        %v923 = vunpack.c.0.s8 %v922
        %v924 = vlaneseq
        %v925 = vshrl.u32 %v924, 7
        %v926 = vsub.s32 %v923, %v925
        %v927 = vrot.slane %v919, %v926
        %v929 = vunpack.c.l.s4 1983009808
        %v930 = vunpack.c.0.s8 %v929
        %v931 = vlaneseq
        %v932 = vshrl.u32 %v931, 7
        %v933 = vsub.s32 %v930, %v932
        %v934 = vrot.slane %v920, %v933
        %v935 = vcombine.low %v854, %v866
        %v936 = vcombine.high %v854, %v866
        %v938 = vunpack.c.l.s4 1983009808
        %v939 = vunpack.c.0.s8 %v938
        %v940 = vlaneseq
        %v941 = vshrl.u32 %v940, 7
        %v942 = vsub.s32 %v939, %v941
        %v943 = vrot.slane %v935, %v942
        %v945 = vunpack.c.l.s4 1983009808
        %v946 = vunpack.c.0.s8 %v945
        %v947 = vlaneseq
        %v948 = vshrl.u32 %v947, 7
        %v949 = vsub.s32 %v946, %v948
        %v950 = vrot.slane %v936, %v949
        %v951 = vcombine.low %v872, %v884
        %v952 = vcombine.high %v872, %v884
        %v954 = vunpack.c.l.s4 1983009808
        %v955 = vunpack.c.0.s8 %v954
        %v956 = vlaneseq
        %v957 = vshrl.u32 %v956, 7
        %v958 = vsub.s32 %v955, %v957
        %v959 = vrot.slane %v951, %v958
        %v961 = vunpack.c.l.s4 1983009808
        %v962 = vunpack.c.0.s8 %v961
        %v963 = vlaneseq
        %v964 = vshrl.u32 %v963, 7
        %v965 = vsub.s32 %v962, %v964
        %v966 = vrot.slane %v952, %v965
        %v967 = vcombine.low %v878, %v890
        %v968 = vcombine.high %v878, %v890
        %v970 = vunpack.c.l.s4 1983009808
        %v971 = vunpack.c.0.s8 %v970
        %v972 = vlaneseq
        %v973 = vshrl.u32 %v972, 7
        %v974 = vsub.s32 %v971, %v973
        %v975 = vrot.slane %v967, %v974
        %v977 = vunpack.c.l.s4 1983009808
        %v978 = vunpack.c.0.s8 %v977
        %v979 = vlaneseq
        %v980 = vshrl.u32 %v979, 7
        %v981 = vsub.s32 %v978, %v980
        %v982 = vrot.slane %v968, %v981
        %v983 = vcombine.low %v927, %v943
        %v984 = vcombine.high %v927, %v943
        %v986 = vunpack.c.l.s4 1934713408
        %v987 = vunpack.c.0.s8 %v986
        %v988 = vlaneseq
        %v989 = vshrl.u32 %v988, 7
        %v990 = vsub.s32 %v987, %v989
        %v991 = vrot.slane %v983, %v990
        %v993 = vunpack.c.l.s4 1934713408
        %v994 = vunpack.c.0.s8 %v993
        %v995 = vlaneseq
        %v996 = vshrl.u32 %v995, 7
        %v997 = vsub.s32 %v994, %v996
        %v998 = vrot.slane %v984, %v997
        %v999 = vcombine.low %v934, %v950
        %v1000 = vcombine.high %v934, %v950
        %v1002 = vunpack.c.l.s4 1934713408
        %v1003 = vunpack.c.0.s8 %v1002
        %v1004 = vlaneseq
        %v1005 = vshrl.u32 %v1004, 7
        %v1006 = vsub.s32 %v1003, %v1005
        %v1007 = vrot.slane %v999, %v1006
        %v1009 = vunpack.c.l.s4 1934713408
        %v1010 = vunpack.c.0.s8 %v1009
        %v1011 = vlaneseq
        %v1012 = vshrl.u32 %v1011, 7
        %v1013 = vsub.s32 %v1010, %v1012
        %v1014 = vrot.slane %v1000, %v1013
        %v1015 = vcombine.low %v959, %v975
        %v1016 = vcombine.high %v959, %v975
        %v1018 = vunpack.c.l.s4 1934713408
        %v1019 = vunpack.c.0.s8 %v1018
        %v1020 = vlaneseq
        %v1021 = vshrl.u32 %v1020, 7
        %v1022 = vsub.s32 %v1019, %v1021
        %v1023 = vrot.slane %v1015, %v1022
        %v1025 = vunpack.c.l.s4 1934713408
        %v1026 = vunpack.c.0.s8 %v1025
        %v1027 = vlaneseq
        %v1028 = vshrl.u32 %v1027, 7
        %v1029 = vsub.s32 %v1026, %v1028
        %v1030 = vrot.slane %v1016, %v1029
        %v1031 = vcombine.low %v966, %v982
        %v1032 = vcombine.high %v966, %v982
        %v1034 = vunpack.c.l.s4 1934713408
        %v1035 = vunpack.c.0.s8 %v1034
        %v1036 = vlaneseq
        %v1037 = vshrl.u32 %v1036, 7
        %v1038 = vsub.s32 %v1035, %v1037
        %v1039 = vrot.slane %v1031, %v1038
        %v1041 = vunpack.c.l.s4 1934713408
        %v1042 = vunpack.c.0.s8 %v1041
        %v1043 = vlaneseq
        %v1044 = vshrl.u32 %v1043, 7
        %v1045 = vsub.s32 %v1042, %v1044
        %v1046 = vrot.slane %v1032, %v1045
        %v1047 = vcombine.low %v991, %v1023
        %v1048 = vcombine.high %v991, %v1023
        %v1049 = vcombine.low %v998, %v1030
        %v1050 = vcombine.high %v998, %v1030
        %v1051 = vcombine.low %v1007, %v1039
        %v1052 = vcombine.high %v1007, %v1039
        %v1053 = vcombine.low %v1014, %v1046
        %v1054 = vcombine.high %v1014, %v1046
        %v1055 = vcombine.low %v896, %v908
        %v1056 = vcombine.high %v896, %v908
        %v1058 = vunpack.c.l.s4 1983009808
        %v1059 = vunpack.c.0.s8 %v1058
        %v1060 = vlaneseq
        %v1061 = vshrl.u32 %v1060, 7
        %v1062 = vsub.s32 %v1059, %v1061
        %v1063 = vrot.slane %v1055, %v1062
        %v1065 = vunpack.c.l.s4 1983009808
        %v1066 = vunpack.c.0.s8 %v1065
        %v1067 = vlaneseq
        %v1068 = vshrl.u32 %v1067, 7
        %v1069 = vsub.s32 %v1066, %v1068
        %v1070 = vrot.slane %v1056, %v1069
        %v1071 = vcombine.low %v902, %v914
        %v1072 = vcombine.high %v902, %v914
        %v1074 = vunpack.c.l.s4 1983009808
        %v1075 = vunpack.c.0.s8 %v1074
        %v1076 = vlaneseq
        %v1077 = vshrl.u32 %v1076, 7
        %v1078 = vsub.s32 %v1075, %v1077
        %v1079 = vrot.slane %v1071, %v1078
        %v1081 = vunpack.c.l.s4 1983009808
        %v1082 = vunpack.c.0.s8 %v1081
        %v1083 = vlaneseq
        %v1084 = vshrl.u32 %v1083, 7
        %v1085 = vsub.s32 %v1082, %v1084
        %v1086 = vrot.slane %v1072, %v1085
        %v1087 = vcombine.low %v1063, %v1079
        %v1088 = vcombine.high %v1063, %v1079
        %v1090 = vunpack.c.l.s4 1934713408
        %v1091 = vunpack.c.0.s8 %v1090
        %v1092 = vlaneseq
        %v1093 = vshrl.u32 %v1092, 7
        %v1094 = vsub.s32 %v1091, %v1093
        %v1095 = vrot.slane %v1087, %v1094
        %v1097 = vunpack.c.l.s4 1934713408
        %v1098 = vunpack.c.0.s8 %v1097
        %v1099 = vlaneseq
        %v1100 = vshrl.u32 %v1099, 7
        %v1101 = vsub.s32 %v1098, %v1100
        %v1102 = vrot.slane %v1088, %v1101
        %v1103 = vcombine.low %v1070, %v1086
        %v1104 = vcombine.high %v1070, %v1086
        %v1106 = vunpack.c.l.s4 1934713408
        %v1107 = vunpack.c.0.s8 %v1106
        %v1108 = vlaneseq
        %v1109 = vshrl.u32 %v1108, 7
        %v1110 = vsub.s32 %v1107, %v1109
        %v1111 = vrot.slane %v1103, %v1110
        %v1113 = vunpack.c.l.s4 1934713408
        %v1114 = vunpack.c.0.s8 %v1113
        %v1115 = vlaneseq
        %v1116 = vshrl.u32 %v1115, 7
        %v1117 = vsub.s32 %v1114, %v1116
        %v1118 = vrot.slane %v1104, %v1117
        %v1119 = vcombine.high %v1095, 0.0
        %v1120 = vcombine.high %v1102, 0.0
        %v1121 = vcombine.high %v1111, 0.0
        %v1122 = vcombine.high %v1118, 0.0
        %v1123 = vcombine.low %v848, %v862
        %v1124 = vcombine.high %v848, %v862
        %v1126 = vunpack.c.l.s4 1983009808
        %v1127 = vunpack.c.0.s8 %v1126
        %v1128 = vlaneseq
        %v1129 = vshrl.u32 %v1128, 7
        %v1130 = vsub.s32 %v1127, %v1129
        %v1131 = vrot.slane %v1123, %v1130
        %v1133 = vunpack.c.l.s4 1983009808
        %v1134 = vunpack.c.0.s8 %v1133
        %v1135 = vlaneseq
        %v1136 = vshrl.u32 %v1135, 7
        %v1137 = vsub.s32 %v1134, %v1136
        %v1138 = vrot.slane %v1124, %v1137
        %v1139 = vcombine.low %v856, %v868
        %v1140 = vcombine.high %v856, %v868
        %v1142 = vunpack.c.l.s4 1983009808
        %v1143 = vunpack.c.0.s8 %v1142
        %v1144 = vlaneseq
        %v1145 = vshrl.u32 %v1144, 7
        %v1146 = vsub.s32 %v1143, %v1145
        %v1147 = vrot.slane %v1139, %v1146
        %v1149 = vunpack.c.l.s4 1983009808
        %v1150 = vunpack.c.0.s8 %v1149
        %v1151 = vlaneseq
        %v1152 = vshrl.u32 %v1151, 7
        %v1153 = vsub.s32 %v1150, %v1152
        %v1154 = vrot.slane %v1140, %v1153
        %v1155 = vcombine.low %v874, %v886
        %v1156 = vcombine.high %v874, %v886
        %v1158 = vunpack.c.l.s4 1983009808
        %v1159 = vunpack.c.0.s8 %v1158
        %v1160 = vlaneseq
        %v1161 = vshrl.u32 %v1160, 7
        %v1162 = vsub.s32 %v1159, %v1161
        %v1163 = vrot.slane %v1155, %v1162
        %v1165 = vunpack.c.l.s4 1983009808
        %v1166 = vunpack.c.0.s8 %v1165
        %v1167 = vlaneseq
        %v1168 = vshrl.u32 %v1167, 7
        %v1169 = vsub.s32 %v1166, %v1168
        %v1170 = vrot.slane %v1156, %v1169
        %v1171 = vcombine.low %v880, %v892
        %v1172 = vcombine.high %v880, %v892
        %v1174 = vunpack.c.l.s4 1983009808
        %v1175 = vunpack.c.0.s8 %v1174
        %v1176 = vlaneseq
        %v1177 = vshrl.u32 %v1176, 7
        %v1178 = vsub.s32 %v1175, %v1177
        %v1179 = vrot.slane %v1171, %v1178
        %v1181 = vunpack.c.l.s4 1983009808
        %v1182 = vunpack.c.0.s8 %v1181
        %v1183 = vlaneseq
        %v1184 = vshrl.u32 %v1183, 7
        %v1185 = vsub.s32 %v1182, %v1184
        %v1186 = vrot.slane %v1172, %v1185
        %v1187 = vcombine.low %v1131, %v1147
        %v1188 = vcombine.high %v1131, %v1147
        %v1190 = vunpack.c.l.s4 1934713408
        %v1191 = vunpack.c.0.s8 %v1190
        %v1192 = vlaneseq
        %v1193 = vshrl.u32 %v1192, 7
        %v1194 = vsub.s32 %v1191, %v1193
        %v1195 = vrot.slane %v1187, %v1194
        %v1197 = vunpack.c.l.s4 1934713408
        %v1198 = vunpack.c.0.s8 %v1197
        %v1199 = vlaneseq
        %v1200 = vshrl.u32 %v1199, 7
        %v1201 = vsub.s32 %v1198, %v1200
        %v1202 = vrot.slane %v1188, %v1201
        %v1203 = vcombine.low %v1138, %v1154
        %v1204 = vcombine.high %v1138, %v1154
        %v1206 = vunpack.c.l.s4 1934713408
        %v1207 = vunpack.c.0.s8 %v1206
        %v1208 = vlaneseq
        %v1209 = vshrl.u32 %v1208, 7
        %v1210 = vsub.s32 %v1207, %v1209
        %v1211 = vrot.slane %v1203, %v1210
        %v1213 = vunpack.c.l.s4 1934713408
        %v1214 = vunpack.c.0.s8 %v1213
        %v1215 = vlaneseq
        %v1216 = vshrl.u32 %v1215, 7
        %v1217 = vsub.s32 %v1214, %v1216
        %v1218 = vrot.slane %v1204, %v1217
        %v1219 = vcombine.low %v1163, %v1179
        %v1220 = vcombine.high %v1163, %v1179
        %v1222 = vunpack.c.l.s4 1934713408
        %v1223 = vunpack.c.0.s8 %v1222
        %v1224 = vlaneseq
        %v1225 = vshrl.u32 %v1224, 7
        %v1226 = vsub.s32 %v1223, %v1225
        %v1227 = vrot.slane %v1219, %v1226
        %v1229 = vunpack.c.l.s4 1934713408
        %v1230 = vunpack.c.0.s8 %v1229
        %v1231 = vlaneseq
        %v1232 = vshrl.u32 %v1231, 7
        %v1233 = vsub.s32 %v1230, %v1232
        %v1234 = vrot.slane %v1220, %v1233
        %v1235 = vcombine.low %v1170, %v1186
        %v1236 = vcombine.high %v1170, %v1186
        %v1238 = vunpack.c.l.s4 1934713408
        %v1239 = vunpack.c.0.s8 %v1238
        %v1240 = vlaneseq
        %v1241 = vshrl.u32 %v1240, 7
        %v1242 = vsub.s32 %v1239, %v1241
        %v1243 = vrot.slane %v1235, %v1242
        %v1245 = vunpack.c.l.s4 1934713408
        %v1246 = vunpack.c.0.s8 %v1245
        %v1247 = vlaneseq
        %v1248 = vshrl.u32 %v1247, 7
        %v1249 = vsub.s32 %v1246, %v1248
        %v1250 = vrot.slane %v1236, %v1249
        %v1251 = vcombine.low %v1195, %v1227
        %v1252 = vcombine.high %v1195, %v1227
        %v1253 = vcombine.low %v1202, %v1234
        %v1254 = vcombine.high %v1202, %v1234
        %v1255 = vcombine.low %v1211, %v1243
        %v1256 = vcombine.high %v1211, %v1243
        %v1257 = vcombine.low %v1218, %v1250
        %v1258 = vcombine.high %v1218, %v1250
        %v1259 = vcombine.low %v898, %v910
        %v1260 = vcombine.high %v898, %v910
        %v1262 = vunpack.c.l.s4 1983009808
        %v1263 = vunpack.c.0.s8 %v1262
        %v1264 = vlaneseq
        %v1265 = vshrl.u32 %v1264, 7
        %v1266 = vsub.s32 %v1263, %v1265
        %v1267 = vrot.slane %v1259, %v1266
        %v1269 = vunpack.c.l.s4 1983009808
        %v1270 = vunpack.c.0.s8 %v1269
        %v1271 = vlaneseq
        %v1272 = vshrl.u32 %v1271, 7
        %v1273 = vsub.s32 %v1270, %v1272
        %v1274 = vrot.slane %v1260, %v1273
        %v1275 = vcombine.low %v904, %v916
        %v1276 = vcombine.high %v904, %v916
        %v1278 = vunpack.c.l.s4 1983009808
        %v1279 = vunpack.c.0.s8 %v1278
        %v1280 = vlaneseq
        %v1281 = vshrl.u32 %v1280, 7
        %v1282 = vsub.s32 %v1279, %v1281
        %v1283 = vrot.slane %v1275, %v1282
        %v1285 = vunpack.c.l.s4 1983009808
        %v1286 = vunpack.c.0.s8 %v1285
        %v1287 = vlaneseq
        %v1288 = vshrl.u32 %v1287, 7
        %v1289 = vsub.s32 %v1286, %v1288
        %v1290 = vrot.slane %v1276, %v1289
        %v1291 = vcombine.low %v1267, %v1283
        %v1292 = vcombine.high %v1267, %v1283
        %v1294 = vunpack.c.l.s4 1934713408
        %v1295 = vunpack.c.0.s8 %v1294
        %v1296 = vlaneseq
        %v1297 = vshrl.u32 %v1296, 7
        %v1298 = vsub.s32 %v1295, %v1297
        %v1299 = vrot.slane %v1291, %v1298
        %v1301 = vunpack.c.l.s4 1934713408
        %v1302 = vunpack.c.0.s8 %v1301
        %v1303 = vlaneseq
        %v1304 = vshrl.u32 %v1303, 7
        %v1305 = vsub.s32 %v1302, %v1304
        %v1306 = vrot.slane %v1292, %v1305
        %v1307 = vcombine.low %v1274, %v1290
        %v1308 = vcombine.high %v1274, %v1290
        %v1310 = vunpack.c.l.s4 1934713408
        %v1311 = vunpack.c.0.s8 %v1310
        %v1312 = vlaneseq
        %v1313 = vshrl.u32 %v1312, 7
        %v1314 = vsub.s32 %v1311, %v1313
        %v1315 = vrot.slane %v1307, %v1314
        %v1317 = vunpack.c.l.s4 1934713408
        %v1318 = vunpack.c.0.s8 %v1317
        %v1319 = vlaneseq
        %v1320 = vshrl.u32 %v1319, 7
        %v1321 = vsub.s32 %v1318, %v1320
        %v1322 = vrot.slane %v1308, %v1321
        %v1323 = vcombine.high %v1299, 0.0
        %v1324 = vcombine.high %v1306, 0.0
        %v1325 = vcombine.high %v1315, 0.0
        %v1326 = vcombine.high %v1322, 0.0
        %v1327 = vcombine.low %v1047, %v1049
        %v1328 = vcombine.high %v1047, %v1049
        %v1330 = vunpack.c.l.s4 1983009808
        %v1331 = vunpack.c.0.s8 %v1330
        %v1332 = vlaneseq
        %v1333 = vshrl.u32 %v1332, 7
        %v1334 = vsub.s32 %v1331, %v1333
        %v1335 = vrot.slane %v1327, %v1334
        %v1337 = vunpack.c.l.s4 1983009808
        %v1338 = vunpack.c.0.s8 %v1337
        %v1339 = vlaneseq
        %v1340 = vshrl.u32 %v1339, 7
        %v1341 = vsub.s32 %v1338, %v1340
        %v1342 = vrot.slane %v1328, %v1341
        %v1343 = vcombine.low %v1048, %v1050
        %v1344 = vcombine.high %v1048, %v1050
        %v1346 = vunpack.c.l.s4 1983009808
        %v1347 = vunpack.c.0.s8 %v1346
        %v1348 = vlaneseq
        %v1349 = vshrl.u32 %v1348, 7
        %v1350 = vsub.s32 %v1347, %v1349
        %v1351 = vrot.slane %v1343, %v1350
        %v1353 = vunpack.c.l.s4 1983009808
        %v1354 = vunpack.c.0.s8 %v1353
        %v1355 = vlaneseq
        %v1356 = vshrl.u32 %v1355, 7
        %v1357 = vsub.s32 %v1354, %v1356
        %v1358 = vrot.slane %v1344, %v1357
        %v1359 = vcombine.low %v1051, %v1053
        %v1360 = vcombine.high %v1051, %v1053
        %v1362 = vunpack.c.l.s4 1983009808
        %v1363 = vunpack.c.0.s8 %v1362
        %v1364 = vlaneseq
        %v1365 = vshrl.u32 %v1364, 7
        %v1366 = vsub.s32 %v1363, %v1365
        %v1367 = vrot.slane %v1359, %v1366
        %v1369 = vunpack.c.l.s4 1983009808
        %v1370 = vunpack.c.0.s8 %v1369
        %v1371 = vlaneseq
        %v1372 = vshrl.u32 %v1371, 7
        %v1373 = vsub.s32 %v1370, %v1372
        %v1374 = vrot.slane %v1360, %v1373
        %v1375 = vcombine.low %v1052, %v1054
        %v1376 = vcombine.high %v1052, %v1054
        %v1378 = vunpack.c.l.s4 1983009808
        %v1379 = vunpack.c.0.s8 %v1378
        %v1380 = vlaneseq
        %v1381 = vshrl.u32 %v1380, 7
        %v1382 = vsub.s32 %v1379, %v1381
        %v1383 = vrot.slane %v1375, %v1382
        %v1385 = vunpack.c.l.s4 1983009808
        %v1386 = vunpack.c.0.s8 %v1385
        %v1387 = vlaneseq
        %v1388 = vshrl.u32 %v1387, 7
        %v1389 = vsub.s32 %v1386, %v1388
        %v1390 = vrot.slane %v1376, %v1389
        %v1391 = vcombine.low %v1335, %v1351
        %v1392 = vcombine.high %v1335, %v1351
        %v1394 = vunpack.c.l.s4 1934713408
        %v1395 = vunpack.c.0.s8 %v1394
        %v1396 = vlaneseq
        %v1397 = vshrl.u32 %v1396, 7
        %v1398 = vsub.s32 %v1395, %v1397
        %v1399 = vrot.slane %v1391, %v1398
        %v1401 = vunpack.c.l.s4 1934713408
        %v1402 = vunpack.c.0.s8 %v1401
        %v1403 = vlaneseq
        %v1404 = vshrl.u32 %v1403, 7
        %v1405 = vsub.s32 %v1402, %v1404
        %v1406 = vrot.slane %v1392, %v1405
        %v1407 = vcombine.low %v1342, %v1358
        %v1408 = vcombine.high %v1342, %v1358
        %v1410 = vunpack.c.l.s4 1934713408
        %v1411 = vunpack.c.0.s8 %v1410
        %v1412 = vlaneseq
        %v1413 = vshrl.u32 %v1412, 7
        %v1414 = vsub.s32 %v1411, %v1413
        %v1415 = vrot.slane %v1407, %v1414
        %v1417 = vunpack.c.l.s4 1934713408
        %v1418 = vunpack.c.0.s8 %v1417
        %v1419 = vlaneseq
        %v1420 = vshrl.u32 %v1419, 7
        %v1421 = vsub.s32 %v1418, %v1420
        %v1422 = vrot.slane %v1408, %v1421
        %v1423 = vcombine.low %v1367, %v1383
        %v1424 = vcombine.high %v1367, %v1383
        %v1426 = vunpack.c.l.s4 1934713408
        %v1427 = vunpack.c.0.s8 %v1426
        %v1428 = vlaneseq
        %v1429 = vshrl.u32 %v1428, 7
        %v1430 = vsub.s32 %v1427, %v1429
        %v1431 = vrot.slane %v1423, %v1430
        %v1433 = vunpack.c.l.s4 1934713408
        %v1434 = vunpack.c.0.s8 %v1433
        %v1435 = vlaneseq
        %v1436 = vshrl.u32 %v1435, 7
        %v1437 = vsub.s32 %v1434, %v1436
        %v1438 = vrot.slane %v1424, %v1437
        %v1439 = vcombine.low %v1374, %v1390
        %v1440 = vcombine.high %v1374, %v1390
        %v1442 = vunpack.c.l.s4 1934713408
        %v1443 = vunpack.c.0.s8 %v1442
        %v1444 = vlaneseq
        %v1445 = vshrl.u32 %v1444, 7
        %v1446 = vsub.s32 %v1443, %v1445
        %v1447 = vrot.slane %v1439, %v1446
        %v1449 = vunpack.c.l.s4 1934713408
        %v1450 = vunpack.c.0.s8 %v1449
        %v1451 = vlaneseq
        %v1452 = vshrl.u32 %v1451, 7
        %v1453 = vsub.s32 %v1450, %v1452
        %v1454 = vrot.slane %v1440, %v1453
        %v1455 = vcombine.low %v1399, %v1431
        %v1456 = vcombine.high %v1399, %v1431
        %v1457 = vcombine.low %v1406, %v1438
        %v1458 = vcombine.high %v1406, %v1438
        %v1459 = vcombine.low %v1415, %v1447
        %v1460 = vcombine.high %v1415, %v1447
        %v1461 = vcombine.low %v1422, %v1454
        %v1462 = vcombine.high %v1422, %v1454
        %v1463 = vcombine.low %v1251, %v1253
        %v1464 = vcombine.high %v1251, %v1253
        %v1466 = vunpack.c.l.s4 1983009808
        %v1467 = vunpack.c.0.s8 %v1466
        %v1468 = vlaneseq
        %v1469 = vshrl.u32 %v1468, 7
        %v1470 = vsub.s32 %v1467, %v1469
        %v1471 = vrot.slane %v1463, %v1470
        %v1473 = vunpack.c.l.s4 1983009808
        %v1474 = vunpack.c.0.s8 %v1473
        %v1475 = vlaneseq
        %v1476 = vshrl.u32 %v1475, 7
        %v1477 = vsub.s32 %v1474, %v1476
        %v1478 = vrot.slane %v1464, %v1477
        %v1479 = vcombine.low %v1252, %v1254
        %v1480 = vcombine.high %v1252, %v1254
        %v1482 = vunpack.c.l.s4 1983009808
        %v1483 = vunpack.c.0.s8 %v1482
        %v1484 = vlaneseq
        %v1485 = vshrl.u32 %v1484, 7
        %v1486 = vsub.s32 %v1483, %v1485
        %v1487 = vrot.slane %v1479, %v1486
        %v1489 = vunpack.c.l.s4 1983009808
        %v1490 = vunpack.c.0.s8 %v1489
        %v1491 = vlaneseq
        %v1492 = vshrl.u32 %v1491, 7
        %v1493 = vsub.s32 %v1490, %v1492
        %v1494 = vrot.slane %v1480, %v1493
        %v1495 = vcombine.low %v1255, %v1257
        %v1496 = vcombine.high %v1255, %v1257
        %v1498 = vunpack.c.l.s4 1983009808
        %v1499 = vunpack.c.0.s8 %v1498
        %v1500 = vlaneseq
        %v1501 = vshrl.u32 %v1500, 7
        %v1502 = vsub.s32 %v1499, %v1501
        %v1503 = vrot.slane %v1495, %v1502
        %v1505 = vunpack.c.l.s4 1983009808
        %v1506 = vunpack.c.0.s8 %v1505
        %v1507 = vlaneseq
        %v1508 = vshrl.u32 %v1507, 7
        %v1509 = vsub.s32 %v1506, %v1508
        %v1510 = vrot.slane %v1496, %v1509
        %v1511 = vcombine.low %v1256, %v1258
        %v1512 = vcombine.high %v1256, %v1258
        %v1514 = vunpack.c.l.s4 1983009808
        %v1515 = vunpack.c.0.s8 %v1514
        %v1516 = vlaneseq
        %v1517 = vshrl.u32 %v1516, 7
        %v1518 = vsub.s32 %v1515, %v1517
        %v1519 = vrot.slane %v1511, %v1518
        %v1521 = vunpack.c.l.s4 1983009808
        %v1522 = vunpack.c.0.s8 %v1521
        %v1523 = vlaneseq
        %v1524 = vshrl.u32 %v1523, 7
        %v1525 = vsub.s32 %v1522, %v1524
        %v1526 = vrot.slane %v1512, %v1525
        %v1527 = vcombine.low %v1471, %v1487
        %v1528 = vcombine.high %v1471, %v1487
        %v1530 = vunpack.c.l.s4 1934713408
        %v1531 = vunpack.c.0.s8 %v1530
        %v1532 = vlaneseq
        %v1533 = vshrl.u32 %v1532, 7
        %v1534 = vsub.s32 %v1531, %v1533
        %v1535 = vrot.slane %v1527, %v1534
        %v1537 = vunpack.c.l.s4 1934713408
        %v1538 = vunpack.c.0.s8 %v1537
        %v1539 = vlaneseq
        %v1540 = vshrl.u32 %v1539, 7
        %v1541 = vsub.s32 %v1538, %v1540
        %v1542 = vrot.slane %v1528, %v1541
        %v1543 = vcombine.low %v1478, %v1494
        %v1544 = vcombine.high %v1478, %v1494
        %v1546 = vunpack.c.l.s4 1934713408
        %v1547 = vunpack.c.0.s8 %v1546
        %v1548 = vlaneseq
        %v1549 = vshrl.u32 %v1548, 7
        %v1550 = vsub.s32 %v1547, %v1549
        %v1551 = vrot.slane %v1543, %v1550
        %v1553 = vunpack.c.l.s4 1934713408
        %v1554 = vunpack.c.0.s8 %v1553
        %v1555 = vlaneseq
        %v1556 = vshrl.u32 %v1555, 7
        %v1557 = vsub.s32 %v1554, %v1556
        %v1558 = vrot.slane %v1544, %v1557
        %v1559 = vcombine.low %v1503, %v1519
        %v1560 = vcombine.high %v1503, %v1519
        %v1562 = vunpack.c.l.s4 1934713408
        %v1563 = vunpack.c.0.s8 %v1562
        %v1564 = vlaneseq
        %v1565 = vshrl.u32 %v1564, 7
        %v1566 = vsub.s32 %v1563, %v1565
        %v1567 = vrot.slane %v1559, %v1566
        %v1569 = vunpack.c.l.s4 1934713408
        %v1570 = vunpack.c.0.s8 %v1569
        %v1571 = vlaneseq
        %v1572 = vshrl.u32 %v1571, 7
        %v1573 = vsub.s32 %v1570, %v1572
        %v1574 = vrot.slane %v1560, %v1573
        %v1575 = vcombine.low %v1510, %v1526
        %v1576 = vcombine.high %v1510, %v1526
        %v1578 = vunpack.c.l.s4 1934713408
        %v1579 = vunpack.c.0.s8 %v1578
        %v1580 = vlaneseq
        %v1581 = vshrl.u32 %v1580, 7
        %v1582 = vsub.s32 %v1579, %v1581
        %v1583 = vrot.slane %v1575, %v1582
        %v1585 = vunpack.c.l.s4 1934713408
        %v1586 = vunpack.c.0.s8 %v1585
        %v1587 = vlaneseq
        %v1588 = vshrl.u32 %v1587, 7
        %v1589 = vsub.s32 %v1586, %v1588
        %v1590 = vrot.slane %v1576, %v1589
        %v1591 = vcombine.low %v1535, %v1567
        %v1592 = vcombine.high %v1535, %v1567
        %v1593 = vcombine.low %v1542, %v1574
        %v1594 = vcombine.high %v1542, %v1574
        %v1595 = vcombine.low %v1551, %v1583
        %v1596 = vcombine.high %v1551, %v1583
        %v1597 = vcombine.low %v1558, %v1590
        %v1598 = vcombine.high %v1558, %v1590
        %v1599 = vcombine.low %v1095, %v1102
        %v1601 = vunpack.c.l.s4 1983009808
        %v1602 = vunpack.c.0.s8 %v1601
        %v1603 = vlaneseq
        %v1604 = vshrl.u32 %v1603, 7
        %v1605 = vsub.s32 %v1602, %v1604
        %v1606 = vrot.slane %v1599, %v1605
        %v1607 = vcombine.low %v1119, %v1120
        %v1609 = vunpack.c.l.s4 1983009808
        %v1610 = vunpack.c.0.s8 %v1609
        %v1611 = vlaneseq
        %v1612 = vshrl.u32 %v1611, 7
        %v1613 = vsub.s32 %v1610, %v1612
        %v1614 = vrot.slane %v1607, %v1613
        %v1615 = vcombine.low %v1111, %v1118
        %v1617 = vunpack.c.l.s4 1983009808
        %v1618 = vunpack.c.0.s8 %v1617
        %v1619 = vlaneseq
        %v1620 = vshrl.u32 %v1619, 7
        %v1621 = vsub.s32 %v1618, %v1620
        %v1622 = vrot.slane %v1615, %v1621
        %v1623 = vcombine.low %v1121, %v1122
        %v1625 = vunpack.c.l.s4 1983009808
        %v1626 = vunpack.c.0.s8 %v1625
        %v1627 = vlaneseq
        %v1628 = vshrl.u32 %v1627, 7
        %v1629 = vsub.s32 %v1626, %v1628
        %v1630 = vrot.slane %v1623, %v1629
        %v1631 = vcombine.low %v1606, %v1614
        %v1632 = vcombine.high %v1606, %v1614
        %v1634 = vunpack.c.l.s4 1934713408
        %v1635 = vunpack.c.0.s8 %v1634
        %v1636 = vlaneseq
        %v1637 = vshrl.u32 %v1636, 7
        %v1638 = vsub.s32 %v1635, %v1637
        %v1639 = vrot.slane %v1631, %v1638
        %v1641 = vunpack.c.l.s4 1934713408
        %v1642 = vunpack.c.0.s8 %v1641
        %v1643 = vlaneseq
        %v1644 = vshrl.u32 %v1643, 7
        %v1645 = vsub.s32 %v1642, %v1644
        %v1646 = vrot.slane %v1632, %v1645
        %v1647 = vcombine.low %v1622, %v1630
        %v1648 = vcombine.high %v1622, %v1630
        %v1650 = vunpack.c.l.s4 1934713408
        %v1651 = vunpack.c.0.s8 %v1650
        %v1652 = vlaneseq
        %v1653 = vshrl.u32 %v1652, 7
        %v1654 = vsub.s32 %v1651, %v1653
        %v1655 = vrot.slane %v1647, %v1654
        %v1657 = vunpack.c.l.s4 1934713408
        %v1658 = vunpack.c.0.s8 %v1657
        %v1659 = vlaneseq
        %v1660 = vshrl.u32 %v1659, 7
        %v1661 = vsub.s32 %v1658, %v1660
        %v1662 = vrot.slane %v1648, %v1661
        %v1663 = vcombine.low %v1639, %v1655
        %v1664 = vcombine.high %v1639, %v1655
        %v1665 = vcombine.low %v1646, %v1662
        %v1666 = vcombine.high %v1646, %v1662
        %v1667 = vcombine.low %v1299, %v1306
        %v1669 = vunpack.c.l.s4 1983009808
        %v1670 = vunpack.c.0.s8 %v1669
        %v1671 = vlaneseq
        %v1672 = vshrl.u32 %v1671, 7
        %v1673 = vsub.s32 %v1670, %v1672
        %v1674 = vrot.slane %v1667, %v1673
        %v1675 = vcombine.low %v1323, %v1324
        %v1677 = vunpack.c.l.s4 1983009808
        %v1678 = vunpack.c.0.s8 %v1677
        %v1679 = vlaneseq
        %v1680 = vshrl.u32 %v1679, 7
        %v1681 = vsub.s32 %v1678, %v1680
        %v1682 = vrot.slane %v1675, %v1681
        %v1683 = vcombine.low %v1315, %v1322
        %v1685 = vunpack.c.l.s4 1983009808
        %v1686 = vunpack.c.0.s8 %v1685
        %v1687 = vlaneseq
        %v1688 = vshrl.u32 %v1687, 7
        %v1689 = vsub.s32 %v1686, %v1688
        %v1690 = vrot.slane %v1683, %v1689
        %v1691 = vcombine.low %v1325, %v1326
        %v1693 = vunpack.c.l.s4 1983009808
        %v1694 = vunpack.c.0.s8 %v1693
        %v1695 = vlaneseq
        %v1696 = vshrl.u32 %v1695, 7
        %v1697 = vsub.s32 %v1694, %v1696
        %v1698 = vrot.slane %v1691, %v1697
        %v1699 = vcombine.low %v1674, %v1682
        %v1700 = vcombine.high %v1674, %v1682
        %v1702 = vunpack.c.l.s4 1934713408
        %v1703 = vunpack.c.0.s8 %v1702
        %v1704 = vlaneseq
        %v1705 = vshrl.u32 %v1704, 7
        %v1706 = vsub.s32 %v1703, %v1705
        %v1707 = vrot.slane %v1699, %v1706
        %v1709 = vunpack.c.l.s4 1934713408
        %v1710 = vunpack.c.0.s8 %v1709
        %v1711 = vlaneseq
        %v1712 = vshrl.u32 %v1711, 7
        %v1713 = vsub.s32 %v1710, %v1712
        %v1714 = vrot.slane %v1700, %v1713
        %v1715 = vcombine.low %v1690, %v1698
        %v1716 = vcombine.high %v1690, %v1698
        %v1718 = vunpack.c.l.s4 1934713408
        %v1719 = vunpack.c.0.s8 %v1718
        %v1720 = vlaneseq
        %v1721 = vshrl.u32 %v1720, 7
        %v1722 = vsub.s32 %v1719, %v1721
        %v1723 = vrot.slane %v1715, %v1722
        %v1725 = vunpack.c.l.s4 1934713408
        %v1726 = vunpack.c.0.s8 %v1725
        %v1727 = vlaneseq
        %v1728 = vshrl.u32 %v1727, 7
        %v1729 = vsub.s32 %v1726, %v1728
        %v1730 = vrot.slane %v1716, %v1729
        %v1731 = vcombine.low %v1707, %v1723
        %v1732 = vcombine.high %v1707, %v1723
        %v1733 = vcombine.low %v1714, %v1730
        %v1734 = vcombine.high %v1714, %v1730
        %v1735 = vpack.c.bf16 %v1591, %v1455
        %v1736 = vpack.c.bf16 %v1592, %v1456
        %v1737 = vpack.c.bf16 %v1593, %v1457
        %v1738 = vpack.c.bf16 %v1594, %v1458
        %v1739 = vpack.c.bf16 %v1595, %v1459
        %v1740 = vpack.c.bf16 %v1596, %v1460
        %v1741 = vpack.c.bf16 %v1597, %v1461
        %v1742 = vpack.c.bf16 %v1598, %v1462
        %v1743 = vpack.c.bf16 %v1731, %v1663
        %v1744 = vpack.c.bf16 %v1732, %v1664
        %v1745 = vpack.c.bf16 %v1733, %v1665
        %v1746 = vpack.c.bf16 %v1734, %v1666
        %v1751 = vunpack.c.l.b16 %v1735
        %v1752 = vunpack.c.h.b16 %v1735
        %v1753 = vunpack.c.l.b16 %v1736
        %v1754 = vunpack.c.h.b16 %v1736
        %v1755 = vunpack.c.l.b16 %v1737
        %v1756 = vunpack.c.h.b16 %v1737
        %v1757 = vunpack.c.l.b16 %v1738
        %v1758 = vunpack.c.h.b16 %v1738
        %v1759 = vpack.c.b16 %v1751, %v1751
        %v1760 = vpack.c.b16 %v1752, %v1752
        %v1761 = vpack.c.b16 %v1753, %v1753
        %v1762 = vpack.c.b16 %v1754, %v1754
        %v1763 = vpack.c.b16 %v1755, %v1755
        %v1764 = vpack.c.b16 %v1756, %v1756
        %v1765 = vpack.c.b16 %v1757, %v1757
        %v1766 = vpack.c.b16 %v1758, %v1758
        %v1771 = vunpack.c.l.b16 %v1739
        %v1772 = vunpack.c.h.b16 %v1739
        %v1773 = vunpack.c.l.b16 %v1740
        %v1774 = vunpack.c.h.b16 %v1740
        %v1775 = vunpack.c.l.b16 %v1741
        %v1776 = vunpack.c.h.b16 %v1741
        %v1777 = vunpack.c.l.b16 %v1742
        %v1778 = vunpack.c.h.b16 %v1742
        %v1779 = vpack.c.b16 %v1771, %v1771
        %v1780 = vpack.c.b16 %v1772, %v1772
        %v1781 = vpack.c.b16 %v1773, %v1773
        %v1782 = vpack.c.b16 %v1774, %v1774
        %v1783 = vpack.c.b16 %v1775, %v1775
        %v1784 = vpack.c.b16 %v1776, %v1776
        %v1785 = vpack.c.b16 %v1777, %v1777
        %v1786 = vpack.c.b16 %v1778, %v1778
        %v1791 = vunpack.c.l.b16 %v1743
        %v1792 = vunpack.c.h.b16 %v1743
        %v1793 = vunpack.c.l.b16 %v1744
        %v1794 = vunpack.c.h.b16 %v1744
        %v1795 = vunpack.c.l.b16 %v1745
        %v1796 = vunpack.c.h.b16 %v1745
        %v1797 = vunpack.c.l.b16 %v1746
        %v1798 = vunpack.c.h.b16 %v1746
        %v1799 = vpack.c.b16 %v1791, %v1791
        %v1800 = vpack.c.b16 %v1792, %v1792
        %v1801 = vpack.c.b16 %v1793, %v1793
        %v1802 = vpack.c.b16 %v1794, %v1794
        %v1803 = vpack.c.b16 %v1795, %v1795
        %v1804 = vpack.c.b16 %v1796, %v1796
        %v1805 = vpack.c.b16 %v1797, %v1797
        %v1806 = vpack.c.b16 %v1798, %v1798
        %vm1807 = vcmask 64512
        %v1809 = vsel %vm1807, %v1759, 0
        %v1812 = vsel %vm1807, %v1779, 0
        %1814 = vmatprep.subr.bf16.mxu0 0
        %1815 = vmatpush1.bf16.xpose.msra.mxu0 %v1812
        %1816 = vmatprep.subr.bf16.mxu0 0
        %1817 = vmatpush1.bf16.xpose.msra.mxu0 0
        %1818 = vmatprep.subr.bf16.mxu0 0
        %1819 = vmatpush1.bf16.xpose.msra.mxu0 0
        %1820 = vmatprep.subr.bf16.mxu0 0
        %1821 = vmatpush1.bf16.xpose.msra.mxu0 0
        %1822 = vmatprep.subr.bf16.mxu0 0
        %1823 = vmatpush1.bf16.xpose.msra.mxu0 0
        %1824 = vmatprep.subr.bf16.mxu0 0
        %1825 = vmatpush1.bf16.xpose.msra.mxu0 0
        %1826 = vmatprep.subr.bf16.mxu0 0
        %1827 = vmatpush1.bf16.xpose.msra.mxu0 0
        %1828 = vmatprep.subr.bf16.mxu0 0
        %1829 = vmatpush1.bf16.xpose.msra.mxu0 0
        %1830 = vmatprep.subr.bf16.mxu0 0
        %1831 = vmatpush1.bf16.xpose.msra.mxu0 0
        %1832 = vmatprep.subr.bf16.mxu0 0
        %1833 = vmatpush1.bf16.xpose.msra.mxu0 0
        %1834 = vmatprep.subr.bf16.mxu0 0
        %1835 = vmatpush1.bf16.xpose.msra.mxu0 0
        %1836 = vmatprep.subr.bf16.mxu0 0
        %1837 = vmatpush1.bf16.xpose.msra.mxu0 0
        %1838 = vmatprep.subr.bf16.mxu0 0
        %1839 = vmatpush1.bf16.xpose.msra.mxu0 0
        %1840 = vmatprep.subr.bf16.mxu0 0
        %1841 = vmatpush1.bf16.xpose.msra.mxu0 0
        %1842 = vmatprep.subr.bf16.mxu0 0
        %1843 = vmatpush1.bf16.xpose.msra.mxu0 0
        %1844 = vmatprep.subr.bf16.mxu0 0
        %1845 = vmatpush1.bf16.xpose.msra.mxu0 0
        %1846 = vmatprep.mubr.bf16.mxu0 0
        %1847 = vmatmul.mubr.bf16.gmra.mrb[0].mxu0 %v1809
        %v1848 = vpop.f32.mrb[0].mxu0
        %v1849 = vadd.f32 0.0, %v1848
        %v1850 = vpop.f32.mrb[0].mxu0
        %v1851 = vpop.f32.mrb[0].mxu0
        %v1852 = vpop.f32.mrb[0].mxu0
        %1853 = vdwg.mxu0
        %v1855 = vsel %vm1807, %v1760, 0
        %v1858 = vsel %vm1807, %v1780, 0
        %1860 = vmatprep.subr.bf16.mxu0 0
        %1861 = vmatpush1.bf16.xpose.msra.mxu0 %v1858
        %1862 = vmatprep.subr.bf16.mxu0 0
        %1863 = vmatpush1.bf16.xpose.msra.mxu0 0
        %1864 = vmatprep.subr.bf16.mxu0 0
        %1865 = vmatpush1.bf16.xpose.msra.mxu0 0
        %1866 = vmatprep.subr.bf16.mxu0 0
        %1867 = vmatpush1.bf16.xpose.msra.mxu0 0
        %1868 = vmatprep.subr.bf16.mxu0 0
        %1869 = vmatpush1.bf16.xpose.msra.mxu0 0
        %1870 = vmatprep.subr.bf16.mxu0 0
        %1871 = vmatpush1.bf16.xpose.msra.mxu0 0
        %1872 = vmatprep.subr.bf16.mxu0 0
        %1873 = vmatpush1.bf16.xpose.msra.mxu0 0
        %1874 = vmatprep.subr.bf16.mxu0 0
        %1875 = vmatpush1.bf16.xpose.msra.mxu0 0
        %1876 = vmatprep.subr.bf16.mxu0 0
        %1877 = vmatpush1.bf16.xpose.msra.mxu0 0
        %1878 = vmatprep.subr.bf16.mxu0 0
        %1879 = vmatpush1.bf16.xpose.msra.mxu0 0
        %1880 = vmatprep.subr.bf16.mxu0 0
        %1881 = vmatpush1.bf16.xpose.msra.mxu0 0
        %1882 = vmatprep.subr.bf16.mxu0 0
        %1883 = vmatpush1.bf16.xpose.msra.mxu0 0
        %1884 = vmatprep.subr.bf16.mxu0 0
        %1885 = vmatpush1.bf16.xpose.msra.mxu0 0
        %1886 = vmatprep.subr.bf16.mxu0 0
        %1887 = vmatpush1.bf16.xpose.msra.mxu0 0
        %1888 = vmatprep.subr.bf16.mxu0 0
        %1889 = vmatpush1.bf16.xpose.msra.mxu0 0
        %1890 = vmatprep.subr.bf16.mxu0 0
        %1891 = vmatpush1.bf16.xpose.msra.mxu0 0
        %1892 = vmatprep.mubr.bf16.mxu0 0
        %1893 = vmatmul.mubr.bf16.gmra.mrb[0].mxu0 %v1855
        %v1894 = vpop.f32.mrb[0].mxu0
        %v1895 = vadd.f32 0.0, %v1894
        %v1896 = vpop.f32.mrb[0].mxu0
        %v1897 = vpop.f32.mrb[0].mxu0
        %v1898 = vpop.f32.mrb[0].mxu0
        %1899 = vdwg.mxu0
        %v1901 = vsel %vm1807, %v1761, 0
        %v1904 = vsel %vm1807, %v1781, 0
        %1906 = vmatprep.subr.bf16.mxu0 0
        %1907 = vmatpush1.bf16.xpose.msra.mxu0 %v1904
        %1908 = vmatprep.subr.bf16.mxu0 0
        %1909 = vmatpush1.bf16.xpose.msra.mxu0 0
        %1910 = vmatprep.subr.bf16.mxu0 0
        %1911 = vmatpush1.bf16.xpose.msra.mxu0 0
        %1912 = vmatprep.subr.bf16.mxu0 0
        %1913 = vmatpush1.bf16.xpose.msra.mxu0 0
        %1914 = vmatprep.subr.bf16.mxu0 0
        %1915 = vmatpush1.bf16.xpose.msra.mxu0 0
        %1916 = vmatprep.subr.bf16.mxu0 0
        %1917 = vmatpush1.bf16.xpose.msra.mxu0 0
        %1918 = vmatprep.subr.bf16.mxu0 0
        %1919 = vmatpush1.bf16.xpose.msra.mxu0 0
        %1920 = vmatprep.subr.bf16.mxu0 0
        %1921 = vmatpush1.bf16.xpose.msra.mxu0 0
        %1922 = vmatprep.subr.bf16.mxu0 0
        %1923 = vmatpush1.bf16.xpose.msra.mxu0 0
        %1924 = vmatprep.subr.bf16.mxu0 0
        %1925 = vmatpush1.bf16.xpose.msra.mxu0 0
        %1926 = vmatprep.subr.bf16.mxu0 0
        %1927 = vmatpush1.bf16.xpose.msra.mxu0 0
        %1928 = vmatprep.subr.bf16.mxu0 0
        %1929 = vmatpush1.bf16.xpose.msra.mxu0 0
        %1930 = vmatprep.subr.bf16.mxu0 0
        %1931 = vmatpush1.bf16.xpose.msra.mxu0 0
        %1932 = vmatprep.subr.bf16.mxu0 0
        %1933 = vmatpush1.bf16.xpose.msra.mxu0 0
        %1934 = vmatprep.subr.bf16.mxu0 0
        %1935 = vmatpush1.bf16.xpose.msra.mxu0 0
        %1936 = vmatprep.subr.bf16.mxu0 0
        %1937 = vmatpush1.bf16.xpose.msra.mxu0 0
        %1938 = vmatprep.mubr.bf16.mxu0 0
        %1939 = vmatmul.mubr.bf16.gmra.mrb[0].mxu0 %v1901
        %v1940 = vpop.f32.mrb[0].mxu0
        %v1941 = vadd.f32 0.0, %v1940
        %v1942 = vpop.f32.mrb[0].mxu0
        %v1943 = vpop.f32.mrb[0].mxu0
        %v1944 = vpop.f32.mrb[0].mxu0
        %1945 = vdwg.mxu0
        %v1947 = vsel %vm1807, %v1762, 0
        %v1950 = vsel %vm1807, %v1782, 0
        %1952 = vmatprep.subr.bf16.mxu0 0
        %1953 = vmatpush1.bf16.xpose.msra.mxu0 %v1950
        %1954 = vmatprep.subr.bf16.mxu0 0
        %1955 = vmatpush1.bf16.xpose.msra.mxu0 0
        %1956 = vmatprep.subr.bf16.mxu0 0
        %1957 = vmatpush1.bf16.xpose.msra.mxu0 0
        %1958 = vmatprep.subr.bf16.mxu0 0
        %1959 = vmatpush1.bf16.xpose.msra.mxu0 0
        %1960 = vmatprep.subr.bf16.mxu0 0
        %1961 = vmatpush1.bf16.xpose.msra.mxu0 0
        %1962 = vmatprep.subr.bf16.mxu0 0
        %1963 = vmatpush1.bf16.xpose.msra.mxu0 0
        %1964 = vmatprep.subr.bf16.mxu0 0
        %1965 = vmatpush1.bf16.xpose.msra.mxu0 0
        %1966 = vmatprep.subr.bf16.mxu0 0
        %1967 = vmatpush1.bf16.xpose.msra.mxu0 0
        %1968 = vmatprep.subr.bf16.mxu0 0
        %1969 = vmatpush1.bf16.xpose.msra.mxu0 0
        %1970 = vmatprep.subr.bf16.mxu0 0
        %1971 = vmatpush1.bf16.xpose.msra.mxu0 0
        %1972 = vmatprep.subr.bf16.mxu0 0
        %1973 = vmatpush1.bf16.xpose.msra.mxu0 0
        %1974 = vmatprep.subr.bf16.mxu0 0
        %1975 = vmatpush1.bf16.xpose.msra.mxu0 0
        %1976 = vmatprep.subr.bf16.mxu0 0
        %1977 = vmatpush1.bf16.xpose.msra.mxu0 0
        %1978 = vmatprep.subr.bf16.mxu0 0
        %1979 = vmatpush1.bf16.xpose.msra.mxu0 0
        %1980 = vmatprep.subr.bf16.mxu0 0
        %1981 = vmatpush1.bf16.xpose.msra.mxu0 0
        %1982 = vmatprep.subr.bf16.mxu0 0
        %1983 = vmatpush1.bf16.xpose.msra.mxu0 0
        %1984 = vmatprep.mubr.bf16.mxu0 0
        %1985 = vmatmul.mubr.bf16.gmra.mrb[0].mxu0 %v1947
        %v1986 = vpop.f32.mrb[0].mxu0
        %v1987 = vadd.f32 0.0, %v1986
        %v1988 = vpop.f32.mrb[0].mxu0
        %v1989 = vpop.f32.mrb[0].mxu0
        %v1990 = vpop.f32.mrb[0].mxu0
        %1991 = vdwg.mxu0
        %v1993 = vsel %vm1807, %v1763, 0
        %v1996 = vsel %vm1807, %v1783, 0
        %1998 = vmatprep.subr.bf16.mxu0 0
        %1999 = vmatpush1.bf16.xpose.msra.mxu0 %v1996
        %2000 = vmatprep.subr.bf16.mxu0 0
        %2001 = vmatpush1.bf16.xpose.msra.mxu0 0
        %2002 = vmatprep.subr.bf16.mxu0 0
        %2003 = vmatpush1.bf16.xpose.msra.mxu0 0
        %2004 = vmatprep.subr.bf16.mxu0 0
        %2005 = vmatpush1.bf16.xpose.msra.mxu0 0
        %2006 = vmatprep.subr.bf16.mxu0 0
        %2007 = vmatpush1.bf16.xpose.msra.mxu0 0
        %2008 = vmatprep.subr.bf16.mxu0 0
        %2009 = vmatpush1.bf16.xpose.msra.mxu0 0
        %2010 = vmatprep.subr.bf16.mxu0 0
        %2011 = vmatpush1.bf16.xpose.msra.mxu0 0
        %2012 = vmatprep.subr.bf16.mxu0 0
        %2013 = vmatpush1.bf16.xpose.msra.mxu0 0
        %2014 = vmatprep.subr.bf16.mxu0 0
        %2015 = vmatpush1.bf16.xpose.msra.mxu0 0
        %2016 = vmatprep.subr.bf16.mxu0 0
        %2017 = vmatpush1.bf16.xpose.msra.mxu0 0
        %2018 = vmatprep.subr.bf16.mxu0 0
        %2019 = vmatpush1.bf16.xpose.msra.mxu0 0
        %2020 = vmatprep.subr.bf16.mxu0 0
        %2021 = vmatpush1.bf16.xpose.msra.mxu0 0
        %2022 = vmatprep.subr.bf16.mxu0 0
        %2023 = vmatpush1.bf16.xpose.msra.mxu0 0
        %2024 = vmatprep.subr.bf16.mxu0 0
        %2025 = vmatpush1.bf16.xpose.msra.mxu0 0
        %2026 = vmatprep.subr.bf16.mxu0 0
        %2027 = vmatpush1.bf16.xpose.msra.mxu0 0
        %2028 = vmatprep.subr.bf16.mxu0 0
        %2029 = vmatpush1.bf16.xpose.msra.mxu0 0
        %2030 = vmatprep.mubr.bf16.mxu0 0
        %2031 = vmatmul.mubr.bf16.gmra.mrb[0].mxu0 %v1993
        %v2032 = vpop.f32.mrb[0].mxu0
        %v2033 = vadd.f32 0.0, %v2032
        %v2034 = vpop.f32.mrb[0].mxu0
        %v2035 = vpop.f32.mrb[0].mxu0
        %v2036 = vpop.f32.mrb[0].mxu0
        %2037 = vdwg.mxu0
        %v2039 = vsel %vm1807, %v1764, 0
        %v2042 = vsel %vm1807, %v1784, 0
        %2044 = vmatprep.subr.bf16.mxu0 0
        %2045 = vmatpush1.bf16.xpose.msra.mxu0 %v2042
        %2046 = vmatprep.subr.bf16.mxu0 0
        %2047 = vmatpush1.bf16.xpose.msra.mxu0 0
        %2048 = vmatprep.subr.bf16.mxu0 0
        %2049 = vmatpush1.bf16.xpose.msra.mxu0 0
        %2050 = vmatprep.subr.bf16.mxu0 0
        %2051 = vmatpush1.bf16.xpose.msra.mxu0 0
        %2052 = vmatprep.subr.bf16.mxu0 0
        %2053 = vmatpush1.bf16.xpose.msra.mxu0 0
        %2054 = vmatprep.subr.bf16.mxu0 0
        %2055 = vmatpush1.bf16.xpose.msra.mxu0 0
        %2056 = vmatprep.subr.bf16.mxu0 0
        %2057 = vmatpush1.bf16.xpose.msra.mxu0 0
        %2058 = vmatprep.subr.bf16.mxu0 0
        %2059 = vmatpush1.bf16.xpose.msra.mxu0 0
        %2060 = vmatprep.subr.bf16.mxu0 0
        %2061 = vmatpush1.bf16.xpose.msra.mxu0 0
        %2062 = vmatprep.subr.bf16.mxu0 0
        %2063 = vmatpush1.bf16.xpose.msra.mxu0 0
        %2064 = vmatprep.subr.bf16.mxu0 0
        %2065 = vmatpush1.bf16.xpose.msra.mxu0 0
        %2066 = vmatprep.subr.bf16.mxu0 0
        %2067 = vmatpush1.bf16.xpose.msra.mxu0 0
        %2068 = vmatprep.subr.bf16.mxu0 0
        %2069 = vmatpush1.bf16.xpose.msra.mxu0 0
        %2070 = vmatprep.subr.bf16.mxu0 0
        %2071 = vmatpush1.bf16.xpose.msra.mxu0 0
        %2072 = vmatprep.subr.bf16.mxu0 0
        %2073 = vmatpush1.bf16.xpose.msra.mxu0 0
        %2074 = vmatprep.subr.bf16.mxu0 0
        %2075 = vmatpush1.bf16.xpose.msra.mxu0 0
        %2076 = vmatprep.mubr.bf16.mxu0 0
        %2077 = vmatmul.mubr.bf16.gmra.mrb[0].mxu0 %v2039
        %v2078 = vpop.f32.mrb[0].mxu0
        %v2079 = vadd.f32 0.0, %v2078
        %v2080 = vpop.f32.mrb[0].mxu0
        %v2081 = vpop.f32.mrb[0].mxu0
        %v2082 = vpop.f32.mrb[0].mxu0
        %2083 = vdwg.mxu0
        %v2085 = vsel %vm1807, %v1765, 0
        %v2088 = vsel %vm1807, %v1785, 0
        %2090 = vmatprep.subr.bf16.mxu0 0
        %2091 = vmatpush1.bf16.xpose.msra.mxu0 %v2088
        %2092 = vmatprep.subr.bf16.mxu0 0
        %2093 = vmatpush1.bf16.xpose.msra.mxu0 0
        %2094 = vmatprep.subr.bf16.mxu0 0
        %2095 = vmatpush1.bf16.xpose.msra.mxu0 0
        %2096 = vmatprep.subr.bf16.mxu0 0
        %2097 = vmatpush1.bf16.xpose.msra.mxu0 0
        %2098 = vmatprep.subr.bf16.mxu0 0
        %2099 = vmatpush1.bf16.xpose.msra.mxu0 0
        %2100 = vmatprep.subr.bf16.mxu0 0
        %2101 = vmatpush1.bf16.xpose.msra.mxu0 0
        %2102 = vmatprep.subr.bf16.mxu0 0
        %2103 = vmatpush1.bf16.xpose.msra.mxu0 0
        %2104 = vmatprep.subr.bf16.mxu0 0
        %2105 = vmatpush1.bf16.xpose.msra.mxu0 0
        %2106 = vmatprep.subr.bf16.mxu0 0
        %2107 = vmatpush1.bf16.xpose.msra.mxu0 0
        %2108 = vmatprep.subr.bf16.mxu0 0
        %2109 = vmatpush1.bf16.xpose.msra.mxu0 0
        %2110 = vmatprep.subr.bf16.mxu0 0
        %2111 = vmatpush1.bf16.xpose.msra.mxu0 0
        %2112 = vmatprep.subr.bf16.mxu0 0
        %2113 = vmatpush1.bf16.xpose.msra.mxu0 0
        %2114 = vmatprep.subr.bf16.mxu0 0
        %2115 = vmatpush1.bf16.xpose.msra.mxu0 0
        %2116 = vmatprep.subr.bf16.mxu0 0
        %2117 = vmatpush1.bf16.xpose.msra.mxu0 0
        %2118 = vmatprep.subr.bf16.mxu0 0
        %2119 = vmatpush1.bf16.xpose.msra.mxu0 0
        %2120 = vmatprep.subr.bf16.mxu0 0
        %2121 = vmatpush1.bf16.xpose.msra.mxu0 0
        %2122 = vmatprep.mubr.bf16.mxu0 0
        %2123 = vmatmul.mubr.bf16.gmra.mrb[0].mxu0 %v2085
        %v2124 = vpop.f32.mrb[0].mxu0
        %v2125 = vadd.f32 0.0, %v2124
        %v2126 = vpop.f32.mrb[0].mxu0
        %v2127 = vpop.f32.mrb[0].mxu0
        %v2128 = vpop.f32.mrb[0].mxu0
        %2129 = vdwg.mxu0
        %v2131 = vsel %vm1807, %v1766, 0
        %v2134 = vsel %vm1807, %v1786, 0
        %2136 = vmatprep.subr.bf16.mxu0 0
        %2137 = vmatpush1.bf16.xpose.msra.mxu0 %v2134
        %2138 = vmatprep.subr.bf16.mxu0 0
        %2139 = vmatpush1.bf16.xpose.msra.mxu0 0
        %2140 = vmatprep.subr.bf16.mxu0 0
        %2141 = vmatpush1.bf16.xpose.msra.mxu0 0
        %2142 = vmatprep.subr.bf16.mxu0 0
        %2143 = vmatpush1.bf16.xpose.msra.mxu0 0
        %2144 = vmatprep.subr.bf16.mxu0 0
        %2145 = vmatpush1.bf16.xpose.msra.mxu0 0
        %2146 = vmatprep.subr.bf16.mxu0 0
        %2147 = vmatpush1.bf16.xpose.msra.mxu0 0
        %2148 = vmatprep.subr.bf16.mxu0 0
        %2149 = vmatpush1.bf16.xpose.msra.mxu0 0
        %2150 = vmatprep.subr.bf16.mxu0 0
        %2151 = vmatpush1.bf16.xpose.msra.mxu0 0
        %2152 = vmatprep.subr.bf16.mxu0 0
        %2153 = vmatpush1.bf16.xpose.msra.mxu0 0
        %2154 = vmatprep.subr.bf16.mxu0 0
        %2155 = vmatpush1.bf16.xpose.msra.mxu0 0
        %2156 = vmatprep.subr.bf16.mxu0 0
        %2157 = vmatpush1.bf16.xpose.msra.mxu0 0
        %2158 = vmatprep.subr.bf16.mxu0 0
        %2159 = vmatpush1.bf16.xpose.msra.mxu0 0
        %2160 = vmatprep.subr.bf16.mxu0 0
        %2161 = vmatpush1.bf16.xpose.msra.mxu0 0
        %2162 = vmatprep.subr.bf16.mxu0 0
        %2163 = vmatpush1.bf16.xpose.msra.mxu0 0
        %2164 = vmatprep.subr.bf16.mxu0 0
        %2165 = vmatpush1.bf16.xpose.msra.mxu0 0
        %2166 = vmatprep.subr.bf16.mxu0 0
        %2167 = vmatpush1.bf16.xpose.msra.mxu0 0
        %2168 = vmatprep.mubr.bf16.mxu0 0
        %2169 = vmatmul.mubr.bf16.gmra.mrb[0].mxu0 %v2131
        %v2170 = vpop.f32.mrb[0].mxu0
        %v2171 = vadd.f32 0.0, %v2170
        %v2172 = vpop.f32.mrb[0].mxu0
        %v2173 = vpop.f32.mrb[0].mxu0
        %v2174 = vpop.f32.mrb[0].mxu0
        %2175 = vdwg.mxu0
        %v2176 = vsel %vm1807, %v1849, -inf
        %2177 = vmax.xlane.f32.xlu0 %v2176
        %v2178 = vpop.xlane.xlu0 %2177
        %v2179 = vsel %vm1807, %v1895, -inf
        %2180 = vmax.xlane.f32.xlu0 %v2179
        %v2181 = vpop.xlane.xlu0 %2180
        %v2182 = vsel %vm1807, %v1941, -inf
        %2183 = vmax.xlane.f32.xlu0 %v2182
        %v2184 = vpop.xlane.xlu0 %2183
        %v2185 = vsel %vm1807, %v1987, -inf
        %2186 = vmax.xlane.f32.xlu0 %v2185
        %v2187 = vpop.xlane.xlu0 %2186
        %v2188 = vsel %vm1807, %v2033, -inf
        %2189 = vmax.xlane.f32.xlu0 %v2188
        %v2190 = vpop.xlane.xlu0 %2189
        %v2191 = vsel %vm1807, %v2079, -inf
        %2192 = vmax.xlane.f32.xlu0 %v2191
        %v2193 = vpop.xlane.xlu0 %2192
        %v2194 = vsel %vm1807, %v2125, -inf
        %2195 = vmax.xlane.f32.xlu0 %v2194
        %v2196 = vpop.xlane.xlu0 %2195
        %v2197 = vsel %vm1807, %v2171, -inf
        %2198 = vmax.xlane.f32.xlu0 %v2197
        %v2199 = vpop.xlane.xlu0 %2198
        %v2200 = vsub.f32 %v1849, %v2178
        %v2201 = vsub.f32 %v1895, %v2181
        %v2202 = vsub.f32 %v1941, %v2184
        %v2203 = vsub.f32 %v1987, %v2187
        %v2204 = vsub.f32 %v2033, %v2190
        %v2205 = vsub.f32 %v2079, %v2193
        %v2206 = vsub.f32 %v2125, %v2196
        %v2207 = vsub.f32 %v2171, %v2199
        %v2208 = vmul.f32 %v2200, 1.442695
        %v2209 = vpow.pop %v2208
        %v2210 = vmul.f32 %v2201, 1.442695
        %v2211 = vpow.pop %v2210
        %v2212 = vmul.f32 %v2202, 1.442695
        %v2213 = vpow.pop %v2212
        %v2214 = vmul.f32 %v2203, 1.442695
        %v2215 = vpow.pop %v2214
        %v2216 = vmul.f32 %v2204, 1.442695
        %v2217 = vpow.pop %v2216
        %v2218 = vmul.f32 %v2205, 1.442695
        %v2219 = vpow.pop %v2218
        %v2220 = vmul.f32 %v2206, 1.442695
        %v2221 = vpow.pop %v2220
        %v2222 = vmul.f32 %v2207, 1.442695
        %v2223 = vpow.pop %v2222
        %v2224 = vsel %vm1807, %v2209, 0.0
        %2225 = vadd.xlane.f32.xlu0 %v2224
        %v2226 = vpop.xlane.xlu0 %2225
        %v2227 = vsel %vm1807, %v2211, 0.0
        %2228 = vadd.xlane.f32.xlu0 %v2227
        %v2229 = vpop.xlane.xlu0 %2228
        %v2230 = vsel %vm1807, %v2213, 0.0
        %2231 = vadd.xlane.f32.xlu0 %v2230
        %v2232 = vpop.xlane.xlu0 %2231
        %v2233 = vsel %vm1807, %v2215, 0.0
        %2234 = vadd.xlane.f32.xlu0 %v2233
        %v2235 = vpop.xlane.xlu0 %2234
        %v2236 = vsel %vm1807, %v2217, 0.0
        %2237 = vadd.xlane.f32.xlu0 %v2236
        %v2238 = vpop.xlane.xlu0 %2237
        %v2239 = vsel %vm1807, %v2219, 0.0
        %2240 = vadd.xlane.f32.xlu0 %v2239
        %v2241 = vpop.xlane.xlu0 %2240
        %v2242 = vsel %vm1807, %v2221, 0.0
        %2243 = vadd.xlane.f32.xlu0 %v2242
        %v2244 = vpop.xlane.xlu0 %2243
        %v2245 = vsel %vm1807, %v2223, 0.0
        %2246 = vadd.xlane.f32.xlu0 %v2245
        %v2247 = vpop.xlane.xlu0 %2246
        %v2248 = vrcp.pop %v2226
        %v2249 = vrcp.pop %v2229
        %v2250 = vrcp.pop %v2232
        %v2251 = vrcp.pop %v2235
        %v2252 = vrcp.pop %v2238
        %v2253 = vrcp.pop %v2241
        %v2254 = vrcp.pop %v2244
        %v2255 = vrcp.pop %v2247
        %v2256 = vmul.f32 %v2209, %v2248
        %v2257 = vmul.f32 %v2211, %v2249
        %v2258 = vmul.f32 %v2213, %v2250
        %v2259 = vmul.f32 %v2215, %v2251
        %v2260 = vmul.f32 %v2217, %v2252
        %v2261 = vmul.f32 %v2219, %v2253
        %v2262 = vmul.f32 %v2221, %v2254
        %v2263 = vmul.f32 %v2223, %v2255
        %v2264 = vpack.c.bf16 %v2256, %v2256
        %v2265 = vpack.c.bf16 %v2257, %v2257
        %v2266 = vpack.c.bf16 %v2258, %v2258
        %v2267 = vpack.c.bf16 %v2259, %v2259
        %v2268 = vpack.c.bf16 %v2260, %v2260
        %v2269 = vpack.c.bf16 %v2261, %v2261
        %v2270 = vpack.c.bf16 %v2262, %v2262
        %v2271 = vpack.c.bf16 %v2263, %v2263
        %v2273 = vsel %vm1807, %v2264, 0
        %vm2275 = vcmask 1043456
        %v2277 = vsel %vm2275, %v1799, 0
        %2279 = vmatprep.subr.bf16.mxu0 0
        %2280 = vmatpush1.bf16.msra.mxu0 %v2277
        %2281 = vmatprep.subr.bf16.mxu0 0
        %2282 = vmatpush1.bf16.msra.mxu0 0
        %2283 = vmatprep.subr.bf16.mxu0 0
        %2284 = vmatpush1.bf16.msra.mxu0 0
        %2285 = vmatprep.subr.bf16.mxu0 0
        %2286 = vmatpush1.bf16.msra.mxu0 0
        %2287 = vmatprep.subr.bf16.mxu0 0
        %2288 = vmatpush1.bf16.msra.mxu0 0
        %2289 = vmatprep.subr.bf16.mxu0 0
        %2290 = vmatpush1.bf16.msra.mxu0 0
        %2291 = vmatprep.subr.bf16.mxu0 0
        %2292 = vmatpush1.bf16.msra.mxu0 0
        %2293 = vmatprep.subr.bf16.mxu0 0
        %2294 = vmatpush1.bf16.msra.mxu0 0
        %2295 = vmatprep.subr.bf16.mxu0 0
        %2296 = vmatpush1.bf16.msra.mxu0 0
        %2297 = vmatprep.subr.bf16.mxu0 0
        %2298 = vmatpush1.bf16.msra.mxu0 0
        %2299 = vmatprep.subr.bf16.mxu0 0
        %2300 = vmatpush1.bf16.msra.mxu0 0
        %2301 = vmatprep.subr.bf16.mxu0 0
        %2302 = vmatpush1.bf16.msra.mxu0 0
        %2303 = vmatprep.subr.bf16.mxu0 0
        %2304 = vmatpush1.bf16.msra.mxu0 0
        %2305 = vmatprep.subr.bf16.mxu0 0
        %2306 = vmatpush1.bf16.msra.mxu0 0
        %2307 = vmatprep.subr.bf16.mxu0 0
        %2308 = vmatpush1.bf16.msra.mxu0 0
        %2309 = vmatprep.subr.bf16.mxu0 0
        %2310 = vmatpush1.bf16.msra.mxu0 0
        %2311 = vmatprep.mubr.bf16.mxu0 0
        %2312 = vmatmul.mubr.bf16.gmra.mrb[0].mxu0 %v2273
        %v2313 = vpop.f32.mrb[0].mxu0
        %v2314 = vadd.f32 0.0, %v2313
        %v2315 = vpop.f32.mrb[0].mxu0
        %v2316 = vpop.f32.mrb[0].mxu0
        %v2317 = vpop.f32.mrb[0].mxu0
        %2318 = vdwg.mxu0
        %v2320 = vsel %vm1807, %v2265, 0
        %v2323 = vsel %vm2275, %v1800, 0
        %2325 = vmatprep.subr.bf16.mxu0 0
        %2326 = vmatpush1.bf16.msra.mxu0 %v2323
        %2327 = vmatprep.subr.bf16.mxu0 0
        %2328 = vmatpush1.bf16.msra.mxu0 0
        %2329 = vmatprep.subr.bf16.mxu0 0
        %2330 = vmatpush1.bf16.msra.mxu0 0
        %2331 = vmatprep.subr.bf16.mxu0 0
        %2332 = vmatpush1.bf16.msra.mxu0 0
        %2333 = vmatprep.subr.bf16.mxu0 0
        %2334 = vmatpush1.bf16.msra.mxu0 0
        %2335 = vmatprep.subr.bf16.mxu0 0
        %2336 = vmatpush1.bf16.msra.mxu0 0
        %2337 = vmatprep.subr.bf16.mxu0 0
        %2338 = vmatpush1.bf16.msra.mxu0 0
        %2339 = vmatprep.subr.bf16.mxu0 0
        %2340 = vmatpush1.bf16.msra.mxu0 0
        %2341 = vmatprep.subr.bf16.mxu0 0
        %2342 = vmatpush1.bf16.msra.mxu0 0
        %2343 = vmatprep.subr.bf16.mxu0 0
        %2344 = vmatpush1.bf16.msra.mxu0 0
        %2345 = vmatprep.subr.bf16.mxu0 0
        %2346 = vmatpush1.bf16.msra.mxu0 0
        %2347 = vmatprep.subr.bf16.mxu0 0
        %2348 = vmatpush1.bf16.msra.mxu0 0
        %2349 = vmatprep.subr.bf16.mxu0 0
        %2350 = vmatpush1.bf16.msra.mxu0 0
        %2351 = vmatprep.subr.bf16.mxu0 0
        %2352 = vmatpush1.bf16.msra.mxu0 0
        %2353 = vmatprep.subr.bf16.mxu0 0
        %2354 = vmatpush1.bf16.msra.mxu0 0
        %2355 = vmatprep.subr.bf16.mxu0 0
        %2356 = vmatpush1.bf16.msra.mxu0 0
        %2357 = vmatprep.mubr.bf16.mxu0 0
        %2358 = vmatmul.mubr.bf16.gmra.mrb[0].mxu0 %v2320
        %v2359 = vpop.f32.mrb[0].mxu0
        %v2360 = vadd.f32 0.0, %v2359
        %v2361 = vpop.f32.mrb[0].mxu0
        %v2362 = vpop.f32.mrb[0].mxu0
        %v2363 = vpop.f32.mrb[0].mxu0
        %2364 = vdwg.mxu0
        %v2366 = vsel %vm1807, %v2266, 0
        %v2369 = vsel %vm2275, %v1801, 0
        %2371 = vmatprep.subr.bf16.mxu0 0
        %2372 = vmatpush1.bf16.msra.mxu0 %v2369
        %2373 = vmatprep.subr.bf16.mxu0 0
        %2374 = vmatpush1.bf16.msra.mxu0 0
        %2375 = vmatprep.subr.bf16.mxu0 0
        %2376 = vmatpush1.bf16.msra.mxu0 0
        %2377 = vmatprep.subr.bf16.mxu0 0
        %2378 = vmatpush1.bf16.msra.mxu0 0
        %2379 = vmatprep.subr.bf16.mxu0 0
        %2380 = vmatpush1.bf16.msra.mxu0 0
        %2381 = vmatprep.subr.bf16.mxu0 0
        %2382 = vmatpush1.bf16.msra.mxu0 0
        %2383 = vmatprep.subr.bf16.mxu0 0
        %2384 = vmatpush1.bf16.msra.mxu0 0
        %2385 = vmatprep.subr.bf16.mxu0 0
        %2386 = vmatpush1.bf16.msra.mxu0 0
        %2387 = vmatprep.subr.bf16.mxu0 0
        %2388 = vmatpush1.bf16.msra.mxu0 0
        %2389 = vmatprep.subr.bf16.mxu0 0
        %2390 = vmatpush1.bf16.msra.mxu0 0
        %2391 = vmatprep.subr.bf16.mxu0 0
        %2392 = vmatpush1.bf16.msra.mxu0 0
        %2393 = vmatprep.subr.bf16.mxu0 0
        %2394 = vmatpush1.bf16.msra.mxu0 0
        %2395 = vmatprep.subr.bf16.mxu0 0
        %2396 = vmatpush1.bf16.msra.mxu0 0
        %2397 = vmatprep.subr.bf16.mxu0 0
        %2398 = vmatpush1.bf16.msra.mxu0 0
        %2399 = vmatprep.subr.bf16.mxu0 0
        %2400 = vmatpush1.bf16.msra.mxu0 0
        %2401 = vmatprep.subr.bf16.mxu0 0
        %2402 = vmatpush1.bf16.msra.mxu0 0
        %2403 = vmatprep.mubr.bf16.mxu0 0
        %2404 = vmatmul.mubr.bf16.gmra.mrb[0].mxu0 %v2366
        %v2405 = vpop.f32.mrb[0].mxu0
        %v2406 = vadd.f32 0.0, %v2405
        %v2407 = vpop.f32.mrb[0].mxu0
        %v2408 = vpop.f32.mrb[0].mxu0
        %v2409 = vpop.f32.mrb[0].mxu0
        %2410 = vdwg.mxu0
        %v2412 = vsel %vm1807, %v2267, 0
        %v2415 = vsel %vm2275, %v1802, 0
        %2417 = vmatprep.subr.bf16.mxu0 0
        %2418 = vmatpush1.bf16.msra.mxu0 %v2415
        %2419 = vmatprep.subr.bf16.mxu0 0
        %2420 = vmatpush1.bf16.msra.mxu0 0
        %2421 = vmatprep.subr.bf16.mxu0 0
        %2422 = vmatpush1.bf16.msra.mxu0 0
        %2423 = vmatprep.subr.bf16.mxu0 0
        %2424 = vmatpush1.bf16.msra.mxu0 0
        %2425 = vmatprep.subr.bf16.mxu0 0
        %2426 = vmatpush1.bf16.msra.mxu0 0
        %2427 = vmatprep.subr.bf16.mxu0 0
        %2428 = vmatpush1.bf16.msra.mxu0 0
        %2429 = vmatprep.subr.bf16.mxu0 0
        %2430 = vmatpush1.bf16.msra.mxu0 0
        %2431 = vmatprep.subr.bf16.mxu0 0
        %2432 = vmatpush1.bf16.msra.mxu0 0
        %2433 = vmatprep.subr.bf16.mxu0 0
        %2434 = vmatpush1.bf16.msra.mxu0 0
        %2435 = vmatprep.subr.bf16.mxu0 0
        %2436 = vmatpush1.bf16.msra.mxu0 0
        %2437 = vmatprep.subr.bf16.mxu0 0
        %2438 = vmatpush1.bf16.msra.mxu0 0
        %2439 = vmatprep.subr.bf16.mxu0 0
        %2440 = vmatpush1.bf16.msra.mxu0 0
        %2441 = vmatprep.subr.bf16.mxu0 0
        %2442 = vmatpush1.bf16.msra.mxu0 0
        %2443 = vmatprep.subr.bf16.mxu0 0
        %2444 = vmatpush1.bf16.msra.mxu0 0
        %2445 = vmatprep.subr.bf16.mxu0 0
        %2446 = vmatpush1.bf16.msra.mxu0 0
        %2447 = vmatprep.subr.bf16.mxu0 0
        %2448 = vmatpush1.bf16.msra.mxu0 0
        %2449 = vmatprep.mubr.bf16.mxu0 0
        %2450 = vmatmul.mubr.bf16.gmra.mrb[0].mxu0 %v2412
        %v2451 = vpop.f32.mrb[0].mxu0
        %v2452 = vadd.f32 0.0, %v2451
        %v2453 = vpop.f32.mrb[0].mxu0
        %v2454 = vpop.f32.mrb[0].mxu0
        %v2455 = vpop.f32.mrb[0].mxu0
        %2456 = vdwg.mxu0
        %v2458 = vsel %vm1807, %v2268, 0
        %v2461 = vsel %vm2275, %v1803, 0
        %2463 = vmatprep.subr.bf16.mxu0 0
        %2464 = vmatpush1.bf16.msra.mxu0 %v2461
        %2465 = vmatprep.subr.bf16.mxu0 0
        %2466 = vmatpush1.bf16.msra.mxu0 0
        %2467 = vmatprep.subr.bf16.mxu0 0
        %2468 = vmatpush1.bf16.msra.mxu0 0
        %2469 = vmatprep.subr.bf16.mxu0 0
        %2470 = vmatpush1.bf16.msra.mxu0 0
        %2471 = vmatprep.subr.bf16.mxu0 0
        %2472 = vmatpush1.bf16.msra.mxu0 0
        %2473 = vmatprep.subr.bf16.mxu0 0
        %2474 = vmatpush1.bf16.msra.mxu0 0
        %2475 = vmatprep.subr.bf16.mxu0 0
        %2476 = vmatpush1.bf16.msra.mxu0 0
        %2477 = vmatprep.subr.bf16.mxu0 0
        %2478 = vmatpush1.bf16.msra.mxu0 0
        %2479 = vmatprep.subr.bf16.mxu0 0
        %2480 = vmatpush1.bf16.msra.mxu0 0
        %2481 = vmatprep.subr.bf16.mxu0 0
        %2482 = vmatpush1.bf16.msra.mxu0 0
        %2483 = vmatprep.subr.bf16.mxu0 0
        %2484 = vmatpush1.bf16.msra.mxu0 0
        %2485 = vmatprep.subr.bf16.mxu0 0
        %2486 = vmatpush1.bf16.msra.mxu0 0
        %2487 = vmatprep.subr.bf16.mxu0 0
        %2488 = vmatpush1.bf16.msra.mxu0 0
        %2489 = vmatprep.subr.bf16.mxu0 0
        %2490 = vmatpush1.bf16.msra.mxu0 0
        %2491 = vmatprep.subr.bf16.mxu0 0
        %2492 = vmatpush1.bf16.msra.mxu0 0
        %2493 = vmatprep.subr.bf16.mxu0 0
        %2494 = vmatpush1.bf16.msra.mxu0 0
        %2495 = vmatprep.mubr.bf16.mxu0 0
        %2496 = vmatmul.mubr.bf16.gmra.mrb[0].mxu0 %v2458
        %v2497 = vpop.f32.mrb[0].mxu0
        %v2498 = vadd.f32 0.0, %v2497
        %v2499 = vpop.f32.mrb[0].mxu0
        %v2500 = vpop.f32.mrb[0].mxu0
        %v2501 = vpop.f32.mrb[0].mxu0
        %2502 = vdwg.mxu0
        %v2504 = vsel %vm1807, %v2269, 0
        %v2507 = vsel %vm2275, %v1804, 0
        %2509 = vmatprep.subr.bf16.mxu0 0
        %2510 = vmatpush1.bf16.msra.mxu0 %v2507
        %2511 = vmatprep.subr.bf16.mxu0 0
        %2512 = vmatpush1.bf16.msra.mxu0 0
        %2513 = vmatprep.subr.bf16.mxu0 0
        %2514 = vmatpush1.bf16.msra.mxu0 0
        %2515 = vmatprep.subr.bf16.mxu0 0
        %2516 = vmatpush1.bf16.msra.mxu0 0
        %2517 = vmatprep.subr.bf16.mxu0 0
        %2518 = vmatpush1.bf16.msra.mxu0 0
        %2519 = vmatprep.subr.bf16.mxu0 0
        %2520 = vmatpush1.bf16.msra.mxu0 0
        %2521 = vmatprep.subr.bf16.mxu0 0
        %2522 = vmatpush1.bf16.msra.mxu0 0
        %2523 = vmatprep.subr.bf16.mxu0 0
        %2524 = vmatpush1.bf16.msra.mxu0 0
        %2525 = vmatprep.subr.bf16.mxu0 0
        %2526 = vmatpush1.bf16.msra.mxu0 0
        %2527 = vmatprep.subr.bf16.mxu0 0
        %2528 = vmatpush1.bf16.msra.mxu0 0
        %2529 = vmatprep.subr.bf16.mxu0 0
        %2530 = vmatpush1.bf16.msra.mxu0 0
        %2531 = vmatprep.subr.bf16.mxu0 0
        %2532 = vmatpush1.bf16.msra.mxu0 0
        %2533 = vmatprep.subr.bf16.mxu0 0
        %2534 = vmatpush1.bf16.msra.mxu0 0
        %2535 = vmatprep.subr.bf16.mxu0 0
        %2536 = vmatpush1.bf16.msra.mxu0 0
        %2537 = vmatprep.subr.bf16.mxu0 0
        %2538 = vmatpush1.bf16.msra.mxu0 0
        %2539 = vmatprep.subr.bf16.mxu0 0
        %2540 = vmatpush1.bf16.msra.mxu0 0
        %2541 = vmatprep.mubr.bf16.mxu0 0
        %2542 = vmatmul.mubr.bf16.gmra.mrb[0].mxu0 %v2504
        %v2543 = vpop.f32.mrb[0].mxu0
        %v2544 = vadd.f32 0.0, %v2543
        %v2545 = vpop.f32.mrb[0].mxu0
        %v2546 = vpop.f32.mrb[0].mxu0
        %v2547 = vpop.f32.mrb[0].mxu0
        %2548 = vdwg.mxu0
        %v2550 = vsel %vm1807, %v2270, 0
        %v2553 = vsel %vm2275, %v1805, 0
        %2555 = vmatprep.subr.bf16.mxu0 0
        %2556 = vmatpush1.bf16.msra.mxu0 %v2553
        %2557 = vmatprep.subr.bf16.mxu0 0
        %2558 = vmatpush1.bf16.msra.mxu0 0
        %2559 = vmatprep.subr.bf16.mxu0 0
        %2560 = vmatpush1.bf16.msra.mxu0 0
        %2561 = vmatprep.subr.bf16.mxu0 0
        %2562 = vmatpush1.bf16.msra.mxu0 0
        %2563 = vmatprep.subr.bf16.mxu0 0
        %2564 = vmatpush1.bf16.msra.mxu0 0
        %2565 = vmatprep.subr.bf16.mxu0 0
        %2566 = vmatpush1.bf16.msra.mxu0 0
        %2567 = vmatprep.subr.bf16.mxu0 0
        %2568 = vmatpush1.bf16.msra.mxu0 0
        %2569 = vmatprep.subr.bf16.mxu0 0
        %2570 = vmatpush1.bf16.msra.mxu0 0
        %2571 = vmatprep.subr.bf16.mxu0 0
        %2572 = vmatpush1.bf16.msra.mxu0 0
        %2573 = vmatprep.subr.bf16.mxu0 0
        %2574 = vmatpush1.bf16.msra.mxu0 0
        %2575 = vmatprep.subr.bf16.mxu0 0
        %2576 = vmatpush1.bf16.msra.mxu0 0
        %2577 = vmatprep.subr.bf16.mxu0 0
        %2578 = vmatpush1.bf16.msra.mxu0 0
        %2579 = vmatprep.subr.bf16.mxu0 0
        %2580 = vmatpush1.bf16.msra.mxu0 0
        %2581 = vmatprep.subr.bf16.mxu0 0
        %2582 = vmatpush1.bf16.msra.mxu0 0
        %2583 = vmatprep.subr.bf16.mxu0 0
        %2584 = vmatpush1.bf16.msra.mxu0 0
        %2585 = vmatprep.subr.bf16.mxu0 0
        %2586 = vmatpush1.bf16.msra.mxu0 0
        %2587 = vmatprep.mubr.bf16.mxu0 0
        %2588 = vmatmul.mubr.bf16.gmra.mrb[0].mxu0 %v2550
        %v2589 = vpop.f32.mrb[0].mxu0
        %v2590 = vadd.f32 0.0, %v2589
        %v2591 = vpop.f32.mrb[0].mxu0
        %v2592 = vpop.f32.mrb[0].mxu0
        %v2593 = vpop.f32.mrb[0].mxu0
        %2594 = vdwg.mxu0
        %v2596 = vsel %vm1807, %v2271, 0
        %v2599 = vsel %vm2275, %v1806, 0
        %2601 = vmatprep.subr.bf16.mxu0 0
        %2602 = vmatpush1.bf16.msra.mxu0 %v2599
        %2603 = vmatprep.subr.bf16.mxu0 0
        %2604 = vmatpush1.bf16.msra.mxu0 0
        %2605 = vmatprep.subr.bf16.mxu0 0
        %2606 = vmatpush1.bf16.msra.mxu0 0
        %2607 = vmatprep.subr.bf16.mxu0 0
        %2608 = vmatpush1.bf16.msra.mxu0 0
        %2609 = vmatprep.subr.bf16.mxu0 0
        %2610 = vmatpush1.bf16.msra.mxu0 0
        %2611 = vmatprep.subr.bf16.mxu0 0
        %2612 = vmatpush1.bf16.msra.mxu0 0
        %2613 = vmatprep.subr.bf16.mxu0 0
        %2614 = vmatpush1.bf16.msra.mxu0 0
        %2615 = vmatprep.subr.bf16.mxu0 0
        %2616 = vmatpush1.bf16.msra.mxu0 0
        %2617 = vmatprep.subr.bf16.mxu0 0
        %2618 = vmatpush1.bf16.msra.mxu0 0
        %2619 = vmatprep.subr.bf16.mxu0 0
        %2620 = vmatpush1.bf16.msra.mxu0 0
        %2621 = vmatprep.subr.bf16.mxu0 0
        %2622 = vmatpush1.bf16.msra.mxu0 0
        %2623 = vmatprep.subr.bf16.mxu0 0
        %2624 = vmatpush1.bf16.msra.mxu0 0
        %2625 = vmatprep.subr.bf16.mxu0 0
        %2626 = vmatpush1.bf16.msra.mxu0 0
        %2627 = vmatprep.subr.bf16.mxu0 0
        %2628 = vmatpush1.bf16.msra.mxu0 0
        %2629 = vmatprep.subr.bf16.mxu0 0
        %2630 = vmatpush1.bf16.msra.mxu0 0
        %2631 = vmatprep.subr.bf16.mxu0 0
        %2632 = vmatpush1.bf16.msra.mxu0 0
        %2633 = vmatprep.mubr.bf16.mxu0 0
        %2634 = vmatmul.mubr.bf16.gmra.mrb[0].mxu0 %v2596
        %v2635 = vpop.f32.mrb[0].mxu0
        %v2636 = vadd.f32 0.0, %v2635
        %v2637 = vpop.f32.mrb[0].mxu0
        %v2638 = vpop.f32.mrb[0].mxu0
        %v2639 = vpop.f32.mrb[0].mxu0
        %2640 = vdwg.mxu0
        %v2641 = vcombine.low %v2314, %v2498
        %v2642 = vcombine.high %v2314, %v2498
        %v2644 = vunpack.c.l.s4 1983009808
        %v2645 = vunpack.c.0.s8 %v2644
        %v2646 = vlaneseq
        %v2647 = vshrl.u32 %v2646, 7
        %v2648 = vsub.s32 %v2645, %v2647
        %v2649 = vrot.slane %v2641, %v2648
        %v2651 = vunpack.c.l.s4 1983009808
        %v2652 = vunpack.c.0.s8 %v2651
        %v2653 = vlaneseq
        %v2654 = vshrl.u32 %v2653, 7
        %v2655 = vsub.s32 %v2652, %v2654
        %v2656 = vrot.slane %v2642, %v2655
        %v2657 = vcombine.low %v2406, %v2590
        %v2658 = vcombine.high %v2406, %v2590
        %v2660 = vunpack.c.l.s4 1983009808
        %v2661 = vunpack.c.0.s8 %v2660
        %v2662 = vlaneseq
        %v2663 = vshrl.u32 %v2662, 7
        %v2664 = vsub.s32 %v2661, %v2663
        %v2665 = vrot.slane %v2657, %v2664
        %v2667 = vunpack.c.l.s4 1983009808
        %v2668 = vunpack.c.0.s8 %v2667
        %v2669 = vlaneseq
        %v2670 = vshrl.u32 %v2669, 7
        %v2671 = vsub.s32 %v2668, %v2670
        %v2672 = vrot.slane %v2658, %v2671
        %v2673 = vcombine.low %v2649, %v2665
        %v2674 = vcombine.high %v2649, %v2665
        %v2676 = vunpack.c.l.s4 1934713408
        %v2677 = vunpack.c.0.s8 %v2676
        %v2678 = vlaneseq
        %v2679 = vshrl.u32 %v2678, 7
        %v2680 = vsub.s32 %v2677, %v2679
        %v2681 = vrot.slane %v2673, %v2680
        %v2683 = vunpack.c.l.s4 1934713408
        %v2684 = vunpack.c.0.s8 %v2683
        %v2685 = vlaneseq
        %v2686 = vshrl.u32 %v2685, 7
        %v2687 = vsub.s32 %v2684, %v2686
        %v2688 = vrot.slane %v2674, %v2687
        %v2689 = vcombine.low %v2656, %v2672
        %v2690 = vcombine.high %v2656, %v2672
        %v2692 = vunpack.c.l.s4 1934713408
        %v2693 = vunpack.c.0.s8 %v2692
        %v2694 = vlaneseq
        %v2695 = vshrl.u32 %v2694, 7
        %v2696 = vsub.s32 %v2693, %v2695
        %v2697 = vrot.slane %v2689, %v2696
        %v2699 = vunpack.c.l.s4 1934713408
        %v2700 = vunpack.c.0.s8 %v2699
        %v2701 = vlaneseq
        %v2702 = vshrl.u32 %v2701, 7
        %v2703 = vsub.s32 %v2700, %v2702
        %v2704 = vrot.slane %v2690, %v2703
        %v2705 = vcombine.high %v2681, 0.0
        %v2706 = vcombine.high %v2688, 0.0
        %v2707 = vcombine.high %v2697, 0.0
        %v2708 = vcombine.high %v2704, 0.0
        %v2709 = vcombine.low %v2360, %v2544
        %v2710 = vcombine.high %v2360, %v2544
        %v2712 = vunpack.c.l.s4 1983009808
        %v2713 = vunpack.c.0.s8 %v2712
        %v2714 = vlaneseq
        %v2715 = vshrl.u32 %v2714, 7
        %v2716 = vsub.s32 %v2713, %v2715
        %v2717 = vrot.slane %v2709, %v2716
        %v2719 = vunpack.c.l.s4 1983009808
        %v2720 = vunpack.c.0.s8 %v2719
        %v2721 = vlaneseq
        %v2722 = vshrl.u32 %v2721, 7
        %v2723 = vsub.s32 %v2720, %v2722
        %v2724 = vrot.slane %v2710, %v2723
        %v2725 = vcombine.low %v2452, %v2636
        %v2726 = vcombine.high %v2452, %v2636
        %v2728 = vunpack.c.l.s4 1983009808
        %v2729 = vunpack.c.0.s8 %v2728
        %v2730 = vlaneseq
        %v2731 = vshrl.u32 %v2730, 7
        %v2732 = vsub.s32 %v2729, %v2731
        %v2733 = vrot.slane %v2725, %v2732
        %v2735 = vunpack.c.l.s4 1983009808
        %v2736 = vunpack.c.0.s8 %v2735
        %v2737 = vlaneseq
        %v2738 = vshrl.u32 %v2737, 7
        %v2739 = vsub.s32 %v2736, %v2738
        %v2740 = vrot.slane %v2726, %v2739
        %v2741 = vcombine.low %v2717, %v2733
        %v2742 = vcombine.high %v2717, %v2733
        %v2744 = vunpack.c.l.s4 1934713408
        %v2745 = vunpack.c.0.s8 %v2744
        %v2746 = vlaneseq
        %v2747 = vshrl.u32 %v2746, 7
        %v2748 = vsub.s32 %v2745, %v2747
        %v2749 = vrot.slane %v2741, %v2748
        %v2751 = vunpack.c.l.s4 1934713408
        %v2752 = vunpack.c.0.s8 %v2751
        %v2753 = vlaneseq
        %v2754 = vshrl.u32 %v2753, 7
        %v2755 = vsub.s32 %v2752, %v2754
        %v2756 = vrot.slane %v2742, %v2755
        %v2757 = vcombine.low %v2724, %v2740
        %v2758 = vcombine.high %v2724, %v2740
        %v2760 = vunpack.c.l.s4 1934713408
        %v2761 = vunpack.c.0.s8 %v2760
        %v2762 = vlaneseq
        %v2763 = vshrl.u32 %v2762, 7
        %v2764 = vsub.s32 %v2761, %v2763
        %v2765 = vrot.slane %v2757, %v2764
        %v2767 = vunpack.c.l.s4 1934713408
        %v2768 = vunpack.c.0.s8 %v2767
        %v2769 = vlaneseq
        %v2770 = vshrl.u32 %v2769, 7
        %v2771 = vsub.s32 %v2768, %v2770
        %v2772 = vrot.slane %v2758, %v2771
        %v2773 = vcombine.high %v2749, 0.0
        %v2774 = vcombine.high %v2756, 0.0
        %v2775 = vcombine.high %v2765, 0.0
        %v2776 = vcombine.high %v2772, 0.0
        %v2777 = vcombine.low %v2681, %v2688
        %v2779 = vunpack.c.l.s4 1983009808
        %v2780 = vunpack.c.0.s8 %v2779
        %v2781 = vlaneseq
        %v2782 = vshrl.u32 %v2781, 7
        %v2783 = vsub.s32 %v2780, %v2782
        %v2784 = vrot.slane %v2777, %v2783
        %v2785 = vcombine.low %v2705, %v2706
        %v2787 = vunpack.c.l.s4 1983009808
        %v2788 = vunpack.c.0.s8 %v2787
        %v2789 = vlaneseq
        %v2790 = vshrl.u32 %v2789, 7
        %v2791 = vsub.s32 %v2788, %v2790
        %v2792 = vrot.slane %v2785, %v2791
        %v2793 = vcombine.low %v2697, %v2704
        %v2795 = vunpack.c.l.s4 1983009808
        %v2796 = vunpack.c.0.s8 %v2795
        %v2797 = vlaneseq
        %v2798 = vshrl.u32 %v2797, 7
        %v2799 = vsub.s32 %v2796, %v2798
        %v2800 = vrot.slane %v2793, %v2799
        %v2801 = vcombine.low %v2707, %v2708
        %v2803 = vunpack.c.l.s4 1983009808
        %v2804 = vunpack.c.0.s8 %v2803
        %v2805 = vlaneseq
        %v2806 = vshrl.u32 %v2805, 7
        %v2807 = vsub.s32 %v2804, %v2806
        %v2808 = vrot.slane %v2801, %v2807
        %v2809 = vcombine.low %v2784, %v2792
        %v2810 = vcombine.high %v2784, %v2792
        %v2812 = vunpack.c.l.s4 1934713408
        %v2813 = vunpack.c.0.s8 %v2812
        %v2814 = vlaneseq
        %v2815 = vshrl.u32 %v2814, 7
        %v2816 = vsub.s32 %v2813, %v2815
        %v2817 = vrot.slane %v2809, %v2816
        %v2819 = vunpack.c.l.s4 1934713408
        %v2820 = vunpack.c.0.s8 %v2819
        %v2821 = vlaneseq
        %v2822 = vshrl.u32 %v2821, 7
        %v2823 = vsub.s32 %v2820, %v2822
        %v2824 = vrot.slane %v2810, %v2823
        %v2825 = vcombine.low %v2800, %v2808
        %v2826 = vcombine.high %v2800, %v2808
        %v2828 = vunpack.c.l.s4 1934713408
        %v2829 = vunpack.c.0.s8 %v2828
        %v2830 = vlaneseq
        %v2831 = vshrl.u32 %v2830, 7
        %v2832 = vsub.s32 %v2829, %v2831
        %v2833 = vrot.slane %v2825, %v2832
        %v2835 = vunpack.c.l.s4 1934713408
        %v2836 = vunpack.c.0.s8 %v2835
        %v2837 = vlaneseq
        %v2838 = vshrl.u32 %v2837, 7
        %v2839 = vsub.s32 %v2836, %v2838
        %v2840 = vrot.slane %v2826, %v2839
        %v2841 = vcombine.low %v2817, %v2833
        %v2842 = vcombine.high %v2817, %v2833
        %v2843 = vcombine.low %v2824, %v2840
        %v2844 = vcombine.high %v2824, %v2840
        %v2845 = vcombine.low %v2749, %v2756
        %v2847 = vunpack.c.l.s4 1983009808
        %v2848 = vunpack.c.0.s8 %v2847
        %v2849 = vlaneseq
        %v2850 = vshrl.u32 %v2849, 7
        %v2851 = vsub.s32 %v2848, %v2850
        %v2852 = vrot.slane %v2845, %v2851
        %v2853 = vcombine.low %v2773, %v2774
        %v2855 = vunpack.c.l.s4 1983009808
        %v2856 = vunpack.c.0.s8 %v2855
        %v2857 = vlaneseq
        %v2858 = vshrl.u32 %v2857, 7
        %v2859 = vsub.s32 %v2856, %v2858
        %v2860 = vrot.slane %v2853, %v2859
        %v2861 = vcombine.low %v2765, %v2772
        %v2863 = vunpack.c.l.s4 1983009808
        %v2864 = vunpack.c.0.s8 %v2863
        %v2865 = vlaneseq
        %v2866 = vshrl.u32 %v2865, 7
        %v2867 = vsub.s32 %v2864, %v2866
        %v2868 = vrot.slane %v2861, %v2867
        %v2869 = vcombine.low %v2775, %v2776
        %v2871 = vunpack.c.l.s4 1983009808
        %v2872 = vunpack.c.0.s8 %v2871
        %v2873 = vlaneseq
        %v2874 = vshrl.u32 %v2873, 7
        %v2875 = vsub.s32 %v2872, %v2874
        %v2876 = vrot.slane %v2869, %v2875
        %v2877 = vcombine.low %v2852, %v2860
        %v2878 = vcombine.high %v2852, %v2860
        %v2880 = vunpack.c.l.s4 1934713408
        %v2881 = vunpack.c.0.s8 %v2880
        %v2882 = vlaneseq
        %v2883 = vshrl.u32 %v2882, 7
        %v2884 = vsub.s32 %v2881, %v2883
        %v2885 = vrot.slane %v2877, %v2884
        %v2887 = vunpack.c.l.s4 1934713408
        %v2888 = vunpack.c.0.s8 %v2887
        %v2889 = vlaneseq
        %v2890 = vshrl.u32 %v2889, 7
        %v2891 = vsub.s32 %v2888, %v2890
        %v2892 = vrot.slane %v2878, %v2891
        %v2893 = vcombine.low %v2868, %v2876
        %v2894 = vcombine.high %v2868, %v2876
        %v2896 = vunpack.c.l.s4 1934713408
        %v2897 = vunpack.c.0.s8 %v2896
        %v2898 = vlaneseq
        %v2899 = vshrl.u32 %v2898, 7
        %v2900 = vsub.s32 %v2897, %v2899
        %v2901 = vrot.slane %v2893, %v2900
        %v2903 = vunpack.c.l.s4 1934713408
        %v2904 = vunpack.c.0.s8 %v2903
        %v2905 = vlaneseq
        %v2906 = vshrl.u32 %v2905, 7
        %v2907 = vsub.s32 %v2904, %v2906
        %v2908 = vrot.slane %v2894, %v2907
        %v2909 = vcombine.low %v2885, %v2901
        %v2910 = vcombine.high %v2885, %v2901
        %v2911 = vcombine.low %v2892, %v2908
        %v2912 = vcombine.high %v2892, %v2908
        %2915 = vrot.lane.b32.xlu0 %v2842, 8
        %v2916 = vpop.permute.xlu0 %2915
        %2917 = vrot.lane.b32.xlu0 %v2910, 8
        %v2918 = vpop.permute.xlu0 %2917
        %2923 = vrot.lane.b32.xlu0 %v2843, 16
        %v2924 = vpop.permute.xlu0 %2923
        %2925 = vrot.lane.b32.xlu0 %v2911, 16
        %v2926 = vpop.permute.xlu0 %2925
        %2931 = vrot.lane.b32.xlu0 %v2844, 24
        %v2932 = vpop.permute.xlu0 %2931
        %2933 = vrot.lane.b32.xlu0 %v2912, 24
        %v2934 = vpop.permute.xlu0 %2933
        %v2937 = vsel %vm1807, %v2841, %v2916
        %v2938 = vsel %vm1807, %v2909, %v2918
        %vm2939 = vcmask 130048
        %v2940 = vsel %vm2939, %v2937, %v2924
        %v2941 = vsel %vm2939, %v2938, %v2926
        %vm2942 = vcmask 195584
        %v2943 = vsel %vm2942, %v2940, %v2932
        %v2944 = vsel %vm2942, %v2941, %v2934
        %v2945 = vpack.c.bf16 %v2944, %v2943
        %v2946 = vld [vmem:[%s749] sm:$0xf]
        %v2947 = vld [vmem:[%s749 + $0x4] sm:$0xf]
        %v2948 = vld [vmem:[%s749 + $0x8] sm:$0xf]
        %v2949 = vld [vmem:[%s749 + $0xc] sm:$0xf]
        %v2950 = vld [vmem:[%s752] sm:$0x1]
        %v2952 = vlaneseq
        %v2953 = vshrl.u32 %v2952, 7
        %v2954 = vsub.s32 0, %v2953
        %v2955 = vrot.slane %v2950, %v2954
        %v2961 = vunpack.c.l.b16 %v2946
        %v2962 = vunpack.c.l.b16 %v2947
        %v2963 = vunpack.c.l.b16 %v2948
        %v2964 = vunpack.c.l.b16 %v2949
        %v2965 = vpack.c.b16 %v2962, %v2961
        %v2966 = vpack.c.b16 %v2964, %v2963
        %v2970 = vsel %vm806, %v2945, 0
        %2972 = vmatprep.subr.bf16.mxu0 0
        %2973 = vmatpush1.bf16.msra.mxu0 %v2965
        %2974 = vmatprep.subr.bf16.mxu0 0
        %2975 = vmatpush1.bf16.msra.mxu0 %v2966
        %2976 = vmatprep.subr.bf16.mxu0 0
        %2977 = vmatpush1.bf16.msra.mxu0 0
        %2978 = vmatprep.subr.bf16.mxu0 0
        %2979 = vmatpush1.bf16.msra.mxu0 0
        %2980 = vmatprep.subr.bf16.mxu0 0
        %2981 = vmatpush1.bf16.msra.mxu0 0
        %2982 = vmatprep.subr.bf16.mxu0 0
        %2983 = vmatpush1.bf16.msra.mxu0 0
        %2984 = vmatprep.subr.bf16.mxu0 0
        %2985 = vmatpush1.bf16.msra.mxu0 0
        %2986 = vmatprep.subr.bf16.mxu0 0
        %2987 = vmatpush1.bf16.msra.mxu0 0
        %2988 = vmatprep.subr.bf16.mxu0 0
        %2989 = vmatpush1.bf16.msra.mxu0 0
        %2990 = vmatprep.subr.bf16.mxu0 0
        %2991 = vmatpush1.bf16.msra.mxu0 0
        %2992 = vmatprep.subr.bf16.mxu0 0
        %2993 = vmatpush1.bf16.msra.mxu0 0
        %2994 = vmatprep.subr.bf16.mxu0 0
        %2995 = vmatpush1.bf16.msra.mxu0 0
        %2996 = vmatprep.subr.bf16.mxu0 0
        %2997 = vmatpush1.bf16.msra.mxu0 0
        %2998 = vmatprep.subr.bf16.mxu0 0
        %2999 = vmatpush1.bf16.msra.mxu0 0
        %3000 = vmatprep.subr.bf16.mxu0 0
        %3001 = vmatpush1.bf16.msra.mxu0 0
        %3002 = vmatprep.subr.bf16.mxu0 0
        %3003 = vmatpush1.bf16.msra.mxu0 0
        %3004 = vmatprep.mubr.bf16.mxu0 0
        %3005 = vmatmul.mubr.bf16.gmra.mrb[0].mxu0 %v2970
        %v3006 = vpop.f32.mrb[0].mxu0
        %v3007 = vadd.f32 %v2955, %v3006
        %v3008 = vpop.f32.mrb[0].mxu0
        %v3009 = vpop.f32.mrb[0].mxu0
        %v3010 = vadd.f32 %v2955, %v3009
        %v3011 = vpop.f32.mrb[0].mxu0
        %3012 = vdwg.mxu0
        %v3013 = vadd.f32 %v780, %v3007
        %v3014 = vadd.f32 %v781, %v3010
        %v3015 = vld [vmem:[%s617] sm:$0x1]
        %v3016 = vld [vmem:[%s625] sm:$0x1]
        %v3017 = vsel %vm806, %v3013, 0.0
        %3018 = vadd.xlane.f32.xlu0 %v3017
        %v3019 = vpop.xlane.xlu0 %3018
        %v3020 = vsel %vm806, %v3014, 0.0
        %3021 = vadd.xlane.f32.xlu0 %v3020
        %v3022 = vpop.xlane.xlu0 %3021
        %v3023 = vrcp.pop 32.0
        %v3024 = vmul.f32 %v3019, %v3023
        %v3025 = vmul.f32 %v3022, %v3023
        %v3026 = vsub.f32 %v3013, %v3024
        %v3027 = vsub.f32 %v3014, %v3025
        %v3028 = vmul.f32 %v3026, %v3026
        %v3029 = vmul.f32 %v3027, %v3027
        %v3030 = vsel %vm806, %v3028, 0.0
        %3031 = vadd.xlane.f32.xlu0 %v3030
        %v3032 = vpop.xlane.xlu0 %3031
        %v3033 = vsel %vm806, %v3029, 0.0
        %3034 = vadd.xlane.f32.xlu0 %v3033
        %v3035 = vpop.xlane.xlu0 %3034
        %v3036 = vmul.f32 %v3032, %v3023
        %v3037 = vmul.f32 %v3035, %v3023
        %v3038 = vadd.f32 %v3036, 1e-05
        %v3039 = vadd.f32 %v3037, 1e-05
        %v3040 = vrsqrt.pop %v3038
        %v3041 = vrsqrt.pop %v3039
        %v3042 = vmul.f32 %v3026, %v3040
        %v3043 = vmul.f32 %v3027, %v3041
        %v3045 = vlaneseq
        %v3046 = vshrl.u32 %v3045, 7
        %v3047 = vsub.s32 0, %v3046
        %v3048 = vrot.slane %v3015, %v3047
        %v3050 = vmul.f32 %v3042, %v3048
        %v3051 = vmul.f32 %v3043, %v3048
        %v3053 = vlaneseq
        %v3054 = vshrl.u32 %v3053, 7
        %v3055 = vsub.s32 0, %v3054
        %v3056 = vrot.slane %v3016, %v3055
        %v3058 = vadd.f32 %v3050, %v3056
        %v3059 = vadd.f32 %v3051, %v3056
        %v3060 = vpack.c.bf16 %v3059, %v3058
        %v3061 = vld [vmem:[%s757] sm:$0xf]
        %v3062 = vld [vmem:[%s757 + $0x4] sm:$0xf]
        %v3063 = vld [vmem:[%s757 + $0x8] sm:$0xf]
        %v3064 = vld [vmem:[%s757 + $0xc] sm:$0xf]
        %v3065 = vld [vmem:[%s633] sm:$0x1]
        %v3067 = vlaneseq
        %v3068 = vshrl.u32 %v3067, 7
        %v3069 = vsub.s32 0, %v3068
        %v3070 = vrot.slane %v3065, %v3069
        %v3076 = vunpack.c.l.b16 %v3061
        %v3077 = vunpack.c.l.b16 %v3062
        %v3078 = vunpack.c.l.b16 %v3063
        %v3079 = vunpack.c.l.b16 %v3064
        %v3080 = vpack.c.b16 %v3077, %v3076
        %v3081 = vpack.c.b16 %v3079, %v3078
        %v3085 = vsel %vm806, %v3060, 0
        %3087 = vmatprep.subr.bf16.mxu0 0
        %3088 = vmatpush1.bf16.msra.mxu0 %v3080
        %3089 = vmatprep.subr.bf16.mxu0 0
        %3090 = vmatpush1.bf16.msra.mxu0 %v3081
        %3091 = vmatprep.subr.bf16.mxu0 0
        %3092 = vmatpush1.bf16.msra.mxu0 0
        %3093 = vmatprep.subr.bf16.mxu0 0
        %3094 = vmatpush1.bf16.msra.mxu0 0
        %3095 = vmatprep.subr.bf16.mxu0 0
        %3096 = vmatpush1.bf16.msra.mxu0 0
        %3097 = vmatprep.subr.bf16.mxu0 0
        %3098 = vmatpush1.bf16.msra.mxu0 0
        %3099 = vmatprep.subr.bf16.mxu0 0
        %3100 = vmatpush1.bf16.msra.mxu0 0
        %3101 = vmatprep.subr.bf16.mxu0 0
        %3102 = vmatpush1.bf16.msra.mxu0 0
        %3103 = vmatprep.subr.bf16.mxu0 0
        %3104 = vmatpush1.bf16.msra.mxu0 0
        %3105 = vmatprep.subr.bf16.mxu0 0
        %3106 = vmatpush1.bf16.msra.mxu0 0
        %3107 = vmatprep.subr.bf16.mxu0 0
        %3108 = vmatpush1.bf16.msra.mxu0 0
        %3109 = vmatprep.subr.bf16.mxu0 0
        %3110 = vmatpush1.bf16.msra.mxu0 0
        %3111 = vmatprep.subr.bf16.mxu0 0
        %3112 = vmatpush1.bf16.msra.mxu0 0
        %3113 = vmatprep.subr.bf16.mxu0 0
        %3114 = vmatpush1.bf16.msra.mxu0 0
        %3115 = vmatprep.subr.bf16.mxu0 0
        %3116 = vmatpush1.bf16.msra.mxu0 0
        %3117 = vmatprep.subr.bf16.mxu0 0
        %3118 = vmatpush1.bf16.msra.mxu0 0
        %3119 = vmatprep.mubr.bf16.mxu0 0
        %3120 = vmatmul.mubr.bf16.gmra.mrb[0].mxu0 %v3085
        %v3121 = vpop.f32.mrb[0].mxu0
        %v3122 = vadd.f32 %v3070, %v3121
        %v3123 = vpop.f32.mrb[0].mxu0
        %v3124 = vpop.f32.mrb[0].mxu0
        %v3125 = vadd.f32 %v3070, %v3124
        %v3126 = vpop.f32.mrb[0].mxu0
        %3127 = vdwg.mxu0
        %v3128 = vmax.f32 %v3122, 0.0
        %v3129 = vmax.f32 %v3125, 0.0
        %v3130 = vpack.c.bf16 %v3129, %v3128
        %v3131 = vld [vmem:[%s762] sm:$0xf]
        %v3132 = vld [vmem:[%s762 + $0x4] sm:$0xf]
        %v3133 = vld [vmem:[%s762 + $0x8] sm:$0xf]
        %v3134 = vld [vmem:[%s762 + $0xc] sm:$0xf]
        %v3135 = vld [vmem:[%s762 + $0x10] sm:$0xf]
        %v3136 = vld [vmem:[%s762 + $0x14] sm:$0xf]
        %v3137 = vld [vmem:[%s762 + $0x18] sm:$0xf]
        %v3138 = vld [vmem:[%s762 + $0x1c] sm:$0xf]
        %v3139 = vld [vmem:[%s641] sm:$0x1]
        %v3141 = vlaneseq
        %v3142 = vshrl.u32 %v3141, 7
        %v3143 = vsub.s32 0, %v3142
        %v3144 = vrot.slane %v3139, %v3143
        %v3154 = vunpack.c.l.b16 %v3131
        %v3155 = vunpack.c.l.b16 %v3132
        %v3156 = vunpack.c.l.b16 %v3133
        %v3157 = vunpack.c.l.b16 %v3134
        %v3158 = vunpack.c.l.b16 %v3135
        %v3159 = vunpack.c.l.b16 %v3136
        %v3160 = vunpack.c.l.b16 %v3137
        %v3161 = vunpack.c.l.b16 %v3138
        %v3162 = vpack.c.b16 %v3155, %v3154
        %v3163 = vpack.c.b16 %v3157, %v3156
        %v3164 = vpack.c.b16 %v3159, %v3158
        %v3165 = vpack.c.b16 %v3161, %v3160
        %vm3170 = vcmask 523264
        %v3172 = vsel %vm3170, %v3130, 0
        %3174 = vmatprep.subr.bf16.mxu0 0
        %3175 = vmatpush1.bf16.msra.mxu0 %v3162
        %3176 = vmatprep.subr.bf16.mxu0 0
        %3177 = vmatpush1.bf16.msra.mxu0 %v3163
        %3178 = vmatprep.subr.bf16.mxu0 0
        %3179 = vmatpush1.bf16.msra.mxu0 %v3164
        %3180 = vmatprep.subr.bf16.mxu0 0
        %3181 = vmatpush1.bf16.msra.mxu0 %v3165
        %3182 = vmatprep.subr.bf16.mxu0 0
        %3183 = vmatpush1.bf16.msra.mxu0 0
        %3184 = vmatprep.subr.bf16.mxu0 0
        %3185 = vmatpush1.bf16.msra.mxu0 0
        %3186 = vmatprep.subr.bf16.mxu0 0
        %3187 = vmatpush1.bf16.msra.mxu0 0
        %3188 = vmatprep.subr.bf16.mxu0 0
        %3189 = vmatpush1.bf16.msra.mxu0 0
        %3190 = vmatprep.subr.bf16.mxu0 0
        %3191 = vmatpush1.bf16.msra.mxu0 0
        %3192 = vmatprep.subr.bf16.mxu0 0
        %3193 = vmatpush1.bf16.msra.mxu0 0
        %3194 = vmatprep.subr.bf16.mxu0 0
        %3195 = vmatpush1.bf16.msra.mxu0 0
        %3196 = vmatprep.subr.bf16.mxu0 0
        %3197 = vmatpush1.bf16.msra.mxu0 0
        %3198 = vmatprep.subr.bf16.mxu0 0
        %3199 = vmatpush1.bf16.msra.mxu0 0
        %3200 = vmatprep.subr.bf16.mxu0 0
        %3201 = vmatpush1.bf16.msra.mxu0 0
        %3202 = vmatprep.subr.bf16.mxu0 0
        %3203 = vmatpush1.bf16.msra.mxu0 0
        %3204 = vmatprep.subr.bf16.mxu0 0
        %3205 = vmatpush1.bf16.msra.mxu0 0
        %3206 = vmatprep.mubr.bf16.mxu0 0
        %3207 = vmatmul.mubr.bf16.gmra.mrb[0].mxu0 %v3172
        %v3208 = vpop.f32.mrb[0].mxu0
        %v3209 = vadd.f32 %v3144, %v3208
        %v3210 = vpop.f32.mrb[0].mxu0
        %v3211 = vpop.f32.mrb[0].mxu0
        %v3212 = vadd.f32 %v3144, %v3211
        %v3213 = vpop.f32.mrb[0].mxu0
        %3214 = vdwg.mxu0
        %v3215 = vadd.f32 %v3058, %v3209
        %v3216 = vadd.f32 %v3059, %v3212
        %v3217 = vld [vmem:[%s765] sm:$0x1]
        %v3218 = vld [vmem:[%s768] sm:$0x1]
        %v3219 = vsel %vm806, %v3215, 0.0
        %3220 = vadd.xlane.f32.xlu0 %v3219
        %v3221 = vpop.xlane.xlu0 %3220
        %v3222 = vsel %vm806, %v3216, 0.0
        %3223 = vadd.xlane.f32.xlu0 %v3222
        %v3224 = vpop.xlane.xlu0 %3223
        %v3225 = vmul.f32 %v3221, %v3023
        %v3226 = vmul.f32 %v3224, %v3023
        %v3227 = vsub.f32 %v3215, %v3225
        %v3228 = vsub.f32 %v3216, %v3226
        %v3229 = vmul.f32 %v3227, %v3227
        %v3230 = vmul.f32 %v3228, %v3228
        %v3231 = vsel %vm806, %v3229, 0.0
        %3232 = vadd.xlane.f32.xlu0 %v3231
        %v3233 = vpop.xlane.xlu0 %3232
        %v3234 = vsel %vm806, %v3230, 0.0
        %3235 = vadd.xlane.f32.xlu0 %v3234
        %v3236 = vpop.xlane.xlu0 %3235
        %v3237 = vmul.f32 %v3233, %v3023
        %v3238 = vmul.f32 %v3236, %v3023
        %v3239 = vadd.f32 %v3237, 1e-05
        %v3240 = vadd.f32 %v3238, 1e-05
        %v3241 = vrsqrt.pop %v3239
        %v3242 = vrsqrt.pop %v3240
        %v3243 = vmul.f32 %v3227, %v3241
        %v3244 = vmul.f32 %v3228, %v3242
        %v3246 = vlaneseq
        %v3247 = vshrl.u32 %v3246, 7
        %v3248 = vsub.s32 0, %v3247
        %v3249 = vrot.slane %v3217, %v3248
        %v3251 = vmul.f32 %v3243, %v3249
        %v3252 = vmul.f32 %v3244, %v3249
        %v3254 = vlaneseq
        %v3255 = vshrl.u32 %v3254, 7
        %v3256 = vsub.s32 0, %v3255
        %v3257 = vrot.slane %v3218, %v3256
        %v3259 = vadd.f32 %v3251, %v3257
        %v3260 = vadd.f32 %v3252, %v3257
        %3261 = vst.msk [vmem:[#allocation2] sm:$0xff] %vm806, %v3259
        %3262 = vst.msk [vmem:[#allocation2 + $0x8] sm:$0xff] %vm806, %v3260
        %p3263 = scmp.eq.s32.totalorder %s41, 1
        // Predicated region
        $region101: #{tpu_custom_call.1} parent=79 // pred_check
          %p3264 = pneg %p3263
        $region102: #{tpu_custom_call.1} parent=79 // pred_check_branch
          %3266 = sbr.rel (%p3264) target = $region104
        $region103: #{tpu_custom_call.1} parent=79 // pred_region
          %v3267 = vsel %vm806, %v3259, 0.0
          %v3268 = vrot.slane %v3267, 4
          %v3269 = vadd.f32 %v3267, %v3268
          %v3270 = vrot.slane %v3269, 2
          %v3271 = vadd.f32 %v3269, %v3270
          %v3272 = vrot.slane %v3271, 1
          %v3273 = vadd.f32 %v3271, %v3272
          %v3274 = vsel %vm806, %v3260, 0.0
          %v3275 = vrot.slane %v3274, 4
          %v3276 = vadd.f32 %v3274, %v3275
          %v3277 = vrot.slane %v3276, 2
          %v3278 = vadd.f32 %v3276, %v3277
          %v3279 = vrot.slane %v3278, 1
          %v3280 = vadd.f32 %v3278, %v3279
          %v3281 = vrcp.pop 8.0
          %v3282 = vmul.f32 %v3273, %v3281
          %v3283 = vmul.f32 %v3280, %v3281
          %v3284 = vpack.c.bf16 %v3282, %v3282
          %v3285 = vpack.c.bf16 %v3283, %v3283
          %v3286 = vld [vmem:[%s13] sm:$0xf]
          %v3287 = vld [vmem:[%s13 + $0x4] sm:$0xf]
          %v3288 = vld [vmem:[%s13 + $0x8] sm:$0xf]
          %v3289 = vld [vmem:[%s13 + $0xc] sm:$0xf]
          %v3290 = vld [vmem:[%s14] sm:$0x1]
          %v3292 = vlaneseq
          %v3293 = vshrl.u32 %v3292, 7
          %v3294 = vsub.s32 0, %v3293
          %v3295 = vrot.slane %v3290, %v3294
          %v3299 = vunpack.c.l.b16 %v3284
          %v3300 = vunpack.c.l.b16 %v3285
          %vm3301 = vcmask 1041409
          %v3302 = vsel %vm3301, %v3300, %v3299
          %v3303 = vpack.c.b16 %v3302, %v3302
          %v3308 = vunpack.c.l.b16 %v3286
          %v3309 = vunpack.c.l.b16 %v3287
          %v3310 = vunpack.c.l.b16 %v3288
          %v3311 = vunpack.c.l.b16 %v3289
          %v3312 = vpack.c.b16 %v3309, %v3308
          %v3313 = vpack.c.b16 %v3311, %v3310
          %v3317 = vsel %vm806, %v3303, 0
          %3319 = vmatprep.subr.bf16.mxu0 0
          %3320 = vmatpush1.bf16.msra.mxu0 %v3312
          %3321 = vmatprep.subr.bf16.mxu0 0
          %3322 = vmatpush1.bf16.msra.mxu0 %v3313
          %3323 = vmatprep.subr.bf16.mxu0 0
          %3324 = vmatpush1.bf16.msra.mxu0 0
          %3325 = vmatprep.subr.bf16.mxu0 0
          %3326 = vmatpush1.bf16.msra.mxu0 0
          %3327 = vmatprep.subr.bf16.mxu0 0
          %3328 = vmatpush1.bf16.msra.mxu0 0
          %3329 = vmatprep.subr.bf16.mxu0 0
          %3330 = vmatpush1.bf16.msra.mxu0 0
          %3331 = vmatprep.subr.bf16.mxu0 0
          %3332 = vmatpush1.bf16.msra.mxu0 0
          %3333 = vmatprep.subr.bf16.mxu0 0
          %3334 = vmatpush1.bf16.msra.mxu0 0
          %3335 = vmatprep.subr.bf16.mxu0 0
          %3336 = vmatpush1.bf16.msra.mxu0 0
          %3337 = vmatprep.subr.bf16.mxu0 0
          %3338 = vmatpush1.bf16.msra.mxu0 0
          %3339 = vmatprep.subr.bf16.mxu0 0
          %3340 = vmatpush1.bf16.msra.mxu0 0
          %3341 = vmatprep.subr.bf16.mxu0 0
          %3342 = vmatpush1.bf16.msra.mxu0 0
          %3343 = vmatprep.subr.bf16.mxu0 0
          %3344 = vmatpush1.bf16.msra.mxu0 0
          %3345 = vmatprep.subr.bf16.mxu0 0
          %3346 = vmatpush1.bf16.msra.mxu0 0
          %3347 = vmatprep.subr.bf16.mxu0 0
          %3348 = vmatpush1.bf16.msra.mxu0 0
          %3349 = vmatprep.subr.bf16.mxu0 0
          %3350 = vmatpush1.bf16.msra.mxu0 0
          %3351 = vmatprep.mubr.bf16.mxu0 0
          %3352 = vmatmul.mubr.bf16.gmra.mrb[0].mxu0 %v3317
          %v3353 = vpop.f32.mrb[0].mxu0
          %v3354 = vadd.f32 %v3295, %v3353
          %v3355 = vpop.f32.mrb[0].mxu0
          %v3356 = vpop.f32.mrb[0].mxu0
          %v3357 = vpop.f32.mrb[0].mxu0
          %3358 = vdwg.mxu0
          %v3361 = vunpack.c.l.s4 1966171168
          %v3362 = vunpack.c.0.s8 %v3361
          %v3363 = vlaneseq
          %v3364 = vshrl.u32 %v3363, 7
          %v3365 = vsub.s32 %v3362, %v3364
          %v3366 = vrot.slane %v3354, %v3365
          %v3367 = vcombine.high %v3366, %v3366
          %v3369 = vunpack.c.l.s4 1966171168
          %v3370 = vunpack.c.0.s8 %v3369
          %v3371 = vlaneseq
          %v3372 = vshrl.u32 %v3371, 7
          %v3373 = vsub.s32 %v3370, %v3372
          %v3374 = vrot.slane %v3366, %v3373
          %v3376 = vunpack.c.l.s4 1966171168
          %v3377 = vunpack.c.0.s8 %v3376
          %v3378 = vlaneseq
          %v3379 = vshrl.u32 %v3378, 7
          %v3380 = vsub.s32 %v3377, %v3379
          %v3381 = vrot.slane %v3367, %v3380
          %vm3384 = vcmask 32768
          %3385 = vst.msk [vmem:[#allocation11] sm:$0x1] %vm3384, %v3374
          %3386 = vst.msk [vmem:[#allocation11 + $0x1] sm:$0x1] %vm3384, %v3381
        $region104: #{tpu_custom_call.1} parent=79 // pred_fallthru
          _
        // Predicated region
        $region105: #{tpu_custom_call.1} parent=79 // pred_check
          %p3387 = pneg %p446
        $region106: #{tpu_custom_call.1} parent=79 // pred_check_branch
          %3389 = sbr.rel (%p3387) target = $region108
        $region107: #{tpu_custom_call.1} parent=79 // pred_region
          %s3390 = smul.u32 2, %s40
          %s3392 = ssub.s32 32, 32
          %3393 = vsyncadd [#allocation5], %s3392
          %s3394 = smul.addr %s3390, 16
          %s3395 = scalar_lea.hbm %s15, %s3394
          %s3396 = sshll.u32 [#allocation11], 4
          %s3397 = int_to_ptr.vmem [resolvable:$true] %s3396
          %3402 = dma.vmem_to_hbm [thread:$0]  %s3397, 32, %s3395, [#allocation5], 16, 16, 1
        $region108: #{tpu_custom_call.1} parent=79 // pred_fallthru
          _
        // Predicated region
        $region109: #{tpu_custom_call.1} parent=79 // pred_check
          %p3403 = pneg %p446
        $region110: #{tpu_custom_call.1} parent=79 // pred_check_branch
          %3405 = sbr.rel (%p3403) target = $region112
        $region111: #{tpu_custom_call.1} parent=79 // pred_region
          %3406 = dma.done [#allocation5], 32
        $region112: #{tpu_custom_call.1} parent=79 // pred_fallthru
          _
      $region80: #{tpu_custom_call.1} parent=5 // pred_fallthru
        _
      %p3407 = scmp.le.s32.totalorder 2, %s31
      // Predicated region
      $region113: #{tpu_custom_call.1} parent=5 // pred_check
        %p3408 = pneg %p3407
      $region114: #{tpu_custom_call.1} parent=5 // pred_check_branch
        %3410 = sbr.rel (%p3408) target = $region116
      $region115: #{tpu_custom_call.1} parent=5 // pred_region
        %s3411 = ssub.s32 %s31, 2
      $region116: #{tpu_custom_call.1} parent=5 // pred_fallthru
        _
    $region6: #{tpu_custom_call.1} parent=1 // loop_footer
      %s35 = sadd.s32 1, %s31
    $region7: #{tpu_custom_call.1} parent=1 // loop_footer_branch
      %30 = sbr.rel target = $region3
    $region8: #{tpu_custom_call.1} parent=1 // loop_exit
      _
    %3412 = vsyncpa [#allocation4], 1
    %s3413 = scalar_lea.sflag [#allocation4], 1
    %3414 = vsyncpa %s3413, 1
    %3415 = vsyncpa [#allocation7], 1
    %s3416 = scalar_lea.sflag [#allocation7], 1
    %3417 = vsyncpa %s3416, 1
    %3418 = vsyncpa [#allocation10], 1
    %s3419 = scalar_lea.sflag [#allocation10], 1
    %3420 = vsyncpa %s3419, 1
    %3421 = vsyncpa [#allocation5], 1
    %s3422 = scalar_lea.sflag [#allocation5], 1
    %3423 = vsyncpa %s3422, 1

// kernel: tpu_custom_call.1
$region0: #{tpu_custom_call.1}
  #allocation0 [shape = 'u32[]', space=smem, size = 0x4, offset = 0x4, fixed_abs, tag = 'smem constant byte address 0x4 - core index']
  #allocation1 [shape = 'u32[144,128]{1,0:T(1,128)}', space=vmem, size = 0x12000, scoped, tag = 'internal scratch']
  #allocation2 [shape = 'f32[16,32]{1,0:T(8,128)}', space=vmem, size = 0x2000, scoped, tag = 'scratch operand']
  %s0 = inlined_call_operand.vmem [shape: f32[2,8,32], index: 0, kind: input, shape index: {}]
  %s1 = inlined_call_operand.vmem [shape: bf16[2,32,96], index: 1, kind: input, shape index: {}]
  %s2 = inlined_call_operand.vmem [shape: f32[2,1,96], index: 2, kind: input, shape index: {}]
  %s3 = inlined_call_operand.vmem [shape: bf16[2,32,32], index: 3, kind: input, shape index: {}]
  %s4 = inlined_call_operand.vmem [shape: f32[2,1,32], index: 4, kind: input, shape index: {}]
  %s5 = inlined_call_operand.hbm [shape: f32[2,1,32], index: 5, kind: input, shape index: {}]
  %s6 = inlined_call_operand.hbm [shape: f32[2,1,32], index: 6, kind: input, shape index: {}]
  %s7 = inlined_call_operand.vmem [shape: bf16[2,32,64], index: 7, kind: input, shape index: {}]
  %s8 = inlined_call_operand.hbm [shape: f32[2,1,64], index: 8, kind: input, shape index: {}]
  %s9 = inlined_call_operand.vmem [shape: bf16[2,64,32], index: 9, kind: input, shape index: {}]
  %s10 = inlined_call_operand.hbm [shape: f32[2,1,32], index: 10, kind: input, shape index: {}]
  %s11 = inlined_call_operand.vmem [shape: f32[2,1,32], index: 11, kind: input, shape index: {}]
  %s12 = inlined_call_operand.vmem [shape: f32[2,1,32], index: 12, kind: input, shape index: {}]
  %s13 = inlined_call_operand.vmem [shape: bf16[32,5], index: 13, kind: input, shape index: {}]
  %s14 = inlined_call_operand.vmem [shape: f32[1,5], index: 14, kind: input, shape index: {}]
  %s15 = inlined_call_operand.hbm [shape: f32[2,1,5], index: 15, kind: output, shape index: {}]
  %s16 = sld [smem:[#allocation0]]
  $region117: #{tpu_custom_call.1} parent=0
    _
  %s18 = ssub.s32 1, %s16
  %s19 = scalar_select 0, %s18, %s16
  $region1: #{tpu_custom_call.1} parent=0
    #allocation3 [shape = 'u8[1024]{0}', space=vmem, size = 0x400, scoped, tag = 'input window, operand 5']
    #allocation4 [shape = 's32[2]{0}', space=sflag, size = 0x8, scoped, tag = 'scoped memory for tpu_custom_call.1']
    #allocation5 [shape = 's32[2]{0}', space=sflag, size = 0x8, scoped, tag = 'scoped memory for tpu_custom_call.1']
    #allocation6 [shape = 'u8[1024]{0}', space=vmem, size = 0x400, scoped, tag = 'input window, operand 6']
    #allocation7 [shape = 's32[2]{0}', space=sflag, size = 0x8, scoped, tag = 'scoped memory for tpu_custom_call.1']
    #allocation8 [shape = 'u8[1024]{0}', space=vmem, size = 0x400, scoped, tag = 'input window, operand 8']
    #allocation9 [shape = 'u8[1024]{0}', space=vmem, size = 0x400, scoped, tag = 'input window, operand 10']
    #allocation10 [shape = 's32[2]{0}', space=sflag, size = 0x8, scoped, tag = 'scoped memory for tpu_custom_call.1']
    #allocation11 [shape = 'u8[1024]{0}', space=vmem, size = 0x400, scoped, tag = 'output window, operand 0, single buffered']
    %20 = vsyncpa [#allocation4], 0
    %s21 = scalar_lea.sflag [#allocation4], 1
    %22 = vsyncpa %s21, 0
    %23 = vsyncpa [#allocation7], 0
    %s24 = scalar_lea.sflag [#allocation7], 1
    %25 = vsyncpa %s24, 0
    %26 = vsyncpa [#allocation10], 0
    %s27 = scalar_lea.sflag [#allocation10], 1
    %28 = vsyncpa %s27, 0
    %29 = vsyncpa [#allocation5], 0
    loop: start=0, step=1, limit=4
    $region2: #{tpu_custom_call.1} parent=1 // loop_pre_header
      _
    $region3: #{tpu_custom_call.1} parent=1 // loop_header
      %s31 = sphi 0, %s35
      %p32 = scmp.ge.s32.totalorder %s31, 4
      %s38 = sphi 0, %s50
      %s39 = sphi 0, %s46
      %s40 = sphi 0, %s38
      %s41 = sphi 0, %s39
      %s42 = sphi 0, %s40
      %s43 = sphi 0, %s41
      %s53 = sphi 0, %s55
      %s56 = sphi 0, %s53
      %s57 = sphi 0, %s56
      %s73 = sphi 0, %s57
      %s79 = sphi 0, %s81
      %s82 = sphi 0, %s79
      %s83 = sphi 0, %s82
      %s99 = sphi 0, %s83
      %s105 = sphi 0, %s107
      %s108 = sphi 0, %s105
      %s109 = sphi 0, %s108
      %s125 = sphi 0, %s109
      %s131 = sphi 0, %s133
      %s134 = sphi 0, %s131
      %s135 = sphi 0, %s134
      %s151 = sphi 0, %s135
      %s157 = sphi 0, %s159
      %s160 = sphi 0, %s157
      %s161 = sphi 0, %s160
      %s177 = sphi 0, %s161
      %s183 = sphi 0, %s185
      %s186 = sphi 0, %s183
      %s187 = sphi 0, %s186
      %s203 = sphi 0, %s187
      %s209 = sphi 0, %s211
      %s212 = sphi 0, %s209
      %s213 = sphi 0, %s212
      %s229 = sphi 0, %s213
      %s235 = sphi 0, %s237
      %s238 = sphi 0, %s235
      %s239 = sphi 0, %s238
      %s255 = sphi 0, %s239
      %s261 = sphi 0, %s263
      %s264 = sphi 0, %s261
      %s265 = sphi 0, %s264
      %s281 = sphi 0, %s265
      %s287 = sphi 0, %s289
      %s290 = sphi 0, %s287
      %s291 = sphi 0, %s290
      %s307 = sphi 0, %s291
      %s313 = sphi 0, %s315
      %s316 = sphi 0, %s313
      %s317 = sphi 0, %s316
      %s333 = sphi 0, %s317
      %s339 = sphi 0, %s341
      %s342 = sphi 0, %s339
      %s343 = sphi 0, %s342
      %s359 = sphi 0, %s343
      %s365 = sphi 0, %s367
      %s368 = sphi 0, %s365
      %s369 = sphi 0, %s368
      %s385 = sphi 0, %s369
      %s389 = sphi 0, %s389
      %s391 = sphi 0, %s389
      %s392 = sphi 0, %s391
      %s406 = sphi 0, %s392
      %s410 = sphi 0, %s410
      %s412 = sphi 0, %s410
      %s413 = sphi 0, %s412
      %s427 = sphi 0, %s413
      %s433 = sphi 0, %s435
      %s436 = sphi 0, %s433
      %s437 = sphi 0, %s436
      %s453 = sphi 0, %s437
    $region4: #{tpu_custom_call.1} parent=1 // loop_header_branch
      %34 = sbr.rel (%p32) target = $region8
    $region5: #{tpu_custom_call.1} parent=1 // loop_body
      %s36 = ssub.s32 %s31, 1
      %s37 = ssub.s32 %s31, 2
      %s44 = sadd.s32 1, %s39
      %p45 = scmp.ge.s32.totalorder %s44, 2
      %s46 = scalar_select %p45, 0, %s44
      %s47 = sadd.s32 1, %s38
      %s48 = scalar_select %p45, %s47, %s38
      %p49 = scmp.ge.s32.totalorder %s48, 1
      %s50 = scalar_select %p49, 0, %s48
      %s51 = ssub.s32 %s38, %s50
      %p52 = scmp.eq.s32.totalorder %s51, 0
      %s54 = sadd.s32 %s53, 1
      %s55 = scalar_select %p52, %s53, %s54
      %p58 = pneg %p52
      %p59 = scmp.eq.s32.totalorder %s31, 1
      %p60 = por %p58, %p59
      %p61 = scmp.ne.s32.totalorder %s53, %s56
      %p62 = scmp.eq.s32.totalorder %s31, 0
      %p63 = por %p61, %p62
      %p64 = scmp.ne.s32.totalorder %s53, %s56
      %p65 = scmp.eq.s32.totalorder %s36, 1
      %p66 = por %p64, %p65
      %p67 = scmp.ne.s32.totalorder %s56, %s57
      %p68 = scmp.eq.s32.totalorder %s36, 0
      %p69 = por %p67, %p68
      %p70 = scmp.ne.s32.totalorder %s56, %s57
      %p71 = scmp.eq.s32.totalorder %s37, 1
      %p72 = por %p70, %p71
      %p74 = scmp.ne.s32.totalorder %s57, %s73
      %p75 = scmp.eq.s32.totalorder %s37, 0
      %p76 = por %p74, %p75
      %s77 = ssub.s32 %s39, %s46
      %p78 = scmp.eq.s32.totalorder %s77, 0
      %s80 = sadd.s32 %s79, 1
      %s81 = scalar_select %p78, %s79, %s80
      %p84 = pneg %p78
      %p85 = scmp.eq.s32.totalorder %s31, 1
      %p86 = por %p84, %p85
      %p87 = scmp.ne.s32.totalorder %s79, %s82
      %p88 = scmp.eq.s32.totalorder %s31, 0
      %p89 = por %p87, %p88
      %p90 = scmp.ne.s32.totalorder %s79, %s82
      %p91 = scmp.eq.s32.totalorder %s36, 1
      %p92 = por %p90, %p91
      %p93 = scmp.ne.s32.totalorder %s82, %s83
      %p94 = scmp.eq.s32.totalorder %s36, 0
      %p95 = por %p93, %p94
      %p96 = scmp.ne.s32.totalorder %s82, %s83
      %p97 = scmp.eq.s32.totalorder %s37, 1
      %p98 = por %p96, %p97
      %p100 = scmp.ne.s32.totalorder %s83, %s99
      %p101 = scmp.eq.s32.totalorder %s37, 0
      %p102 = por %p100, %p101
      %s103 = ssub.s32 %s39, %s46
      %p104 = scmp.eq.s32.totalorder %s103, 0
      %s106 = sadd.s32 %s105, 1
      %s107 = scalar_select %p104, %s105, %s106
      %p110 = pneg %p104
      %p111 = scmp.eq.s32.totalorder %s31, 1
      %p112 = por %p110, %p111
      %p113 = scmp.ne.s32.totalorder %s105, %s108
      %p114 = scmp.eq.s32.totalorder %s31, 0
      %p115 = por %p113, %p114
      %p116 = scmp.ne.s32.totalorder %s105, %s108
      %p117 = scmp.eq.s32.totalorder %s36, 1
      %p118 = por %p116, %p117
      %p119 = scmp.ne.s32.totalorder %s108, %s109
      %p120 = scmp.eq.s32.totalorder %s36, 0
      %p121 = por %p119, %p120
      %p122 = scmp.ne.s32.totalorder %s108, %s109
      %p123 = scmp.eq.s32.totalorder %s37, 1
      %p124 = por %p122, %p123
      %p126 = scmp.ne.s32.totalorder %s109, %s125
      %p127 = scmp.eq.s32.totalorder %s37, 0
      %p128 = por %p126, %p127
      %s129 = ssub.s32 %s39, %s46
      %p130 = scmp.eq.s32.totalorder %s129, 0
      %s132 = sadd.s32 %s131, 1
      %s133 = scalar_select %p130, %s131, %s132
      %p136 = pneg %p130
      %p137 = scmp.eq.s32.totalorder %s31, 1
      %p138 = por %p136, %p137
      %p139 = scmp.ne.s32.totalorder %s131, %s134
      %p140 = scmp.eq.s32.totalorder %s31, 0
      %p141 = por %p139, %p140
      %p142 = scmp.ne.s32.totalorder %s131, %s134
      %p143 = scmp.eq.s32.totalorder %s36, 1
      %p144 = por %p142, %p143
      %p145 = scmp.ne.s32.totalorder %s134, %s135
      %p146 = scmp.eq.s32.totalorder %s36, 0
      %p147 = por %p145, %p146
      %p148 = scmp.ne.s32.totalorder %s134, %s135
      %p149 = scmp.eq.s32.totalorder %s37, 1
      %p150 = por %p148, %p149
      %p152 = scmp.ne.s32.totalorder %s135, %s151
      %p153 = scmp.eq.s32.totalorder %s37, 0
      %p154 = por %p152, %p153
      %s155 = ssub.s32 %s39, %s46
      %p156 = scmp.eq.s32.totalorder %s155, 0
      %s158 = sadd.s32 %s157, 1
      %s159 = scalar_select %p156, %s157, %s158
      %p162 = pneg %p156
      %p163 = scmp.eq.s32.totalorder %s31, 1
      %p164 = por %p162, %p163
      %p165 = scmp.ne.s32.totalorder %s157, %s160
      %p166 = scmp.eq.s32.totalorder %s31, 0
      %p167 = por %p165, %p166
      %p168 = scmp.ne.s32.totalorder %s157, %s160
      %p169 = scmp.eq.s32.totalorder %s36, 1
      %p170 = por %p168, %p169
      %p171 = scmp.ne.s32.totalorder %s160, %s161
      %p172 = scmp.eq.s32.totalorder %s36, 0
      %p173 = por %p171, %p172
      %p174 = scmp.ne.s32.totalorder %s160, %s161
      %p175 = scmp.eq.s32.totalorder %s37, 1
      %p176 = por %p174, %p175
      %p178 = scmp.ne.s32.totalorder %s161, %s177
      %p179 = scmp.eq.s32.totalorder %s37, 0
      %p180 = por %p178, %p179
      %s181 = ssub.s32 %s39, %s46
      %p182 = scmp.eq.s32.totalorder %s181, 0
      %s184 = sadd.s32 %s183, 1
      %s185 = scalar_select %p182, %s183, %s184
      %p188 = pneg %p182
      %p189 = scmp.eq.s32.totalorder %s31, 1
      %p190 = por %p188, %p189
      %p191 = scmp.ne.s32.totalorder %s183, %s186
      %p192 = scmp.eq.s32.totalorder %s31, 0
      %p193 = por %p191, %p192
      %p194 = scmp.ne.s32.totalorder %s183, %s186
      %p195 = scmp.eq.s32.totalorder %s36, 1
      %p196 = por %p194, %p195
      %p197 = scmp.ne.s32.totalorder %s186, %s187
      %p198 = scmp.eq.s32.totalorder %s36, 0
      %p199 = por %p197, %p198
      %p200 = scmp.ne.s32.totalorder %s186, %s187
      %p201 = scmp.eq.s32.totalorder %s37, 1
      %p202 = por %p200, %p201
      %p204 = scmp.ne.s32.totalorder %s187, %s203
      %p205 = scmp.eq.s32.totalorder %s37, 0
      %p206 = por %p204, %p205
      %s207 = ssub.s32 %s39, %s46
      %p208 = scmp.eq.s32.totalorder %s207, 0
      %s210 = sadd.s32 %s209, 1
      %s211 = scalar_select %p208, %s209, %s210
      %p214 = pneg %p208
      %p215 = scmp.eq.s32.totalorder %s31, 1
      %p216 = por %p214, %p215
      %p217 = scmp.ne.s32.totalorder %s209, %s212
      %p218 = scmp.eq.s32.totalorder %s31, 0
      %p219 = por %p217, %p218
      %p220 = scmp.ne.s32.totalorder %s209, %s212
      %p221 = scmp.eq.s32.totalorder %s36, 1
      %p222 = por %p220, %p221
      %p223 = scmp.ne.s32.totalorder %s212, %s213
      %p224 = scmp.eq.s32.totalorder %s36, 0
      %p225 = por %p223, %p224
      %p226 = scmp.ne.s32.totalorder %s212, %s213
      %p227 = scmp.eq.s32.totalorder %s37, 1
      %p228 = por %p226, %p227
      %p230 = scmp.ne.s32.totalorder %s213, %s229
      %p231 = scmp.eq.s32.totalorder %s37, 0
      %p232 = por %p230, %p231
      %s233 = ssub.s32 %s39, %s46
      %p234 = scmp.eq.s32.totalorder %s233, 0
      %s236 = sadd.s32 %s235, 1
      %s237 = scalar_select %p234, %s235, %s236
      %p240 = pneg %p234
      %p241 = scmp.eq.s32.totalorder %s31, 1
      %p242 = por %p240, %p241
      %p243 = scmp.ne.s32.totalorder %s235, %s238
      %p244 = scmp.eq.s32.totalorder %s31, 0
      %p245 = por %p243, %p244
      %p246 = scmp.ne.s32.totalorder %s235, %s238
      %p247 = scmp.eq.s32.totalorder %s36, 1
      %p248 = por %p246, %p247
      %p249 = scmp.ne.s32.totalorder %s238, %s239
      %p250 = scmp.eq.s32.totalorder %s36, 0
      %p251 = por %p249, %p250
      %p252 = scmp.ne.s32.totalorder %s238, %s239
      %p253 = scmp.eq.s32.totalorder %s37, 1
      %p254 = por %p252, %p253
      %p256 = scmp.ne.s32.totalorder %s239, %s255
      %p257 = scmp.eq.s32.totalorder %s37, 0
      %p258 = por %p256, %p257
      %s259 = ssub.s32 %s39, %s46
      %p260 = scmp.eq.s32.totalorder %s259, 0
      %s262 = sadd.s32 %s261, 1
      %s263 = scalar_select %p260, %s261, %s262
      %p266 = pneg %p260
      %p267 = scmp.eq.s32.totalorder %s31, 1
      %p268 = por %p266, %p267
      %p269 = scmp.ne.s32.totalorder %s261, %s264
      %p270 = scmp.eq.s32.totalorder %s31, 0
      %p271 = por %p269, %p270
      %p272 = scmp.ne.s32.totalorder %s261, %s264
      %p273 = scmp.eq.s32.totalorder %s36, 1
      %p274 = por %p272, %p273
      %p275 = scmp.ne.s32.totalorder %s264, %s265
      %p276 = scmp.eq.s32.totalorder %s36, 0
      %p277 = por %p275, %p276
      %p278 = scmp.ne.s32.totalorder %s264, %s265
      %p279 = scmp.eq.s32.totalorder %s37, 1
      %p280 = por %p278, %p279
      %p282 = scmp.ne.s32.totalorder %s265, %s281
      %p283 = scmp.eq.s32.totalorder %s37, 0
      %p284 = por %p282, %p283
      %s285 = ssub.s32 %s39, %s46
      %p286 = scmp.eq.s32.totalorder %s285, 0
      %s288 = sadd.s32 %s287, 1
      %s289 = scalar_select %p286, %s287, %s288
      %p292 = pneg %p286
      %p293 = scmp.eq.s32.totalorder %s31, 1
      %p294 = por %p292, %p293
      %p295 = scmp.ne.s32.totalorder %s287, %s290
      %p296 = scmp.eq.s32.totalorder %s31, 0
      %p297 = por %p295, %p296
      %p298 = scmp.ne.s32.totalorder %s287, %s290
      %p299 = scmp.eq.s32.totalorder %s36, 1
      %p300 = por %p298, %p299
      %p301 = scmp.ne.s32.totalorder %s290, %s291
      %p302 = scmp.eq.s32.totalorder %s36, 0
      %p303 = por %p301, %p302
      %p304 = scmp.ne.s32.totalorder %s290, %s291
      %p305 = scmp.eq.s32.totalorder %s37, 1
      %p306 = por %p304, %p305
      %p308 = scmp.ne.s32.totalorder %s291, %s307
      %p309 = scmp.eq.s32.totalorder %s37, 0
      %p310 = por %p308, %p309
      %s311 = ssub.s32 %s39, %s46
      %p312 = scmp.eq.s32.totalorder %s311, 0
      %s314 = sadd.s32 %s313, 1
      %s315 = scalar_select %p312, %s313, %s314
      %p318 = pneg %p312
      %p319 = scmp.eq.s32.totalorder %s31, 1
      %p320 = por %p318, %p319
      %p321 = scmp.ne.s32.totalorder %s313, %s316
      %p322 = scmp.eq.s32.totalorder %s31, 0
      %p323 = por %p321, %p322
      %p324 = scmp.ne.s32.totalorder %s313, %s316
      %p325 = scmp.eq.s32.totalorder %s36, 1
      %p326 = por %p324, %p325
      %p327 = scmp.ne.s32.totalorder %s316, %s317
      %p328 = scmp.eq.s32.totalorder %s36, 0
      %p329 = por %p327, %p328
      %p330 = scmp.ne.s32.totalorder %s316, %s317
      %p331 = scmp.eq.s32.totalorder %s37, 1
      %p332 = por %p330, %p331
      %p334 = scmp.ne.s32.totalorder %s317, %s333
      %p335 = scmp.eq.s32.totalorder %s37, 0
      %p336 = por %p334, %p335
      %s337 = ssub.s32 %s39, %s46
      %p338 = scmp.eq.s32.totalorder %s337, 0
      %s340 = sadd.s32 %s339, 1
      %s341 = scalar_select %p338, %s339, %s340
      %p344 = pneg %p338
      %p345 = scmp.eq.s32.totalorder %s31, 1
      %p346 = por %p344, %p345
      %p347 = scmp.ne.s32.totalorder %s339, %s342
      %p348 = scmp.eq.s32.totalorder %s31, 0
      %p349 = por %p347, %p348
      %p350 = scmp.ne.s32.totalorder %s339, %s342
      %p351 = scmp.eq.s32.totalorder %s36, 1
      %p352 = por %p350, %p351
      %p353 = scmp.ne.s32.totalorder %s342, %s343
      %p354 = scmp.eq.s32.totalorder %s36, 0
      %p355 = por %p353, %p354
      %p356 = scmp.ne.s32.totalorder %s342, %s343
      %p357 = scmp.eq.s32.totalorder %s37, 1
      %p358 = por %p356, %p357
      %p360 = scmp.ne.s32.totalorder %s343, %s359
      %p361 = scmp.eq.s32.totalorder %s37, 0
      %p362 = por %p360, %p361
      %s363 = ssub.s32 %s39, %s46
      %p364 = scmp.eq.s32.totalorder %s363, 0
      %s366 = sadd.s32 %s365, 1
      %s367 = scalar_select %p364, %s365, %s366
      %p370 = pneg %p364
      %p371 = scmp.eq.s32.totalorder %s31, 1
      %p372 = por %p370, %p371
      %p373 = scmp.ne.s32.totalorder %s365, %s368
      %p374 = scmp.eq.s32.totalorder %s31, 0
      %p375 = por %p373, %p374
      %p376 = scmp.ne.s32.totalorder %s365, %s368
      %p377 = scmp.eq.s32.totalorder %s36, 1
      %p378 = por %p376, %p377
      %p379 = scmp.ne.s32.totalorder %s368, %s369
      %p380 = scmp.eq.s32.totalorder %s36, 0
      %p381 = por %p379, %p380
      %p382 = scmp.ne.s32.totalorder %s368, %s369
      %p383 = scmp.eq.s32.totalorder %s37, 1
      %p384 = por %p382, %p383
      %p386 = scmp.ne.s32.totalorder %s369, %s385
      %p387 = scmp.eq.s32.totalorder %s37, 0
      %p388 = por %p386, %p387
      %s390 = sadd.s32 %s389, 1
      %p393 = scmp.eq.s32.totalorder %s31, 1
      %p394 = scmp.ne.s32.totalorder %s389, %s391
      %p395 = scmp.eq.s32.totalorder %s31, 0
      %p396 = por %p394, %p395
      %p397 = scmp.ne.s32.totalorder %s389, %s391
      %p398 = scmp.eq.s32.totalorder %s36, 1
      %p399 = por %p397, %p398
      %p400 = scmp.ne.s32.totalorder %s391, %s392
      %p401 = scmp.eq.s32.totalorder %s36, 0
      %p402 = por %p400, %p401
      %p403 = scmp.ne.s32.totalorder %s391, %s392
      %p404 = scmp.eq.s32.totalorder %s37, 1
      %p405 = por %p403, %p404
      %p407 = scmp.ne.s32.totalorder %s392, %s406
      %p408 = scmp.eq.s32.totalorder %s37, 0
      %p409 = por %p407, %p408
      %s411 = sadd.s32 %s410, 1
      %p414 = scmp.eq.s32.totalorder %s31, 1
      %p415 = scmp.ne.s32.totalorder %s410, %s412
      %p416 = scmp.eq.s32.totalorder %s31, 0
      %p417 = por %p415, %p416
      %p418 = scmp.ne.s32.totalorder %s410, %s412
      %p419 = scmp.eq.s32.totalorder %s36, 1
      %p420 = por %p418, %p419
      %p421 = scmp.ne.s32.totalorder %s412, %s413
      %p422 = scmp.eq.s32.totalorder %s36, 0
      %p423 = por %p421, %p422
      %p424 = scmp.ne.s32.totalorder %s412, %s413
      %p425 = scmp.eq.s32.totalorder %s37, 1
      %p426 = por %p424, %p425
      %p428 = scmp.ne.s32.totalorder %s413, %s427
      %p429 = scmp.eq.s32.totalorder %s37, 0
      %p430 = por %p428, %p429
      %s431 = ssub.s32 %s38, %s50
      %p432 = scmp.eq.s32.totalorder %s431, 0
      %s434 = sadd.s32 %s433, 1
      %s435 = scalar_select %p432, %s433, %s434
      %p438 = pneg %p432
      %p439 = scmp.eq.s32.totalorder %s31, 1
      %p440 = por %p438, %p439
      %p441 = scmp.ne.s32.totalorder %s433, %s436
      %p442 = scmp.eq.s32.totalorder %s31, 0
      %p443 = por %p441, %p442
      %p444 = scmp.ne.s32.totalorder %s433, %s436
      %p445 = scmp.eq.s32.totalorder %s36, 1
      %p446 = por %p444, %p445
      %p447 = scmp.ne.s32.totalorder %s436, %s437
      %p448 = scmp.eq.s32.totalorder %s36, 0
      %p449 = por %p447, %p448
      %p450 = scmp.ne.s32.totalorder %s436, %s437
      %p451 = scmp.eq.s32.totalorder %s37, 1
      %p452 = por %p450, %p451
      %p454 = scmp.ne.s32.totalorder %s437, %s453
      %p455 = scmp.eq.s32.totalorder %s37, 0
      %p456 = por %p454, %p455
      %p457 = scmp.le.s32.totalorder 1, %s31
      %p458 = scmp.lt.s32.totalorder %s31, 3
      %p459 = pnand %p457, %p458
      %p460 = pneg %p459
      // Predicated region
      $region9: #{tpu_custom_call.1} parent=5 // pred_check
        _
      $region10: #{tpu_custom_call.1} parent=5 // pred_check_branch
        %462 = sbr.rel (%p459) target = $region12
      $region11: #{tpu_custom_call.1} parent=5 // pred_region
        %s463 = ssub.s32 %s31, 1
        // Predicated region
        $region13: #{tpu_custom_call.1} parent=11 // pred_check
          %p464 = pneg %p69
        $region14: #{tpu_custom_call.1} parent=11 // pred_check_branch
          %466 = sbr.rel (%p464) target = $region16
        $region15: #{tpu_custom_call.1} parent=11 // pred_region
          %s467 = smul.u32 2, %s40
          %p468 = scmp.lt.s32.totalorder %s467, 1
          %s469 = scalar_select %p468, %s467, 1
          %s470 = smul.addr %s469, 8
          %s471 = scalar_lea.vmem %s0, %s470
          %s472 = smul.u32 2, %s40
        $region16: #{tpu_custom_call.1} parent=11 // pred_fallthru
          _
        // Predicated region
        $region17: #{tpu_custom_call.1} parent=11 // pred_check
          %p473 = pneg %p402
        $region18: #{tpu_custom_call.1} parent=11 // pred_check_branch
          %475 = sbr.rel (%p473) target = $region20
        $region19: #{tpu_custom_call.1} parent=11 // pred_region
          _
        $region20: #{tpu_custom_call.1} parent=11 // pred_fallthru
          _
        // Predicated region
        $region21: #{tpu_custom_call.1} parent=11 // pred_check
          %p476 = pneg %p423
        $region22: #{tpu_custom_call.1} parent=11 // pred_check_branch
          %478 = sbr.rel (%p476) target = $region24
        $region23: #{tpu_custom_call.1} parent=11 // pred_region
          _
        $region24: #{tpu_custom_call.1} parent=11 // pred_fallthru
          _
      $region12: #{tpu_custom_call.1} parent=5 // pred_fallthru
        _
      %p479 = scmp.lt.s32.totalorder %s31, 2
      // Predicated region
      $region25: #{tpu_custom_call.1} parent=5 // pred_check
        %p480 = pneg %p479
      $region26: #{tpu_custom_call.1} parent=5 // pred_check_branch
        %482 = sbr.rel (%p480) target = $region28
      $region27: #{tpu_custom_call.1} parent=5 // pred_region
        // Predicated region
        $region29: #{tpu_custom_call.1} parent=27 // pred_check
          %p483 = pneg %p89
        $region30: #{tpu_custom_call.1} parent=27 // pred_check_branch
          %485 = sbr.rel (%p483) target = $region32
        $region31: #{tpu_custom_call.1} parent=27 // pred_region
          %p486 = scmp.lt.s32.totalorder %s39, 1
          %s487 = scalar_select %p486, %s39, 1
          %s488 = smul.addr %s487, 4
          %s489 = smul.addr %s488, 4
          %s490 = scalar_lea.vmem %s1, %s489
        $region32: #{tpu_custom_call.1} parent=27 // pred_fallthru
          _
        // Predicated region
        $region33: #{tpu_custom_call.1} parent=27 // pred_check
          %p491 = pneg %p115
        $region34: #{tpu_custom_call.1} parent=27 // pred_check_branch
          %493 = sbr.rel (%p491) target = $region36
        $region35: #{tpu_custom_call.1} parent=27 // pred_region
          %p494 = scmp.lt.s32.totalorder %s39, 1
          %s495 = scalar_select %p494, %s39, 1
          %s496 = scalar_lea.vmem %s2, %s495
        $region36: #{tpu_custom_call.1} parent=27 // pred_fallthru
          _
        // Predicated region
        $region37: #{tpu_custom_call.1} parent=27 // pred_check
          %p497 = pneg %p141
        $region38: #{tpu_custom_call.1} parent=27 // pred_check_branch
          %499 = sbr.rel (%p497) target = $region40
        $region39: #{tpu_custom_call.1} parent=27 // pred_region
          %p500 = scmp.lt.s32.totalorder %s39, 1
          %s501 = scalar_select %p500, %s39, 1
          %s502 = smul.addr %s501, 4
          %s503 = smul.addr %s502, 4
          %s504 = scalar_lea.vmem %s3, %s503
        $region40: #{tpu_custom_call.1} parent=27 // pred_fallthru
          _
        // Predicated region
        $region41: #{tpu_custom_call.1} parent=27 // pred_check
          %p505 = pneg %p167
        $region42: #{tpu_custom_call.1} parent=27 // pred_check_branch
          %507 = sbr.rel (%p505) target = $region44
        $region43: #{tpu_custom_call.1} parent=27 // pred_region
          %p508 = scmp.lt.s32.totalorder %s39, 1
          %s509 = scalar_select %p508, %s39, 1
          %s510 = scalar_lea.vmem %s4, %s509
        $region44: #{tpu_custom_call.1} parent=27 // pred_fallthru
          _
        // Predicated region
        $region45: #{tpu_custom_call.1} parent=27 // pred_check
          %p511 = pneg %p193
        $region46: #{tpu_custom_call.1} parent=27 // pred_check_branch
          %513 = sbr.rel (%p511) target = $region48
        $region47: #{tpu_custom_call.1} parent=27 // pred_region
          %s514 = sand.u32 %s183, 1
          %s515 = scalar_lea.sflag [#allocation4], %s514
          %s516 = sand.u32 %s183, 1
          %s517 = scalar_lea.vmem [#allocation3], %s516
          %s519 = ssub.s32 16, 16
          %520 = vsyncadd %s515, %s519
          %s521 = smul.addr %s39, 16
          %s522 = scalar_lea.hbm %s5, %s521
          %s524 = sshll.u32 %s517, 4
          %s525 = int_to_ptr.vmem [resolvable:$true] %s524
          %527 = dma.hbm_to_vmem [thread:$0]  %s522, 16, %s525, %s515
        $region48: #{tpu_custom_call.1} parent=27 // pred_fallthru
          _
        // Predicated region
        $region49: #{tpu_custom_call.1} parent=27 // pred_check
          %p528 = pneg %p219
        $region50: #{tpu_custom_call.1} parent=27 // pred_check_branch
          %530 = sbr.rel (%p528) target = $region52
        $region51: #{tpu_custom_call.1} parent=27 // pred_region
          %s531 = sand.u32 %s31, 1
          %s532 = scalar_lea.sflag [#allocation7], %s531
          %s533 = sand.u32 %s209, 1
          %s534 = scalar_lea.vmem [#allocation6], %s533
          %s536 = ssub.s32 16, 16
          %537 = vsyncadd %s532, %s536
          %s538 = smul.addr %s39, 16
          %s539 = scalar_lea.hbm %s6, %s538
          %s541 = sshll.u32 %s534, 4
          %s542 = int_to_ptr.vmem [resolvable:$true] %s541
          %544 = dma.hbm_to_vmem [thread:$0]  %s539, 16, %s542, %s532
        $region52: #{tpu_custom_call.1} parent=27 // pred_fallthru
          _
        // Predicated region
        $region53: #{tpu_custom_call.1} parent=27 // pred_check
          %p545 = pneg %p245
        $region54: #{tpu_custom_call.1} parent=27 // pred_check_branch
          %547 = sbr.rel (%p545) target = $region56
        $region55: #{tpu_custom_call.1} parent=27 // pred_region
          %p548 = scmp.lt.s32.totalorder %s39, 1
          %s549 = scalar_select %p548, %s39, 1
          %s550 = smul.addr %s549, 4
          %s551 = smul.addr %s550, 4
          %s552 = scalar_lea.vmem %s7, %s551
        $region56: #{tpu_custom_call.1} parent=27 // pred_fallthru
          _
        // Predicated region
        $region57: #{tpu_custom_call.1} parent=27 // pred_check
          %p553 = pneg %p271
        $region58: #{tpu_custom_call.1} parent=27 // pred_check_branch
          %555 = sbr.rel (%p553) target = $region60
        $region59: #{tpu_custom_call.1} parent=27 // pred_region
          %s556 = sand.u32 %s31, 1
          %s557 = scalar_lea.sflag [#allocation7], %s556
          %s558 = sand.u32 %s261, 1
          %s559 = scalar_lea.vmem [#allocation8], %s558
          %s561 = ssub.s32 16, 16
          %562 = vsyncadd %s557, %s561
          %s563 = smul.addr %s39, 16
          %s564 = scalar_lea.hbm %s8, %s563
          %s566 = sshll.u32 %s559, 4
          %s567 = int_to_ptr.vmem [resolvable:$true] %s566
          %569 = dma.hbm_to_vmem [thread:$0]  %s564, 16, %s567, %s557
        $region60: #{tpu_custom_call.1} parent=27 // pred_fallthru
          _
        // Predicated region
        $region61: #{tpu_custom_call.1} parent=27 // pred_check
          %p570 = pneg %p297
        $region62: #{tpu_custom_call.1} parent=27 // pred_check_branch
          %572 = sbr.rel (%p570) target = $region64
        $region63: #{tpu_custom_call.1} parent=27 // pred_region
          %p573 = scmp.lt.s32.totalorder %s39, 1
          %s574 = scalar_select %p573, %s39, 1
          %s575 = smul.addr %s574, 8
          %s576 = smul.addr %s575, 4
          %s577 = scalar_lea.vmem %s9, %s576
        $region64: #{tpu_custom_call.1} parent=27 // pred_fallthru
          _
        // Predicated region
        $region65: #{tpu_custom_call.1} parent=27 // pred_check
          %p578 = pneg %p323
        $region66: #{tpu_custom_call.1} parent=27 // pred_check_branch
          %580 = sbr.rel (%p578) target = $region68
        $region67: #{tpu_custom_call.1} parent=27 // pred_region
          %s581 = sand.u32 %s313, 1
          %s582 = scalar_lea.sflag [#allocation10], %s581
          %s583 = sand.u32 %s313, 1
          %s584 = scalar_lea.vmem [#allocation9], %s583
          %s586 = ssub.s32 16, 16
          %587 = vsyncadd %s582, %s586
          %s588 = smul.addr %s39, 16
          %s589 = scalar_lea.hbm %s10, %s588
          %s591 = sshll.u32 %s584, 4
          %s592 = int_to_ptr.vmem [resolvable:$true] %s591
          %594 = dma.hbm_to_vmem [thread:$0]  %s589, 16, %s592, %s582
        $region68: #{tpu_custom_call.1} parent=27 // pred_fallthru
          _
        // Predicated region
        $region69: #{tpu_custom_call.1} parent=27 // pred_check
          %p595 = pneg %p349
        $region70: #{tpu_custom_call.1} parent=27 // pred_check_branch
          %597 = sbr.rel (%p595) target = $region72
        $region71: #{tpu_custom_call.1} parent=27 // pred_region
          %p598 = scmp.lt.s32.totalorder %s39, 1
          %s599 = scalar_select %p598, %s39, 1
          %s600 = scalar_lea.vmem %s11, %s599
        $region72: #{tpu_custom_call.1} parent=27 // pred_fallthru
          _
        // Predicated region
        $region73: #{tpu_custom_call.1} parent=27 // pred_check
          %p601 = pneg %p375
        $region74: #{tpu_custom_call.1} parent=27 // pred_check_branch
          %603 = sbr.rel (%p601) target = $region76
        $region75: #{tpu_custom_call.1} parent=27 // pred_region
          %p604 = scmp.lt.s32.totalorder %s39, 1
          %s605 = scalar_select %p604, %s39, 1
          %s606 = scalar_lea.vmem %s12, %s605
        $region76: #{tpu_custom_call.1} parent=27 // pred_fallthru
          _
      $region28: #{tpu_custom_call.1} parent=5 // pred_fallthru
        _
      %p607 = scmp.le.s32.totalorder 1, %s31
      %p608 = scmp.lt.s32.totalorder %s31, 3
      %p609 = pnand %p607, %p608
      %p610 = pneg %p609
      // Predicated region
      $region77: #{tpu_custom_call.1} parent=5 // pred_check
        _
      $region78: #{tpu_custom_call.1} parent=5 // pred_check_branch
        %612 = sbr.rel (%p609) target = $region80
      $region79: #{tpu_custom_call.1} parent=5 // pred_region
        %s613 = ssub.s32 %s31, 1
        %s614 = sand.u32 %s186, 1
        %s615 = scalar_lea.sflag [#allocation4], %s614
        %s616 = sand.u32 %s186, 1
        %s617 = scalar_lea.vmem [#allocation3], %s616
        // Predicated region
        $region81: #{tpu_custom_call.1} parent=79 // pred_check
          %p618 = pneg %p199
        $region82: #{tpu_custom_call.1} parent=79 // pred_check_branch
          %620 = sbr.rel (%p618) target = $region84
        $region83: #{tpu_custom_call.1} parent=79 // pred_region
          %621 = dma.done %s615, 16
        $region84: #{tpu_custom_call.1} parent=79 // pred_fallthru
          _
        %s622 = sand.u32 %s36, 1
        %s623 = scalar_lea.sflag [#allocation7], %s622
        %s624 = sand.u32 %s212, 1
        %s625 = scalar_lea.vmem [#allocation6], %s624
        // Predicated region
        $region85: #{tpu_custom_call.1} parent=79 // pred_check
          %p626 = pneg %p225
        $region86: #{tpu_custom_call.1} parent=79 // pred_check_branch
          %628 = sbr.rel (%p626) target = $region88
        $region87: #{tpu_custom_call.1} parent=79 // pred_region
          %629 = dma.done %s623, 16
        $region88: #{tpu_custom_call.1} parent=79 // pred_fallthru
          _
        %s630 = sand.u32 %s36, 1
        %s631 = scalar_lea.sflag [#allocation7], %s630
        %s632 = sand.u32 %s264, 1
        %s633 = scalar_lea.vmem [#allocation8], %s632
        // Predicated region
        $region89: #{tpu_custom_call.1} parent=79 // pred_check
          %p634 = pneg %p277
        $region90: #{tpu_custom_call.1} parent=79 // pred_check_branch
          %636 = sbr.rel (%p634) target = $region92
        $region91: #{tpu_custom_call.1} parent=79 // pred_region
          %637 = dma.done %s631, 16
        $region92: #{tpu_custom_call.1} parent=79 // pred_fallthru
          _
        %s638 = sand.u32 %s316, 1
        %s639 = scalar_lea.sflag [#allocation10], %s638
        %s640 = sand.u32 %s316, 1
        %s641 = scalar_lea.vmem [#allocation9], %s640
        // Predicated region
        $region93: #{tpu_custom_call.1} parent=79 // pred_check
          %p642 = pneg %p329
        $region94: #{tpu_custom_call.1} parent=79 // pred_check_branch
          %644 = sbr.rel (%p642) target = $region96
        $region95: #{tpu_custom_call.1} parent=79 // pred_region
          %645 = dma.done %s639, 16
        $region96: #{tpu_custom_call.1} parent=79 // pred_fallthru
          _
        %s646 = smul.u32 2, %s40
        %p647 = scmp.lt.s32.totalorder %s646, 1
        %s648 = scalar_select %p647, %s646, 1
        %s649 = smul.addr %s648, 8
        %s650 = scalar_lea.vmem %s0, %s649
        %p651 = pneg %p69
        %p652 = pneg %p66
        %p653 = scmp.lt.s32.totalorder %s41, 1
        %s654 = scalar_select %p653, %s41, 1
        %s655 = smul.addr %s654, 4
        %s656 = smul.addr %s655, 4
        %s657 = scalar_lea.vmem %s1, %s656
        %p658 = pneg %p95
        %p659 = pneg %p92
        %p660 = scmp.lt.s32.totalorder %s41, 1
        %s661 = scalar_select %p660, %s41, 1
        %s662 = scalar_lea.vmem %s2, %s661
        %p663 = pneg %p121
        %p664 = pneg %p118
        %p665 = scmp.lt.s32.totalorder %s41, 1
        %s666 = scalar_select %p665, %s41, 1
        %s667 = smul.addr %s666, 4
        %s668 = smul.addr %s667, 4
        %s669 = scalar_lea.vmem %s3, %s668
        %p670 = pneg %p147
        %p671 = pneg %p144
        %p672 = scmp.lt.s32.totalorder %s41, 1
        %s673 = scalar_select %p672, %s41, 1
        %s674 = scalar_lea.vmem %s4, %s673
        %p675 = pneg %p173
        %p676 = pneg %p170
        %s677 = sand.u32 %s186, 1
        %s678 = scalar_lea.sflag [#allocation4], %s677
        %s679 = sand.u32 %s186, 1
        %s680 = scalar_lea.vmem [#allocation3], %s679
        %p681 = pneg %p199
        %p682 = pneg %p196
        %s683 = sand.u32 %s36, 1
        %s684 = scalar_lea.sflag [#allocation7], %s683
        %s685 = sand.u32 %s212, 1
        %s686 = scalar_lea.vmem [#allocation6], %s685
        %p687 = pneg %p225
        %p688 = pneg %p222
        %p689 = scmp.lt.s32.totalorder %s41, 1
        %s690 = scalar_select %p689, %s41, 1
        %s691 = smul.addr %s690, 4
        %s692 = smul.addr %s691, 4
        %s693 = scalar_lea.vmem %s7, %s692
        %p694 = pneg %p251
        %p695 = pneg %p248
        %s696 = sand.u32 %s36, 1
        %s697 = scalar_lea.sflag [#allocation7], %s696
        %s698 = sand.u32 %s264, 1
        %s699 = scalar_lea.vmem [#allocation8], %s698
        %p700 = pneg %p277
        %p701 = pneg %p274
        %p702 = scmp.lt.s32.totalorder %s41, 1
        %s703 = scalar_select %p702, %s41, 1
        %s704 = smul.addr %s703, 8
        %s705 = smul.addr %s704, 4
        %s706 = scalar_lea.vmem %s9, %s705
        %p707 = pneg %p303
        %p708 = pneg %p300
        %s709 = sand.u32 %s316, 1
        %s710 = scalar_lea.sflag [#allocation10], %s709
        %s711 = sand.u32 %s316, 1
        %s712 = scalar_lea.vmem [#allocation9], %s711
        %p713 = pneg %p329
        %p714 = pneg %p326
        %p715 = scmp.lt.s32.totalorder %s41, 1
        %s716 = scalar_select %p715, %s41, 1
        %s717 = scalar_lea.vmem %s11, %s716
        %p718 = pneg %p355
        %p719 = pneg %p352
        %p720 = scmp.lt.s32.totalorder %s41, 1
        %s721 = scalar_select %p720, %s41, 1
        %s722 = scalar_lea.vmem %s12, %s721
        %p723 = pneg %p381
        %p724 = pneg %p378
        %p725 = pneg %p402
        %p726 = pneg %p399
        %p727 = pneg %p423
        %p728 = pneg %p420
        %p729 = pneg %p449
        %p730 = pneg %p446
        %s731 = smul.u32 2, %s40
        %p732 = scmp.lt.s32.totalorder %s731, 1
        %s733 = scalar_select %p732, %s731, 1
        %s734 = smul.addr %s733, 8
        %s735 = scalar_lea.vmem %s0, %s734
        %s736 = smul.u32 2, %s40
        %p737 = scmp.lt.s32.totalorder %s41, 1
        %s738 = scalar_select %p737, %s41, 1
        %s739 = smul.addr %s738, 4
        %s740 = smul.addr %s739, 4
        %s741 = scalar_lea.vmem %s1, %s740
        %p742 = scmp.lt.s32.totalorder %s41, 1
        %s743 = scalar_select %p742, %s41, 1
        %s744 = scalar_lea.vmem %s2, %s743
        %p745 = scmp.lt.s32.totalorder %s41, 1
        %s746 = scalar_select %p745, %s41, 1
        %s747 = smul.addr %s746, 4
        %s748 = smul.addr %s747, 4
        %s749 = scalar_lea.vmem %s3, %s748
        %p750 = scmp.lt.s32.totalorder %s41, 1
        %s751 = scalar_select %p750, %s41, 1
        %s752 = scalar_lea.vmem %s4, %s751
        %p753 = scmp.lt.s32.totalorder %s41, 1
        %s754 = scalar_select %p753, %s41, 1
        %s755 = smul.addr %s754, 4
        %s756 = smul.addr %s755, 4
        %s757 = scalar_lea.vmem %s7, %s756
        %p758 = scmp.lt.s32.totalorder %s41, 1
        %s759 = scalar_select %p758, %s41, 1
        %s760 = smul.addr %s759, 8
        %s761 = smul.addr %s760, 4
        %s762 = scalar_lea.vmem %s9, %s761
        %p763 = scmp.lt.s32.totalorder %s41, 1
        %s764 = scalar_select %p763, %s41, 1
        %s765 = scalar_lea.vmem %s11, %s764
        %p766 = scmp.lt.s32.totalorder %s41, 1
        %s767 = scalar_select %p766, %s41, 1
        %s768 = scalar_lea.vmem %s12, %s767
        %s769 = smul.u32 2, %s40
        %p771 = scmp.eq.s32.totalorder %s41, 0
        // Predicated region
        $region97: #{tpu_custom_call.1} parent=79 // pred_check
          %p772 = pneg %p771
        $region98: #{tpu_custom_call.1} parent=79 // pred_check_branch
          %774 = sbr.rel (%p772) target = $region100
        $region99: #{tpu_custom_call.1} parent=79 // pred_region
          %v775 = vld [vmem:[%s735] sm:$0xff]
          %v776 = vld [vmem:[%s735 + $0x8] sm:$0xff]
          %vm777 = vcmask 261120
          %778 = vst.msk [vmem:[#allocation2] sm:$0xff] %vm777, %v775
          %779 = vst.msk [vmem:[#allocation2 + $0x8] sm:$0xff] %vm777, %v776
        $region100: #{tpu_custom_call.1} parent=79 // pred_fallthru
          _
        %v780 = vld [vmem:[#allocation2] sm:$0xff]
        %v781 = vld [vmem:[#allocation2 + $0x8] sm:$0xff]
        %v782 = vpack.c.bf16 %v781, %v780
        %v783 = vld [vmem:[%s741] sm:$0xf]
        %v784 = vld [vmem:[%s741 + $0x4] sm:$0xf]
        %v785 = vld [vmem:[%s741 + $0x8] sm:$0xf]
        %v786 = vld [vmem:[%s741 + $0xc] sm:$0xf]
        %v787 = vld [vmem:[%s744] sm:$0x1]
        %v789 = vlaneseq
        %v790 = vshrl.u32 %v789, 7
        %v791 = vsub.s32 0, %v790
        %v792 = vrot.slane %v787, %v791
        %v798 = vunpack.c.l.b16 %v783
        %v799 = vunpack.c.l.b16 %v784
        %v800 = vunpack.c.l.b16 %v785
        %v801 = vunpack.c.l.b16 %v786
        %v802 = vpack.c.b16 %v799, %v798
        %v803 = vpack.c.b16 %v801, %v800
        %vm806 = vcmask 261120
        %v808 = vsel %vm806, %v782, 0
        %810 = vmatprep.subr.bf16.mxu0 0
        %811 = vmatpush1.bf16.msra.mxu0 %v802
        %812 = vmatprep.subr.bf16.mxu0 0
        %813 = vmatpush1.bf16.msra.mxu0 %v803
        %814 = vmatprep.subr.bf16.mxu0 0
        %815 = vmatpush1.bf16.msra.mxu0 0
        %816 = vmatprep.subr.bf16.mxu0 0
        %817 = vmatpush1.bf16.msra.mxu0 0
        %818 = vmatprep.subr.bf16.mxu0 0
        %819 = vmatpush1.bf16.msra.mxu0 0
        %820 = vmatprep.subr.bf16.mxu0 0
        %821 = vmatpush1.bf16.msra.mxu0 0
        %822 = vmatprep.subr.bf16.mxu0 0
        %823 = vmatpush1.bf16.msra.mxu0 0
        %824 = vmatprep.subr.bf16.mxu0 0
        %825 = vmatpush1.bf16.msra.mxu0 0
        %826 = vmatprep.subr.bf16.mxu0 0
        %827 = vmatpush1.bf16.msra.mxu0 0
        %828 = vmatprep.subr.bf16.mxu0 0
        %829 = vmatpush1.bf16.msra.mxu0 0
        %830 = vmatprep.subr.bf16.mxu0 0
        %831 = vmatpush1.bf16.msra.mxu0 0
        %832 = vmatprep.subr.bf16.mxu0 0
        %833 = vmatpush1.bf16.msra.mxu0 0
        %834 = vmatprep.subr.bf16.mxu0 0
        %835 = vmatpush1.bf16.msra.mxu0 0
        %836 = vmatprep.subr.bf16.mxu0 0
        %837 = vmatpush1.bf16.msra.mxu0 0
        %838 = vmatprep.subr.bf16.mxu0 0
        %839 = vmatpush1.bf16.msra.mxu0 0
        %840 = vmatprep.subr.bf16.mxu0 0
        %841 = vmatpush1.bf16.msra.mxu0 0
        %842 = vmatprep.mubr.bf16.mxu0 0
        %843 = vmatmul.mubr.bf16.gmra.mrb[0].mxu0 %v808
        %v844 = vpop.f32.mrb[0].mxu0
        %v845 = vadd.f32 %v792, %v844
        %v846 = vpop.f32.mrb[0].mxu0
        %v847 = vpop.f32.mrb[0].mxu0
        %v848 = vadd.f32 %v792, %v847
        %v849 = vpop.f32.mrb[0].mxu0
        %850 = vdwg.mxu0
        %853 = vrot.lane.b32.xlu0 %v845, 120
        %v854 = vpop.permute.xlu0 %853
        %855 = vrot.lane.b32.xlu0 %v848, 120
        %v856 = vpop.permute.xlu0 %855
        %859 = vrot.lane.b32.xlu0 %v845, 112
        %v860 = vpop.permute.xlu0 %859
        %861 = vrot.lane.b32.xlu0 %v848, 112
        %v862 = vpop.permute.xlu0 %861
        %865 = vrot.lane.b32.xlu0 %v845, 104
        %v866 = vpop.permute.xlu0 %865
        %867 = vrot.lane.b32.xlu0 %v848, 104
        %v868 = vpop.permute.xlu0 %867
        %871 = vrot.lane.b32.xlu0 %v845, 96
        %v872 = vpop.permute.xlu0 %871
        %873 = vrot.lane.b32.xlu0 %v848, 96
        %v874 = vpop.permute.xlu0 %873
        %877 = vrot.lane.b32.xlu0 %v845, 88
        %v878 = vpop.permute.xlu0 %877
        %879 = vrot.lane.b32.xlu0 %v848, 88
        %v880 = vpop.permute.xlu0 %879
        %883 = vrot.lane.b32.xlu0 %v845, 80
        %v884 = vpop.permute.xlu0 %883
        %885 = vrot.lane.b32.xlu0 %v848, 80
        %v886 = vpop.permute.xlu0 %885
        %889 = vrot.lane.b32.xlu0 %v845, 72
        %v890 = vpop.permute.xlu0 %889
        %891 = vrot.lane.b32.xlu0 %v848, 72
        %v892 = vpop.permute.xlu0 %891
        %895 = vrot.lane.b32.xlu0 %v845, 64
        %v896 = vpop.permute.xlu0 %895
        %897 = vrot.lane.b32.xlu0 %v848, 64
        %v898 = vpop.permute.xlu0 %897
        %901 = vrot.lane.b32.xlu0 %v845, 56
        %v902 = vpop.permute.xlu0 %901
        %903 = vrot.lane.b32.xlu0 %v848, 56
        %v904 = vpop.permute.xlu0 %903
        %907 = vrot.lane.b32.xlu0 %v845, 48
        %v908 = vpop.permute.xlu0 %907
        %909 = vrot.lane.b32.xlu0 %v848, 48
        %v910 = vpop.permute.xlu0 %909
        %913 = vrot.lane.b32.xlu0 %v845, 40
        %v914 = vpop.permute.xlu0 %913
        %915 = vrot.lane.b32.xlu0 %v848, 40
        %v916 = vpop.permute.xlu0 %915
        %v919 = vcombine.low %v845, %v860
        %v920 = vcombine.high %v845, %v860
        %v922 = vunpack.c.l.s4 1983009808
        %v923 = vunpack.c.0.s8 %v922
        %v924 = vlaneseq
        %v925 = vshrl.u32 %v924, 7
        %v926 = vsub.s32 %v923, %v925
        %v927 = vrot.slane %v919, %v926
        %v929 = vunpack.c.l.s4 1983009808
        %v930 = vunpack.c.0.s8 %v929
        %v931 = vlaneseq
        %v932 = vshrl.u32 %v931, 7
        %v933 = vsub.s32 %v930, %v932
        %v934 = vrot.slane %v920, %v933
        %v935 = vcombine.low %v854, %v866
        %v936 = vcombine.high %v854, %v866
        %v938 = vunpack.c.l.s4 1983009808
        %v939 = vunpack.c.0.s8 %v938
        %v940 = vlaneseq
        %v941 = vshrl.u32 %v940, 7
        %v942 = vsub.s32 %v939, %v941
        %v943 = vrot.slane %v935, %v942
        %v945 = vunpack.c.l.s4 1983009808
        %v946 = vunpack.c.0.s8 %v945
        %v947 = vlaneseq
        %v948 = vshrl.u32 %v947, 7
        %v949 = vsub.s32 %v946, %v948
        %v950 = vrot.slane %v936, %v949
        %v951 = vcombine.low %v872, %v884
        %v952 = vcombine.high %v872, %v884
        %v954 = vunpack.c.l.s4 1983009808
        %v955 = vunpack.c.0.s8 %v954
        %v956 = vlaneseq
        %v957 = vshrl.u32 %v956, 7
        %v958 = vsub.s32 %v955, %v957
        %v959 = vrot.slane %v951, %v958
        %v961 = vunpack.c.l.s4 1983009808
        %v962 = vunpack.c.0.s8 %v961
        %v963 = vlaneseq
        %v964 = vshrl.u32 %v963, 7
        %v965 = vsub.s32 %v962, %v964
        %v966 = vrot.slane %v952, %v965
        %v967 = vcombine.low %v878, %v890
        %v968 = vcombine.high %v878, %v890
        %v970 = vunpack.c.l.s4 1983009808
        %v971 = vunpack.c.0.s8 %v970
        %v972 = vlaneseq
        %v973 = vshrl.u32 %v972, 7
        %v974 = vsub.s32 %v971, %v973
        %v975 = vrot.slane %v967, %v974
        %v977 = vunpack.c.l.s4 1983009808
        %v978 = vunpack.c.0.s8 %v977
        %v979 = vlaneseq
        %v980 = vshrl.u32 %v979, 7
        %v981 = vsub.s32 %v978, %v980
        %v982 = vrot.slane %v968, %v981
        %v983 = vcombine.low %v927, %v943
        %v984 = vcombine.high %v927, %v943
        %v986 = vunpack.c.l.s4 1934713408
        %v987 = vunpack.c.0.s8 %v986
        %v988 = vlaneseq
        %v989 = vshrl.u32 %v988, 7
        %v990 = vsub.s32 %v987, %v989
        %v991 = vrot.slane %v983, %v990
        %v993 = vunpack.c.l.s4 1934713408
        %v994 = vunpack.c.0.s8 %v993
        %v995 = vlaneseq
        %v996 = vshrl.u32 %v995, 7
        %v997 = vsub.s32 %v994, %v996
        %v998 = vrot.slane %v984, %v997
        %v999 = vcombine.low %v934, %v950
        %v1000 = vcombine.high %v934, %v950
        %v1002 = vunpack.c.l.s4 1934713408
        %v1003 = vunpack.c.0.s8 %v1002
        %v1004 = vlaneseq
        %v1005 = vshrl.u32 %v1004, 7
        %v1006 = vsub.s32 %v1003, %v1005
        %v1007 = vrot.slane %v999, %v1006
        %v1009 = vunpack.c.l.s4 1934713408
        %v1010 = vunpack.c.0.s8 %v1009
        %v1011 = vlaneseq
        %v1012 = vshrl.u32 %v1011, 7
        %v1013 = vsub.s32 %v1010, %v1012
        %v1014 = vrot.slane %v1000, %v1013
        %v1015 = vcombine.low %v959, %v975
        %v1016 = vcombine.high %v959, %v975
        %v1018 = vunpack.c.l.s4 1934713408
        %v1019 = vunpack.c.0.s8 %v1018
        %v1020 = vlaneseq
        %v1021 = vshrl.u32 %v1020, 7
        %v1022 = vsub.s32 %v1019, %v1021
        %v1023 = vrot.slane %v1015, %v1022
        %v1025 = vunpack.c.l.s4 1934713408
        %v1026 = vunpack.c.0.s8 %v1025
        %v1027 = vlaneseq
        %v1028 = vshrl.u32 %v1027, 7
        %v1029 = vsub.s32 %v1026, %v1028
        %v1030 = vrot.slane %v1016, %v1029
        %v1031 = vcombine.low %v966, %v982
        %v1032 = vcombine.high %v966, %v982
        %v1034 = vunpack.c.l.s4 1934713408
        %v1035 = vunpack.c.0.s8 %v1034
        %v1036 = vlaneseq
        %v1037 = vshrl.u32 %v1036, 7
        %v1038 = vsub.s32 %v1035, %v1037
        %v1039 = vrot.slane %v1031, %v1038
        %v1041 = vunpack.c.l.s4 1934713408
        %v1042 = vunpack.c.0.s8 %v1041
        %v1043 = vlaneseq
        %v1044 = vshrl.u32 %v1043, 7
        %v1045 = vsub.s32 %v1042, %v1044
        %v1046 = vrot.slane %v1032, %v1045
        %v1047 = vcombine.low %v991, %v1023
        %v1048 = vcombine.high %v991, %v1023
        %v1049 = vcombine.low %v998, %v1030
        %v1050 = vcombine.high %v998, %v1030
        %v1051 = vcombine.low %v1007, %v1039
        %v1052 = vcombine.high %v1007, %v1039
        %v1053 = vcombine.low %v1014, %v1046
        %v1054 = vcombine.high %v1014, %v1046
        %v1055 = vcombine.low %v896, %v908
        %v1056 = vcombine.high %v896, %v908
        %v1058 = vunpack.c.l.s4 1983009808
        %v1059 = vunpack.c.0.s8 %v1058
        %v1060 = vlaneseq
        %v1061 = vshrl.u32 %v1060, 7
        %v1062 = vsub.s32 %v1059, %v1061
        %v1063 = vrot.slane %v1055, %v1062
        %v1065 = vunpack.c.l.s4 1983009808
        %v1066 = vunpack.c.0.s8 %v1065
        %v1067 = vlaneseq
        %v1068 = vshrl.u32 %v1067, 7
        %v1069 = vsub.s32 %v1066, %v1068
        %v1070 = vrot.slane %v1056, %v1069
        %v1071 = vcombine.low %v902, %v914
        %v1072 = vcombine.high %v902, %v914
        %v1074 = vunpack.c.l.s4 1983009808
        %v1075 = vunpack.c.0.s8 %v1074
        %v1076 = vlaneseq
        %v1077 = vshrl.u32 %v1076, 7
        %v1078 = vsub.s32 %v1075, %v1077
        %v1079 = vrot.slane %v1071, %v1078
        %v1081 = vunpack.c.l.s4 1983009808
        %v1082 = vunpack.c.0.s8 %v1081
        %v1083 = vlaneseq
        %v1084 = vshrl.u32 %v1083, 7
        %v1085 = vsub.s32 %v1082, %v1084
        %v1086 = vrot.slane %v1072, %v1085
        %v1087 = vcombine.low %v1063, %v1079
        %v1088 = vcombine.high %v1063, %v1079
        %v1090 = vunpack.c.l.s4 1934713408
        %v1091 = vunpack.c.0.s8 %v1090
        %v1092 = vlaneseq
        %v1093 = vshrl.u32 %v1092, 7
        %v1094 = vsub.s32 %v1091, %v1093
        %v1095 = vrot.slane %v1087, %v1094
        %v1097 = vunpack.c.l.s4 1934713408
        %v1098 = vunpack.c.0.s8 %v1097
        %v1099 = vlaneseq
        %v1100 = vshrl.u32 %v1099, 7
        %v1101 = vsub.s32 %v1098, %v1100
        %v1102 = vrot.slane %v1088, %v1101
        %v1103 = vcombine.low %v1070, %v1086
        %v1104 = vcombine.high %v1070, %v1086
        %v1106 = vunpack.c.l.s4 1934713408
        %v1107 = vunpack.c.0.s8 %v1106
        %v1108 = vlaneseq
        %v1109 = vshrl.u32 %v1108, 7
        %v1110 = vsub.s32 %v1107, %v1109
        %v1111 = vrot.slane %v1103, %v1110
        %v1113 = vunpack.c.l.s4 1934713408
        %v1114 = vunpack.c.0.s8 %v1113
        %v1115 = vlaneseq
        %v1116 = vshrl.u32 %v1115, 7
        %v1117 = vsub.s32 %v1114, %v1116
        %v1118 = vrot.slane %v1104, %v1117
        %v1119 = vcombine.high %v1095, 0.0
        %v1120 = vcombine.high %v1102, 0.0
        %v1121 = vcombine.high %v1111, 0.0
        %v1122 = vcombine.high %v1118, 0.0
        %v1123 = vcombine.low %v848, %v862
        %v1124 = vcombine.high %v848, %v862
        %v1126 = vunpack.c.l.s4 1983009808
        %v1127 = vunpack.c.0.s8 %v1126
        %v1128 = vlaneseq
        %v1129 = vshrl.u32 %v1128, 7
        %v1130 = vsub.s32 %v1127, %v1129
        %v1131 = vrot.slane %v1123, %v1130
        %v1133 = vunpack.c.l.s4 1983009808
        %v1134 = vunpack.c.0.s8 %v1133
        %v1135 = vlaneseq
        %v1136 = vshrl.u32 %v1135, 7
        %v1137 = vsub.s32 %v1134, %v1136
        %v1138 = vrot.slane %v1124, %v1137
        %v1139 = vcombine.low %v856, %v868
        %v1140 = vcombine.high %v856, %v868
        %v1142 = vunpack.c.l.s4 1983009808
        %v1143 = vunpack.c.0.s8 %v1142
        %v1144 = vlaneseq
        %v1145 = vshrl.u32 %v1144, 7
        %v1146 = vsub.s32 %v1143, %v1145
        %v1147 = vrot.slane %v1139, %v1146
        %v1149 = vunpack.c.l.s4 1983009808
        %v1150 = vunpack.c.0.s8 %v1149
        %v1151 = vlaneseq
        %v1152 = vshrl.u32 %v1151, 7
        %v1153 = vsub.s32 %v1150, %v1152
        %v1154 = vrot.slane %v1140, %v1153
        %v1155 = vcombine.low %v874, %v886
        %v1156 = vcombine.high %v874, %v886
        %v1158 = vunpack.c.l.s4 1983009808
        %v1159 = vunpack.c.0.s8 %v1158
        %v1160 = vlaneseq
        %v1161 = vshrl.u32 %v1160, 7
        %v1162 = vsub.s32 %v1159, %v1161
        %v1163 = vrot.slane %v1155, %v1162
        %v1165 = vunpack.c.l.s4 1983009808
        %v1166 = vunpack.c.0.s8 %v1165
        %v1167 = vlaneseq
        %v1168 = vshrl.u32 %v1167, 7
        %v1169 = vsub.s32 %v1166, %v1168
        %v1170 = vrot.slane %v1156, %v1169
        %v1171 = vcombine.low %v880, %v892
        %v1172 = vcombine.high %v880, %v892
        %v1174 = vunpack.c.l.s4 1983009808
        %v1175 = vunpack.c.0.s8 %v1174
        %v1176 = vlaneseq
        %v1177 = vshrl.u32 %v1176, 7
        %v1178 = vsub.s32 %v1175, %v1177
        %v1179 = vrot.slane %v1171, %v1178
        %v1181 = vunpack.c.l.s4 1983009808
        %v1182 = vunpack.c.0.s8 %v1181
        %v1183 = vlaneseq
        %v1184 = vshrl.u32 %v1183, 7
        %v1185 = vsub.s32 %v1182, %v1184
        %v1186 = vrot.slane %v1172, %v1185
        %v1187 = vcombine.low %v1131, %v1147
        %v1188 = vcombine.high %v1131, %v1147
        %v1190 = vunpack.c.l.s4 1934713408
        %v1191 = vunpack.c.0.s8 %v1190
        %v1192 = vlaneseq
        %v1193 = vshrl.u32 %v1192, 7
        %v1194 = vsub.s32 %v1191, %v1193
        %v1195 = vrot.slane %v1187, %v1194
        %v1197 = vunpack.c.l.s4 1934713408
        %v1198 = vunpack.c.0.s8 %v1197
        %v1199 = vlaneseq
        %v1200 = vshrl.u32 %v1199, 7
        %v1201 = vsub.s32 %v1198, %v1200
        %v1202 = vrot.slane %v1188, %v1201
        %v1203 = vcombine.low %v1138, %v1154
        %v1204 = vcombine.high %v1138, %v1154
        %v1206 = vunpack.c.l.s4 1934713408
        %v1207 = vunpack.c.0.s8 %v1206
        %v1208 = vlaneseq
        %v1209 = vshrl.u32 %v1208, 7
        %v1210 = vsub.s32 %v1207, %v1209
        %v1211 = vrot.slane %v1203, %v1210
        %v1213 = vunpack.c.l.s4 1934713408
        %v1214 = vunpack.c.0.s8 %v1213
        %v1215 = vlaneseq
        %v1216 = vshrl.u32 %v1215, 7
        %v1217 = vsub.s32 %v1214, %v1216
        %v1218 = vrot.slane %v1204, %v1217
        %v1219 = vcombine.low %v1163, %v1179
        %v1220 = vcombine.high %v1163, %v1179
        %v1222 = vunpack.c.l.s4 1934713408
        %v1223 = vunpack.c.0.s8 %v1222
        %v1224 = vlaneseq
        %v1225 = vshrl.u32 %v1224, 7
        %v1226 = vsub.s32 %v1223, %v1225
        %v1227 = vrot.slane %v1219, %v1226
        %v1229 = vunpack.c.l.s4 1934713408
        %v1230 = vunpack.c.0.s8 %v1229
        %v1231 = vlaneseq
        %v1232 = vshrl.u32 %v1231, 7
        %v1233 = vsub.s32 %v1230, %v1232
        %v1234 = vrot.slane %v1220, %v1233
        %v1235 = vcombine.low %v1170, %v1186
        %v1236 = vcombine.high %v1170, %v1186
        %v1238 = vunpack.c.l.s4 1934713408
        %v1239 = vunpack.c.0.s8 %v1238
        %v1240 = vlaneseq
        %v1241 = vshrl.u32 %v1240, 7
        %v1242 = vsub.s32 %v1239, %v1241
        %v1243 = vrot.slane %v1235, %v1242
        %v1245 = vunpack.c.l.s4 1934713408
        %v1246 = vunpack.c.0.s8 %v1245
        %v1247 = vlaneseq
        %v1248 = vshrl.u32 %v1247, 7
        %v1249 = vsub.s32 %v1246, %v1248
        %v1250 = vrot.slane %v1236, %v1249
        %v1251 = vcombine.low %v1195, %v1227
        %v1252 = vcombine.high %v1195, %v1227
        %v1253 = vcombine.low %v1202, %v1234
        %v1254 = vcombine.high %v1202, %v1234
        %v1255 = vcombine.low %v1211, %v1243
        %v1256 = vcombine.high %v1211, %v1243
        %v1257 = vcombine.low %v1218, %v1250
        %v1258 = vcombine.high %v1218, %v1250
        %v1259 = vcombine.low %v898, %v910
        %v1260 = vcombine.high %v898, %v910
        %v1262 = vunpack.c.l.s4 1983009808
        %v1263 = vunpack.c.0.s8 %v1262
        %v1264 = vlaneseq
        %v1265 = vshrl.u32 %v1264, 7
        %v1266 = vsub.s32 %v1263, %v1265
        %v1267 = vrot.slane %v1259, %v1266
        %v1269 = vunpack.c.l.s4 1983009808
        %v1270 = vunpack.c.0.s8 %v1269
        %v1271 = vlaneseq
        %v1272 = vshrl.u32 %v1271, 7
        %v1273 = vsub.s32 %v1270, %v1272
        %v1274 = vrot.slane %v1260, %v1273
        %v1275 = vcombine.low %v904, %v916
        %v1276 = vcombine.high %v904, %v916
        %v1278 = vunpack.c.l.s4 1983009808
        %v1279 = vunpack.c.0.s8 %v1278
        %v1280 = vlaneseq
        %v1281 = vshrl.u32 %v1280, 7
        %v1282 = vsub.s32 %v1279, %v1281
        %v1283 = vrot.slane %v1275, %v1282
        %v1285 = vunpack.c.l.s4 1983009808
        %v1286 = vunpack.c.0.s8 %v1285
        %v1287 = vlaneseq
        %v1288 = vshrl.u32 %v1287, 7
        %v1289 = vsub.s32 %v1286, %v1288
        %v1290 = vrot.slane %v1276, %v1289
        %v1291 = vcombine.low %v1267, %v1283
        %v1292 = vcombine.high %v1267, %v1283
        %v1294 = vunpack.c.l.s4 1934713408
        %v1295 = vunpack.c.0.s8 %v1294
        %v1296 = vlaneseq
        %v1297 = vshrl.u32 %v1296, 7
        %v1298 = vsub.s32 %v1295, %v1297
        %v1299 = vrot.slane %v1291, %v1298
        %v1301 = vunpack.c.l.s4 1934713408
        %v1302 = vunpack.c.0.s8 %v1301
        %v1303 = vlaneseq
        %v1304 = vshrl.u32 %v1303, 7
        %v1305 = vsub.s32 %v1302, %v1304
        %v1306 = vrot.slane %v1292, %v1305
        %v1307 = vcombine.low %v1274, %v1290
        %v1308 = vcombine.high %v1274, %v1290
        %v1310 = vunpack.c.l.s4 1934713408
        %v1311 = vunpack.c.0.s8 %v1310
        %v1312 = vlaneseq
        %v1313 = vshrl.u32 %v1312, 7
        %v1314 = vsub.s32 %v1311, %v1313
        %v1315 = vrot.slane %v1307, %v1314
        %v1317 = vunpack.c.l.s4 1934713408
        %v1318 = vunpack.c.0.s8 %v1317
        %v1319 = vlaneseq
        %v1320 = vshrl.u32 %v1319, 7
        %v1321 = vsub.s32 %v1318, %v1320
        %v1322 = vrot.slane %v1308, %v1321
        %v1323 = vcombine.high %v1299, 0.0
        %v1324 = vcombine.high %v1306, 0.0
        %v1325 = vcombine.high %v1315, 0.0
        %v1326 = vcombine.high %v1322, 0.0
        %v1327 = vcombine.low %v1047, %v1049
        %v1328 = vcombine.high %v1047, %v1049
        %v1330 = vunpack.c.l.s4 1983009808
        %v1331 = vunpack.c.0.s8 %v1330
        %v1332 = vlaneseq
        %v1333 = vshrl.u32 %v1332, 7
        %v1334 = vsub.s32 %v1331, %v1333
        %v1335 = vrot.slane %v1327, %v1334
        %v1337 = vunpack.c.l.s4 1983009808
        %v1338 = vunpack.c.0.s8 %v1337
        %v1339 = vlaneseq
        %v1340 = vshrl.u32 %v1339, 7
        %v1341 = vsub.s32 %v1338, %v1340
        %v1342 = vrot.slane %v1328, %v1341
        %v1343 = vcombine.low %v1048, %v1050
        %v1344 = vcombine.high %v1048, %v1050
        %v1346 = vunpack.c.l.s4 1983009808
        %v1347 = vunpack.c.0.s8 %v1346
        %v1348 = vlaneseq
        %v1349 = vshrl.u32 %v1348, 7
        %v1350 = vsub.s32 %v1347, %v1349
        %v1351 = vrot.slane %v1343, %v1350
        %v1353 = vunpack.c.l.s4 1983009808
        %v1354 = vunpack.c.0.s8 %v1353
        %v1355 = vlaneseq
        %v1356 = vshrl.u32 %v1355, 7
        %v1357 = vsub.s32 %v1354, %v1356
        %v1358 = vrot.slane %v1344, %v1357
        %v1359 = vcombine.low %v1051, %v1053
        %v1360 = vcombine.high %v1051, %v1053
        %v1362 = vunpack.c.l.s4 1983009808
        %v1363 = vunpack.c.0.s8 %v1362
        %v1364 = vlaneseq
        %v1365 = vshrl.u32 %v1364, 7
        %v1366 = vsub.s32 %v1363, %v1365
        %v1367 = vrot.slane %v1359, %v1366
        %v1369 = vunpack.c.l.s4 1983009808
        %v1370 = vunpack.c.0.s8 %v1369
        %v1371 = vlaneseq
        %v1372 = vshrl.u32 %v1371, 7
        %v1373 = vsub.s32 %v1370, %v1372
        %v1374 = vrot.slane %v1360, %v1373
        %v1375 = vcombine.low %v1052, %v1054
        %v1376 = vcombine.high %v1052, %v1054
        %v1378 = vunpack.c.l.s4 1983009808
        %v1379 = vunpack.c.0.s8 %v1378
        %v1380 = vlaneseq
        %v1381 = vshrl.u32 %v1380, 7
        %v1382 = vsub.s32 %v1379, %v1381
        %v1383 = vrot.slane %v1375, %v1382
        %v1385 = vunpack.c.l.s4 1983009808
        %v1386 = vunpack.c.0.s8 %v1385
        %v1387 = vlaneseq
        %v1388 = vshrl.u32 %v1387, 7
        %v1389 = vsub.s32 %v1386, %v1388
        %v1390 = vrot.slane %v1376, %v1389
        %v1391 = vcombine.low %v1335, %v1351
        %v1392 = vcombine.high %v1335, %v1351
        %v1394 = vunpack.c.l.s4 1934713408
        %v1395 = vunpack.c.0.s8 %v1394
        %v1396 = vlaneseq
        %v1397 = vshrl.u32 %v1396, 7
        %v1398 = vsub.s32 %v1395, %v1397
        %v1399 = vrot.slane %v1391, %v1398
        %v1401 = vunpack.c.l.s4 1934713408
        %v1402 = vunpack.c.0.s8 %v1401
        %v1403 = vlaneseq
        %v1404 = vshrl.u32 %v1403, 7
        %v1405 = vsub.s32 %v1402, %v1404
        %v1406 = vrot.slane %v1392, %v1405
        %v1407 = vcombine.low %v1342, %v1358
        %v1408 = vcombine.high %v1342, %v1358
        %v1410 = vunpack.c.l.s4 1934713408
        %v1411 = vunpack.c.0.s8 %v1410
        %v1412 = vlaneseq
        %v1413 = vshrl.u32 %v1412, 7
        %v1414 = vsub.s32 %v1411, %v1413
        %v1415 = vrot.slane %v1407, %v1414
        %v1417 = vunpack.c.l.s4 1934713408
        %v1418 = vunpack.c.0.s8 %v1417
        %v1419 = vlaneseq
        %v1420 = vshrl.u32 %v1419, 7
        %v1421 = vsub.s32 %v1418, %v1420
        %v1422 = vrot.slane %v1408, %v1421
        %v1423 = vcombine.low %v1367, %v1383
        %v1424 = vcombine.high %v1367, %v1383
        %v1426 = vunpack.c.l.s4 1934713408
        %v1427 = vunpack.c.0.s8 %v1426
        %v1428 = vlaneseq
        %v1429 = vshrl.u32 %v1428, 7
        %v1430 = vsub.s32 %v1427, %v1429
        %v1431 = vrot.slane %v1423, %v1430
        %v1433 = vunpack.c.l.s4 1934713408
        %v1434 = vunpack.c.0.s8 %v1433
        %v1435 = vlaneseq
        %v1436 = vshrl.u32 %v1435, 7
        %v1437 = vsub.s32 %v1434, %v1436
        %v1438 = vrot.slane %v1424, %v1437
        %v1439 = vcombine.low %v1374, %v1390
        %v1440 = vcombine.high %v1374, %v1390
        %v1442 = vunpack.c.l.s4 1934713408
        %v1443 = vunpack.c.0.s8 %v1442
        %v1444 = vlaneseq
        %v1445 = vshrl.u32 %v1444, 7
        %v1446 = vsub.s32 %v1443, %v1445
        %v1447 = vrot.slane %v1439, %v1446
        %v1449 = vunpack.c.l.s4 1934713408
        %v1450 = vunpack.c.0.s8 %v1449
        %v1451 = vlaneseq
        %v1452 = vshrl.u32 %v1451, 7
        %v1453 = vsub.s32 %v1450, %v1452
        %v1454 = vrot.slane %v1440, %v1453
        %v1455 = vcombine.low %v1399, %v1431
        %v1456 = vcombine.high %v1399, %v1431
        %v1457 = vcombine.low %v1406, %v1438
        %v1458 = vcombine.high %v1406, %v1438
        %v1459 = vcombine.low %v1415, %v1447
        %v1460 = vcombine.high %v1415, %v1447
        %v1461 = vcombine.low %v1422, %v1454
        %v1462 = vcombine.high %v1422, %v1454
        %v1463 = vcombine.low %v1251, %v1253
        %v1464 = vcombine.high %v1251, %v1253
        %v1466 = vunpack.c.l.s4 1983009808
        %v1467 = vunpack.c.0.s8 %v1466
        %v1468 = vlaneseq
        %v1469 = vshrl.u32 %v1468, 7
        %v1470 = vsub.s32 %v1467, %v1469
        %v1471 = vrot.slane %v1463, %v1470
        %v1473 = vunpack.c.l.s4 1983009808
        %v1474 = vunpack.c.0.s8 %v1473
        %v1475 = vlaneseq
        %v1476 = vshrl.u32 %v1475, 7
        %v1477 = vsub.s32 %v1474, %v1476
        %v1478 = vrot.slane %v1464, %v1477
        %v1479 = vcombine.low %v1252, %v1254
        %v1480 = vcombine.high %v1252, %v1254
        %v1482 = vunpack.c.l.s4 1983009808
        %v1483 = vunpack.c.0.s8 %v1482
        %v1484 = vlaneseq
        %v1485 = vshrl.u32 %v1484, 7
        %v1486 = vsub.s32 %v1483, %v1485
        %v1487 = vrot.slane %v1479, %v1486
        %v1489 = vunpack.c.l.s4 1983009808
        %v1490 = vunpack.c.0.s8 %v1489
        %v1491 = vlaneseq
        %v1492 = vshrl.u32 %v1491, 7
        %v1493 = vsub.s32 %v1490, %v1492
        %v1494 = vrot.slane %v1480, %v1493
        %v1495 = vcombine.low %v1255, %v1257
        %v1496 = vcombine.high %v1255, %v1257
        %v1498 = vunpack.c.l.s4 1983009808
        %v1499 = vunpack.c.0.s8 %v1498
        %v1500 = vlaneseq
        %v1501 = vshrl.u32 %v1500, 7
        %v1502 = vsub.s32 %v1499, %v1501
        %v1503 = vrot.slane %v1495, %v1502
        %v1505 = vunpack.c.l.s4 1983009808
        %v1506 = vunpack.c.0.s8 %v1505
        %v1507 = vlaneseq
        %v1508 = vshrl.u32 %v1507, 7
        %v1509 = vsub.s32 %v1506, %v1508
        %v1510 = vrot.slane %v1496, %v1509
        %v1511 = vcombine.low %v1256, %v1258
        %v1512 = vcombine.high %v1256, %v1258
        %v1514 = vunpack.c.l.s4 1983009808
        %v1515 = vunpack.c.0.s8 %v1514
        %v1516 = vlaneseq
        %v1517 = vshrl.u32 %v1516, 7
        %v1518 = vsub.s32 %v1515, %v1517
        %v1519 = vrot.slane %v1511, %v1518
        %v1521 = vunpack.c.l.s4 1983009808
        %v1522 = vunpack.c.0.s8 %v1521
        %v1523 = vlaneseq
        %v1524 = vshrl.u32 %v1523, 7
        %v1525 = vsub.s32 %v1522, %v1524
        %v1526 = vrot.slane %v1512, %v1525
        %v1527 = vcombine.low %v1471, %v1487
        %v1528 = vcombine.high %v1471, %v1487
        %v1530 = vunpack.c.l.s4 1934713408
        %v1531 = vunpack.c.0.s8 %v1530
        %v1532 = vlaneseq
        %v1533 = vshrl.u32 %v1532, 7
        %v1534 = vsub.s32 %v1531, %v1533
        %v1535 = vrot.slane %v1527, %v1534
        %v1537 = vunpack.c.l.s4 1934713408
        %v1538 = vunpack.c.0.s8 %v1537
        %v1539 = vlaneseq
        %v1540 = vshrl.u32 %v1539, 7
        %v1541 = vsub.s32 %v1538, %v1540
        %v1542 = vrot.slane %v1528, %v1541
        %v1543 = vcombine.low %v1478, %v1494
        %v1544 = vcombine.high %v1478, %v1494
        %v1546 = vunpack.c.l.s4 1934713408
        %v1547 = vunpack.c.0.s8 %v1546
        %v1548 = vlaneseq
        %v1549 = vshrl.u32 %v1548, 7
        %v1550 = vsub.s32 %v1547, %v1549
        %v1551 = vrot.slane %v1543, %v1550
        %v1553 = vunpack.c.l.s4 1934713408
        %v1554 = vunpack.c.0.s8 %v1553
        %v1555 = vlaneseq
        %v1556 = vshrl.u32 %v1555, 7
        %v1557 = vsub.s32 %v1554, %v1556
        %v1558 = vrot.slane %v1544, %v1557
        %v1559 = vcombine.low %v1503, %v1519
        %v1560 = vcombine.high %v1503, %v1519
        %v1562 = vunpack.c.l.s4 1934713408
        %v1563 = vunpack.c.0.s8 %v1562
        %v1564 = vlaneseq
        %v1565 = vshrl.u32 %v1564, 7
        %v1566 = vsub.s32 %v1563, %v1565
        %v1567 = vrot.slane %v1559, %v1566
        %v1569 = vunpack.c.l.s4 1934713408
        %v1570 = vunpack.c.0.s8 %v1569
        %v1571 = vlaneseq
        %v1572 = vshrl.u32 %v1571, 7
        %v1573 = vsub.s32 %v1570, %v1572
        %v1574 = vrot.slane %v1560, %v1573
        %v1575 = vcombine.low %v1510, %v1526
        %v1576 = vcombine.high %v1510, %v1526
        %v1578 = vunpack.c.l.s4 1934713408
        %v1579 = vunpack.c.0.s8 %v1578
        %v1580 = vlaneseq
        %v1581 = vshrl.u32 %v1580, 7
        %v1582 = vsub.s32 %v1579, %v1581
        %v1583 = vrot.slane %v1575, %v1582
        %v1585 = vunpack.c.l.s4 1934713408
        %v1586 = vunpack.c.0.s8 %v1585
        %v1587 = vlaneseq
        %v1588 = vshrl.u32 %v1587, 7
        %v1589 = vsub.s32 %v1586, %v1588
        %v1590 = vrot.slane %v1576, %v1589
        %v1591 = vcombine.low %v1535, %v1567
        %v1592 = vcombine.high %v1535, %v1567
        %v1593 = vcombine.low %v1542, %v1574
        %v1594 = vcombine.high %v1542, %v1574
        %v1595 = vcombine.low %v1551, %v1583
        %v1596 = vcombine.high %v1551, %v1583
        %v1597 = vcombine.low %v1558, %v1590
        %v1598 = vcombine.high %v1558, %v1590
        %v1599 = vcombine.low %v1095, %v1102
        %v1601 = vunpack.c.l.s4 1983009808
        %v1602 = vunpack.c.0.s8 %v1601
        %v1603 = vlaneseq
        %v1604 = vshrl.u32 %v1603, 7
        %v1605 = vsub.s32 %v1602, %v1604
        %v1606 = vrot.slane %v1599, %v1605
        %v1607 = vcombine.low %v1119, %v1120
        %v1609 = vunpack.c.l.s4 1983009808
        %v1610 = vunpack.c.0.s8 %v1609
        %v1611 = vlaneseq
        %v1612 = vshrl.u32 %v1611, 7
        %v1613 = vsub.s32 %v1610, %v1612
        %v1614 = vrot.slane %v1607, %v1613
        %v1615 = vcombine.low %v1111, %v1118
        %v1617 = vunpack.c.l.s4 1983009808
        %v1618 = vunpack.c.0.s8 %v1617
        %v1619 = vlaneseq
        %v1620 = vshrl.u32 %v1619, 7
        %v1621 = vsub.s32 %v1618, %v1620
        %v1622 = vrot.slane %v1615, %v1621
        %v1623 = vcombine.low %v1121, %v1122
        %v1625 = vunpack.c.l.s4 1983009808
        %v1626 = vunpack.c.0.s8 %v1625
        %v1627 = vlaneseq
        %v1628 = vshrl.u32 %v1627, 7
        %v1629 = vsub.s32 %v1626, %v1628
        %v1630 = vrot.slane %v1623, %v1629
        %v1631 = vcombine.low %v1606, %v1614
        %v1632 = vcombine.high %v1606, %v1614
        %v1634 = vunpack.c.l.s4 1934713408
        %v1635 = vunpack.c.0.s8 %v1634
        %v1636 = vlaneseq
        %v1637 = vshrl.u32 %v1636, 7
        %v1638 = vsub.s32 %v1635, %v1637
        %v1639 = vrot.slane %v1631, %v1638
        %v1641 = vunpack.c.l.s4 1934713408
        %v1642 = vunpack.c.0.s8 %v1641
        %v1643 = vlaneseq
        %v1644 = vshrl.u32 %v1643, 7
        %v1645 = vsub.s32 %v1642, %v1644
        %v1646 = vrot.slane %v1632, %v1645
        %v1647 = vcombine.low %v1622, %v1630
        %v1648 = vcombine.high %v1622, %v1630
        %v1650 = vunpack.c.l.s4 1934713408
        %v1651 = vunpack.c.0.s8 %v1650
        %v1652 = vlaneseq
        %v1653 = vshrl.u32 %v1652, 7
        %v1654 = vsub.s32 %v1651, %v1653
        %v1655 = vrot.slane %v1647, %v1654
        %v1657 = vunpack.c.l.s4 1934713408
        %v1658 = vunpack.c.0.s8 %v1657
        %v1659 = vlaneseq
        %v1660 = vshrl.u32 %v1659, 7
        %v1661 = vsub.s32 %v1658, %v1660
        %v1662 = vrot.slane %v1648, %v1661
        %v1663 = vcombine.low %v1639, %v1655
        %v1664 = vcombine.high %v1639, %v1655
        %v1665 = vcombine.low %v1646, %v1662
        %v1666 = vcombine.high %v1646, %v1662
        %v1667 = vcombine.low %v1299, %v1306
        %v1669 = vunpack.c.l.s4 1983009808
        %v1670 = vunpack.c.0.s8 %v1669
        %v1671 = vlaneseq
        %v1672 = vshrl.u32 %v1671, 7
        %v1673 = vsub.s32 %v1670, %v1672
        %v1674 = vrot.slane %v1667, %v1673
        %v1675 = vcombine.low %v1323, %v1324
        %v1677 = vunpack.c.l.s4 1983009808
        %v1678 = vunpack.c.0.s8 %v1677
        %v1679 = vlaneseq
        %v1680 = vshrl.u32 %v1679, 7
        %v1681 = vsub.s32 %v1678, %v1680
        %v1682 = vrot.slane %v1675, %v1681
        %v1683 = vcombine.low %v1315, %v1322
        %v1685 = vunpack.c.l.s4 1983009808
        %v1686 = vunpack.c.0.s8 %v1685
        %v1687 = vlaneseq
        %v1688 = vshrl.u32 %v1687, 7
        %v1689 = vsub.s32 %v1686, %v1688
        %v1690 = vrot.slane %v1683, %v1689
        %v1691 = vcombine.low %v1325, %v1326
        %v1693 = vunpack.c.l.s4 1983009808
        %v1694 = vunpack.c.0.s8 %v1693
        %v1695 = vlaneseq
        %v1696 = vshrl.u32 %v1695, 7
        %v1697 = vsub.s32 %v1694, %v1696
        %v1698 = vrot.slane %v1691, %v1697
        %v1699 = vcombine.low %v1674, %v1682
        %v1700 = vcombine.high %v1674, %v1682
        %v1702 = vunpack.c.l.s4 1934713408
        %v1703 = vunpack.c.0.s8 %v1702
        %v1704 = vlaneseq
        %v1705 = vshrl.u32 %v1704, 7
        %v1706 = vsub.s32 %v1703, %v1705
        %v1707 = vrot.slane %v1699, %v1706
        %v1709 = vunpack.c.l.s4 1934713408
        %v1710 = vunpack.c.0.s8 %v1709
        %v1711 = vlaneseq
        %v1712 = vshrl.u32 %v1711, 7
        %v1713 = vsub.s32 %v1710, %v1712
        %v1714 = vrot.slane %v1700, %v1713
        %v1715 = vcombine.low %v1690, %v1698
        %v1716 = vcombine.high %v1690, %v1698
        %v1718 = vunpack.c.l.s4 1934713408
        %v1719 = vunpack.c.0.s8 %v1718
        %v1720 = vlaneseq
        %v1721 = vshrl.u32 %v1720, 7
        %v1722 = vsub.s32 %v1719, %v1721
        %v1723 = vrot.slane %v1715, %v1722
        %v1725 = vunpack.c.l.s4 1934713408
        %v1726 = vunpack.c.0.s8 %v1725
        %v1727 = vlaneseq
        %v1728 = vshrl.u32 %v1727, 7
        %v1729 = vsub.s32 %v1726, %v1728
        %v1730 = vrot.slane %v1716, %v1729
        %v1731 = vcombine.low %v1707, %v1723
        %v1732 = vcombine.high %v1707, %v1723
        %v1733 = vcombine.low %v1714, %v1730
        %v1734 = vcombine.high %v1714, %v1730
        %v1735 = vpack.c.bf16 %v1591, %v1455
        %v1736 = vpack.c.bf16 %v1592, %v1456
        %v1737 = vpack.c.bf16 %v1593, %v1457
        %v1738 = vpack.c.bf16 %v1594, %v1458
        %v1739 = vpack.c.bf16 %v1595, %v1459
        %v1740 = vpack.c.bf16 %v1596, %v1460
        %v1741 = vpack.c.bf16 %v1597, %v1461
        %v1742 = vpack.c.bf16 %v1598, %v1462
        %v1743 = vpack.c.bf16 %v1731, %v1663
        %v1744 = vpack.c.bf16 %v1732, %v1664
        %v1745 = vpack.c.bf16 %v1733, %v1665
        %v1746 = vpack.c.bf16 %v1734, %v1666
        %v1751 = vunpack.c.l.b16 %v1735
        %v1752 = vunpack.c.h.b16 %v1735
        %v1753 = vunpack.c.l.b16 %v1736
        %v1754 = vunpack.c.h.b16 %v1736
        %v1755 = vunpack.c.l.b16 %v1737
        %v1756 = vunpack.c.h.b16 %v1737
        %v1757 = vunpack.c.l.b16 %v1738
        %v1758 = vunpack.c.h.b16 %v1738
        %v1759 = vpack.c.b16 %v1751, %v1751
        %v1760 = vpack.c.b16 %v1752, %v1752
        %v1761 = vpack.c.b16 %v1753, %v1753
        %v1762 = vpack.c.b16 %v1754, %v1754
        %v1763 = vpack.c.b16 %v1755, %v1755
        %v1764 = vpack.c.b16 %v1756, %v1756
        %v1765 = vpack.c.b16 %v1757, %v1757
        %v1766 = vpack.c.b16 %v1758, %v1758
        %v1771 = vunpack.c.l.b16 %v1739
        %v1772 = vunpack.c.h.b16 %v1739
        %v1773 = vunpack.c.l.b16 %v1740
        %v1774 = vunpack.c.h.b16 %v1740
        %v1775 = vunpack.c.l.b16 %v1741
        %v1776 = vunpack.c.h.b16 %v1741
        %v1777 = vunpack.c.l.b16 %v1742
        %v1778 = vunpack.c.h.b16 %v1742
        %v1779 = vpack.c.b16 %v1771, %v1771
        %v1780 = vpack.c.b16 %v1772, %v1772
        %v1781 = vpack.c.b16 %v1773, %v1773
        %v1782 = vpack.c.b16 %v1774, %v1774
        %v1783 = vpack.c.b16 %v1775, %v1775
        %v1784 = vpack.c.b16 %v1776, %v1776
        %v1785 = vpack.c.b16 %v1777, %v1777
        %v1786 = vpack.c.b16 %v1778, %v1778
        %v1791 = vunpack.c.l.b16 %v1743
        %v1792 = vunpack.c.h.b16 %v1743
        %v1793 = vunpack.c.l.b16 %v1744
        %v1794 = vunpack.c.h.b16 %v1744
        %v1795 = vunpack.c.l.b16 %v1745
        %v1796 = vunpack.c.h.b16 %v1745
        %v1797 = vunpack.c.l.b16 %v1746
        %v1798 = vunpack.c.h.b16 %v1746
        %v1799 = vpack.c.b16 %v1791, %v1791
        %v1800 = vpack.c.b16 %v1792, %v1792
        %v1801 = vpack.c.b16 %v1793, %v1793
        %v1802 = vpack.c.b16 %v1794, %v1794
        %v1803 = vpack.c.b16 %v1795, %v1795
        %v1804 = vpack.c.b16 %v1796, %v1796
        %v1805 = vpack.c.b16 %v1797, %v1797
        %v1806 = vpack.c.b16 %v1798, %v1798
        %vm1807 = vcmask 64512
        %v1809 = vsel %vm1807, %v1759, 0
        %v1812 = vsel %vm1807, %v1779, 0
        %1814 = vmatprep.subr.bf16.mxu0 0
        %1815 = vmatpush1.bf16.xpose.msra.mxu0 %v1812
        %1816 = vmatprep.subr.bf16.mxu0 0
        %1817 = vmatpush1.bf16.xpose.msra.mxu0 0
        %1818 = vmatprep.subr.bf16.mxu0 0
        %1819 = vmatpush1.bf16.xpose.msra.mxu0 0
        %1820 = vmatprep.subr.bf16.mxu0 0
        %1821 = vmatpush1.bf16.xpose.msra.mxu0 0
        %1822 = vmatprep.subr.bf16.mxu0 0
        %1823 = vmatpush1.bf16.xpose.msra.mxu0 0
        %1824 = vmatprep.subr.bf16.mxu0 0
        %1825 = vmatpush1.bf16.xpose.msra.mxu0 0
        %1826 = vmatprep.subr.bf16.mxu0 0
        %1827 = vmatpush1.bf16.xpose.msra.mxu0 0
        %1828 = vmatprep.subr.bf16.mxu0 0
        %1829 = vmatpush1.bf16.xpose.msra.mxu0 0
        %1830 = vmatprep.subr.bf16.mxu0 0
        %1831 = vmatpush1.bf16.xpose.msra.mxu0 0
        %1832 = vmatprep.subr.bf16.mxu0 0
        %1833 = vmatpush1.bf16.xpose.msra.mxu0 0
        %1834 = vmatprep.subr.bf16.mxu0 0
        %1835 = vmatpush1.bf16.xpose.msra.mxu0 0
        %1836 = vmatprep.subr.bf16.mxu0 0
        %1837 = vmatpush1.bf16.xpose.msra.mxu0 0
        %1838 = vmatprep.subr.bf16.mxu0 0
        %1839 = vmatpush1.bf16.xpose.msra.mxu0 0
        %1840 = vmatprep.subr.bf16.mxu0 0
        %1841 = vmatpush1.bf16.xpose.msra.mxu0 0
        %1842 = vmatprep.subr.bf16.mxu0 0
        %1843 = vmatpush1.bf16.xpose.msra.mxu0 0
        %1844 = vmatprep.subr.bf16.mxu0 0
        %1845 = vmatpush1.bf16.xpose.msra.mxu0 0
        %1846 = vmatprep.mubr.bf16.mxu0 0
        %1847 = vmatmul.mubr.bf16.gmra.mrb[0].mxu0 %v1809
        %v1848 = vpop.f32.mrb[0].mxu0
        %v1849 = vadd.f32 0.0, %v1848
        %v1850 = vpop.f32.mrb[0].mxu0
        %v1851 = vpop.f32.mrb[0].mxu0
        %v1852 = vpop.f32.mrb[0].mxu0
        %1853 = vdwg.mxu0
        %v1855 = vsel %vm1807, %v1760, 0
        %v1858 = vsel %vm1807, %v1780, 0
        %1860 = vmatprep.subr.bf16.mxu0 0
        %1861 = vmatpush1.bf16.xpose.msra.mxu0 %v1858
        %1862 = vmatprep.subr.bf16.mxu0 0
        %1863 = vmatpush1.bf16.xpose.msra.mxu0 0
        %1864 = vmatprep.subr.bf16.mxu0 0
        %1865 = vmatpush1.bf16.xpose.msra.mxu0 0
        %1866 = vmatprep.subr.bf16.mxu0 0
        %1867 = vmatpush1.bf16.xpose.msra.mxu0 0
        %1868 = vmatprep.subr.bf16.mxu0 0
        %1869 = vmatpush1.bf16.xpose.msra.mxu0 0
        %1870 = vmatprep.subr.bf16.mxu0 0
        %1871 = vmatpush1.bf16.xpose.msra.mxu0 0
        %1872 = vmatprep.subr.bf16.mxu0 0
        %1873 = vmatpush1.bf16.xpose.msra.mxu0 0
        %1874 = vmatprep.subr.bf16.mxu0 0
        %1875 = vmatpush1.bf16.xpose.msra.mxu0 0
        %1876 = vmatprep.subr.bf16.mxu0 0
        %1877 = vmatpush1.bf16.xpose.msra.mxu0 0
        %1878 = vmatprep.subr.bf16.mxu0 0
        %1879 = vmatpush1.bf16.xpose.msra.mxu0 0
        %1880 = vmatprep.subr.bf16.mxu0 0
        %1881 = vmatpush1.bf16.xpose.msra.mxu0 0
        %1882 = vmatprep.subr.bf16.mxu0 0
        %1883 = vmatpush1.bf16.xpose.msra.mxu0 0
        %1884 = vmatprep.subr.bf16.mxu0 0
        %1885 = vmatpush1.bf16.xpose.msra.mxu0 0
        %1886 = vmatprep.subr.bf16.mxu0 0
        %1887 = vmatpush1.bf16.xpose.msra.mxu0 0
        %1888 = vmatprep.subr.bf16.mxu0 0
        %1889 = vmatpush1.bf16.xpose.msra.mxu0 0
        %1890 = vmatprep.subr.bf16.mxu0 0
        %1891 = vmatpush1.bf16.xpose.msra.mxu0 0
        %1892 = vmatprep.mubr.bf16.mxu0 0
        %1893 = vmatmul.mubr.bf16.gmra.mrb[0].mxu0 %v1855
        %v1894 = vpop.f32.mrb[0].mxu0
        %v1895 = vadd.f32 0.0, %v1894
        %v1896 = vpop.f32.mrb[0].mxu0
        %v1897 = vpop.f32.mrb[0].mxu0
        %v1898 = vpop.f32.mrb[0].mxu0
        %1899 = vdwg.mxu0
        %v1901 = vsel %vm1807, %v1761, 0
        %v1904 = vsel %vm1807, %v1781, 0
        %1906 = vmatprep.subr.bf16.mxu0 0
        %1907 = vmatpush1.bf16.xpose.msra.mxu0 %v1904
        %1908 = vmatprep.subr.bf16.mxu0 0
        %1909 = vmatpush1.bf16.xpose.msra.mxu0 0
        %1910 = vmatprep.subr.bf16.mxu0 0
        %1911 = vmatpush1.bf16.xpose.msra.mxu0 0
        %1912 = vmatprep.subr.bf16.mxu0 0
        %1913 = vmatpush1.bf16.xpose.msra.mxu0 0
        %1914 = vmatprep.subr.bf16.mxu0 0
        %1915 = vmatpush1.bf16.xpose.msra.mxu0 0
        %1916 = vmatprep.subr.bf16.mxu0 0
        %1917 = vmatpush1.bf16.xpose.msra.mxu0 0
        %1918 = vmatprep.subr.bf16.mxu0 0
        %1919 = vmatpush1.bf16.xpose.msra.mxu0 0
        %1920 = vmatprep.subr.bf16.mxu0 0
        %1921 = vmatpush1.bf16.xpose.msra.mxu0 0
        %1922 = vmatprep.subr.bf16.mxu0 0
        %1923 = vmatpush1.bf16.xpose.msra.mxu0 0
        %1924 = vmatprep.subr.bf16.mxu0 0
        %1925 = vmatpush1.bf16.xpose.msra.mxu0 0
        %1926 = vmatprep.subr.bf16.mxu0 0
        %1927 = vmatpush1.bf16.xpose.msra.mxu0 0
        %1928 = vmatprep.subr.bf16.mxu0 0
        %1929 = vmatpush1.bf16.xpose.msra.mxu0 0
        %1930 = vmatprep.subr.bf16.mxu0 0
        %1931 = vmatpush1.bf16.xpose.msra.mxu0 0
        %1932 = vmatprep.subr.bf16.mxu0 0
        %1933 = vmatpush1.bf16.xpose.msra.mxu0 0
        %1934 = vmatprep.subr.bf16.mxu0 0
        %1935 = vmatpush1.bf16.xpose.msra.mxu0 0
        %1936 = vmatprep.subr.bf16.mxu0 0
        %1937 = vmatpush1.bf16.xpose.msra.mxu0 0
        %1938 = vmatprep.mubr.bf16.mxu0 0
        %1939 = vmatmul.mubr.bf16.gmra.mrb[0].mxu0 %v1901
        %v1940 = vpop.f32.mrb[0].mxu0
        %v1941 = vadd.f32 0.0, %v1940
        %v1942 = vpop.f32.mrb[0].mxu0
        %v1943 = vpop.f32.mrb[0].mxu0
        %v1944 = vpop.f32.mrb[0].mxu0
        %1945 = vdwg.mxu0
        %v1947 = vsel %vm1807, %v1762, 0
        %v1950 = vsel %vm1807, %v1782, 0
        %1952 = vmatprep.subr.bf16.mxu0 0
        %1953 = vmatpush1.bf16.xpose.msra.mxu0 %v1950
        %1954 = vmatprep.subr.bf16.mxu0 0
        %1955 = vmatpush1.bf16.xpose.msra.mxu0 0
        %1956 = vmatprep.subr.bf16.mxu0 0
        %1957 = vmatpush1.bf16.xpose.msra.mxu0 0
        %1958 = vmatprep.subr.bf16.mxu0 0
        %1959 = vmatpush1.bf16.xpose.msra.mxu0 0
        %1960 = vmatprep.subr.bf16.mxu0 0
        %1961 = vmatpush1.bf16.xpose.msra.mxu0 0
        %1962 = vmatprep.subr.bf16.mxu0 0
        %1963 = vmatpush1.bf16.xpose.msra.mxu0 0
        %1964 = vmatprep.subr.bf16.mxu0 0
        %1965 = vmatpush1.bf16.xpose.msra.mxu0 0
        %1966 = vmatprep.subr.bf16.mxu0 0
        %1967 = vmatpush1.bf16.xpose.msra.mxu0 0
        %1968 = vmatprep.subr.bf16.mxu0 0
        %1969 = vmatpush1.bf16.xpose.msra.mxu0 0
        %1970 = vmatprep.subr.bf16.mxu0 0
        %1971 = vmatpush1.bf16.xpose.msra.mxu0 0
        %1972 = vmatprep.subr.bf16.mxu0 0
        %1973 = vmatpush1.bf16.xpose.msra.mxu0 0
        %1974 = vmatprep.subr.bf16.mxu0 0
        %1975 = vmatpush1.bf16.xpose.msra.mxu0 0
        %1976 = vmatprep.subr.bf16.mxu0 0
        %1977 = vmatpush1.bf16.xpose.msra.mxu0 0
        %1978 = vmatprep.subr.bf16.mxu0 0
        %1979 = vmatpush1.bf16.xpose.msra.mxu0 0
        %1980 = vmatprep.subr.bf16.mxu0 0
        %1981 = vmatpush1.bf16.xpose.msra.mxu0 0
        %1982 = vmatprep.subr.bf16.mxu0 0
        %1983 = vmatpush1.bf16.xpose.msra.mxu0 0
        %1984 = vmatprep.mubr.bf16.mxu0 0
        %1985 = vmatmul.mubr.bf16.gmra.mrb[0].mxu0 %v1947
        %v1986 = vpop.f32.mrb[0].mxu0
        %v1987 = vadd.f32 0.0, %v1986
        %v1988 = vpop.f32.mrb[0].mxu0
        %v1989 = vpop.f32.mrb[0].mxu0
        %v1990 = vpop.f32.mrb[0].mxu0
        %1991 = vdwg.mxu0
        %v1993 = vsel %vm1807, %v1763, 0
        %v1996 = vsel %vm1807, %v1783, 0
        %1998 = vmatprep.subr.bf16.mxu0 0
        %1999 = vmatpush1.bf16.xpose.msra.mxu0 %v1996
        %2000 = vmatprep.subr.bf16.mxu0 0
        %2001 = vmatpush1.bf16.xpose.msra.mxu0 0
        %2002 = vmatprep.subr.bf16.mxu0 0
        %2003 = vmatpush1.bf16.xpose.msra.mxu0 0
        %2004 = vmatprep.subr.bf16.mxu0 0
        %2005 = vmatpush1.bf16.xpose.msra.mxu0 0
        %2006 = vmatprep.subr.bf16.mxu0 0
        %2007 = vmatpush1.bf16.xpose.msra.mxu0 0
        %2008 = vmatprep.subr.bf16.mxu0 0
        %2009 = vmatpush1.bf16.xpose.msra.mxu0 0
        %2010 = vmatprep.subr.bf16.mxu0 0
        %2011 = vmatpush1.bf16.xpose.msra.mxu0 0
        %2012 = vmatprep.subr.bf16.mxu0 0
        %2013 = vmatpush1.bf16.xpose.msra.mxu0 0
        %2014 = vmatprep.subr.bf16.mxu0 0
        %2015 = vmatpush1.bf16.xpose.msra.mxu0 0
        %2016 = vmatprep.subr.bf16.mxu0 0
        %2017 = vmatpush1.bf16.xpose.msra.mxu0 0
        %2018 = vmatprep.subr.bf16.mxu0 0
        %2019 = vmatpush1.bf16.xpose.msra.mxu0 0
        %2020 = vmatprep.subr.bf16.mxu0 0
        %2021 = vmatpush1.bf16.xpose.msra.mxu0 0
        %2022 = vmatprep.subr.bf16.mxu0 0
        %2023 = vmatpush1.bf16.xpose.msra.mxu0 0
        %2024 = vmatprep.subr.bf16.mxu0 0
        %2025 = vmatpush1.bf16.xpose.msra.mxu0 0
        %2026 = vmatprep.subr.bf16.mxu0 0
        %2027 = vmatpush1.bf16.xpose.msra.mxu0 0
        %2028 = vmatprep.subr.bf16.mxu0 0
        %2029 = vmatpush1.bf16.xpose.msra.mxu0 0
        %2030 = vmatprep.mubr.bf16.mxu0 0
        %2031 = vmatmul.mubr.bf16.gmra.mrb[0].mxu0 %v1993
        %v2032 = vpop.f32.mrb[0].mxu0
        %v2033 = vadd.f32 0.0, %v2032
        %v2034 = vpop.f32.mrb[0].mxu0
        %v2035 = vpop.f32.mrb[0].mxu0
        %v2036 = vpop.f32.mrb[0].mxu0
        %2037 = vdwg.mxu0
        %v2039 = vsel %vm1807, %v1764, 0
        %v2042 = vsel %vm1807, %v1784, 0
        %2044 = vmatprep.subr.bf16.mxu0 0
        %2045 = vmatpush1.bf16.xpose.msra.mxu0 %v2042
        %2046 = vmatprep.subr.bf16.mxu0 0
        %2047 = vmatpush1.bf16.xpose.msra.mxu0 0
        %2048 = vmatprep.subr.bf16.mxu0 0
        %2049 = vmatpush1.bf16.xpose.msra.mxu0 0
        %2050 = vmatprep.subr.bf16.mxu0 0
        %2051 = vmatpush1.bf16.xpose.msra.mxu0 0
        %2052 = vmatprep.subr.bf16.mxu0 0
        %2053 = vmatpush1.bf16.xpose.msra.mxu0 0
        %2054 = vmatprep.subr.bf16.mxu0 0
        %2055 = vmatpush1.bf16.xpose.msra.mxu0 0
        %2056 = vmatprep.subr.bf16.mxu0 0
        %2057 = vmatpush1.bf16.xpose.msra.mxu0 0
        %2058 = vmatprep.subr.bf16.mxu0 0
        %2059 = vmatpush1.bf16.xpose.msra.mxu0 0
        %2060 = vmatprep.subr.bf16.mxu0 0
        %2061 = vmatpush1.bf16.xpose.msra.mxu0 0
        %2062 = vmatprep.subr.bf16.mxu0 0
        %2063 = vmatpush1.bf16.xpose.msra.mxu0 0
        %2064 = vmatprep.subr.bf16.mxu0 0
        %2065 = vmatpush1.bf16.xpose.msra.mxu0 0
        %2066 = vmatprep.subr.bf16.mxu0 0
        %2067 = vmatpush1.bf16.xpose.msra.mxu0 0
        %2068 = vmatprep.subr.bf16.mxu0 0
        %2069 = vmatpush1.bf16.xpose.msra.mxu0 0
        %2070 = vmatprep.subr.bf16.mxu0 0
        %2071 = vmatpush1.bf16.xpose.msra.mxu0 0
        %2072 = vmatprep.subr.bf16.mxu0 0
        %2073 = vmatpush1.bf16.xpose.msra.mxu0 0
        %2074 = vmatprep.subr.bf16.mxu0 0
        %2075 = vmatpush1.bf16.xpose.msra.mxu0 0
        %2076 = vmatprep.mubr.bf16.mxu0 0
        %2077 = vmatmul.mubr.bf16.gmra.mrb[0].mxu0 %v2039
        %v2078 = vpop.f32.mrb[0].mxu0
        %v2079 = vadd.f32 0.0, %v2078
        %v2080 = vpop.f32.mrb[0].mxu0
        %v2081 = vpop.f32.mrb[0].mxu0
        %v2082 = vpop.f32.mrb[0].mxu0
        %2083 = vdwg.mxu0
        %v2085 = vsel %vm1807, %v1765, 0
        %v2088 = vsel %vm1807, %v1785, 0
        %2090 = vmatprep.subr.bf16.mxu0 0
        %2091 = vmatpush1.bf16.xpose.msra.mxu0 %v2088
        %2092 = vmatprep.subr.bf16.mxu0 0
        %2093 = vmatpush1.bf16.xpose.msra.mxu0 0
        %2094 = vmatprep.subr.bf16.mxu0 0
        %2095 = vmatpush1.bf16.xpose.msra.mxu0 0
        %2096 = vmatprep.subr.bf16.mxu0 0
        %2097 = vmatpush1.bf16.xpose.msra.mxu0 0
        %2098 = vmatprep.subr.bf16.mxu0 0
        %2099 = vmatpush1.bf16.xpose.msra.mxu0 0
        %2100 = vmatprep.subr.bf16.mxu0 0
        %2101 = vmatpush1.bf16.xpose.msra.mxu0 0
        %2102 = vmatprep.subr.bf16.mxu0 0
        %2103 = vmatpush1.bf16.xpose.msra.mxu0 0
        %2104 = vmatprep.subr.bf16.mxu0 0
        %2105 = vmatpush1.bf16.xpose.msra.mxu0 0
        %2106 = vmatprep.subr.bf16.mxu0 0
        %2107 = vmatpush1.bf16.xpose.msra.mxu0 0
        %2108 = vmatprep.subr.bf16.mxu0 0
        %2109 = vmatpush1.bf16.xpose.msra.mxu0 0
        %2110 = vmatprep.subr.bf16.mxu0 0
        %2111 = vmatpush1.bf16.xpose.msra.mxu0 0
        %2112 = vmatprep.subr.bf16.mxu0 0
        %2113 = vmatpush1.bf16.xpose.msra.mxu0 0
        %2114 = vmatprep.subr.bf16.mxu0 0
        %2115 = vmatpush1.bf16.xpose.msra.mxu0 0
        %2116 = vmatprep.subr.bf16.mxu0 0
        %2117 = vmatpush1.bf16.xpose.msra.mxu0 0
        %2118 = vmatprep.subr.bf16.mxu0 0
        %2119 = vmatpush1.bf16.xpose.msra.mxu0 0
        %2120 = vmatprep.subr.bf16.mxu0 0
        %2121 = vmatpush1.bf16.xpose.msra.mxu0 0
        %2122 = vmatprep.mubr.bf16.mxu0 0
        %2123 = vmatmul.mubr.bf16.gmra.mrb[0].mxu0 %v2085
        %v2124 = vpop.f32.mrb[0].mxu0
        %v2125 = vadd.f32 0.0, %v2124
        %v2126 = vpop.f32.mrb[0].mxu0
        %v2127 = vpop.f32.mrb[0].mxu0
        %v2128 = vpop.f32.mrb[0].mxu0
        %2129 = vdwg.mxu0
        %v2131 = vsel %vm1807, %v1766, 0
        %v2134 = vsel %vm1807, %v1786, 0
        %2136 = vmatprep.subr.bf16.mxu0 0
        %2137 = vmatpush1.bf16.xpose.msra.mxu0 %v2134
        %2138 = vmatprep.subr.bf16.mxu0 0
        %2139 = vmatpush1.bf16.xpose.msra.mxu0 0
        %2140 = vmatprep.subr.bf16.mxu0 0
        %2141 = vmatpush1.bf16.xpose.msra.mxu0 0
        %2142 = vmatprep.subr.bf16.mxu0 0
        %2143 = vmatpush1.bf16.xpose.msra.mxu0 0
        %2144 = vmatprep.subr.bf16.mxu0 0
        %2145 = vmatpush1.bf16.xpose.msra.mxu0 0
        %2146 = vmatprep.subr.bf16.mxu0 0
        %2147 = vmatpush1.bf16.xpose.msra.mxu0 0
        %2148 = vmatprep.subr.bf16.mxu0 0
        %2149 = vmatpush1.bf16.xpose.msra.mxu0 0
        %2150 = vmatprep.subr.bf16.mxu0 0
        %2151 = vmatpush1.bf16.xpose.msra.mxu0 0
        %2152 = vmatprep.subr.bf16.mxu0 0
        %2153 = vmatpush1.bf16.xpose.msra.mxu0 0
        %2154 = vmatprep.subr.bf16.mxu0 0
        %2155 = vmatpush1.bf16.xpose.msra.mxu0 0
        %2156 = vmatprep.subr.bf16.mxu0 0
        %2157 = vmatpush1.bf16.xpose.msra.mxu0 0
        %2158 = vmatprep.subr.bf16.mxu0 0
        %2159 = vmatpush1.bf16.xpose.msra.mxu0 0
        %2160 = vmatprep.subr.bf16.mxu0 0
        %2161 = vmatpush1.bf16.xpose.msra.mxu0 0
        %2162 = vmatprep.subr.bf16.mxu0 0
        %2163 = vmatpush1.bf16.xpose.msra.mxu0 0
        %2164 = vmatprep.subr.bf16.mxu0 0
        %2165 = vmatpush1.bf16.xpose.msra.mxu0 0
        %2166 = vmatprep.subr.bf16.mxu0 0
        %2167 = vmatpush1.bf16.xpose.msra.mxu0 0
        %2168 = vmatprep.mubr.bf16.mxu0 0
        %2169 = vmatmul.mubr.bf16.gmra.mrb[0].mxu0 %v2131
        %v2170 = vpop.f32.mrb[0].mxu0
        %v2171 = vadd.f32 0.0, %v2170
        %v2172 = vpop.f32.mrb[0].mxu0
        %v2173 = vpop.f32.mrb[0].mxu0
        %v2174 = vpop.f32.mrb[0].mxu0
        %2175 = vdwg.mxu0
        %v2176 = vsel %vm1807, %v1849, -inf
        %2177 = vmax.xlane.f32.xlu0 %v2176
        %v2178 = vpop.xlane.xlu0 %2177
        %v2179 = vsel %vm1807, %v1895, -inf
        %2180 = vmax.xlane.f32.xlu0 %v2179
        %v2181 = vpop.xlane.xlu0 %2180
        %v2182 = vsel %vm1807, %v1941, -inf
        %2183 = vmax.xlane.f32.xlu0 %v2182
        %v2184 = vpop.xlane.xlu0 %2183
        %v2185 = vsel %vm1807, %v1987, -inf
        %2186 = vmax.xlane.f32.xlu0 %v2185
        %v2187 = vpop.xlane.xlu0 %2186
        %v2188 = vsel %vm1807, %v2033, -inf
        %2189 = vmax.xlane.f32.xlu0 %v2188
        %v2190 = vpop.xlane.xlu0 %2189
        %v2191 = vsel %vm1807, %v2079, -inf
        %2192 = vmax.xlane.f32.xlu0 %v2191
        %v2193 = vpop.xlane.xlu0 %2192
        %v2194 = vsel %vm1807, %v2125, -inf
        %2195 = vmax.xlane.f32.xlu0 %v2194
        %v2196 = vpop.xlane.xlu0 %2195
        %v2197 = vsel %vm1807, %v2171, -inf
        %2198 = vmax.xlane.f32.xlu0 %v2197
        %v2199 = vpop.xlane.xlu0 %2198
        %v2200 = vsub.f32 %v1849, %v2178
        %v2201 = vsub.f32 %v1895, %v2181
        %v2202 = vsub.f32 %v1941, %v2184
        %v2203 = vsub.f32 %v1987, %v2187
        %v2204 = vsub.f32 %v2033, %v2190
        %v2205 = vsub.f32 %v2079, %v2193
        %v2206 = vsub.f32 %v2125, %v2196
        %v2207 = vsub.f32 %v2171, %v2199
        %v2208 = vmul.f32 %v2200, 1.442695
        %v2209 = vpow.pop %v2208
        %v2210 = vmul.f32 %v2201, 1.442695
        %v2211 = vpow.pop %v2210
        %v2212 = vmul.f32 %v2202, 1.442695
        %v2213 = vpow.pop %v2212
        %v2214 = vmul.f32 %v2203, 1.442695
        %v2215 = vpow.pop %v2214
        %v2216 = vmul.f32 %v2204, 1.442695
        %v2217 = vpow.pop %v2216
        %v2218 = vmul.f32 %v2205, 1.442695
        %v2219 = vpow.pop %v2218
        %v2220 = vmul.f32 %v2206, 1.442695
        %v2221 = vpow.pop %v2220
        %v2222 = vmul.f32 %v2207, 1.442695
        %v2223 = vpow.pop %v2222
        %v2224 = vsel %vm1807, %v2209, 0.0
        %2225 = vadd.xlane.f32.xlu0 %v2224
        %v2226 = vpop.xlane.xlu0 %2225
        %v2227 = vsel %vm1807, %v2211, 0.0
        %2228 = vadd.xlane.f32.xlu0 %v2227
        %v2229 = vpop.xlane.xlu0 %2228
        %v2230 = vsel %vm1807, %v2213, 0.0
        %2231 = vadd.xlane.f32.xlu0 %v2230
        %v2232 = vpop.xlane.xlu0 %2231
        %v2233 = vsel %vm1807, %v2215, 0.0
        %2234 = vadd.xlane.f32.xlu0 %v2233
        %v2235 = vpop.xlane.xlu0 %2234
        %v2236 = vsel %vm1807, %v2217, 0.0
        %2237 = vadd.xlane.f32.xlu0 %v2236
        %v2238 = vpop.xlane.xlu0 %2237
        %v2239 = vsel %vm1807, %v2219, 0.0
        %2240 = vadd.xlane.f32.xlu0 %v2239
        %v2241 = vpop.xlane.xlu0 %2240
        %v2242 = vsel %vm1807, %v2221, 0.0
        %2243 = vadd.xlane.f32.xlu0 %v2242
        %v2244 = vpop.xlane.xlu0 %2243
        %v2245 = vsel %vm1807, %v2223, 0.0
        %2246 = vadd.xlane.f32.xlu0 %v2245
        %v2247 = vpop.xlane.xlu0 %2246
        %v2248 = vrcp.pop %v2226
        %v2249 = vrcp.pop %v2229
        %v2250 = vrcp.pop %v2232
        %v2251 = vrcp.pop %v2235
        %v2252 = vrcp.pop %v2238
        %v2253 = vrcp.pop %v2241
        %v2254 = vrcp.pop %v2244
        %v2255 = vrcp.pop %v2247
        %v2256 = vmul.f32 %v2209, %v2248
        %v2257 = vmul.f32 %v2211, %v2249
        %v2258 = vmul.f32 %v2213, %v2250
        %v2259 = vmul.f32 %v2215, %v2251
        %v2260 = vmul.f32 %v2217, %v2252
        %v2261 = vmul.f32 %v2219, %v2253
        %v2262 = vmul.f32 %v2221, %v2254
        %v2263 = vmul.f32 %v2223, %v2255
        %v2264 = vpack.c.bf16 %v2256, %v2256
        %v2265 = vpack.c.bf16 %v2257, %v2257
        %v2266 = vpack.c.bf16 %v2258, %v2258
        %v2267 = vpack.c.bf16 %v2259, %v2259
        %v2268 = vpack.c.bf16 %v2260, %v2260
        %v2269 = vpack.c.bf16 %v2261, %v2261
        %v2270 = vpack.c.bf16 %v2262, %v2262
        %v2271 = vpack.c.bf16 %v2263, %v2263
        %v2273 = vsel %vm1807, %v2264, 0
        %vm2275 = vcmask 1043456
        %v2277 = vsel %vm2275, %v1799, 0
        %2279 = vmatprep.subr.bf16.mxu0 0
        %2280 = vmatpush1.bf16.msra.mxu0 %v2277
        %2281 = vmatprep.subr.bf16.mxu0 0
        %2282 = vmatpush1.bf16.msra.mxu0 0
        %2283 = vmatprep.subr.bf16.mxu0 0
        %2284 = vmatpush1.bf16.msra.mxu0 0
        %2285 = vmatprep.subr.bf16.mxu0 0
        %2286 = vmatpush1.bf16.msra.mxu0 0
        %2287 = vmatprep.subr.bf16.mxu0 0
        %2288 = vmatpush1.bf16.msra.mxu0 0
        %2289 = vmatprep.subr.bf16.mxu0 0
        %2290 = vmatpush1.bf16.msra.mxu0 0
        %2291 = vmatprep.subr.bf16.mxu0 0
        %2292 = vmatpush1.bf16.msra.mxu0 0
        %2293 = vmatprep.subr.bf16.mxu0 0
        %2294 = vmatpush1.bf16.msra.mxu0 0
        %2295 = vmatprep.subr.bf16.mxu0 0
        %2296 = vmatpush1.bf16.msra.mxu0 0
        %2297 = vmatprep.subr.bf16.mxu0 0
        %2298 = vmatpush1.bf16.msra.mxu0 0
        %2299 = vmatprep.subr.bf16.mxu0 0
        %2300 = vmatpush1.bf16.msra.mxu0 0
        %2301 = vmatprep.subr.bf16.mxu0 0
        %2302 = vmatpush1.bf16.msra.mxu0 0
        %2303 = vmatprep.subr.bf16.mxu0 0
        %2304 = vmatpush1.bf16.msra.mxu0 0
        %2305 = vmatprep.subr.bf16.mxu0 0
        %2306 = vmatpush1.bf16.msra.mxu0 0
        %2307 = vmatprep.subr.bf16.mxu0 0
        %2308 = vmatpush1.bf16.msra.mxu0 0
        %2309 = vmatprep.subr.bf16.mxu0 0
        %2310 = vmatpush1.bf16.msra.mxu0 0
        %2311 = vmatprep.mubr.bf16.mxu0 0
        %2312 = vmatmul.mubr.bf16.gmra.mrb[0].mxu0 %v2273
        %v2313 = vpop.f32.mrb[0].mxu0
        %v2314 = vadd.f32 0.0, %v2313
        %v2315 = vpop.f32.mrb[0].mxu0
        %v2316 = vpop.f32.mrb[0].mxu0
        %v2317 = vpop.f32.mrb[0].mxu0
        %2318 = vdwg.mxu0
        %v2320 = vsel %vm1807, %v2265, 0
        %v2323 = vsel %vm2275, %v1800, 0
        %2325 = vmatprep.subr.bf16.mxu0 0
        %2326 = vmatpush1.bf16.msra.mxu0 %v2323
        %2327 = vmatprep.subr.bf16.mxu0 0
        %2328 = vmatpush1.bf16.msra.mxu0 0
        %2329 = vmatprep.subr.bf16.mxu0 0
        %2330 = vmatpush1.bf16.msra.mxu0 0
        %2331 = vmatprep.subr.bf16.mxu0 0
        %2332 = vmatpush1.bf16.msra.mxu0 0
        %2333 = vmatprep.subr.bf16.mxu0 0
        %2334 = vmatpush1.bf16.msra.mxu0 0
        %2335 = vmatprep.subr.bf16.mxu0 0
        %2336 = vmatpush1.bf16.msra.mxu0 0
        %2337 = vmatprep.subr.bf16.mxu0 0
        %2338 = vmatpush1.bf16.msra.mxu0 0
        %2339 = vmatprep.subr.bf16.mxu0 0
        %2340 = vmatpush1.bf16.msra.mxu0 0
        %2341 = vmatprep.subr.bf16.mxu0 0
        %2342 = vmatpush1.bf16.msra.mxu0 0
        %2343 = vmatprep.subr.bf16.mxu0 0
        %2344 = vmatpush1.bf16.msra.mxu0 0
        %2345 = vmatprep.subr.bf16.mxu0 0
        %2346 = vmatpush1.bf16.msra.mxu0 0
        %2347 = vmatprep.subr.bf16.mxu0 0
        %2348 = vmatpush1.bf16.msra.mxu0 0
        %2349 = vmatprep.subr.bf16.mxu0 0
        %2350 = vmatpush1.bf16.msra.mxu0 0
        %2351 = vmatprep.subr.bf16.mxu0 0
        %2352 = vmatpush1.bf16.msra.mxu0 0
        %2353 = vmatprep.subr.bf16.mxu0 0
        %2354 = vmatpush1.bf16.msra.mxu0 0
        %2355 = vmatprep.subr.bf16.mxu0 0
        %2356 = vmatpush1.bf16.msra.mxu0 0
        %2357 = vmatprep.mubr.bf16.mxu0 0
        %2358 = vmatmul.mubr.bf16.gmra.mrb[0].mxu0 %v2320
        %v2359 = vpop.f32.mrb[0].mxu0
        %v2360 = vadd.f32 0.0, %v2359
        %v2361 = vpop.f32.mrb[0].mxu0
        %v2362 = vpop.f32.mrb[0].mxu0
        %v2363 = vpop.f32.mrb[0].mxu0
        %2364 = vdwg.mxu0
        %v2366 = vsel %vm1807, %v2266, 0
        %v2369 = vsel %vm2275, %v1801, 0
        %2371 = vmatprep.subr.bf16.mxu0 0
        %2372 = vmatpush1.bf16.msra.mxu0 %v2369
        %2373 = vmatprep.subr.bf16.mxu0 0
        %2374 = vmatpush1.bf16.msra.mxu0 0
        %2375 = vmatprep.subr.bf16.mxu0 0
        %2376 = vmatpush1.bf16.msra.mxu0 0
        %2377 = vmatprep.subr.bf16.mxu0 0
        %2378 = vmatpush1.bf16.msra.mxu0 0
        %2379 = vmatprep.subr.bf16.mxu0 0
        %2380 = vmatpush1.bf16.msra.mxu0 0
        %2381 = vmatprep.subr.bf16.mxu0 0
        %2382 = vmatpush1.bf16.msra.mxu0 0
        %2383 = vmatprep.subr.bf16.mxu0 0
        %2384 = vmatpush1.bf16.msra.mxu0 0
        %2385 = vmatprep.subr.bf16.mxu0 0
        %2386 = vmatpush1.bf16.msra.mxu0 0
        %2387 = vmatprep.subr.bf16.mxu0 0
        %2388 = vmatpush1.bf16.msra.mxu0 0
        %2389 = vmatprep.subr.bf16.mxu0 0
        %2390 = vmatpush1.bf16.msra.mxu0 0
        %2391 = vmatprep.subr.bf16.mxu0 0
        %2392 = vmatpush1.bf16.msra.mxu0 0
        %2393 = vmatprep.subr.bf16.mxu0 0
        %2394 = vmatpush1.bf16.msra.mxu0 0
        %2395 = vmatprep.subr.bf16.mxu0 0
        %2396 = vmatpush1.bf16.msra.mxu0 0
        %2397 = vmatprep.subr.bf16.mxu0 0
        %2398 = vmatpush1.bf16.msra.mxu0 0
        %2399 = vmatprep.subr.bf16.mxu0 0
        %2400 = vmatpush1.bf16.msra.mxu0 0
        %2401 = vmatprep.subr.bf16.mxu0 0
        %2402 = vmatpush1.bf16.msra.mxu0 0
        %2403 = vmatprep.mubr.bf16.mxu0 0
        %2404 = vmatmul.mubr.bf16.gmra.mrb[0].mxu0 %v2366
        %v2405 = vpop.f32.mrb[0].mxu0
        %v2406 = vadd.f32 0.0, %v2405
        %v2407 = vpop.f32.mrb[0].mxu0
        %v2408 = vpop.f32.mrb[0].mxu0
        %v2409 = vpop.f32.mrb[0].mxu0
        %2410 = vdwg.mxu0
        %v2412 = vsel %vm1807, %v2267, 0
        %v2415 = vsel %vm2275, %v1802, 0
        %2417 = vmatprep.subr.bf16.mxu0 0
        %2418 = vmatpush1.bf16.msra.mxu0 %v2415
        %2419 = vmatprep.subr.bf16.mxu0 0
        %2420 = vmatpush1.bf16.msra.mxu0 0
        %2421 = vmatprep.subr.bf16.mxu0 0
        %2422 = vmatpush1.bf16.msra.mxu0 0
        %2423 = vmatprep.subr.bf16.mxu0 0
        %2424 = vmatpush1.bf16.msra.mxu0 0
        %2425 = vmatprep.subr.bf16.mxu0 0
        %2426 = vmatpush1.bf16.msra.mxu0 0
        %2427 = vmatprep.subr.bf16.mxu0 0
        %2428 = vmatpush1.bf16.msra.mxu0 0
        %2429 = vmatprep.subr.bf16.mxu0 0
        %2430 = vmatpush1.bf16.msra.mxu0 0
        %2431 = vmatprep.subr.bf16.mxu0 0
        %2432 = vmatpush1.bf16.msra.mxu0 0
        %2433 = vmatprep.subr.bf16.mxu0 0
        %2434 = vmatpush1.bf16.msra.mxu0 0
        %2435 = vmatprep.subr.bf16.mxu0 0
        %2436 = vmatpush1.bf16.msra.mxu0 0
        %2437 = vmatprep.subr.bf16.mxu0 0
        %2438 = vmatpush1.bf16.msra.mxu0 0
        %2439 = vmatprep.subr.bf16.mxu0 0
        %2440 = vmatpush1.bf16.msra.mxu0 0
        %2441 = vmatprep.subr.bf16.mxu0 0
        %2442 = vmatpush1.bf16.msra.mxu0 0
        %2443 = vmatprep.subr.bf16.mxu0 0
        %2444 = vmatpush1.bf16.msra.mxu0 0
        %2445 = vmatprep.subr.bf16.mxu0 0
        %2446 = vmatpush1.bf16.msra.mxu0 0
        %2447 = vmatprep.subr.bf16.mxu0 0
        %2448 = vmatpush1.bf16.msra.mxu0 0
        %2449 = vmatprep.mubr.bf16.mxu0 0
        %2450 = vmatmul.mubr.bf16.gmra.mrb[0].mxu0 %v2412
        %v2451 = vpop.f32.mrb[0].mxu0
        %v2452 = vadd.f32 0.0, %v2451
        %v2453 = vpop.f32.mrb[0].mxu0
        %v2454 = vpop.f32.mrb[0].mxu0
        %v2455 = vpop.f32.mrb[0].mxu0
        %2456 = vdwg.mxu0
        %v2458 = vsel %vm1807, %v2268, 0
        %v2461 = vsel %vm2275, %v1803, 0
        %2463 = vmatprep.subr.bf16.mxu0 0
        %2464 = vmatpush1.bf16.msra.mxu0 %v2461
        %2465 = vmatprep.subr.bf16.mxu0 0
        %2466 = vmatpush1.bf16.msra.mxu0 0
        %2467 = vmatprep.subr.bf16.mxu0 0
        %2468 = vmatpush1.bf16.msra.mxu0 0
        %2469 = vmatprep.subr.bf16.mxu0 0
        %2470 = vmatpush1.bf16.msra.mxu0 0
        %2471 = vmatprep.subr.bf16.mxu0 0
        %2472 = vmatpush1.bf16.msra.mxu0 0
        %2473 = vmatprep.subr.bf16.mxu0 0
        %2474 = vmatpush1.bf16.msra.mxu0 0
        %2475 = vmatprep.subr.bf16.mxu0 0
        %2476 = vmatpush1.bf16.msra.mxu0 0
        %2477 = vmatprep.subr.bf16.mxu0 0
        %2478 = vmatpush1.bf16.msra.mxu0 0
        %2479 = vmatprep.subr.bf16.mxu0 0
        %2480 = vmatpush1.bf16.msra.mxu0 0
        %2481 = vmatprep.subr.bf16.mxu0 0
        %2482 = vmatpush1.bf16.msra.mxu0 0
        %2483 = vmatprep.subr.bf16.mxu0 0
        %2484 = vmatpush1.bf16.msra.mxu0 0
        %2485 = vmatprep.subr.bf16.mxu0 0
        %2486 = vmatpush1.bf16.msra.mxu0 0
        %2487 = vmatprep.subr.bf16.mxu0 0
        %2488 = vmatpush1.bf16.msra.mxu0 0
        %2489 = vmatprep.subr.bf16.mxu0 0
        %2490 = vmatpush1.bf16.msra.mxu0 0
        %2491 = vmatprep.subr.bf16.mxu0 0
        %2492 = vmatpush1.bf16.msra.mxu0 0
        %2493 = vmatprep.subr.bf16.mxu0 0
        %2494 = vmatpush1.bf16.msra.mxu0 0
        %2495 = vmatprep.mubr.bf16.mxu0 0
        %2496 = vmatmul.mubr.bf16.gmra.mrb[0].mxu0 %v2458
        %v2497 = vpop.f32.mrb[0].mxu0
        %v2498 = vadd.f32 0.0, %v2497
        %v2499 = vpop.f32.mrb[0].mxu0
        %v2500 = vpop.f32.mrb[0].mxu0
        %v2501 = vpop.f32.mrb[0].mxu0
        %2502 = vdwg.mxu0
        %v2504 = vsel %vm1807, %v2269, 0
        %v2507 = vsel %vm2275, %v1804, 0
        %2509 = vmatprep.subr.bf16.mxu0 0
        %2510 = vmatpush1.bf16.msra.mxu0 %v2507
        %2511 = vmatprep.subr.bf16.mxu0 0
        %2512 = vmatpush1.bf16.msra.mxu0 0
        %2513 = vmatprep.subr.bf16.mxu0 0
        %2514 = vmatpush1.bf16.msra.mxu0 0
        %2515 = vmatprep.subr.bf16.mxu0 0
        %2516 = vmatpush1.bf16.msra.mxu0 0
        %2517 = vmatprep.subr.bf16.mxu0 0
        %2518 = vmatpush1.bf16.msra.mxu0 0
        %2519 = vmatprep.subr.bf16.mxu0 0
        %2520 = vmatpush1.bf16.msra.mxu0 0
        %2521 = vmatprep.subr.bf16.mxu0 0
        %2522 = vmatpush1.bf16.msra.mxu0 0
        %2523 = vmatprep.subr.bf16.mxu0 0
        %2524 = vmatpush1.bf16.msra.mxu0 0
        %2525 = vmatprep.subr.bf16.mxu0 0
        %2526 = vmatpush1.bf16.msra.mxu0 0
        %2527 = vmatprep.subr.bf16.mxu0 0
        %2528 = vmatpush1.bf16.msra.mxu0 0
        %2529 = vmatprep.subr.bf16.mxu0 0
        %2530 = vmatpush1.bf16.msra.mxu0 0
        %2531 = vmatprep.subr.bf16.mxu0 0
        %2532 = vmatpush1.bf16.msra.mxu0 0
        %2533 = vmatprep.subr.bf16.mxu0 0
        %2534 = vmatpush1.bf16.msra.mxu0 0
        %2535 = vmatprep.subr.bf16.mxu0 0
        %2536 = vmatpush1.bf16.msra.mxu0 0
        %2537 = vmatprep.subr.bf16.mxu0 0
        %2538 = vmatpush1.bf16.msra.mxu0 0
        %2539 = vmatprep.subr.bf16.mxu0 0
        %2540 = vmatpush1.bf16.msra.mxu0 0
        %2541 = vmatprep.mubr.bf16.mxu0 0
        %2542 = vmatmul.mubr.bf16.gmra.mrb[0].mxu0 %v2504
        %v2543 = vpop.f32.mrb[0].mxu0
        %v2544 = vadd.f32 0.0, %v2543
        %v2545 = vpop.f32.mrb[0].mxu0
        %v2546 = vpop.f32.mrb[0].mxu0
        %v2547 = vpop.f32.mrb[0].mxu0
        %2548 = vdwg.mxu0
        %v2550 = vsel %vm1807, %v2270, 0
        %v2553 = vsel %vm2275, %v1805, 0
        %2555 = vmatprep.subr.bf16.mxu0 0
        %2556 = vmatpush1.bf16.msra.mxu0 %v2553
        %2557 = vmatprep.subr.bf16.mxu0 0
        %2558 = vmatpush1.bf16.msra.mxu0 0
        %2559 = vmatprep.subr.bf16.mxu0 0
        %2560 = vmatpush1.bf16.msra.mxu0 0
        %2561 = vmatprep.subr.bf16.mxu0 0
        %2562 = vmatpush1.bf16.msra.mxu0 0
        %2563 = vmatprep.subr.bf16.mxu0 0
        %2564 = vmatpush1.bf16.msra.mxu0 0
        %2565 = vmatprep.subr.bf16.mxu0 0
        %2566 = vmatpush1.bf16.msra.mxu0 0
        %2567 = vmatprep.subr.bf16.mxu0 0
        %2568 = vmatpush1.bf16.msra.mxu0 0
        %2569 = vmatprep.subr.bf16.mxu0 0
        %2570 = vmatpush1.bf16.msra.mxu0 0
        %2571 = vmatprep.subr.bf16.mxu0 0
        %2572 = vmatpush1.bf16.msra.mxu0 0
        %2573 = vmatprep.subr.bf16.mxu0 0
        %2574 = vmatpush1.bf16.msra.mxu0 0
        %2575 = vmatprep.subr.bf16.mxu0 0
        %2576 = vmatpush1.bf16.msra.mxu0 0
        %2577 = vmatprep.subr.bf16.mxu0 0
        %2578 = vmatpush1.bf16.msra.mxu0 0
        %2579 = vmatprep.subr.bf16.mxu0 0
        %2580 = vmatpush1.bf16.msra.mxu0 0
        %2581 = vmatprep.subr.bf16.mxu0 0
        %2582 = vmatpush1.bf16.msra.mxu0 0
        %2583 = vmatprep.subr.bf16.mxu0 0
        %2584 = vmatpush1.bf16.msra.mxu0 0
        %2585 = vmatprep.subr.bf16.mxu0 0
        %2586 = vmatpush1.bf16.msra.mxu0 0
        %2587 = vmatprep.mubr.bf16.mxu0 0
        %2588 = vmatmul.mubr.bf16.gmra.mrb[0].mxu0 %v2550
        %v2589 = vpop.f32.mrb[0].mxu0
        %v2590 = vadd.f32 0.0, %v2589
        %v2591 = vpop.f32.mrb[0].mxu0
        %v2592 = vpop.f32.mrb[0].mxu0
        %v2593 = vpop.f32.mrb[0].mxu0
        %2594 = vdwg.mxu0
        %v2596 = vsel %vm1807, %v2271, 0
        %v2599 = vsel %vm2275, %v1806, 0
        %2601 = vmatprep.subr.bf16.mxu0 0
        %2602 = vmatpush1.bf16.msra.mxu0 %v2599
        %2603 = vmatprep.subr.bf16.mxu0 0
        %2604 = vmatpush1.bf16.msra.mxu0 0
        %2605 = vmatprep.subr.bf16.mxu0 0
        %2606 = vmatpush1.bf16.msra.mxu0 0
        %2607 = vmatprep.subr.bf16.mxu0 0
        %2608 = vmatpush1.bf16.msra.mxu0 0
        %2609 = vmatprep.subr.bf16.mxu0 0
        %2610 = vmatpush1.bf16.msra.mxu0 0
        %2611 = vmatprep.subr.bf16.mxu0 0
        %2612 = vmatpush1.bf16.msra.mxu0 0
        %2613 = vmatprep.subr.bf16.mxu0 0
        %2614 = vmatpush1.bf16.msra.mxu0 0
        %2615 = vmatprep.subr.bf16.mxu0 0
        %2616 = vmatpush1.bf16.msra.mxu0 0
        %2617 = vmatprep.subr.bf16.mxu0 0
        %2618 = vmatpush1.bf16.msra.mxu0 0
        %2619 = vmatprep.subr.bf16.mxu0 0
        %2620 = vmatpush1.bf16.msra.mxu0 0
        %2621 = vmatprep.subr.bf16.mxu0 0
        %2622 = vmatpush1.bf16.msra.mxu0 0
        %2623 = vmatprep.subr.bf16.mxu0 0
        %2624 = vmatpush1.bf16.msra.mxu0 0
        %2625 = vmatprep.subr.bf16.mxu0 0
        %2626 = vmatpush1.bf16.msra.mxu0 0
        %2627 = vmatprep.subr.bf16.mxu0 0
        %2628 = vmatpush1.bf16.msra.mxu0 0
        %2629 = vmatprep.subr.bf16.mxu0 0
        %2630 = vmatpush1.bf16.msra.mxu0 0
        %2631 = vmatprep.subr.bf16.mxu0 0
        %2632 = vmatpush1.bf16.msra.mxu0 0
        %2633 = vmatprep.mubr.bf16.mxu0 0
        %2634 = vmatmul.mubr.bf16.gmra.mrb[0].mxu0 %v2596
        %v2635 = vpop.f32.mrb[0].mxu0
        %v2636 = vadd.f32 0.0, %v2635
        %v2637 = vpop.f32.mrb[0].mxu0
        %v2638 = vpop.f32.mrb[0].mxu0
        %v2639 = vpop.f32.mrb[0].mxu0
        %2640 = vdwg.mxu0
        %v2641 = vcombine.low %v2314, %v2498
        %v2642 = vcombine.high %v2314, %v2498
        %v2644 = vunpack.c.l.s4 1983009808
        %v2645 = vunpack.c.0.s8 %v2644
        %v2646 = vlaneseq
        %v2647 = vshrl.u32 %v2646, 7
        %v2648 = vsub.s32 %v2645, %v2647
        %v2649 = vrot.slane %v2641, %v2648
        %v2651 = vunpack.c.l.s4 1983009808
        %v2652 = vunpack.c.0.s8 %v2651
        %v2653 = vlaneseq
        %v2654 = vshrl.u32 %v2653, 7
        %v2655 = vsub.s32 %v2652, %v2654
        %v2656 = vrot.slane %v2642, %v2655
        %v2657 = vcombine.low %v2406, %v2590
        %v2658 = vcombine.high %v2406, %v2590
        %v2660 = vunpack.c.l.s4 1983009808
        %v2661 = vunpack.c.0.s8 %v2660
        %v2662 = vlaneseq
        %v2663 = vshrl.u32 %v2662, 7
        %v2664 = vsub.s32 %v2661, %v2663
        %v2665 = vrot.slane %v2657, %v2664
        %v2667 = vunpack.c.l.s4 1983009808
        %v2668 = vunpack.c.0.s8 %v2667
        %v2669 = vlaneseq
        %v2670 = vshrl.u32 %v2669, 7
        %v2671 = vsub.s32 %v2668, %v2670
        %v2672 = vrot.slane %v2658, %v2671
        %v2673 = vcombine.low %v2649, %v2665
        %v2674 = vcombine.high %v2649, %v2665
        %v2676 = vunpack.c.l.s4 1934713408
        %v2677 = vunpack.c.0.s8 %v2676
        %v2678 = vlaneseq
        %v2679 = vshrl.u32 %v2678, 7
        %v2680 = vsub.s32 %v2677, %v2679
        %v2681 = vrot.slane %v2673, %v2680
        %v2683 = vunpack.c.l.s4 1934713408
        %v2684 = vunpack.c.0.s8 %v2683
        %v2685 = vlaneseq
        %v2686 = vshrl.u32 %v2685, 7
        %v2687 = vsub.s32 %v2684, %v2686
        %v2688 = vrot.slane %v2674, %v2687
        %v2689 = vcombine.low %v2656, %v2672
        %v2690 = vcombine.high %v2656, %v2672
        %v2692 = vunpack.c.l.s4 1934713408
        %v2693 = vunpack.c.0.s8 %v2692
        %v2694 = vlaneseq
        %v2695 = vshrl.u32 %v2694, 7
        %v2696 = vsub.s32 %v2693, %v2695
        %v2697 = vrot.slane %v2689, %v2696
        %v2699 = vunpack.c.l.s4 1934713408
        %v2700 = vunpack.c.0.s8 %v2699
        %v2701 = vlaneseq
        %v2702 = vshrl.u32 %v2701, 7
        %v2703 = vsub.s32 %v2700, %v2702
        %v2704 = vrot.slane %v2690, %v2703
        %v2705 = vcombine.high %v2681, 0.0
        %v2706 = vcombine.high %v2688, 0.0
        %v2707 = vcombine.high %v2697, 0.0
        %v2708 = vcombine.high %v2704, 0.0
        %v2709 = vcombine.low %v2360, %v2544
        %v2710 = vcombine.high %v2360, %v2544
        %v2712 = vunpack.c.l.s4 1983009808
        %v2713 = vunpack.c.0.s8 %v2712
        %v2714 = vlaneseq
        %v2715 = vshrl.u32 %v2714, 7
        %v2716 = vsub.s32 %v2713, %v2715
        %v2717 = vrot.slane %v2709, %v2716
        %v2719 = vunpack.c.l.s4 1983009808
        %v2720 = vunpack.c.0.s8 %v2719
        %v2721 = vlaneseq
        %v2722 = vshrl.u32 %v2721, 7
        %v2723 = vsub.s32 %v2720, %v2722
        %v2724 = vrot.slane %v2710, %v2723
        %v2725 = vcombine.low %v2452, %v2636
        %v2726 = vcombine.high %v2452, %v2636
        %v2728 = vunpack.c.l.s4 1983009808
        %v2729 = vunpack.c.0.s8 %v2728
        %v2730 = vlaneseq
        %v2731 = vshrl.u32 %v2730, 7
        %v2732 = vsub.s32 %v2729, %v2731
        %v2733 = vrot.slane %v2725, %v2732
        %v2735 = vunpack.c.l.s4 1983009808
        %v2736 = vunpack.c.0.s8 %v2735
        %v2737 = vlaneseq
        %v2738 = vshrl.u32 %v2737, 7
        %v2739 = vsub.s32 %v2736, %v2738
        %v2740 = vrot.slane %v2726, %v2739
        %v2741 = vcombine.low %v2717, %v2733
        %v2742 = vcombine.high %v2717, %v2733
        %v2744 = vunpack.c.l.s4 1934713408
        %v2745 = vunpack.c.0.s8 %v2744
        %v2746 = vlaneseq
        %v2747 = vshrl.u32 %v2746, 7
        %v2748 = vsub.s32 %v2745, %v2747
        %v2749 = vrot.slane %v2741, %v2748
        %v2751 = vunpack.c.l.s4 1934713408
        %v2752 = vunpack.c.0.s8 %v2751
        %v2753 = vlaneseq
        %v2754 = vshrl.u32 %v2753, 7
        %v2755 = vsub.s32 %v2752, %v2754
        %v2756 = vrot.slane %v2742, %v2755
        %v2757 = vcombine.low %v2724, %v2740
        %v2758 = vcombine.high %v2724, %v2740
        %v2760 = vunpack.c.l.s4 1934713408
        %v2761 = vunpack.c.0.s8 %v2760
        %v2762 = vlaneseq
        %v2763 = vshrl.u32 %v2762, 7
        %v2764 = vsub.s32 %v2761, %v2763
        %v2765 = vrot.slane %v2757, %v2764
        %v2767 = vunpack.c.l.s4 1934713408
        %v2768 = vunpack.c.0.s8 %v2767
        %v2769 = vlaneseq
        %v2770 = vshrl.u32 %v2769, 7
        %v2771 = vsub.s32 %v2768, %v2770
        %v2772 = vrot.slane %v2758, %v2771
        %v2773 = vcombine.high %v2749, 0.0
        %v2774 = vcombine.high %v2756, 0.0
        %v2775 = vcombine.high %v2765, 0.0
        %v2776 = vcombine.high %v2772, 0.0
        %v2777 = vcombine.low %v2681, %v2688
        %v2779 = vunpack.c.l.s4 1983009808
        %v2780 = vunpack.c.0.s8 %v2779
        %v2781 = vlaneseq
        %v2782 = vshrl.u32 %v2781, 7
        %v2783 = vsub.s32 %v2780, %v2782
        %v2784 = vrot.slane %v2777, %v2783
        %v2785 = vcombine.low %v2705, %v2706
        %v2787 = vunpack.c.l.s4 1983009808
        %v2788 = vunpack.c.0.s8 %v2787
        %v2789 = vlaneseq
        %v2790 = vshrl.u32 %v2789, 7
        %v2791 = vsub.s32 %v2788, %v2790
        %v2792 = vrot.slane %v2785, %v2791
        %v2793 = vcombine.low %v2697, %v2704
        %v2795 = vunpack.c.l.s4 1983009808
        %v2796 = vunpack.c.0.s8 %v2795
        %v2797 = vlaneseq
        %v2798 = vshrl.u32 %v2797, 7
        %v2799 = vsub.s32 %v2796, %v2798
        %v2800 = vrot.slane %v2793, %v2799
        %v2801 = vcombine.low %v2707, %v2708
        %v2803 = vunpack.c.l.s4 1983009808
        %v2804 = vunpack.c.0.s8 %v2803
        %v2805 = vlaneseq
        %v2806 = vshrl.u32 %v2805, 7
        %v2807 = vsub.s32 %v2804, %v2806
        %v2808 = vrot.slane %v2801, %v2807
        %v2809 = vcombine.low %v2784, %v2792
        %v2810 = vcombine.high %v2784, %v2792
        %v2812 = vunpack.c.l.s4 1934713408
        %v2813 = vunpack.c.0.s8 %v2812
        %v2814 = vlaneseq
        %v2815 = vshrl.u32 %v2814, 7
        %v2816 = vsub.s32 %v2813, %v2815
        %v2817 = vrot.slane %v2809, %v2816
        %v2819 = vunpack.c.l.s4 1934713408
        %v2820 = vunpack.c.0.s8 %v2819
        %v2821 = vlaneseq
        %v2822 = vshrl.u32 %v2821, 7
        %v2823 = vsub.s32 %v2820, %v2822
        %v2824 = vrot.slane %v2810, %v2823
        %v2825 = vcombine.low %v2800, %v2808
        %v2826 = vcombine.high %v2800, %v2808
        %v2828 = vunpack.c.l.s4 1934713408
        %v2829 = vunpack.c.0.s8 %v2828
        %v2830 = vlaneseq
        %v2831 = vshrl.u32 %v2830, 7
        %v2832 = vsub.s32 %v2829, %v2831
        %v2833 = vrot.slane %v2825, %v2832
        %v2835 = vunpack.c.l.s4 1934713408
        %v2836 = vunpack.c.0.s8 %v2835
        %v2837 = vlaneseq
        %v2838 = vshrl.u32 %v2837, 7
        %v2839 = vsub.s32 %v2836, %v2838
        %v2840 = vrot.slane %v2826, %v2839
        %v2841 = vcombine.low %v2817, %v2833
        %v2842 = vcombine.high %v2817, %v2833
        %v2843 = vcombine.low %v2824, %v2840
        %v2844 = vcombine.high %v2824, %v2840
        %v2845 = vcombine.low %v2749, %v2756
        %v2847 = vunpack.c.l.s4 1983009808
        %v2848 = vunpack.c.0.s8 %v2847
        %v2849 = vlaneseq
        %v2850 = vshrl.u32 %v2849, 7
        %v2851 = vsub.s32 %v2848, %v2850
        %v2852 = vrot.slane %v2845, %v2851
        %v2853 = vcombine.low %v2773, %v2774
        %v2855 = vunpack.c.l.s4 1983009808
        %v2856 = vunpack.c.0.s8 %v2855
        %v2857 = vlaneseq
        %v2858 = vshrl.u32 %v2857, 7
        %v2859 = vsub.s32 %v2856, %v2858
        %v2860 = vrot.slane %v2853, %v2859
        %v2861 = vcombine.low %v2765, %v2772
        %v2863 = vunpack.c.l.s4 1983009808
        %v2864 = vunpack.c.0.s8 %v2863
        %v2865 = vlaneseq
        %v2866 = vshrl.u32 %v2865, 7
        %v2867 = vsub.s32 %v2864, %v2866
        %v2868 = vrot.slane %v2861, %v2867
        %v2869 = vcombine.low %v2775, %v2776
        %v2871 = vunpack.c.l.s4 1983009808
        %v2872 = vunpack.c.0.s8 %v2871
        %v2873 = vlaneseq
        %v2874 = vshrl.u32 %v2873, 7
        %v2875 = vsub.s32 %v2872, %v2874
        %v2876 = vrot.slane %v2869, %v2875
        %v2877 = vcombine.low %v2852, %v2860
        %v2878 = vcombine.high %v2852, %v2860
        %v2880 = vunpack.c.l.s4 1934713408
        %v2881 = vunpack.c.0.s8 %v2880
        %v2882 = vlaneseq
        %v2883 = vshrl.u32 %v2882, 7
        %v2884 = vsub.s32 %v2881, %v2883
        %v2885 = vrot.slane %v2877, %v2884
        %v2887 = vunpack.c.l.s4 1934713408
        %v2888 = vunpack.c.0.s8 %v2887
        %v2889 = vlaneseq
        %v2890 = vshrl.u32 %v2889, 7
        %v2891 = vsub.s32 %v2888, %v2890
        %v2892 = vrot.slane %v2878, %v2891
        %v2893 = vcombine.low %v2868, %v2876
        %v2894 = vcombine.high %v2868, %v2876
        %v2896 = vunpack.c.l.s4 1934713408
        %v2897 = vunpack.c.0.s8 %v2896
        %v2898 = vlaneseq
        %v2899 = vshrl.u32 %v2898, 7
        %v2900 = vsub.s32 %v2897, %v2899
        %v2901 = vrot.slane %v2893, %v2900
        %v2903 = vunpack.c.l.s4 1934713408
        %v2904 = vunpack.c.0.s8 %v2903
        %v2905 = vlaneseq
        %v2906 = vshrl.u32 %v2905, 7
        %v2907 = vsub.s32 %v2904, %v2906
        %v2908 = vrot.slane %v2894, %v2907
        %v2909 = vcombine.low %v2885, %v2901
        %v2910 = vcombine.high %v2885, %v2901
        %v2911 = vcombine.low %v2892, %v2908
        %v2912 = vcombine.high %v2892, %v2908
        %2915 = vrot.lane.b32.xlu0 %v2842, 8
        %v2916 = vpop.permute.xlu0 %2915
        %2917 = vrot.lane.b32.xlu0 %v2910, 8
        %v2918 = vpop.permute.xlu0 %2917
        %2923 = vrot.lane.b32.xlu0 %v2843, 16
        %v2924 = vpop.permute.xlu0 %2923
        %2925 = vrot.lane.b32.xlu0 %v2911, 16
        %v2926 = vpop.permute.xlu0 %2925
        %2931 = vrot.lane.b32.xlu0 %v2844, 24
        %v2932 = vpop.permute.xlu0 %2931
        %2933 = vrot.lane.b32.xlu0 %v2912, 24
        %v2934 = vpop.permute.xlu0 %2933
        %v2937 = vsel %vm1807, %v2841, %v2916
        %v2938 = vsel %vm1807, %v2909, %v2918
        %vm2939 = vcmask 130048
        %v2940 = vsel %vm2939, %v2937, %v2924
        %v2941 = vsel %vm2939, %v2938, %v2926
        %vm2942 = vcmask 195584
        %v2943 = vsel %vm2942, %v2940, %v2932
        %v2944 = vsel %vm2942, %v2941, %v2934
        %v2945 = vpack.c.bf16 %v2944, %v2943
        %v2946 = vld [vmem:[%s749] sm:$0xf]
        %v2947 = vld [vmem:[%s749 + $0x4] sm:$0xf]
        %v2948 = vld [vmem:[%s749 + $0x8] sm:$0xf]
        %v2949 = vld [vmem:[%s749 + $0xc] sm:$0xf]
        %v2950 = vld [vmem:[%s752] sm:$0x1]
        %v2952 = vlaneseq
        %v2953 = vshrl.u32 %v2952, 7
        %v2954 = vsub.s32 0, %v2953
        %v2955 = vrot.slane %v2950, %v2954
        %v2961 = vunpack.c.l.b16 %v2946
        %v2962 = vunpack.c.l.b16 %v2947
        %v2963 = vunpack.c.l.b16 %v2948
        %v2964 = vunpack.c.l.b16 %v2949
        %v2965 = vpack.c.b16 %v2962, %v2961
        %v2966 = vpack.c.b16 %v2964, %v2963
        %v2970 = vsel %vm806, %v2945, 0
        %2972 = vmatprep.subr.bf16.mxu0 0
        %2973 = vmatpush1.bf16.msra.mxu0 %v2965
        %2974 = vmatprep.subr.bf16.mxu0 0
        %2975 = vmatpush1.bf16.msra.mxu0 %v2966
        %2976 = vmatprep.subr.bf16.mxu0 0
        %2977 = vmatpush1.bf16.msra.mxu0 0
        %2978 = vmatprep.subr.bf16.mxu0 0
        %2979 = vmatpush1.bf16.msra.mxu0 0
        %2980 = vmatprep.subr.bf16.mxu0 0
        %2981 = vmatpush1.bf16.msra.mxu0 0
        %2982 = vmatprep.subr.bf16.mxu0 0
        %2983 = vmatpush1.bf16.msra.mxu0 0
        %2984 = vmatprep.subr.bf16.mxu0 0
        %2985 = vmatpush1.bf16.msra.mxu0 0
        %2986 = vmatprep.subr.bf16.mxu0 0
        %2987 = vmatpush1.bf16.msra.mxu0 0
        %2988 = vmatprep.subr.bf16.mxu0 0
        %2989 = vmatpush1.bf16.msra.mxu0 0
        %2990 = vmatprep.subr.bf16.mxu0 0
        %2991 = vmatpush1.bf16.msra.mxu0 0
        %2992 = vmatprep.subr.bf16.mxu0 0
        %2993 = vmatpush1.bf16.msra.mxu0 0
        %2994 = vmatprep.subr.bf16.mxu0 0
        %2995 = vmatpush1.bf16.msra.mxu0 0
        %2996 = vmatprep.subr.bf16.mxu0 0
        %2997 = vmatpush1.bf16.msra.mxu0 0
        %2998 = vmatprep.subr.bf16.mxu0 0
        %2999 = vmatpush1.bf16.msra.mxu0 0
        %3000 = vmatprep.subr.bf16.mxu0 0
        %3001 = vmatpush1.bf16.msra.mxu0 0
        %3002 = vmatprep.subr.bf16.mxu0 0
        %3003 = vmatpush1.bf16.msra.mxu0 0
        %3004 = vmatprep.mubr.bf16.mxu0 0
        %3005 = vmatmul.mubr.bf16.gmra.mrb[0].mxu0 %v2970
        %v3006 = vpop.f32.mrb[0].mxu0
        %v3007 = vadd.f32 %v2955, %v3006
        %v3008 = vpop.f32.mrb[0].mxu0
        %v3009 = vpop.f32.mrb[0].mxu0
        %v3010 = vadd.f32 %v2955, %v3009
        %v3011 = vpop.f32.mrb[0].mxu0
        %3012 = vdwg.mxu0
        %v3013 = vadd.f32 %v780, %v3007
        %v3014 = vadd.f32 %v781, %v3010
        %v3015 = vld [vmem:[%s617] sm:$0x1]
        %v3016 = vld [vmem:[%s625] sm:$0x1]
        %v3017 = vsel %vm806, %v3013, 0.0
        %3018 = vadd.xlane.f32.xlu0 %v3017
        %v3019 = vpop.xlane.xlu0 %3018
        %v3020 = vsel %vm806, %v3014, 0.0
        %3021 = vadd.xlane.f32.xlu0 %v3020
        %v3022 = vpop.xlane.xlu0 %3021
        %v3023 = vrcp.pop 32.0
        %v3024 = vmul.f32 %v3019, %v3023
        %v3025 = vmul.f32 %v3022, %v3023
        %v3026 = vsub.f32 %v3013, %v3024
        %v3027 = vsub.f32 %v3014, %v3025
        %v3028 = vmul.f32 %v3026, %v3026
        %v3029 = vmul.f32 %v3027, %v3027
        %v3030 = vsel %vm806, %v3028, 0.0
        %3031 = vadd.xlane.f32.xlu0 %v3030
        %v3032 = vpop.xlane.xlu0 %3031
        %v3033 = vsel %vm806, %v3029, 0.0
        %3034 = vadd.xlane.f32.xlu0 %v3033
        %v3035 = vpop.xlane.xlu0 %3034
        %v3036 = vmul.f32 %v3032, %v3023
        %v3037 = vmul.f32 %v3035, %v3023
        %v3038 = vadd.f32 %v3036, 1e-05
        %v3039 = vadd.f32 %v3037, 1e-05
        %v3040 = vrsqrt.pop %v3038
        %v3041 = vrsqrt.pop %v3039
        %v3042 = vmul.f32 %v3026, %v3040
        %v3043 = vmul.f32 %v3027, %v3041
        %v3045 = vlaneseq
        %v3046 = vshrl.u32 %v3045, 7
        %v3047 = vsub.s32 0, %v3046
        %v3048 = vrot.slane %v3015, %v3047
        %v3050 = vmul.f32 %v3042, %v3048
        %v3051 = vmul.f32 %v3043, %v3048
        %v3053 = vlaneseq
        %v3054 = vshrl.u32 %v3053, 7
        %v3055 = vsub.s32 0, %v3054
        %v3056 = vrot.slane %v3016, %v3055
        %v3058 = vadd.f32 %v3050, %v3056
        %v3059 = vadd.f32 %v3051, %v3056
        %v3060 = vpack.c.bf16 %v3059, %v3058
        %v3061 = vld [vmem:[%s757] sm:$0xf]
        %v3062 = vld [vmem:[%s757 + $0x4] sm:$0xf]
        %v3063 = vld [vmem:[%s757 + $0x8] sm:$0xf]
        %v3064 = vld [vmem:[%s757 + $0xc] sm:$0xf]
        %v3065 = vld [vmem:[%s633] sm:$0x1]
        %v3067 = vlaneseq
        %v3068 = vshrl.u32 %v3067, 7
        %v3069 = vsub.s32 0, %v3068
        %v3070 = vrot.slane %v3065, %v3069
        %v3076 = vunpack.c.l.b16 %v3061
        %v3077 = vunpack.c.l.b16 %v3062
        %v3078 = vunpack.c.l.b16 %v3063
        %v3079 = vunpack.c.l.b16 %v3064
        %v3080 = vpack.c.b16 %v3077, %v3076
        %v3081 = vpack.c.b16 %v3079, %v3078
        %v3085 = vsel %vm806, %v3060, 0
        %3087 = vmatprep.subr.bf16.mxu0 0
        %3088 = vmatpush1.bf16.msra.mxu0 %v3080
        %3089 = vmatprep.subr.bf16.mxu0 0
        %3090 = vmatpush1.bf16.msra.mxu0 %v3081
        %3091 = vmatprep.subr.bf16.mxu0 0
        %3092 = vmatpush1.bf16.msra.mxu0 0
        %3093 = vmatprep.subr.bf16.mxu0 0
        %3094 = vmatpush1.bf16.msra.mxu0 0
        %3095 = vmatprep.subr.bf16.mxu0 0
        %3096 = vmatpush1.bf16.msra.mxu0 0
        %3097 = vmatprep.subr.bf16.mxu0 0
        %3098 = vmatpush1.bf16.msra.mxu0 0
        %3099 = vmatprep.subr.bf16.mxu0 0
        %3100 = vmatpush1.bf16.msra.mxu0 0
        %3101 = vmatprep.subr.bf16.mxu0 0
        %3102 = vmatpush1.bf16.msra.mxu0 0
        %3103 = vmatprep.subr.bf16.mxu0 0
        %3104 = vmatpush1.bf16.msra.mxu0 0
        %3105 = vmatprep.subr.bf16.mxu0 0
        %3106 = vmatpush1.bf16.msra.mxu0 0
        %3107 = vmatprep.subr.bf16.mxu0 0
        %3108 = vmatpush1.bf16.msra.mxu0 0
        %3109 = vmatprep.subr.bf16.mxu0 0
        %3110 = vmatpush1.bf16.msra.mxu0 0
        %3111 = vmatprep.subr.bf16.mxu0 0
        %3112 = vmatpush1.bf16.msra.mxu0 0
        %3113 = vmatprep.subr.bf16.mxu0 0
        %3114 = vmatpush1.bf16.msra.mxu0 0
        %3115 = vmatprep.subr.bf16.mxu0 0
        %3116 = vmatpush1.bf16.msra.mxu0 0
        %3117 = vmatprep.subr.bf16.mxu0 0
        %3118 = vmatpush1.bf16.msra.mxu0 0
        %3119 = vmatprep.mubr.bf16.mxu0 0
        %3120 = vmatmul.mubr.bf16.gmra.mrb[0].mxu0 %v3085
        %v3121 = vpop.f32.mrb[0].mxu0
        %v3122 = vadd.f32 %v3070, %v3121
        %v3123 = vpop.f32.mrb[0].mxu0
        %v3124 = vpop.f32.mrb[0].mxu0
        %v3125 = vadd.f32 %v3070, %v3124
        %v3126 = vpop.f32.mrb[0].mxu0
        %3127 = vdwg.mxu0
        %v3128 = vmax.f32 %v3122, 0.0
        %v3129 = vmax.f32 %v3125, 0.0
        %v3130 = vpack.c.bf16 %v3129, %v3128
        %v3131 = vld [vmem:[%s762] sm:$0xf]
        %v3132 = vld [vmem:[%s762 + $0x4] sm:$0xf]
        %v3133 = vld [vmem:[%s762 + $0x8] sm:$0xf]
        %v3134 = vld [vmem:[%s762 + $0xc] sm:$0xf]
        %v3135 = vld [vmem:[%s762 + $0x10] sm:$0xf]
        %v3136 = vld [vmem:[%s762 + $0x14] sm:$0xf]
        %v3137 = vld [vmem:[%s762 + $0x18] sm:$0xf]
        %v3138 = vld [vmem:[%s762 + $0x1c] sm:$0xf]
        %v3139 = vld [vmem:[%s641] sm:$0x1]
        %v3141 = vlaneseq
        %v3142 = vshrl.u32 %v3141, 7
        %v3143 = vsub.s32 0, %v3142
        %v3144 = vrot.slane %v3139, %v3143
        %v3154 = vunpack.c.l.b16 %v3131
        %v3155 = vunpack.c.l.b16 %v3132
        %v3156 = vunpack.c.l.b16 %v3133
        %v3157 = vunpack.c.l.b16 %v3134
        %v3158 = vunpack.c.l.b16 %v3135
        %v3159 = vunpack.c.l.b16 %v3136
        %v3160 = vunpack.c.l.b16 %v3137
        %v3161 = vunpack.c.l.b16 %v3138
        %v3162 = vpack.c.b16 %v3155, %v3154
        %v3163 = vpack.c.b16 %v3157, %v3156
        %v3164 = vpack.c.b16 %v3159, %v3158
        %v3165 = vpack.c.b16 %v3161, %v3160
        %vm3170 = vcmask 523264
        %v3172 = vsel %vm3170, %v3130, 0
        %3174 = vmatprep.subr.bf16.mxu0 0
        %3175 = vmatpush1.bf16.msra.mxu0 %v3162
        %3176 = vmatprep.subr.bf16.mxu0 0
        %3177 = vmatpush1.bf16.msra.mxu0 %v3163
        %3178 = vmatprep.subr.bf16.mxu0 0
        %3179 = vmatpush1.bf16.msra.mxu0 %v3164
        %3180 = vmatprep.subr.bf16.mxu0 0
        %3181 = vmatpush1.bf16.msra.mxu0 %v3165
        %3182 = vmatprep.subr.bf16.mxu0 0
        %3183 = vmatpush1.bf16.msra.mxu0 0
        %3184 = vmatprep.subr.bf16.mxu0 0
        %3185 = vmatpush1.bf16.msra.mxu0 0
        %3186 = vmatprep.subr.bf16.mxu0 0
        %3187 = vmatpush1.bf16.msra.mxu0 0
        %3188 = vmatprep.subr.bf16.mxu0 0
        %3189 = vmatpush1.bf16.msra.mxu0 0
        %3190 = vmatprep.subr.bf16.mxu0 0
        %3191 = vmatpush1.bf16.msra.mxu0 0
        %3192 = vmatprep.subr.bf16.mxu0 0
        %3193 = vmatpush1.bf16.msra.mxu0 0
        %3194 = vmatprep.subr.bf16.mxu0 0
        %3195 = vmatpush1.bf16.msra.mxu0 0
        %3196 = vmatprep.subr.bf16.mxu0 0
        %3197 = vmatpush1.bf16.msra.mxu0 0
        %3198 = vmatprep.subr.bf16.mxu0 0
        %3199 = vmatpush1.bf16.msra.mxu0 0
        %3200 = vmatprep.subr.bf16.mxu0 0
        %3201 = vmatpush1.bf16.msra.mxu0 0
        %3202 = vmatprep.subr.bf16.mxu0 0
        %3203 = vmatpush1.bf16.msra.mxu0 0
        %3204 = vmatprep.subr.bf16.mxu0 0
        %3205 = vmatpush1.bf16.msra.mxu0 0
        %3206 = vmatprep.mubr.bf16.mxu0 0
        %3207 = vmatmul.mubr.bf16.gmra.mrb[0].mxu0 %v3172
        %v3208 = vpop.f32.mrb[0].mxu0
        %v3209 = vadd.f32 %v3144, %v3208
        %v3210 = vpop.f32.mrb[0].mxu0
        %v3211 = vpop.f32.mrb[0].mxu0
        %v3212 = vadd.f32 %v3144, %v3211
        %v3213 = vpop.f32.mrb[0].mxu0
        %3214 = vdwg.mxu0
        %v3215 = vadd.f32 %v3058, %v3209
        %v3216 = vadd.f32 %v3059, %v3212
        %v3217 = vld [vmem:[%s765] sm:$0x1]
        %v3218 = vld [vmem:[%s768] sm:$0x1]
        %v3219 = vsel %vm806, %v3215, 0.0
        %3220 = vadd.xlane.f32.xlu0 %v3219
        %v3221 = vpop.xlane.xlu0 %3220
        %v3222 = vsel %vm806, %v3216, 0.0
        %3223 = vadd.xlane.f32.xlu0 %v3222
        %v3224 = vpop.xlane.xlu0 %3223
        %v3225 = vmul.f32 %v3221, %v3023
        %v3226 = vmul.f32 %v3224, %v3023
        %v3227 = vsub.f32 %v3215, %v3225
        %v3228 = vsub.f32 %v3216, %v3226
        %v3229 = vmul.f32 %v3227, %v3227
        %v3230 = vmul.f32 %v3228, %v3228
        %v3231 = vsel %vm806, %v3229, 0.0
        %3232 = vadd.xlane.f32.xlu0 %v3231
        %v3233 = vpop.xlane.xlu0 %3232
        %v3234 = vsel %vm806, %v3230, 0.0
        %3235 = vadd.xlane.f32.xlu0 %v3234
        %v3236 = vpop.xlane.xlu0 %3235
        %v3237 = vmul.f32 %v3233, %v3023
        %v3238 = vmul.f32 %v3236, %v3023
        %v3239 = vadd.f32 %v3237, 1e-05
        %v3240 = vadd.f32 %v3238, 1e-05
        %v3241 = vrsqrt.pop %v3239
        %v3242 = vrsqrt.pop %v3240
        %v3243 = vmul.f32 %v3227, %v3241
        %v3244 = vmul.f32 %v3228, %v3242
        %v3246 = vlaneseq
        %v3247 = vshrl.u32 %v3246, 7
        %v3248 = vsub.s32 0, %v3247
        %v3249 = vrot.slane %v3217, %v3248
        %v3251 = vmul.f32 %v3243, %v3249
        %v3252 = vmul.f32 %v3244, %v3249
        %v3254 = vlaneseq
        %v3255 = vshrl.u32 %v3254, 7
        %v3256 = vsub.s32 0, %v3255
        %v3257 = vrot.slane %v3218, %v3256
        %v3259 = vadd.f32 %v3251, %v3257
        %v3260 = vadd.f32 %v3252, %v3257
        %3261 = vst.msk [vmem:[#allocation2] sm:$0xff] %vm806, %v3259
        %3262 = vst.msk [vmem:[#allocation2 + $0x8] sm:$0xff] %vm806, %v3260
        %p3263 = scmp.eq.s32.totalorder %s41, 1
        // Predicated region
        $region101: #{tpu_custom_call.1} parent=79 // pred_check
          %p3264 = pneg %p3263
        $region102: #{tpu_custom_call.1} parent=79 // pred_check_branch
          %3266 = sbr.rel (%p3264) target = $region104
        $region103: #{tpu_custom_call.1} parent=79 // pred_region
          %v3267 = vsel %vm806, %v3259, 0.0
          %v3268 = vrot.slane %v3267, 4
          %v3269 = vadd.f32 %v3267, %v3268
          %v3270 = vrot.slane %v3269, 2
          %v3271 = vadd.f32 %v3269, %v3270
          %v3272 = vrot.slane %v3271, 1
          %v3273 = vadd.f32 %v3271, %v3272
          %v3274 = vsel %vm806, %v3260, 0.0
          %v3275 = vrot.slane %v3274, 4
          %v3276 = vadd.f32 %v3274, %v3275
          %v3277 = vrot.slane %v3276, 2
          %v3278 = vadd.f32 %v3276, %v3277
          %v3279 = vrot.slane %v3278, 1
          %v3280 = vadd.f32 %v3278, %v3279
          %v3281 = vrcp.pop 8.0
          %v3282 = vmul.f32 %v3273, %v3281
          %v3283 = vmul.f32 %v3280, %v3281
          %v3284 = vpack.c.bf16 %v3282, %v3282
          %v3285 = vpack.c.bf16 %v3283, %v3283
          %v3286 = vld [vmem:[%s13] sm:$0xf]
          %v3287 = vld [vmem:[%s13 + $0x4] sm:$0xf]
          %v3288 = vld [vmem:[%s13 + $0x8] sm:$0xf]
          %v3289 = vld [vmem:[%s13 + $0xc] sm:$0xf]
          %v3290 = vld [vmem:[%s14] sm:$0x1]
          %v3292 = vlaneseq
          %v3293 = vshrl.u32 %v3292, 7
          %v3294 = vsub.s32 0, %v3293
          %v3295 = vrot.slane %v3290, %v3294
          %v3299 = vunpack.c.l.b16 %v3284
          %v3300 = vunpack.c.l.b16 %v3285
          %vm3301 = vcmask 1041409
          %v3302 = vsel %vm3301, %v3300, %v3299
          %v3303 = vpack.c.b16 %v3302, %v3302
          %v3308 = vunpack.c.l.b16 %v3286
          %v3309 = vunpack.c.l.b16 %v3287
          %v3310 = vunpack.c.l.b16 %v3288
          %v3311 = vunpack.c.l.b16 %v3289
          %v3312 = vpack.c.b16 %v3309, %v3308
          %v3313 = vpack.c.b16 %v3311, %v3310
          %v3317 = vsel %vm806, %v3303, 0
          %3319 = vmatprep.subr.bf16.mxu0 0
          %3320 = vmatpush1.bf16.msra.mxu0 %v3312
          %3321 = vmatprep.subr.bf16.mxu0 0
          %3322 = vmatpush1.bf16.msra.mxu0 %v3313
          %3323 = vmatprep.subr.bf16.mxu0 0
          %3324 = vmatpush1.bf16.msra.mxu0 0
          %3325 = vmatprep.subr.bf16.mxu0 0
          %3326 = vmatpush1.bf16.msra.mxu0 0
          %3327 = vmatprep.subr.bf16.mxu0 0
          %3328 = vmatpush1.bf16.msra.mxu0 0
          %3329 = vmatprep.subr.bf16.mxu0 0
          %3330 = vmatpush1.bf16.msra.mxu0 0
          %3331 = vmatprep.subr.bf16.mxu0 0
          %3332 = vmatpush1.bf16.msra.mxu0 0
          %3333 = vmatprep.subr.bf16.mxu0 0
          %3334 = vmatpush1.bf16.msra.mxu0 0
          %3335 = vmatprep.subr.bf16.mxu0 0
          %3336 = vmatpush1.bf16.msra.mxu0 0
          %3337 = vmatprep.subr.bf16.mxu0 0
          %3338 = vmatpush1.bf16.msra.mxu0 0
          %3339 = vmatprep.subr.bf16.mxu0 0
          %3340 = vmatpush1.bf16.msra.mxu0 0
          %3341 = vmatprep.subr.bf16.mxu0 0
          %3342 = vmatpush1.bf16.msra.mxu0 0
          %3343 = vmatprep.subr.bf16.mxu0 0
          %3344 = vmatpush1.bf16.msra.mxu0 0
          %3345 = vmatprep.subr.bf16.mxu0 0
          %3346 = vmatpush1.bf16.msra.mxu0 0
          %3347 = vmatprep.subr.bf16.mxu0 0
          %3348 = vmatpush1.bf16.msra.mxu0 0
          %3349 = vmatprep.subr.bf16.mxu0 0
          %3350 = vmatpush1.bf16.msra.mxu0 0
          %3351 = vmatprep.mubr.bf16.mxu0 0
          %3352 = vmatmul.mubr.bf16.gmra.mrb[0].mxu0 %v3317
          %v3353 = vpop.f32.mrb[0].mxu0
          %v3354 = vadd.f32 %v3295, %v3353
          %v3355 = vpop.f32.mrb[0].mxu0
          %v3356 = vpop.f32.mrb[0].mxu0
          %v3357 = vpop.f32.mrb[0].mxu0
          %3358 = vdwg.mxu0
          %v3361 = vunpack.c.l.s4 1966171168
          %v3362 = vunpack.c.0.s8 %v3361
          %v3363 = vlaneseq
          %v3364 = vshrl.u32 %v3363, 7
          %v3365 = vsub.s32 %v3362, %v3364
          %v3366 = vrot.slane %v3354, %v3365
          %v3367 = vcombine.high %v3366, %v3366
          %v3369 = vunpack.c.l.s4 1966171168
          %v3370 = vunpack.c.0.s8 %v3369
          %v3371 = vlaneseq
          %v3372 = vshrl.u32 %v3371, 7
          %v3373 = vsub.s32 %v3370, %v3372
          %v3374 = vrot.slane %v3366, %v3373
          %v3376 = vunpack.c.l.s4 1966171168
          %v3377 = vunpack.c.0.s8 %v3376
          %v3378 = vlaneseq
          %v3379 = vshrl.u32 %v3378, 7
          %v3380 = vsub.s32 %v3377, %v3379
          %v3381 = vrot.slane %v3367, %v3380
          %vm3384 = vcmask 32768
          %3385 = vst.msk [vmem:[#allocation11] sm:$0x1] %vm3384, %v3374
          %3386 = vst.msk [vmem:[#allocation11 + $0x1] sm:$0x1] %vm3384, %v3381
        $region104: #{tpu_custom_call.1} parent=79 // pred_fallthru
          _
        // Predicated region
        $region105: #{tpu_custom_call.1} parent=79 // pred_check
          %p3387 = pneg %p446
        $region106: #{tpu_custom_call.1} parent=79 // pred_check_branch
          %3389 = sbr.rel (%p3387) target = $region108
        $region107: #{tpu_custom_call.1} parent=79 // pred_region
          %s3390 = smul.u32 2, %s40
          %s3392 = ssub.s32 32, 32
          %3393 = vsyncadd [#allocation5], %s3392
          %s3394 = smul.addr %s3390, 16
          %s3395 = scalar_lea.hbm %s15, %s3394
          %s3396 = sshll.u32 [#allocation11], 4
          %s3397 = int_to_ptr.vmem [resolvable:$true] %s3396
          %3402 = dma.vmem_to_hbm [thread:$0]  %s3397, 32, %s3395, [#allocation5], 16, 16, 1
        $region108: #{tpu_custom_call.1} parent=79 // pred_fallthru
          _
        // Predicated region
        $region109: #{tpu_custom_call.1} parent=79 // pred_check
          %p3403 = pneg %p446
        $region110: #{tpu_custom_call.1} parent=79 // pred_check_branch
          %3405 = sbr.rel (%p3403) target = $region112
        $region111: #{tpu_custom_call.1} parent=79 // pred_region
          %3406 = dma.done [#allocation5], 32
        $region112: #{tpu_custom_call.1} parent=79 // pred_fallthru
          _
      $region80: #{tpu_custom_call.1} parent=5 // pred_fallthru
        _
      %p3407 = scmp.le.s32.totalorder 2, %s31
      // Predicated region
      $region113: #{tpu_custom_call.1} parent=5 // pred_check
        %p3408 = pneg %p3407
      $region114: #{tpu_custom_call.1} parent=5 // pred_check_branch
        %3410 = sbr.rel (%p3408) target = $region116
      $region115: #{tpu_custom_call.1} parent=5 // pred_region
        %s3411 = ssub.s32 %s31, 2
      $region116: #{tpu_custom_call.1} parent=5 // pred_fallthru
        _
    $region6: #{tpu_custom_call.1} parent=1 // loop_footer
      %s35 = sadd.s32 1, %s31
    $region7: #{tpu_custom_call.1} parent=1 // loop_footer_branch
      %30 = sbr.rel target = $region3
    $region8: #{tpu_custom_call.1} parent=1 // loop_exit
      _
    %3412 = vsyncpa [#allocation4], 1
    %s3413 = scalar_lea.sflag [#allocation4], 1
    %3414 = vsyncpa %s3413, 1
    %3415 = vsyncpa [#allocation7], 1
    %s3416 = scalar_lea.sflag [#allocation7], 1
    %3417 = vsyncpa %s3416, 1
    %3418 = vsyncpa [#allocation10], 1
    %s3419 = scalar_lea.sflag [#allocation10], 1
    %3420 = vsyncpa %s3419, 1
    %3421 = vsyncpa [#allocation5], 1
    %s3422 = scalar_lea.sflag [#allocation5], 1
    %3423 = vsyncpa %s3422, 1

</llo_original>
